<compile_context>
chip_gen: v5e
topology: v5e:2x2
jax: 0.10.0
libtpu: 0.0.40
codegen_flags: <defaults>
</compile_context>

<pallas_src>
import jax
import jax.numpy as jnp
from jax.experimental import pallas as pl
from jax.experimental.pallas import tpu as pltpu

ENCODER_DIM = 400    # self.encoder_vector_size
EXPANDER_DIM = 500   # self.expander_vector_size
PAD_DIM = 512        # lane-dense padded width (4 x 128)
BN_EPS = 1e-5

# Row layout of the packed per-column vector input (8, PAD_DIM).
ROW_G1, ROW_BE1, ROW_G2, ROW_BE2, ROW_B3 = 0, 1, 2, 3, 4


def expander_kernel(x_ref, w1_ref, vecs_ref, w2_hbm, w3_hbm,
                    z_ref, stats_ref, w2_vmem, w3_vmem, dma_sem):
    B = x_ref.shape[0]
    inv_b = 1.0 / B

    # Kick off w2/w3 HBM->VMEM DMAs immediately; they overlap fc1 + bn1.
    cp_w2 = pltpu.make_async_copy(w2_hbm, w2_vmem, dma_sem.at[0])
    cp_w3 = pltpu.make_async_copy(w3_hbm, w3_vmem, dma_sem.at[1])
    cp_w2.start()
    cp_w3.start()

    def refined_rsqrt(v):
        # EUP rsqrt + one Newton step (cheap: (1,512) vector on the VPU).
        r = jax.lax.rsqrt(v)
        return r * (1.5 - 0.5 * v * r * r)

    def bn_relu(h, gamma, beta):
        # One traversal for both reductions, then a single FMA.
        mean = jnp.sum(h, axis=0, keepdims=True) * inv_b
        ex2 = jnp.sum(h * h, axis=0, keepdims=True) * inv_b
        var = jnp.maximum(ex2 - mean * mean, 0.0)   # clamp f32 cancellation
        scale = gamma * refined_rsqrt(var + BN_EPS)
        offset = beta - mean * scale
        return jnp.maximum(h * scale + offset, 0.0)

    g1 = vecs_ref[ROW_G1:ROW_G1 + 1, :]
    be1 = vecs_ref[ROW_BE1:ROW_BE1 + 1, :]
    g2 = vecs_ref[ROW_G2:ROW_G2 + 1, :]
    be2 = vecs_ref[ROW_BE2:ROW_BE2 + 1, :]
    b3 = vecs_ref[ROW_B3:ROW_B3 + 1, :]

    # fc1 at K=400 (bias dropped: cancelled by BN mean subtraction) + bn1/relu1.
    h = jnp.dot(x_ref[...].astype(jnp.bfloat16), w1_ref[...],
                preferred_element_type=jnp.float32)
    h = bn_relu(h, g1, be1)

    # fc2 (bias dropped) + bn2 + relu2 -- wait for its weights only now.
    cp_w2.wait()
    h = jnp.dot(h.astype(jnp.bfloat16), w2_vmem[...],
                preferred_element_type=jnp.float32)
    h = bn_relu(h, g2, be2)

    # fc3 (+ bias, kept).
    cp_w3.wait()
    z = jnp.dot(h.astype(jnp.bfloat16), w3_vmem[...],
                preferred_element_type=jnp.float32) + b3
    z_ref[...] = z

    # Fused downstream statistics for the VICReg std-loss term:
    # row 0 = per-column mean(z), row 1 = per-column unbiased var(z).
    zmean = jnp.sum(z, axis=0, keepdims=True) * inv_b
    zex2 = jnp.sum(z * z, axis=0, keepdims=True) * inv_b
    zvar = jnp.maximum(zex2 - zmean * zmean, 0.0) * (B / (B - 1.0))
    stats_ref[...] = jnp.zeros_like(stats_ref)
    stats_ref[0:1, :] = zmean
    stats_ref[1:2, :] = zvar


def vicreg_forward(x, kparams):
    """x: (B, ENCODER_DIM) float32.

    Returns:
      z_pad : (B, PAD_DIM) float32 -- cols [EXPANDER_DIM:PAD_DIM] are exactly 0
      stats : (8, PAD_DIM) float32 -- row 0 = mean(z, axis=0),
                                      row 1 = var(z, axis=0, ddof=1)
    """
    B = x.shape[0]
    assert B % 8 == 0, "batch must be a multiple of 8 sublanes"

    vmem = pl.BlockSpec(memory_space=pltpu.MemorySpace.VMEM)
    any_spec = pl.BlockSpec(memory_space=pl.ANY)

    flops = 2 * B * (ENCODER_DIM * PAD_DIM + 2 * PAD_DIM * PAD_DIM)
    bytes_accessed = (B * ENCODER_DIM * 4            # x (f32 in)
                      + ENCODER_DIM * PAD_DIM * 2    # w1 (bf16)
                      + 2 * PAD_DIM * PAD_DIM * 2    # w2, w3 (bf16)
                      + 8 * PAD_DIM * 4              # packed vectors
                      + B * PAD_DIM * 4              # z out (f32)
                      + 8 * PAD_DIM * 4)             # stats out

    z_pad, stats = pl.pallas_call(
        expander_kernel,
        out_shape=(jax.ShapeDtypeStruct((B, PAD_DIM), jnp.float32),
                   jax.ShapeDtypeStruct((8, PAD_DIM), jnp.float32)),
        in_specs=[vmem, vmem, vmem, any_spec, any_spec],
        out_specs=(vmem, vmem),
        scratch_shapes=[pltpu.VMEM((PAD_DIM, PAD_DIM), jnp.bfloat16),
                        pltpu.VMEM((PAD_DIM, PAD_DIM), jnp.bfloat16),
                        pltpu.SemaphoreType.DMA((2,))],
        compiler_params=pltpu.CompilerParams(vmem_limit_bytes=32 * 1024 * 1024),
        cost_estimate=pl.CostEstimate(flops=int(flops),
                                      transcendentals=2 * PAD_DIM,
                                      bytes_accessed=int(bytes_accessed)),
    )(x, kparams["w1"], kparams["vecs"], kparams["w2"], kparams["w3"])
    return z_pad, stats


def init_params(key):
    """Returns (kernel_params, reference_params).

    nn.Linear(in, out): weight (out, in), bias (out,); stored transposed as
    (in, out) and init'd uniform(-1/sqrt(in), 1/sqrt(in)) like PyTorch.
    BatchNorm1d: gamma=1, beta=0.
    Kernel weights: w1 kept at K=400 (cols padded 500->512), w2/w3 padded to
    (512,512), all cast to bf16; per-column vectors (g1, be1, g2, be2, b3)
    packed into one (8, 512) f32 array with zeros in the padded columns so the
    padded lanes stay exactly 0 through every layer.
    """
    ks = jax.random.split(key, 6)

    def lin(kw, kb, fan_in, fan_out):
        bound = 1.0 / float(fan_in) ** 0.5
        w = jax.random.uniform(kw, (fan_in, fan_out), jnp.float32, -bound, bound)
        b = jax.random.uniform(kb, (1, fan_out), jnp.float32, -bound, bound)
        return w, b

    w1, b1 = lin(ks[0], ks[1], ENCODER_DIM, EXPANDER_DIM)
    w2, b2 = lin(ks[2], ks[3], EXPANDER_DIM, EXPANDER_DIM)
    w3, b3 = lin(ks[4], ks[5], EXPANDER_DIM, EXPANDER_DIM)
    ones = jnp.ones((1, EXPANDER_DIM), jnp.float32)
    zeros = jnp.zeros((1, EXPANDER_DIM), jnp.float32)

    ref_params = dict(w1=w1, b1=b1, g1=ones, be1=zeros,
                      w2=w2, b2=b2, g2=ones, be2=zeros,
                      w3=w3, b3=b3)

    def pad_bf16(w, out_rows, out_cols):
        wp = jnp.zeros((out_rows, out_cols), jnp.float32)
        wp = wp.at[:w.shape[0], :w.shape[1]].set(w)
        return wp.astype(jnp.bfloat16)

    def pad_v(v):
        return jnp.zeros((PAD_DIM,), jnp.float32).at[:v.shape[-1]].set(
            v.reshape(-1))

    zero_row = jnp.zeros((PAD_DIM,), jnp.float32)
    vecs = jnp.stack([pad_v(ones), pad_v(zeros),        # g1, be1
                      pad_v(ones), pad_v(zeros),        # g2, be2
                      pad_v(b3),                        # b3
                      zero_row, zero_row, zero_row])    # pad to 8 sublanes

    kernel_params = dict(
        w1=pad_bf16(w1, ENCODER_DIM, PAD_DIM),   # K kept at 400
        w2=pad_bf16(w2, PAD_DIM, PAD_DIM),
        w3=pad_bf16(w3, PAD_DIM, PAD_DIM),
        vecs=vecs)
    return kernel_params, ref_params


def _bn_train_f32(h, gamma, beta):
    mean = jnp.mean(h, axis=0, keepdims=True)
    var = jnp.mean((h - mean) ** 2, axis=0, keepdims=True)
    return (h - mean) * jax.lax.rsqrt(var + BN_EPS) * gamma + beta


def reference_forward_f32(x, p):
    """Exact module semantics in f32 (incl. pre-BN biases)."""
    hi = jax.lax.Precision.HIGHEST
    h = jnp.dot(x, p["w1"], precision=hi) + p["b1"]
    h = jnp.maximum(_bn_train_f32(h, p["g1"], p["be1"]), 0.0)
    h = jnp.dot(h, p["w2"], precision=hi) + p["b2"]
    h = jnp.maximum(_bn_train_f32(h, p["g2"], p["be2"]), 0.0)
    return jnp.dot(h, p["w3"], precision=hi) + p["b3"]


if __name__ == "__main__":
    key = jax.random.PRNGKey(0)
    kx, kp = jax.random.split(key)

    B = 256  # the module's real training batch size (self.batch_size)
    x = jax.random.normal(kx, (B, ENCODER_DIM), jnp.float32)
    kernel_params, ref_params = init_params(kp)

    fwd = jax.jit(vicreg_forward)
    z_pad, stats = fwd(x, kernel_params)
    z_pad = jax.block_until_ready(z_pad)
    stats = jax.block_until_ready(stats)

    assert z_pad.shape == (B, PAD_DIM)
    assert stats.shape == (8, PAD_DIM)
    assert bool(jnp.all(jnp.isfinite(z_pad))), "non-finite z"
    assert bool(jnp.all(jnp.isfinite(stats))), "non-finite stats"

    # Padded lanes must be exactly zero (safe to hand downstream unsliced).
    assert bool(jnp.all(z_pad[:, EXPANDER_DIM:] == 0.0)), "padded lanes not 0"

    z = z_pad[:, :EXPANDER_DIM]

    # Check vs exact f32 module semantics.  bf16 MXU operands => ~1% expected
    # relative error; bound at 3%.
    ref_f32 = reference_forward_f32(x, ref_params)
    rel_err = jnp.linalg.norm(z - ref_f32) / jnp.linalg.norm(ref_f32)
    assert float(rel_err) < 3e-2, f"relative error too large: {float(rel_err)}"

    # Fused z-statistics (for the VICReg std-loss term) must be consistent
    # with the z the kernel itself emitted (only reduction-order differences).
    assert jnp.allclose(stats[0, :EXPANDER_DIM], jnp.mean(z, axis=0),
                        atol=1e-3, rtol=1e-2), "fused mean mismatch"
    assert jnp.allclose(stats[1, :EXPANDER_DIM], jnp.var(z, axis=0, ddof=1),
                        atol=1e-3, rtol=1e-2), "fused var mismatch"

    print("KERNEL_OK")
</pallas_src>

<mosaic_0001>
module attributes {stable_mosaic.version = 11 : i64} {
  func.func @expander_kernel(%arg0: memref<256x400xf32, #tpu.memory_space<vmem>>, %arg1: memref<400x512xbf16, #tpu.memory_space<vmem>>, %arg2: memref<8x512xf32, #tpu.memory_space<vmem>>, %arg3: memref<512x512xbf16, #tpu.memory_space<any>>, %arg4: memref<512x512xbf16, #tpu.memory_space<any>>, %arg5: memref<256x512xf32, #tpu.memory_space<vmem>>, %arg6: memref<8x512xf32, #tpu.memory_space<vmem>>, %arg7: memref<512x512xbf16, #tpu.memory_space<vmem>>, %arg8: memref<512x512xbf16, #tpu.memory_space<vmem>>, %arg9: memref<2x!tpu.dma_semaphore, #tpu.memory_space<semaphore_mem>>) attributes {dimension_semantics = [], scalar_prefetch = 0 : i64, scratch_operands = 3 : i64, tpu.core_type = #tpu.core_type<tc>} {
    %c0_i32 = arith.constant 0 : i32
    %0 = tpu.memref_slice %arg9[%c0_i32] : memref<2x!tpu.dma_semaphore, #tpu.memory_space<semaphore_mem>> -> memref<1x!tpu.dma_semaphore, #tpu.memory_space<semaphore_mem>>
    %1 = tpu.memref_squeeze %0 : memref<1x!tpu.dma_semaphore, #tpu.memory_space<semaphore_mem>> -> memref<!tpu.dma_semaphore, #tpu.memory_space<semaphore_mem>>
    tpu.enqueue_dma source(%arg3 : memref<512x512xbf16, #tpu.memory_space<any>>) target(%arg7 : memref<512x512xbf16, #tpu.memory_space<vmem>>) target_semaphore(%1 : memref<!tpu.dma_semaphore, #tpu.memory_space<semaphore_mem>>)
    %c1_i32 = arith.constant 1 : i32
    %2 = tpu.memref_slice %arg9[%c1_i32] : memref<2x!tpu.dma_semaphore, #tpu.memory_space<semaphore_mem>> -> memref<1x!tpu.dma_semaphore, #tpu.memory_space<semaphore_mem>>
    %3 = tpu.memref_squeeze %2 : memref<1x!tpu.dma_semaphore, #tpu.memory_space<semaphore_mem>> -> memref<!tpu.dma_semaphore, #tpu.memory_space<semaphore_mem>>
    tpu.enqueue_dma source(%arg4 : memref<512x512xbf16, #tpu.memory_space<any>>) target(%arg8 : memref<512x512xbf16, #tpu.memory_space<vmem>>) target_semaphore(%3 : memref<!tpu.dma_semaphore, #tpu.memory_space<semaphore_mem>>)
    %c0 = arith.constant 0 : index
    %c0_0 = arith.constant 0 : index
    %4 = vector.load %arg2[%c0, %c0_0] : memref<8x512xf32, #tpu.memory_space<vmem>>, vector<1x512xf32>
    %c1 = arith.constant 1 : index
    %c0_1 = arith.constant 0 : index
    %5 = vector.load %arg2[%c1, %c0_1] : memref<8x512xf32, #tpu.memory_space<vmem>>, vector<1x512xf32>
    %c2 = arith.constant 2 : index
    %c0_2 = arith.constant 0 : index
    %6 = vector.load %arg2[%c2, %c0_2] : memref<8x512xf32, #tpu.memory_space<vmem>>, vector<1x512xf32>
    %c3 = arith.constant 3 : index
    %c0_3 = arith.constant 0 : index
    %7 = vector.load %arg2[%c3, %c0_3] : memref<8x512xf32, #tpu.memory_space<vmem>>, vector<1x512xf32>
    %c4 = arith.constant 4 : index
    %c0_4 = arith.constant 0 : index
    %8 = vector.load %arg2[%c4, %c0_4] : memref<8x512xf32, #tpu.memory_space<vmem>>, vector<1x512xf32>
    %c0_5 = arith.constant 0 : index
    %c0_6 = arith.constant 0 : index
    %9 = vector.load %arg0[%c0_5, %c0_6] : memref<256x400xf32, #tpu.memory_space<vmem>>, vector<256x400xf32>
    %10 = arith.truncf %9 : vector<256x400xf32> to vector<256x400xbf16>
    %c0_7 = arith.constant 0 : index
    %c0_8 = arith.constant 0 : index
    %11 = vector.load %arg1[%c0_7, %c0_8] : memref<400x512xbf16, #tpu.memory_space<vmem>>, vector<400x512xbf16>
    %cst = arith.constant dense<0.000000e+00> : vector<256x512xf32>
    %12 = tpu.matmul %10, %11, %cst {dimension_numbers = #tpu.dot_dimension_numbers<[1], [0], [0], [1], [0, 0, 1, 1], [], []>} : vector<256x400xbf16>, vector<400x512xbf16>, vector<256x512xf32> -> vector<256x512xf32>
    %cst_9 = arith.constant dense<0.000000e+00> : vector<512xf32>
    %13 = vector.multi_reduction <add>, %12, %cst_9 [0] : vector<256x512xf32> to vector<512xf32>
    %14 = vector.shape_cast %13 : vector<512xf32> to vector<1x512xf32>
    %cst_10 = arith.constant 3.906250e-03 : f32
    %15 = vector.broadcast %cst_10 : f32 to vector<1x512xf32>
    %16 = arith.mulf %14, %15 : vector<1x512xf32>
    %17 = arith.mulf %12, %12 : vector<256x512xf32>
    %cst_11 = arith.constant dense<0.000000e+00> : vector<512xf32>
    %18 = vector.multi_reduction <add>, %17, %cst_11 [0] : vector<256x512xf32> to vector<512xf32>
    %19 = vector.shape_cast %18 : vector<512xf32> to vector<1x512xf32>
    %cst_12 = arith.constant 3.906250e-03 : f32
    %20 = vector.broadcast %cst_12 : f32 to vector<1x512xf32>
    %21 = arith.mulf %19, %20 : vector<1x512xf32>
    %22 = arith.mulf %16, %16 : vector<1x512xf32>
    %23 = arith.subf %21, %22 : vector<1x512xf32>
    %cst_13 = arith.constant 0.000000e+00 : f32
    %24 = vector.broadcast %cst_13 : f32 to vector<1x512xf32>
    %25 = arith.maximumf %23, %24 : vector<1x512xf32>
    %cst_14 = arith.constant 9.99999974E-6 : f32
    %26 = vector.broadcast %cst_14 : f32 to vector<1x512xf32>
    %27 = arith.addf %25, %26 : vector<1x512xf32>
    %28 = math.rsqrt %27 : vector<1x512xf32>
    %cst_15 = arith.constant 5.000000e-01 : f32
    %29 = vector.broadcast %cst_15 : f32 to vector<1x512xf32>
    %30 = arith.mulf %29, %27 : vector<1x512xf32>
    %31 = arith.mulf %30, %28 : vector<1x512xf32>
    %32 = arith.mulf %31, %28 : vector<1x512xf32>
    %cst_16 = arith.constant 1.500000e+00 : f32
    %33 = vector.broadcast %cst_16 : f32 to vector<1x512xf32>
    %34 = arith.subf %33, %32 : vector<1x512xf32>
    %35 = arith.mulf %28, %34 : vector<1x512xf32>
    %36 = arith.mulf %4, %35 : vector<1x512xf32>
    %37 = arith.mulf %16, %36 : vector<1x512xf32>
    %38 = arith.subf %5, %37 : vector<1x512xf32>
    %39 = vector.broadcast %36 : vector<1x512xf32> to vector<256x512xf32>
    %40 = arith.mulf %12, %39 : vector<256x512xf32>
    %41 = vector.broadcast %38 : vector<1x512xf32> to vector<256x512xf32>
    %42 = arith.addf %40, %41 : vector<256x512xf32>
    %cst_17 = arith.constant 0.000000e+00 : f32
    %43 = vector.broadcast %cst_17 : f32 to vector<256x512xf32>
    %44 = arith.maximumf %42, %43 : vector<256x512xf32>
    %c0_i32_18 = arith.constant 0 : i32
    %45 = tpu.memref_slice %arg9[%c0_i32_18] : memref<2x!tpu.dma_semaphore, #tpu.memory_space<semaphore_mem>> -> memref<1x!tpu.dma_semaphore, #tpu.memory_space<semaphore_mem>>
    %46 = tpu.memref_squeeze %45 : memref<1x!tpu.dma_semaphore, #tpu.memory_space<semaphore_mem>> -> memref<!tpu.dma_semaphore, #tpu.memory_space<semaphore_mem>>
    tpu.wait_dma2 semaphore(%46 : memref<!tpu.dma_semaphore, #tpu.memory_space<semaphore_mem>>) src(%arg3 : memref<512x512xbf16, #tpu.memory_space<any>>) dst(%arg7 : memref<512x512xbf16, #tpu.memory_space<vmem>>)
    %47 = arith.truncf %44 : vector<256x512xf32> to vector<256x512xbf16>
    %c0_19 = arith.constant 0 : index
    %c0_20 = arith.constant 0 : index
    %48 = vector.load %arg7[%c0_19, %c0_20] : memref<512x512xbf16, #tpu.memory_space<vmem>>, vector<512x512xbf16>
    %cst_21 = arith.constant dense<0.000000e+00> : vector<256x512xf32>
    %49 = tpu.matmul %47, %48, %cst_21 {dimension_numbers = #tpu.dot_dimension_numbers<[1], [0], [0], [1], [0, 0, 1, 1], [], []>} : vector<256x512xbf16>, vector<512x512xbf16>, vector<256x512xf32> -> vector<256x512xf32>
    %cst_22 = arith.constant dense<0.000000e+00> : vector<512xf32>
    %50 = vector.multi_reduction <add>, %49, %cst_22 [0] : vector<256x512xf32> to vector<512xf32>
    %51 = vector.shape_cast %50 : vector<512xf32> to vector<1x512xf32>
    %cst_23 = arith.constant 3.906250e-03 : f32
    %52 = vector.broadcast %cst_23 : f32 to vector<1x512xf32>
    %53 = arith.mulf %51, %52 : vector<1x512xf32>
    %54 = arith.mulf %49, %49 : vector<256x512xf32>
    %cst_24 = arith.constant dense<0.000000e+00> : vector<512xf32>
    %55 = vector.multi_reduction <add>, %54, %cst_24 [0] : vector<256x512xf32> to vector<512xf32>
    %56 = vector.shape_cast %55 : vector<512xf32> to vector<1x512xf32>
    %cst_25 = arith.constant 3.906250e-03 : f32
    %57 = vector.broadcast %cst_25 : f32 to vector<1x512xf32>
    %58 = arith.mulf %56, %57 : vector<1x512xf32>
    %59 = arith.mulf %53, %53 : vector<1x512xf32>
    %60 = arith.subf %58, %59 : vector<1x512xf32>
    %cst_26 = arith.constant 0.000000e+00 : f32
    %61 = vector.broadcast %cst_26 : f32 to vector<1x512xf32>
    %62 = arith.maximumf %60, %61 : vector<1x512xf32>
    %cst_27 = arith.constant 9.99999974E-6 : f32
    %63 = vector.broadcast %cst_27 : f32 to vector<1x512xf32>
    %64 = arith.addf %62, %63 : vector<1x512xf32>
    %65 = math.rsqrt %64 : vector<1x512xf32>
    %cst_28 = arith.constant 5.000000e-01 : f32
    %66 = vector.broadcast %cst_28 : f32 to vector<1x512xf32>
    %67 = arith.mulf %66, %64 : vector<1x512xf32>
    %68 = arith.mulf %67, %65 : vector<1x512xf32>
    %69 = arith.mulf %68, %65 : vector<1x512xf32>
    %cst_29 = arith.constant 1.500000e+00 : f32
    %70 = vector.broadcast %cst_29 : f32 to vector<1x512xf32>
    %71 = arith.subf %70, %69 : vector<1x512xf32>
    %72 = arith.mulf %65, %71 : vector<1x512xf32>
    %73 = arith.mulf %6, %72 : vector<1x512xf32>
    %74 = arith.mulf %53, %73 : vector<1x512xf32>
    %75 = arith.subf %7, %74 : vector<1x512xf32>
    %76 = vector.broadcast %73 : vector<1x512xf32> to vector<256x512xf32>
    %77 = arith.mulf %49, %76 : vector<256x512xf32>
    %78 = vector.broadcast %75 : vector<1x512xf32> to vector<256x512xf32>
    %79 = arith.addf %77, %78 : vector<256x512xf32>
    %cst_30 = arith.constant 0.000000e+00 : f32
    %80 = vector.broadcast %cst_30 : f32 to vector<256x512xf32>
    %81 = arith.maximumf %79, %80 : vector<256x512xf32>
    %c1_i32_31 = arith.constant 1 : i32
    %82 = tpu.memref_slice %arg9[%c1_i32_31] : memref<2x!tpu.dma_semaphore, #tpu.memory_space<semaphore_mem>> -> memref<1x!tpu.dma_semaphore, #tpu.memory_space<semaphore_mem>>
    %83 = tpu.memref_squeeze %82 : memref<1x!tpu.dma_semaphore, #tpu.memory_space<semaphore_mem>> -> memref<!tpu.dma_semaphore, #tpu.memory_space<semaphore_mem>>
    tpu.wait_dma2 semaphore(%83 : memref<!tpu.dma_semaphore, #tpu.memory_space<semaphore_mem>>) src(%arg4 : memref<512x512xbf16, #tpu.memory_space<any>>) dst(%arg8 : memref<512x512xbf16, #tpu.memory_space<vmem>>)
    %84 = arith.truncf %81 : vector<256x512xf32> to vector<256x512xbf16>
    %c0_32 = arith.constant 0 : index
    %c0_33 = arith.constant 0 : index
    %85 = vector.load %arg8[%c0_32, %c0_33] : memref<512x512xbf16, #tpu.memory_space<vmem>>, vector<512x512xbf16>
    %cst_34 = arith.constant dense<0.000000e+00> : vector<256x512xf32>
    %86 = tpu.matmul %84, %85, %cst_34 {dimension_numbers = #tpu.dot_dimension_numbers<[1], [0], [0], [1], [0, 0, 1, 1], [], []>} : vector<256x512xbf16>, vector<512x512xbf16>, vector<256x512xf32> -> vector<256x512xf32>
    %87 = vector.broadcast %8 : vector<1x512xf32> to vector<256x512xf32>
    %88 = arith.addf %86, %87 : vector<256x512xf32>
    %c0_35 = arith.constant 0 : index
    %c0_36 = arith.constant 0 : index
    %89 = vector.load %arg5[%c0_35, %c0_36] : memref<256x512xf32, #tpu.memory_space<vmem>>, vector<256x512xf32>
    tpu.vector_store %arg5[%c0_35, %c0_36], %88 {strides = array<i32>} : memref<256x512xf32, #tpu.memory_space<vmem>>, vector<256x512xf32>,
    %cst_37 = arith.constant dense<0.000000e+00> : vector<512xf32>
    %90 = vector.multi_reduction <add>, %88, %cst_37 [0] : vector<256x512xf32> to vector<512xf32>
    %91 = vector.shape_cast %90 : vector<512xf32> to vector<1x512xf32>
    %cst_38 = arith.constant 3.906250e-03 : f32
    %92 = vector.broadcast %cst_38 : f32 to vector<1x512xf32>
    %93 = arith.mulf %91, %92 : vector<1x512xf32>
    %94 = arith.mulf %88, %88 : vector<256x512xf32>
    %cst_39 = arith.constant dense<0.000000e+00> : vector<512xf32>
    %95 = vector.multi_reduction <add>, %94, %cst_39 [0] : vector<256x512xf32> to vector<512xf32>
    %96 = vector.shape_cast %95 : vector<512xf32> to vector<1x512xf32>
    %cst_40 = arith.constant 3.906250e-03 : f32
    %97 = vector.broadcast %cst_40 : f32 to vector<1x512xf32>
    %98 = arith.mulf %96, %97 : vector<1x512xf32>
    %99 = arith.mulf %93, %93 : vector<1x512xf32>
    %100 = arith.subf %98, %99 : vector<1x512xf32>
    %cst_41 = arith.constant 0.000000e+00 : f32
    %101 = vector.broadcast %cst_41 : f32 to vector<1x512xf32>
    %102 = arith.maximumf %100, %101 : vector<1x512xf32>
    %cst_42 = arith.constant 1.00392163 : f32
    %103 = vector.broadcast %cst_42 : f32 to vector<1x512xf32>
    %104 = arith.mulf %102, %103 : vector<1x512xf32>
    %cst_43 = arith.constant 0.000000e+00 : f32
    %105 = vector.broadcast %cst_43 : f32 to vector<8x512xf32>
    %c0_44 = arith.constant 0 : index
    %c0_45 = arith.constant 0 : index
    %106 = vector.load %arg6[%c0_44, %c0_45] : memref<8x512xf32, #tpu.memory_space<vmem>>, vector<8x512xf32>
    tpu.vector_store %arg6[%c0_44, %c0_45], %105 {strides = array<i32>} : memref<8x512xf32, #tpu.memory_space<vmem>>, vector<8x512xf32>,
    %c0_46 = arith.constant 0 : index
    %c0_47 = arith.constant 0 : index
    %107 = vector.load %arg6[%c0_46, %c0_47] : memref<8x512xf32, #tpu.memory_space<vmem>>, vector<1x512xf32>
    tpu.vector_store %arg6[%c0_46, %c0_47], %93 {strides = array<i32>} : memref<8x512xf32, #tpu.memory_space<vmem>>, vector<1x512xf32>,
    %c1_48 = arith.constant 1 : index
    %c0_49 = arith.constant 0 : index
    %108 = vector.load %arg6[%c1_48, %c0_49] : memref<8x512xf32, #tpu.memory_space<vmem>>, vector<1x512xf32>
    tpu.vector_store %arg6[%c1_48, %c0_49], %104 {strides = array<i32>} : memref<8x512xf32, #tpu.memory_space<vmem>>, vector<1x512xf32>,
    return
  }
}

</mosaic_0001>

<llo_original>
// kernel: vicreg_forward.1
$region0: #{vicreg_forward.1}
  #allocation0 [shape = 'u32[]', space=smem, size = 0x4, offset = 0x4, fixed_abs, tag = 'smem constant byte address 0x4 - core index']
  #allocation1 [shape = 'u32[72,128]{1,0:T(1,128)}', space=vmem, size = 0x9000, scoped, tag = 'internal scratch']
  #allocation2 [shape = 'bf16[512,512]{1,0:T(8,128)(2,1)}', space=vmem, size = 0x80000, scoped, tag = 'scratch operand']
  #allocation3 [shape = 'bf16[512,512]{1,0:T(8,128)(2,1)}', space=vmem, size = 0x80000, scoped, tag = 'scratch operand']
  #allocation4 [shape = 's32[2]{0}', space=sflag, size = 0x8, scoped, tag = 'scratch operand']
  #allocation11 [shape = 's32[]', space=sflag, size = 0x4, offset = 0, fixed_abs, tag = 'sflag constant byte address 0x0 - dummy sync flag']
  #allocation12 [shape = 's32[]', space=sflag, size = 0x4, offset = 0, fixed_abs, tag = 'sflag constant byte address 0x0 - dummy sync flag']
  #allocation13 [shape = 's32[]', space=sflag, size = 0x4, offset = 0, fixed_abs, tag = 'sflag constant byte address 0x0 - dummy sync flag']
  #allocation14 [shape = 'u32[]', space=smem, size = 0x4, offset = 0x44, fixed_abs, tag = 'smem constant byte address 0x44 - assertion arg 0']
  #allocation15 [shape = 'u32[]', space=smem, size = 0x4, offset = 0x48, fixed_abs, tag = 'smem constant byte address 0x48 - assertion arg 1']
  %s0 = inlined_call_operand.vmem [shape: f32[256,400], index: 0, kind: input, shape index: {}]
  %s1 = inlined_call_operand.vmem [shape: bf16[400,512], index: 1, kind: input, shape index: {}]
  %s2 = inlined_call_operand.hbm [shape: f32[8,512], index: 2, kind: input, shape index: {}]
  %s3 = inlined_call_operand.vmem [shape: bf16[512,512], index: 3, kind: input, shape index: {}]
  %s4 = inlined_call_operand.hbm [shape: bf16[512,512], index: 4, kind: input, shape index: {}]
  %s5 = inlined_call_operand.hbm [shape: f32[256,512], index: 5, kind: output, shape index: {0}]
  %s6 = inlined_call_operand.hbm [shape: f32[8,512], index: 6, kind: output, shape index: {1}]
  %7 = xla_tuple %s5, %s6
  %s8 = sld [smem:[#allocation0]]
  $region57: #{vicreg_forward.1} parent=0
    _
  %s10 = ssub.s32 1, %s8
  %s11 = scalar_select 0, %s10, %s8
  $region1: #{vicreg_forward.1} parent=0
    #allocation5 [shape = 'u8[16384]{0}', space=vmem, size = 0x4000, scoped, tag = 'input window, operand 2, single buffered']
    #allocation6 [shape = 's32[1]{0}', space=sflag, size = 0x4, scoped, tag = 'scoped memory for vicreg_forward.1']
    #allocation7 [shape = 's32[1]{0}', space=sflag, size = 0x4, scoped, tag = 'scoped memory for vicreg_forward.1']
    #allocation8 [shape = 'u8[524288]{0}', space=vmem, size = 0x80000, scoped, tag = 'output window, operand 0, single buffered']
    #allocation9 [shape = 'u8[16384]{0}', space=vmem, size = 0x4000, scoped, tag = 'output window, operand 1, single buffered']
    #allocation10 [shape = 's32[1]{0}', space=sflag, size = 0x4, scoped, tag = 'scoped memory for vicreg_forward.1']
    %12 = vsyncpa [#allocation6], 0
    %13 = vsyncpa [#allocation7], 0
    %14 = vsyncpa [#allocation10], 0
    // Predicated region
    $region2: #{vicreg_forward.1} parent=1 // pred_check
      _
    $region3: #{vicreg_forward.1} parent=1 // pred_check_branch
      %16 = sbr.rel (0) target = $region5
    $region4: #{vicreg_forward.1} parent=1 // pred_region
      _
    $region5: #{vicreg_forward.1} parent=1 // pred_fallthru
      _
    // Predicated region
    $region6: #{vicreg_forward.1} parent=1 // pred_check
      _
    $region7: #{vicreg_forward.1} parent=1 // pred_check_branch
      %18 = sbr.rel (0) target = $region9
    $region8: #{vicreg_forward.1} parent=1 // pred_region
      _
    $region9: #{vicreg_forward.1} parent=1 // pred_fallthru
      _
    // Predicated region
    $region10: #{vicreg_forward.1} parent=1 // pred_check
      _
    $region11: #{vicreg_forward.1} parent=1 // pred_check_branch
      %20 = sbr.rel (0) target = $region13
    $region12: #{vicreg_forward.1} parent=1 // pred_region
      %22 = vsyncadd [#allocation6], 0
      %s24 = sshll.u32 %s2, 4
      %s25 = int_to_ptr.hbm [resolvable:$true] %s24
      %s26 = sshll.u32 [#allocation5], 4
      %s27 = int_to_ptr.vmem [resolvable:$true] %s26
      %29 = dma.hbm_to_vmem [thread:$0]  %s25, 512, %s27, [#allocation6]
    $region13: #{vicreg_forward.1} parent=1 // pred_fallthru
      _
    // Predicated region
    $region14: #{vicreg_forward.1} parent=1 // pred_check
      _
    $region15: #{vicreg_forward.1} parent=1 // pred_check_branch
      %31 = sbr.rel (0) target = $region17
    $region16: #{vicreg_forward.1} parent=1 // pred_region
      %33 = dma.done [#allocation6], 512
    $region17: #{vicreg_forward.1} parent=1 // pred_fallthru
      _
    // Predicated region
    $region18: #{vicreg_forward.1} parent=1 // pred_check
      _
    $region19: #{vicreg_forward.1} parent=1 // pred_check_branch
      %36 = sbr.rel (0) target = $region21
    $region20: #{vicreg_forward.1} parent=1 // pred_region
      loop: start=0, step=1, limit=1
      $region22: #{vicreg_forward.1} parent=20 // loop_pre_header
        _
      $region23: #{vicreg_forward.1} parent=20 // loop_header
        %s38 = sphi 0, %s42
        %p39 = scmp.ge.s32.totalorder %s38, 1
        %s43 = sphi %s3, %s3
        %s44 = sphi [#allocation2], [#allocation2]
      $region24: #{vicreg_forward.1} parent=20 // loop_header_branch
        %41 = sbr.rel (%p39) target = $region28
      $region25: #{vicreg_forward.1} parent=20 // loop_body
        %v45 = vld [vmem:[%s43] sm:$0xff]
        %46 = vst [vmem:[%s44] sm:$0xff] %v45
        %v47 = vld [vmem:[%s43 + $0x8] sm:$0xff]
        %48 = vst [vmem:[%s44 + $0x8] sm:$0xff] %v47
        %v49 = vld [vmem:[%s43 + $0x10] sm:$0xff]
        %50 = vst [vmem:[%s44 + $0x10] sm:$0xff] %v49
        %v51 = vld [vmem:[%s43 + $0x18] sm:$0xff]
        %52 = vst [vmem:[%s44 + $0x18] sm:$0xff] %v51
        %v53 = vld [vmem:[%s43 + $0x20] sm:$0xff]
        %54 = vst [vmem:[%s44 + $0x20] sm:$0xff] %v53
        %v55 = vld [vmem:[%s43 + $0x28] sm:$0xff]
        %56 = vst [vmem:[%s44 + $0x28] sm:$0xff] %v55
        %v57 = vld [vmem:[%s43 + $0x30] sm:$0xff]
        %58 = vst [vmem:[%s44 + $0x30] sm:$0xff] %v57
        %v59 = vld [vmem:[%s43 + $0x38] sm:$0xff]
        %60 = vst [vmem:[%s44 + $0x38] sm:$0xff] %v59
        %v61 = vld [vmem:[%s43 + $0x40] sm:$0xff]
        %62 = vst [vmem:[%s44 + $0x40] sm:$0xff] %v61
        %v63 = vld [vmem:[%s43 + $0x48] sm:$0xff]
        %64 = vst [vmem:[%s44 + $0x48] sm:$0xff] %v63
        %v65 = vld [vmem:[%s43 + $0x50] sm:$0xff]
        %66 = vst [vmem:[%s44 + $0x50] sm:$0xff] %v65
        %v67 = vld [vmem:[%s43 + $0x58] sm:$0xff]
        %68 = vst [vmem:[%s44 + $0x58] sm:$0xff] %v67
        %v69 = vld [vmem:[%s43 + $0x60] sm:$0xff]
        %70 = vst [vmem:[%s44 + $0x60] sm:$0xff] %v69
        %v71 = vld [vmem:[%s43 + $0x68] sm:$0xff]
        %72 = vst [vmem:[%s44 + $0x68] sm:$0xff] %v71
        %v73 = vld [vmem:[%s43 + $0x70] sm:$0xff]
        %74 = vst [vmem:[%s44 + $0x70] sm:$0xff] %v73
        %v75 = vld [vmem:[%s43 + $0x78] sm:$0xff]
        %76 = vst [vmem:[%s44 + $0x78] sm:$0xff] %v75
        %v77 = vld [vmem:[%s43 + $0x80] sm:$0xff]
        %78 = vst [vmem:[%s44 + $0x80] sm:$0xff] %v77
        %v79 = vld [vmem:[%s43 + $0x88] sm:$0xff]
        %80 = vst [vmem:[%s44 + $0x88] sm:$0xff] %v79
        %v81 = vld [vmem:[%s43 + $0x90] sm:$0xff]
        %82 = vst [vmem:[%s44 + $0x90] sm:$0xff] %v81
        %v83 = vld [vmem:[%s43 + $0x98] sm:$0xff]
        %84 = vst [vmem:[%s44 + $0x98] sm:$0xff] %v83
        %v85 = vld [vmem:[%s43 + $0xa0] sm:$0xff]
        %86 = vst [vmem:[%s44 + $0xa0] sm:$0xff] %v85
        %v87 = vld [vmem:[%s43 + $0xa8] sm:$0xff]
        %88 = vst [vmem:[%s44 + $0xa8] sm:$0xff] %v87
        %v89 = vld [vmem:[%s43 + $0xb0] sm:$0xff]
        %90 = vst [vmem:[%s44 + $0xb0] sm:$0xff] %v89
        %v91 = vld [vmem:[%s43 + $0xb8] sm:$0xff]
        %92 = vst [vmem:[%s44 + $0xb8] sm:$0xff] %v91
        %v93 = vld [vmem:[%s43 + $0xc0] sm:$0xff]
        %94 = vst [vmem:[%s44 + $0xc0] sm:$0xff] %v93
        %v95 = vld [vmem:[%s43 + $0xc8] sm:$0xff]
        %96 = vst [vmem:[%s44 + $0xc8] sm:$0xff] %v95
        %v97 = vld [vmem:[%s43 + $0xd0] sm:$0xff]
        %98 = vst [vmem:[%s44 + $0xd0] sm:$0xff] %v97
        %v99 = vld [vmem:[%s43 + $0xd8] sm:$0xff]
        %100 = vst [vmem:[%s44 + $0xd8] sm:$0xff] %v99
        %v101 = vld [vmem:[%s43 + $0xe0] sm:$0xff]
        %102 = vst [vmem:[%s44 + $0xe0] sm:$0xff] %v101
        %v103 = vld [vmem:[%s43 + $0xe8] sm:$0xff]
        %104 = vst [vmem:[%s44 + $0xe8] sm:$0xff] %v103
        %v105 = vld [vmem:[%s43 + $0xf0] sm:$0xff]
        %106 = vst [vmem:[%s44 + $0xf0] sm:$0xff] %v105
        %v107 = vld [vmem:[%s43 + $0xf8] sm:$0xff]
        %108 = vst [vmem:[%s44 + $0xf8] sm:$0xff] %v107
        %v109 = vld [vmem:[%s43 + $0x100] sm:$0xff]
        %110 = vst [vmem:[%s44 + $0x100] sm:$0xff] %v109
        %v111 = vld [vmem:[%s43 + $0x108] sm:$0xff]
        %112 = vst [vmem:[%s44 + $0x108] sm:$0xff] %v111
        %v113 = vld [vmem:[%s43 + $0x110] sm:$0xff]
        %114 = vst [vmem:[%s44 + $0x110] sm:$0xff] %v113
        %v115 = vld [vmem:[%s43 + $0x118] sm:$0xff]
        %116 = vst [vmem:[%s44 + $0x118] sm:$0xff] %v115
        %v117 = vld [vmem:[%s43 + $0x120] sm:$0xff]
        %118 = vst [vmem:[%s44 + $0x120] sm:$0xff] %v117
        %v119 = vld [vmem:[%s43 + $0x128] sm:$0xff]
        %120 = vst [vmem:[%s44 + $0x128] sm:$0xff] %v119
        %v121 = vld [vmem:[%s43 + $0x130] sm:$0xff]
        %122 = vst [vmem:[%s44 + $0x130] sm:$0xff] %v121
        %v123 = vld [vmem:[%s43 + $0x138] sm:$0xff]
        %124 = vst [vmem:[%s44 + $0x138] sm:$0xff] %v123
        %v125 = vld [vmem:[%s43 + $0x140] sm:$0xff]
        %126 = vst [vmem:[%s44 + $0x140] sm:$0xff] %v125
        %v127 = vld [vmem:[%s43 + $0x148] sm:$0xff]
        %128 = vst [vmem:[%s44 + $0x148] sm:$0xff] %v127
        %v129 = vld [vmem:[%s43 + $0x150] sm:$0xff]
        %130 = vst [vmem:[%s44 + $0x150] sm:$0xff] %v129
        %v131 = vld [vmem:[%s43 + $0x158] sm:$0xff]
        %132 = vst [vmem:[%s44 + $0x158] sm:$0xff] %v131
        %v133 = vld [vmem:[%s43 + $0x160] sm:$0xff]
        %134 = vst [vmem:[%s44 + $0x160] sm:$0xff] %v133
        %v135 = vld [vmem:[%s43 + $0x168] sm:$0xff]
        %136 = vst [vmem:[%s44 + $0x168] sm:$0xff] %v135
        %v137 = vld [vmem:[%s43 + $0x170] sm:$0xff]
        %138 = vst [vmem:[%s44 + $0x170] sm:$0xff] %v137
        %v139 = vld [vmem:[%s43 + $0x178] sm:$0xff]
        %140 = vst [vmem:[%s44 + $0x178] sm:$0xff] %v139
        %v141 = vld [vmem:[%s43 + $0x180] sm:$0xff]
        %142 = vst [vmem:[%s44 + $0x180] sm:$0xff] %v141
        %v143 = vld [vmem:[%s43 + $0x188] sm:$0xff]
        %144 = vst [vmem:[%s44 + $0x188] sm:$0xff] %v143
        %v145 = vld [vmem:[%s43 + $0x190] sm:$0xff]
        %146 = vst [vmem:[%s44 + $0x190] sm:$0xff] %v145
        %v147 = vld [vmem:[%s43 + $0x198] sm:$0xff]
        %148 = vst [vmem:[%s44 + $0x198] sm:$0xff] %v147
        %v149 = vld [vmem:[%s43 + $0x1a0] sm:$0xff]
        %150 = vst [vmem:[%s44 + $0x1a0] sm:$0xff] %v149
        %v151 = vld [vmem:[%s43 + $0x1a8] sm:$0xff]
        %152 = vst [vmem:[%s44 + $0x1a8] sm:$0xff] %v151
        %v153 = vld [vmem:[%s43 + $0x1b0] sm:$0xff]
        %154 = vst [vmem:[%s44 + $0x1b0] sm:$0xff] %v153
        %v155 = vld [vmem:[%s43 + $0x1b8] sm:$0xff]
        %156 = vst [vmem:[%s44 + $0x1b8] sm:$0xff] %v155
        %v157 = vld [vmem:[%s43 + $0x1c0] sm:$0xff]
        %158 = vst [vmem:[%s44 + $0x1c0] sm:$0xff] %v157
        %v159 = vld [vmem:[%s43 + $0x1c8] sm:$0xff]
        %160 = vst [vmem:[%s44 + $0x1c8] sm:$0xff] %v159
        %v161 = vld [vmem:[%s43 + $0x1d0] sm:$0xff]
        %162 = vst [vmem:[%s44 + $0x1d0] sm:$0xff] %v161
        %v163 = vld [vmem:[%s43 + $0x1d8] sm:$0xff]
        %164 = vst [vmem:[%s44 + $0x1d8] sm:$0xff] %v163
        %v165 = vld [vmem:[%s43 + $0x1e0] sm:$0xff]
        %166 = vst [vmem:[%s44 + $0x1e0] sm:$0xff] %v165
        %v167 = vld [vmem:[%s43 + $0x1e8] sm:$0xff]
        %168 = vst [vmem:[%s44 + $0x1e8] sm:$0xff] %v167
        %v169 = vld [vmem:[%s43 + $0x1f0] sm:$0xff]
        %170 = vst [vmem:[%s44 + $0x1f0] sm:$0xff] %v169
        %v171 = vld [vmem:[%s43 + $0x1f8] sm:$0xff]
        %172 = vst [vmem:[%s44 + $0x1f8] sm:$0xff] %v171
        %v173 = vld [vmem:[%s43 + $0x200] sm:$0xff]
        %174 = vst [vmem:[%s44 + $0x200] sm:$0xff] %v173
        %v175 = vld [vmem:[%s43 + $0x208] sm:$0xff]
        %176 = vst [vmem:[%s44 + $0x208] sm:$0xff] %v175
        %v177 = vld [vmem:[%s43 + $0x210] sm:$0xff]
        %178 = vst [vmem:[%s44 + $0x210] sm:$0xff] %v177
        %v179 = vld [vmem:[%s43 + $0x218] sm:$0xff]
        %180 = vst [vmem:[%s44 + $0x218] sm:$0xff] %v179
        %v181 = vld [vmem:[%s43 + $0x220] sm:$0xff]
        %182 = vst [vmem:[%s44 + $0x220] sm:$0xff] %v181
        %v183 = vld [vmem:[%s43 + $0x228] sm:$0xff]
        %184 = vst [vmem:[%s44 + $0x228] sm:$0xff] %v183
        %v185 = vld [vmem:[%s43 + $0x230] sm:$0xff]
        %186 = vst [vmem:[%s44 + $0x230] sm:$0xff] %v185
        %v187 = vld [vmem:[%s43 + $0x238] sm:$0xff]
        %188 = vst [vmem:[%s44 + $0x238] sm:$0xff] %v187
        %v189 = vld [vmem:[%s43 + $0x240] sm:$0xff]
        %190 = vst [vmem:[%s44 + $0x240] sm:$0xff] %v189
        %v191 = vld [vmem:[%s43 + $0x248] sm:$0xff]
        %192 = vst [vmem:[%s44 + $0x248] sm:$0xff] %v191
        %v193 = vld [vmem:[%s43 + $0x250] sm:$0xff]
        %194 = vst [vmem:[%s44 + $0x250] sm:$0xff] %v193
        %v195 = vld [vmem:[%s43 + $0x258] sm:$0xff]
        %196 = vst [vmem:[%s44 + $0x258] sm:$0xff] %v195
        %v197 = vld [vmem:[%s43 + $0x260] sm:$0xff]
        %198 = vst [vmem:[%s44 + $0x260] sm:$0xff] %v197
        %v199 = vld [vmem:[%s43 + $0x268] sm:$0xff]
        %200 = vst [vmem:[%s44 + $0x268] sm:$0xff] %v199
        %v201 = vld [vmem:[%s43 + $0x270] sm:$0xff]
        %202 = vst [vmem:[%s44 + $0x270] sm:$0xff] %v201
        %v203 = vld [vmem:[%s43 + $0x278] sm:$0xff]
        %204 = vst [vmem:[%s44 + $0x278] sm:$0xff] %v203
        %v205 = vld [vmem:[%s43 + $0x280] sm:$0xff]
        %206 = vst [vmem:[%s44 + $0x280] sm:$0xff] %v205
        %v207 = vld [vmem:[%s43 + $0x288] sm:$0xff]
        %208 = vst [vmem:[%s44 + $0x288] sm:$0xff] %v207
        %v209 = vld [vmem:[%s43 + $0x290] sm:$0xff]
        %210 = vst [vmem:[%s44 + $0x290] sm:$0xff] %v209
        %v211 = vld [vmem:[%s43 + $0x298] sm:$0xff]
        %212 = vst [vmem:[%s44 + $0x298] sm:$0xff] %v211
        %v213 = vld [vmem:[%s43 + $0x2a0] sm:$0xff]
        %214 = vst [vmem:[%s44 + $0x2a0] sm:$0xff] %v213
        %v215 = vld [vmem:[%s43 + $0x2a8] sm:$0xff]
        %216 = vst [vmem:[%s44 + $0x2a8] sm:$0xff] %v215
        %v217 = vld [vmem:[%s43 + $0x2b0] sm:$0xff]
        %218 = vst [vmem:[%s44 + $0x2b0] sm:$0xff] %v217
        %v219 = vld [vmem:[%s43 + $0x2b8] sm:$0xff]
        %220 = vst [vmem:[%s44 + $0x2b8] sm:$0xff] %v219
        %v221 = vld [vmem:[%s43 + $0x2c0] sm:$0xff]
        %222 = vst [vmem:[%s44 + $0x2c0] sm:$0xff] %v221
        %v223 = vld [vmem:[%s43 + $0x2c8] sm:$0xff]
        %224 = vst [vmem:[%s44 + $0x2c8] sm:$0xff] %v223
        %v225 = vld [vmem:[%s43 + $0x2d0] sm:$0xff]
        %226 = vst [vmem:[%s44 + $0x2d0] sm:$0xff] %v225
        %v227 = vld [vmem:[%s43 + $0x2d8] sm:$0xff]
        %228 = vst [vmem:[%s44 + $0x2d8] sm:$0xff] %v227
        %v229 = vld [vmem:[%s43 + $0x2e0] sm:$0xff]
        %230 = vst [vmem:[%s44 + $0x2e0] sm:$0xff] %v229
        %v231 = vld [vmem:[%s43 + $0x2e8] sm:$0xff]
        %232 = vst [vmem:[%s44 + $0x2e8] sm:$0xff] %v231
        %v233 = vld [vmem:[%s43 + $0x2f0] sm:$0xff]
        %234 = vst [vmem:[%s44 + $0x2f0] sm:$0xff] %v233
        %v235 = vld [vmem:[%s43 + $0x2f8] sm:$0xff]
        %236 = vst [vmem:[%s44 + $0x2f8] sm:$0xff] %v235
        %v237 = vld [vmem:[%s43 + $0x300] sm:$0xff]
        %238 = vst [vmem:[%s44 + $0x300] sm:$0xff] %v237
        %v239 = vld [vmem:[%s43 + $0x308] sm:$0xff]
        %240 = vst [vmem:[%s44 + $0x308] sm:$0xff] %v239
        %v241 = vld [vmem:[%s43 + $0x310] sm:$0xff]
        %242 = vst [vmem:[%s44 + $0x310] sm:$0xff] %v241
        %v243 = vld [vmem:[%s43 + $0x318] sm:$0xff]
        %244 = vst [vmem:[%s44 + $0x318] sm:$0xff] %v243
        %v245 = vld [vmem:[%s43 + $0x320] sm:$0xff]
        %246 = vst [vmem:[%s44 + $0x320] sm:$0xff] %v245
        %v247 = vld [vmem:[%s43 + $0x328] sm:$0xff]
        %248 = vst [vmem:[%s44 + $0x328] sm:$0xff] %v247
        %v249 = vld [vmem:[%s43 + $0x330] sm:$0xff]
        %250 = vst [vmem:[%s44 + $0x330] sm:$0xff] %v249
        %v251 = vld [vmem:[%s43 + $0x338] sm:$0xff]
        %252 = vst [vmem:[%s44 + $0x338] sm:$0xff] %v251
        %v253 = vld [vmem:[%s43 + $0x340] sm:$0xff]
        %254 = vst [vmem:[%s44 + $0x340] sm:$0xff] %v253
        %v255 = vld [vmem:[%s43 + $0x348] sm:$0xff]
        %256 = vst [vmem:[%s44 + $0x348] sm:$0xff] %v255
        %v257 = vld [vmem:[%s43 + $0x350] sm:$0xff]
        %258 = vst [vmem:[%s44 + $0x350] sm:$0xff] %v257
        %v259 = vld [vmem:[%s43 + $0x358] sm:$0xff]
        %260 = vst [vmem:[%s44 + $0x358] sm:$0xff] %v259
        %v261 = vld [vmem:[%s43 + $0x360] sm:$0xff]
        %262 = vst [vmem:[%s44 + $0x360] sm:$0xff] %v261
        %v263 = vld [vmem:[%s43 + $0x368] sm:$0xff]
        %264 = vst [vmem:[%s44 + $0x368] sm:$0xff] %v263
        %v265 = vld [vmem:[%s43 + $0x370] sm:$0xff]
        %266 = vst [vmem:[%s44 + $0x370] sm:$0xff] %v265
        %v267 = vld [vmem:[%s43 + $0x378] sm:$0xff]
        %268 = vst [vmem:[%s44 + $0x378] sm:$0xff] %v267
        %v269 = vld [vmem:[%s43 + $0x380] sm:$0xff]
        %270 = vst [vmem:[%s44 + $0x380] sm:$0xff] %v269
        %v271 = vld [vmem:[%s43 + $0x388] sm:$0xff]
        %272 = vst [vmem:[%s44 + $0x388] sm:$0xff] %v271
        %v273 = vld [vmem:[%s43 + $0x390] sm:$0xff]
        %274 = vst [vmem:[%s44 + $0x390] sm:$0xff] %v273
        %v275 = vld [vmem:[%s43 + $0x398] sm:$0xff]
        %276 = vst [vmem:[%s44 + $0x398] sm:$0xff] %v275
        %v277 = vld [vmem:[%s43 + $0x3a0] sm:$0xff]
        %278 = vst [vmem:[%s44 + $0x3a0] sm:$0xff] %v277
        %v279 = vld [vmem:[%s43 + $0x3a8] sm:$0xff]
        %280 = vst [vmem:[%s44 + $0x3a8] sm:$0xff] %v279
        %v281 = vld [vmem:[%s43 + $0x3b0] sm:$0xff]
        %282 = vst [vmem:[%s44 + $0x3b0] sm:$0xff] %v281
        %v283 = vld [vmem:[%s43 + $0x3b8] sm:$0xff]
        %284 = vst [vmem:[%s44 + $0x3b8] sm:$0xff] %v283
        %v285 = vld [vmem:[%s43 + $0x3c0] sm:$0xff]
        %286 = vst [vmem:[%s44 + $0x3c0] sm:$0xff] %v285
        %v287 = vld [vmem:[%s43 + $0x3c8] sm:$0xff]
        %288 = vst [vmem:[%s44 + $0x3c8] sm:$0xff] %v287
        %v289 = vld [vmem:[%s43 + $0x3d0] sm:$0xff]
        %290 = vst [vmem:[%s44 + $0x3d0] sm:$0xff] %v289
        %v291 = vld [vmem:[%s43 + $0x3d8] sm:$0xff]
        %292 = vst [vmem:[%s44 + $0x3d8] sm:$0xff] %v291
        %v293 = vld [vmem:[%s43 + $0x3e0] sm:$0xff]
        %294 = vst [vmem:[%s44 + $0x3e0] sm:$0xff] %v293
        %v295 = vld [vmem:[%s43 + $0x3e8] sm:$0xff]
        %296 = vst [vmem:[%s44 + $0x3e8] sm:$0xff] %v295
        %v297 = vld [vmem:[%s43 + $0x3f0] sm:$0xff]
        %298 = vst [vmem:[%s44 + $0x3f0] sm:$0xff] %v297
        %v299 = vld [vmem:[%s43 + $0x3f8] sm:$0xff]
        %300 = vst [vmem:[%s44 + $0x3f8] sm:$0xff] %v299
      $region26: #{vicreg_forward.1} parent=20 // loop_footer
        %s42 = sadd.s32 1, %s38
      $region27: #{vicreg_forward.1} parent=20 // loop_footer_branch
        %37 = sbr.rel target = $region23
      $region28: #{vicreg_forward.1} parent=20 // loop_exit
        _
    $region21: #{vicreg_forward.1} parent=1 // pred_fallthru
      _
    // Predicated region
    $region29: #{vicreg_forward.1} parent=1 // pred_check
      _
    $region30: #{vicreg_forward.1} parent=1 // pred_check_branch
      %302 = sbr.rel target = $region32
    $region31: #{vicreg_forward.1} parent=1 // pred_region
      _
    $region32: #{vicreg_forward.1} parent=1 // pred_fallthru
      _
    // Predicated region
    $region33: #{vicreg_forward.1} parent=1 // pred_check
      _
    $region34: #{vicreg_forward.1} parent=1 // pred_check_branch
      %305 = sbr.rel (0) target = $region36
    $region35: #{vicreg_forward.1} parent=1 // pred_region
      %306 = vsyncadd [#allocation4], 16384
    $region36: #{vicreg_forward.1} parent=1 // pred_fallthru
      _
    %s307 = scalar_lea.sflag [#allocation4], 1
    // Predicated region
    $region37: #{vicreg_forward.1} parent=1 // pred_check
      _
    $region38: #{vicreg_forward.1} parent=1 // pred_check_branch
      %309 = sbr.rel target = $region40
    $region39: #{vicreg_forward.1} parent=1 // pred_region
      %310 = sst [smem:[#allocation14]] [#allocation13]
      %311 = sst [smem:[#allocation15]] [#allocation12]
    $region40: #{vicreg_forward.1} parent=1 // pred_fallthru
      _
    %313 = shalt.err (0)
    %s315 = sshll.u32 %s4, 4
    %s316 = int_to_ptr.hbm [resolvable:$true] %s315
    %s317 = sshll.u32 [#allocation3], 4
    %s318 = int_to_ptr.vmem [resolvable:$true] %s317
    %320 = dma.hbm_to_vmem [thread:$0]  %s316, 16384, %s318, %s307
    %v321 = vld [vmem:[#allocation5] ss:$8 sm:$0xf]
    %s322 = scalar_lea.vmem [#allocation5], 1
    %v323 = vld [vmem:[%s322] ss:$8 sm:$0xf]
    %s324 = scalar_lea.vmem [#allocation5], 2
    %v325 = vld [vmem:[%s324] ss:$8 sm:$0xf]
    %s326 = scalar_lea.vmem [#allocation5], 3
    %v327 = vld [vmem:[%s326] ss:$8 sm:$0xf]
    %s328 = scalar_lea.vmem [#allocation5], 4
    %v329 = vld [vmem:[%s328] ss:$8 sm:$0xf]
    %v330 = vld [vmem:[%s0] sm:$0xff]
    %v331 = vld [vmem:[%s0 + $0x8] sm:$0xff]
    %v332 = vld [vmem:[%s0 + $0x10] sm:$0xff]
    %v333 = vld [vmem:[%s0 + $0x18] sm:$0xff]
    %v334 = vld [vmem:[%s0 + $0x20] sm:$0xff]
    %v335 = vld [vmem:[%s0 + $0x28] sm:$0xff]
    %v336 = vld [vmem:[%s0 + $0x30] sm:$0xff]
    %v337 = vld [vmem:[%s0 + $0x38] sm:$0xff]
    %v338 = vld [vmem:[%s0 + $0x40] sm:$0xff]
    %v339 = vld [vmem:[%s0 + $0x48] sm:$0xff]
    %v340 = vld [vmem:[%s0 + $0x50] sm:$0xff]
    %v341 = vld [vmem:[%s0 + $0x58] sm:$0xff]
    %v342 = vld [vmem:[%s0 + $0x60] sm:$0xff]
    %v343 = vld [vmem:[%s0 + $0x68] sm:$0xff]
    %v344 = vld [vmem:[%s0 + $0x70] sm:$0xff]
    %v345 = vld [vmem:[%s0 + $0x78] sm:$0xff]
    %v346 = vld [vmem:[%s0 + $0x80] sm:$0xff]
    %v347 = vld [vmem:[%s0 + $0x88] sm:$0xff]
    %v348 = vld [vmem:[%s0 + $0x90] sm:$0xff]
    %v349 = vld [vmem:[%s0 + $0x98] sm:$0xff]
    %v350 = vld [vmem:[%s0 + $0xa0] sm:$0xff]
    %v351 = vld [vmem:[%s0 + $0xa8] sm:$0xff]
    %v352 = vld [vmem:[%s0 + $0xb0] sm:$0xff]
    %v353 = vld [vmem:[%s0 + $0xb8] sm:$0xff]
    %v354 = vld [vmem:[%s0 + $0xc0] sm:$0xff]
    %v355 = vld [vmem:[%s0 + $0xc8] sm:$0xff]
    %v356 = vld [vmem:[%s0 + $0xd0] sm:$0xff]
    %v357 = vld [vmem:[%s0 + $0xd8] sm:$0xff]
    %v358 = vld [vmem:[%s0 + $0xe0] sm:$0xff]
    %v359 = vld [vmem:[%s0 + $0xe8] sm:$0xff]
    %v360 = vld [vmem:[%s0 + $0xf0] sm:$0xff]
    %v361 = vld [vmem:[%s0 + $0xf8] sm:$0xff]
    %v362 = vld [vmem:[%s0 + $0x100] sm:$0xff]
    %v363 = vld [vmem:[%s0 + $0x108] sm:$0xff]
    %v364 = vld [vmem:[%s0 + $0x110] sm:$0xff]
    %v365 = vld [vmem:[%s0 + $0x118] sm:$0xff]
    %v366 = vld [vmem:[%s0 + $0x120] sm:$0xff]
    %v367 = vld [vmem:[%s0 + $0x128] sm:$0xff]
    %v368 = vld [vmem:[%s0 + $0x130] sm:$0xff]
    %v369 = vld [vmem:[%s0 + $0x138] sm:$0xff]
    %v370 = vld [vmem:[%s0 + $0x140] sm:$0xff]
    %v371 = vld [vmem:[%s0 + $0x148] sm:$0xff]
    %v372 = vld [vmem:[%s0 + $0x150] sm:$0xff]
    %v373 = vld [vmem:[%s0 + $0x158] sm:$0xff]
    %v374 = vld [vmem:[%s0 + $0x160] sm:$0xff]
    %v375 = vld [vmem:[%s0 + $0x168] sm:$0xff]
    %v376 = vld [vmem:[%s0 + $0x170] sm:$0xff]
    %v377 = vld [vmem:[%s0 + $0x178] sm:$0xff]
    %v378 = vld [vmem:[%s0 + $0x180] sm:$0xff]
    %v379 = vld [vmem:[%s0 + $0x188] sm:$0xff]
    %v380 = vld [vmem:[%s0 + $0x190] sm:$0xff]
    %v381 = vld [vmem:[%s0 + $0x198] sm:$0xff]
    %v382 = vld [vmem:[%s0 + $0x1a0] sm:$0xff]
    %v383 = vld [vmem:[%s0 + $0x1a8] sm:$0xff]
    %v384 = vld [vmem:[%s0 + $0x1b0] sm:$0xff]
    %v385 = vld [vmem:[%s0 + $0x1b8] sm:$0xff]
    %v386 = vld [vmem:[%s0 + $0x1c0] sm:$0xff]
    %v387 = vld [vmem:[%s0 + $0x1c8] sm:$0xff]
    %v388 = vld [vmem:[%s0 + $0x1d0] sm:$0xff]
    %v389 = vld [vmem:[%s0 + $0x1d8] sm:$0xff]
    %v390 = vld [vmem:[%s0 + $0x1e0] sm:$0xff]
    %v391 = vld [vmem:[%s0 + $0x1e8] sm:$0xff]
    %v392 = vld [vmem:[%s0 + $0x1f0] sm:$0xff]
    %v393 = vld [vmem:[%s0 + $0x1f8] sm:$0xff]
    %v394 = vld [vmem:[%s0 + $0x200] sm:$0xff]
    %v395 = vld [vmem:[%s0 + $0x208] sm:$0xff]
    %v396 = vld [vmem:[%s0 + $0x210] sm:$0xff]
    %v397 = vld [vmem:[%s0 + $0x218] sm:$0xff]
    %v398 = vld [vmem:[%s0 + $0x220] sm:$0xff]
    %v399 = vld [vmem:[%s0 + $0x228] sm:$0xff]
    %v400 = vld [vmem:[%s0 + $0x230] sm:$0xff]
    %v401 = vld [vmem:[%s0 + $0x238] sm:$0xff]
    %v402 = vld [vmem:[%s0 + $0x240] sm:$0xff]
    %v403 = vld [vmem:[%s0 + $0x248] sm:$0xff]
    %v404 = vld [vmem:[%s0 + $0x250] sm:$0xff]
    %v405 = vld [vmem:[%s0 + $0x258] sm:$0xff]
    %v406 = vld [vmem:[%s0 + $0x260] sm:$0xff]
    %v407 = vld [vmem:[%s0 + $0x268] sm:$0xff]
    %v408 = vld [vmem:[%s0 + $0x270] sm:$0xff]
    %v409 = vld [vmem:[%s0 + $0x278] sm:$0xff]
    %v410 = vld [vmem:[%s0 + $0x280] sm:$0xff]
    %v411 = vld [vmem:[%s0 + $0x288] sm:$0xff]
    %v412 = vld [vmem:[%s0 + $0x290] sm:$0xff]
    %v413 = vld [vmem:[%s0 + $0x298] sm:$0xff]
    %v414 = vld [vmem:[%s0 + $0x2a0] sm:$0xff]
    %v415 = vld [vmem:[%s0 + $0x2a8] sm:$0xff]
    %v416 = vld [vmem:[%s0 + $0x2b0] sm:$0xff]
    %v417 = vld [vmem:[%s0 + $0x2b8] sm:$0xff]
    %v418 = vld [vmem:[%s0 + $0x2c0] sm:$0xff]
    %v419 = vld [vmem:[%s0 + $0x2c8] sm:$0xff]
    %v420 = vld [vmem:[%s0 + $0x2d0] sm:$0xff]
    %v421 = vld [vmem:[%s0 + $0x2d8] sm:$0xff]
    %v422 = vld [vmem:[%s0 + $0x2e0] sm:$0xff]
    %v423 = vld [vmem:[%s0 + $0x2e8] sm:$0xff]
    %v424 = vld [vmem:[%s0 + $0x2f0] sm:$0xff]
    %v425 = vld [vmem:[%s0 + $0x2f8] sm:$0xff]
    %v426 = vld [vmem:[%s0 + $0x300] sm:$0xff]
    %v427 = vld [vmem:[%s0 + $0x308] sm:$0xff]
    %v428 = vld [vmem:[%s0 + $0x310] sm:$0xff]
    %v429 = vld [vmem:[%s0 + $0x318] sm:$0xff]
    %v430 = vld [vmem:[%s0 + $0x320] sm:$0xff]
    %v431 = vld [vmem:[%s0 + $0x328] sm:$0xff]
    %v432 = vld [vmem:[%s0 + $0x330] sm:$0xff]
    %v433 = vld [vmem:[%s0 + $0x338] sm:$0xff]
    %v434 = vld [vmem:[%s0 + $0x340] sm:$0xff]
    %v435 = vld [vmem:[%s0 + $0x348] sm:$0xff]
    %v436 = vld [vmem:[%s0 + $0x350] sm:$0xff]
    %v437 = vld [vmem:[%s0 + $0x358] sm:$0xff]
    %v438 = vld [vmem:[%s0 + $0x360] sm:$0xff]
    %v439 = vld [vmem:[%s0 + $0x368] sm:$0xff]
    %v440 = vld [vmem:[%s0 + $0x370] sm:$0xff]
    %v441 = vld [vmem:[%s0 + $0x378] sm:$0xff]
    %v442 = vld [vmem:[%s0 + $0x380] sm:$0xff]
    %v443 = vld [vmem:[%s0 + $0x388] sm:$0xff]
    %v444 = vld [vmem:[%s0 + $0x390] sm:$0xff]
    %v445 = vld [vmem:[%s0 + $0x398] sm:$0xff]
    %v446 = vld [vmem:[%s0 + $0x3a0] sm:$0xff]
    %v447 = vld [vmem:[%s0 + $0x3a8] sm:$0xff]
    %v448 = vld [vmem:[%s0 + $0x3b0] sm:$0xff]
    %v449 = vld [vmem:[%s0 + $0x3b8] sm:$0xff]
    %v450 = vld [vmem:[%s0 + $0x3c0] sm:$0xff]
    %v451 = vld [vmem:[%s0 + $0x3c8] sm:$0xff]
    %v452 = vld [vmem:[%s0 + $0x3d0] sm:$0xff]
    %v453 = vld [vmem:[%s0 + $0x3d8] sm:$0xff]
    %v454 = vld [vmem:[%s0 + $0x3e0] sm:$0xff]
    %v455 = vld [vmem:[%s0 + $0x3e8] sm:$0xff]
    %v456 = vld [vmem:[%s0 + $0x3f0] sm:$0xff]
    %v457 = vld [vmem:[%s0 + $0x3f8] sm:$0xff]
    %v458 = vpack.c.bf16 %v334, %v330
    %v459 = vpack.c.bf16 %v335, %v331
    %v460 = vpack.c.bf16 %v336, %v332
    %v461 = vpack.c.bf16 %v337, %v333
    %v462 = vpack.c.bf16 %v342, %v338
    %v463 = vpack.c.bf16 %v343, %v339
    %v464 = vpack.c.bf16 %v344, %v340
    %v465 = vpack.c.bf16 %v345, %v341
    %v466 = vpack.c.bf16 %v350, %v346
    %v467 = vpack.c.bf16 %v351, %v347
    %v468 = vpack.c.bf16 %v352, %v348
    %v469 = vpack.c.bf16 %v353, %v349
    %v470 = vpack.c.bf16 %v358, %v354
    %v471 = vpack.c.bf16 %v359, %v355
    %v472 = vpack.c.bf16 %v360, %v356
    %v473 = vpack.c.bf16 %v361, %v357
    %v474 = vpack.c.bf16 %v366, %v362
    %v475 = vpack.c.bf16 %v367, %v363
    %v476 = vpack.c.bf16 %v368, %v364
    %v477 = vpack.c.bf16 %v369, %v365
    %v478 = vpack.c.bf16 %v374, %v370
    %v479 = vpack.c.bf16 %v375, %v371
    %v480 = vpack.c.bf16 %v376, %v372
    %v481 = vpack.c.bf16 %v377, %v373
    %v482 = vpack.c.bf16 %v382, %v378
    %v483 = vpack.c.bf16 %v383, %v379
    %v484 = vpack.c.bf16 %v384, %v380
    %v485 = vpack.c.bf16 %v385, %v381
    %v486 = vpack.c.bf16 %v390, %v386
    %v487 = vpack.c.bf16 %v391, %v387
    %v488 = vpack.c.bf16 %v392, %v388
    %v489 = vpack.c.bf16 %v393, %v389
    %v490 = vpack.c.bf16 %v398, %v394
    %v491 = vpack.c.bf16 %v399, %v395
    %v492 = vpack.c.bf16 %v400, %v396
    %v493 = vpack.c.bf16 %v401, %v397
    %v494 = vpack.c.bf16 %v406, %v402
    %v495 = vpack.c.bf16 %v407, %v403
    %v496 = vpack.c.bf16 %v408, %v404
    %v497 = vpack.c.bf16 %v409, %v405
    %v498 = vpack.c.bf16 %v414, %v410
    %v499 = vpack.c.bf16 %v415, %v411
    %v500 = vpack.c.bf16 %v416, %v412
    %v501 = vpack.c.bf16 %v417, %v413
    %v502 = vpack.c.bf16 %v422, %v418
    %v503 = vpack.c.bf16 %v423, %v419
    %v504 = vpack.c.bf16 %v424, %v420
    %v505 = vpack.c.bf16 %v425, %v421
    %v506 = vpack.c.bf16 %v430, %v426
    %v507 = vpack.c.bf16 %v431, %v427
    %v508 = vpack.c.bf16 %v432, %v428
    %v509 = vpack.c.bf16 %v433, %v429
    %v510 = vpack.c.bf16 %v438, %v434
    %v511 = vpack.c.bf16 %v439, %v435
    %v512 = vpack.c.bf16 %v440, %v436
    %v513 = vpack.c.bf16 %v441, %v437
    %v514 = vpack.c.bf16 %v446, %v442
    %v515 = vpack.c.bf16 %v447, %v443
    %v516 = vpack.c.bf16 %v448, %v444
    %v517 = vpack.c.bf16 %v449, %v445
    %v518 = vpack.c.bf16 %v454, %v450
    %v519 = vpack.c.bf16 %v455, %v451
    %v520 = vpack.c.bf16 %v456, %v452
    %v521 = vpack.c.bf16 %v457, %v453
    %v522 = vld [vmem:[%s1] sm:$0xff]
    %v523 = vld [vmem:[%s1 + $0x8] sm:$0xff]
    %v524 = vld [vmem:[%s1 + $0x10] sm:$0xff]
    %v525 = vld [vmem:[%s1 + $0x18] sm:$0xff]
    %v526 = vld [vmem:[%s1 + $0x20] sm:$0xff]
    %v527 = vld [vmem:[%s1 + $0x28] sm:$0xff]
    %v528 = vld [vmem:[%s1 + $0x30] sm:$0xff]
    %v529 = vld [vmem:[%s1 + $0x38] sm:$0xff]
    %v530 = vld [vmem:[%s1 + $0x40] sm:$0xff]
    %v531 = vld [vmem:[%s1 + $0x48] sm:$0xff]
    %v532 = vld [vmem:[%s1 + $0x50] sm:$0xff]
    %v533 = vld [vmem:[%s1 + $0x58] sm:$0xff]
    %v534 = vld [vmem:[%s1 + $0x60] sm:$0xff]
    %v535 = vld [vmem:[%s1 + $0x68] sm:$0xff]
    %v536 = vld [vmem:[%s1 + $0x70] sm:$0xff]
    %v537 = vld [vmem:[%s1 + $0x78] sm:$0xff]
    %v538 = vld [vmem:[%s1 + $0x80] sm:$0xff]
    %v539 = vld [vmem:[%s1 + $0x88] sm:$0xff]
    %v540 = vld [vmem:[%s1 + $0x90] sm:$0xff]
    %v541 = vld [vmem:[%s1 + $0x98] sm:$0xff]
    %v542 = vld [vmem:[%s1 + $0xa0] sm:$0xff]
    %v543 = vld [vmem:[%s1 + $0xa8] sm:$0xff]
    %v544 = vld [vmem:[%s1 + $0xb0] sm:$0xff]
    %v545 = vld [vmem:[%s1 + $0xb8] sm:$0xff]
    %v546 = vld [vmem:[%s1 + $0xc0] sm:$0xff]
    %v547 = vld [vmem:[%s1 + $0xc8] sm:$0xff]
    %v548 = vld [vmem:[%s1 + $0xd0] sm:$0xff]
    %v549 = vld [vmem:[%s1 + $0xd8] sm:$0xff]
    %v550 = vld [vmem:[%s1 + $0xe0] sm:$0xff]
    %v551 = vld [vmem:[%s1 + $0xe8] sm:$0xff]
    %v552 = vld [vmem:[%s1 + $0xf0] sm:$0xff]
    %v553 = vld [vmem:[%s1 + $0xf8] sm:$0xff]
    %v554 = vld [vmem:[%s1 + $0x100] sm:$0xff]
    %v555 = vld [vmem:[%s1 + $0x108] sm:$0xff]
    %v556 = vld [vmem:[%s1 + $0x110] sm:$0xff]
    %v557 = vld [vmem:[%s1 + $0x118] sm:$0xff]
    %v558 = vld [vmem:[%s1 + $0x120] sm:$0xff]
    %v559 = vld [vmem:[%s1 + $0x128] sm:$0xff]
    %v560 = vld [vmem:[%s1 + $0x130] sm:$0xff]
    %v561 = vld [vmem:[%s1 + $0x138] sm:$0xff]
    %v562 = vld [vmem:[%s1 + $0x140] sm:$0xff]
    %v563 = vld [vmem:[%s1 + $0x148] sm:$0xff]
    %v564 = vld [vmem:[%s1 + $0x150] sm:$0xff]
    %v565 = vld [vmem:[%s1 + $0x158] sm:$0xff]
    %v566 = vld [vmem:[%s1 + $0x160] sm:$0xff]
    %v567 = vld [vmem:[%s1 + $0x168] sm:$0xff]
    %v568 = vld [vmem:[%s1 + $0x170] sm:$0xff]
    %v569 = vld [vmem:[%s1 + $0x178] sm:$0xff]
    %v570 = vld [vmem:[%s1 + $0x180] sm:$0xff]
    %v571 = vld [vmem:[%s1 + $0x188] sm:$0xff]
    %v572 = vld [vmem:[%s1 + $0x190] sm:$0xff]
    %v573 = vld [vmem:[%s1 + $0x198] sm:$0xff]
    %v574 = vld [vmem:[%s1 + $0x1a0] sm:$0xff]
    %v575 = vld [vmem:[%s1 + $0x1a8] sm:$0xff]
    %v576 = vld [vmem:[%s1 + $0x1b0] sm:$0xff]
    %v577 = vld [vmem:[%s1 + $0x1b8] sm:$0xff]
    %v578 = vld [vmem:[%s1 + $0x1c0] sm:$0xff]
    %v579 = vld [vmem:[%s1 + $0x1c8] sm:$0xff]
    %v580 = vld [vmem:[%s1 + $0x1d0] sm:$0xff]
    %v581 = vld [vmem:[%s1 + $0x1d8] sm:$0xff]
    %v582 = vld [vmem:[%s1 + $0x1e0] sm:$0xff]
    %v583 = vld [vmem:[%s1 + $0x1e8] sm:$0xff]
    %v584 = vld [vmem:[%s1 + $0x1f0] sm:$0xff]
    %v585 = vld [vmem:[%s1 + $0x1f8] sm:$0xff]
    %v586 = vld [vmem:[%s1 + $0x200] sm:$0xff]
    %v587 = vld [vmem:[%s1 + $0x208] sm:$0xff]
    %v588 = vld [vmem:[%s1 + $0x210] sm:$0xff]
    %v589 = vld [vmem:[%s1 + $0x218] sm:$0xff]
    %v590 = vld [vmem:[%s1 + $0x220] sm:$0xff]
    %v591 = vld [vmem:[%s1 + $0x228] sm:$0xff]
    %v592 = vld [vmem:[%s1 + $0x230] sm:$0xff]
    %v593 = vld [vmem:[%s1 + $0x238] sm:$0xff]
    %v594 = vld [vmem:[%s1 + $0x240] sm:$0xff]
    %v595 = vld [vmem:[%s1 + $0x248] sm:$0xff]
    %v596 = vld [vmem:[%s1 + $0x250] sm:$0xff]
    %v597 = vld [vmem:[%s1 + $0x258] sm:$0xff]
    %v598 = vld [vmem:[%s1 + $0x260] sm:$0xff]
    %v599 = vld [vmem:[%s1 + $0x268] sm:$0xff]
    %v600 = vld [vmem:[%s1 + $0x270] sm:$0xff]
    %v601 = vld [vmem:[%s1 + $0x278] sm:$0xff]
    %v602 = vld [vmem:[%s1 + $0x280] sm:$0xff]
    %v603 = vld [vmem:[%s1 + $0x288] sm:$0xff]
    %v604 = vld [vmem:[%s1 + $0x290] sm:$0xff]
    %v605 = vld [vmem:[%s1 + $0x298] sm:$0xff]
    %v606 = vld [vmem:[%s1 + $0x2a0] sm:$0xff]
    %v607 = vld [vmem:[%s1 + $0x2a8] sm:$0xff]
    %v608 = vld [vmem:[%s1 + $0x2b0] sm:$0xff]
    %v609 = vld [vmem:[%s1 + $0x2b8] sm:$0xff]
    %v610 = vld [vmem:[%s1 + $0x2c0] sm:$0xff]
    %v611 = vld [vmem:[%s1 + $0x2c8] sm:$0xff]
    %v612 = vld [vmem:[%s1 + $0x2d0] sm:$0xff]
    %v613 = vld [vmem:[%s1 + $0x2d8] sm:$0xff]
    %v614 = vld [vmem:[%s1 + $0x2e0] sm:$0xff]
    %v615 = vld [vmem:[%s1 + $0x2e8] sm:$0xff]
    %v616 = vld [vmem:[%s1 + $0x2f0] sm:$0xff]
    %v617 = vld [vmem:[%s1 + $0x2f8] sm:$0xff]
    %v618 = vld [vmem:[%s1 + $0x300] sm:$0xff]
    %v619 = vld [vmem:[%s1 + $0x308] sm:$0xff]
    %v620 = vld [vmem:[%s1 + $0x310] sm:$0xff]
    %v621 = vld [vmem:[%s1 + $0x318] sm:$0xff]
    %v722 = vunpack.c.l.b16 %v522
    %v723 = vunpack.c.h.b16 %v522
    %v724 = vunpack.c.l.b16 %v523
    %v725 = vunpack.c.h.b16 %v523
    %v726 = vunpack.c.l.b16 %v524
    %v727 = vunpack.c.h.b16 %v524
    %v728 = vunpack.c.l.b16 %v525
    %v729 = vunpack.c.h.b16 %v525
    %v730 = vunpack.c.l.b16 %v526
    %v731 = vunpack.c.h.b16 %v526
    %v732 = vunpack.c.l.b16 %v527
    %v733 = vunpack.c.h.b16 %v527
    %v734 = vunpack.c.l.b16 %v528
    %v735 = vunpack.c.h.b16 %v528
    %v736 = vunpack.c.l.b16 %v529
    %v737 = vunpack.c.h.b16 %v529
    %v738 = vunpack.c.l.b16 %v530
    %v739 = vunpack.c.h.b16 %v530
    %v740 = vunpack.c.l.b16 %v531
    %v741 = vunpack.c.h.b16 %v531
    %v742 = vunpack.c.l.b16 %v532
    %v743 = vunpack.c.h.b16 %v532
    %v744 = vunpack.c.l.b16 %v533
    %v745 = vunpack.c.h.b16 %v533
    %v746 = vunpack.c.l.b16 %v534
    %v747 = vunpack.c.h.b16 %v534
    %v748 = vunpack.c.l.b16 %v535
    %v749 = vunpack.c.h.b16 %v535
    %v750 = vunpack.c.l.b16 %v536
    %v751 = vunpack.c.h.b16 %v536
    %v752 = vunpack.c.l.b16 %v537
    %v753 = vunpack.c.h.b16 %v537
    %v754 = vunpack.c.l.b16 %v538
    %v755 = vunpack.c.h.b16 %v538
    %v756 = vunpack.c.l.b16 %v539
    %v757 = vunpack.c.h.b16 %v539
    %v758 = vunpack.c.l.b16 %v540
    %v759 = vunpack.c.h.b16 %v540
    %v760 = vunpack.c.l.b16 %v541
    %v761 = vunpack.c.h.b16 %v541
    %v762 = vunpack.c.l.b16 %v542
    %v763 = vunpack.c.h.b16 %v542
    %v764 = vunpack.c.l.b16 %v543
    %v765 = vunpack.c.h.b16 %v543
    %v766 = vunpack.c.l.b16 %v544
    %v767 = vunpack.c.h.b16 %v544
    %v768 = vunpack.c.l.b16 %v545
    %v769 = vunpack.c.h.b16 %v545
    %v770 = vunpack.c.l.b16 %v546
    %v771 = vunpack.c.h.b16 %v546
    %v772 = vunpack.c.l.b16 %v547
    %v773 = vunpack.c.h.b16 %v547
    %v774 = vunpack.c.l.b16 %v548
    %v775 = vunpack.c.h.b16 %v548
    %v776 = vunpack.c.l.b16 %v549
    %v777 = vunpack.c.h.b16 %v549
    %v778 = vunpack.c.l.b16 %v550
    %v779 = vunpack.c.h.b16 %v550
    %v780 = vunpack.c.l.b16 %v551
    %v781 = vunpack.c.h.b16 %v551
    %v782 = vunpack.c.l.b16 %v552
    %v783 = vunpack.c.h.b16 %v552
    %v784 = vunpack.c.l.b16 %v553
    %v785 = vunpack.c.h.b16 %v553
    %v786 = vunpack.c.l.b16 %v554
    %v787 = vunpack.c.h.b16 %v554
    %v788 = vunpack.c.l.b16 %v555
    %v789 = vunpack.c.h.b16 %v555
    %v790 = vunpack.c.l.b16 %v556
    %v791 = vunpack.c.h.b16 %v556
    %v792 = vunpack.c.l.b16 %v557
    %v793 = vunpack.c.h.b16 %v557
    %v794 = vunpack.c.l.b16 %v558
    %v795 = vunpack.c.h.b16 %v558
    %v796 = vunpack.c.l.b16 %v559
    %v797 = vunpack.c.h.b16 %v559
    %v798 = vunpack.c.l.b16 %v560
    %v799 = vunpack.c.h.b16 %v560
    %v800 = vunpack.c.l.b16 %v561
    %v801 = vunpack.c.h.b16 %v561
    %v802 = vunpack.c.l.b16 %v562
    %v803 = vunpack.c.h.b16 %v562
    %v804 = vunpack.c.l.b16 %v563
    %v805 = vunpack.c.h.b16 %v563
    %v806 = vunpack.c.l.b16 %v564
    %v807 = vunpack.c.h.b16 %v564
    %v808 = vunpack.c.l.b16 %v565
    %v809 = vunpack.c.h.b16 %v565
    %v810 = vunpack.c.l.b16 %v566
    %v811 = vunpack.c.h.b16 %v566
    %v812 = vunpack.c.l.b16 %v567
    %v813 = vunpack.c.h.b16 %v567
    %v814 = vunpack.c.l.b16 %v568
    %v815 = vunpack.c.h.b16 %v568
    %v816 = vunpack.c.l.b16 %v569
    %v817 = vunpack.c.h.b16 %v569
    %v818 = vunpack.c.l.b16 %v570
    %v819 = vunpack.c.h.b16 %v570
    %v820 = vunpack.c.l.b16 %v571
    %v821 = vunpack.c.h.b16 %v571
    %v822 = vunpack.c.l.b16 %v572
    %v823 = vunpack.c.h.b16 %v572
    %v824 = vunpack.c.l.b16 %v573
    %v825 = vunpack.c.h.b16 %v573
    %v826 = vunpack.c.l.b16 %v574
    %v827 = vunpack.c.h.b16 %v574
    %v828 = vunpack.c.l.b16 %v575
    %v829 = vunpack.c.h.b16 %v575
    %v830 = vunpack.c.l.b16 %v576
    %v831 = vunpack.c.h.b16 %v576
    %v832 = vunpack.c.l.b16 %v577
    %v833 = vunpack.c.h.b16 %v577
    %v834 = vunpack.c.l.b16 %v578
    %v835 = vunpack.c.h.b16 %v578
    %v836 = vunpack.c.l.b16 %v579
    %v837 = vunpack.c.h.b16 %v579
    %v838 = vunpack.c.l.b16 %v580
    %v839 = vunpack.c.h.b16 %v580
    %v840 = vunpack.c.l.b16 %v581
    %v841 = vunpack.c.h.b16 %v581
    %v842 = vunpack.c.l.b16 %v582
    %v843 = vunpack.c.h.b16 %v582
    %v844 = vunpack.c.l.b16 %v583
    %v845 = vunpack.c.h.b16 %v583
    %v846 = vunpack.c.l.b16 %v584
    %v847 = vunpack.c.h.b16 %v584
    %v848 = vunpack.c.l.b16 %v585
    %v849 = vunpack.c.h.b16 %v585
    %v850 = vunpack.c.l.b16 %v586
    %v851 = vunpack.c.h.b16 %v586
    %v852 = vunpack.c.l.b16 %v587
    %v853 = vunpack.c.h.b16 %v587
    %v854 = vunpack.c.l.b16 %v588
    %v855 = vunpack.c.h.b16 %v588
    %v856 = vunpack.c.l.b16 %v589
    %v857 = vunpack.c.h.b16 %v589
    %v858 = vunpack.c.l.b16 %v590
    %v859 = vunpack.c.h.b16 %v590
    %v860 = vunpack.c.l.b16 %v591
    %v861 = vunpack.c.h.b16 %v591
    %v862 = vunpack.c.l.b16 %v592
    %v863 = vunpack.c.h.b16 %v592
    %v864 = vunpack.c.l.b16 %v593
    %v865 = vunpack.c.h.b16 %v593
    %v866 = vunpack.c.l.b16 %v594
    %v867 = vunpack.c.h.b16 %v594
    %v868 = vunpack.c.l.b16 %v595
    %v869 = vunpack.c.h.b16 %v595
    %v870 = vunpack.c.l.b16 %v596
    %v871 = vunpack.c.h.b16 %v596
    %v872 = vunpack.c.l.b16 %v597
    %v873 = vunpack.c.h.b16 %v597
    %v874 = vunpack.c.l.b16 %v598
    %v875 = vunpack.c.h.b16 %v598
    %v876 = vunpack.c.l.b16 %v599
    %v877 = vunpack.c.h.b16 %v599
    %v878 = vunpack.c.l.b16 %v600
    %v879 = vunpack.c.h.b16 %v600
    %v880 = vunpack.c.l.b16 %v601
    %v881 = vunpack.c.h.b16 %v601
    %v882 = vunpack.c.l.b16 %v602
    %v883 = vunpack.c.h.b16 %v602
    %v884 = vunpack.c.l.b16 %v603
    %v885 = vunpack.c.h.b16 %v603
    %v886 = vunpack.c.l.b16 %v604
    %v887 = vunpack.c.h.b16 %v604
    %v888 = vunpack.c.l.b16 %v605
    %v889 = vunpack.c.h.b16 %v605
    %v890 = vunpack.c.l.b16 %v606
    %v891 = vunpack.c.h.b16 %v606
    %v892 = vunpack.c.l.b16 %v607
    %v893 = vunpack.c.h.b16 %v607
    %v894 = vunpack.c.l.b16 %v608
    %v895 = vunpack.c.h.b16 %v608
    %v896 = vunpack.c.l.b16 %v609
    %v897 = vunpack.c.h.b16 %v609
    %v898 = vunpack.c.l.b16 %v610
    %v899 = vunpack.c.h.b16 %v610
    %v900 = vunpack.c.l.b16 %v611
    %v901 = vunpack.c.h.b16 %v611
    %v902 = vunpack.c.l.b16 %v612
    %v903 = vunpack.c.h.b16 %v612
    %v904 = vunpack.c.l.b16 %v613
    %v905 = vunpack.c.h.b16 %v613
    %v906 = vunpack.c.l.b16 %v614
    %v907 = vunpack.c.h.b16 %v614
    %v908 = vunpack.c.l.b16 %v615
    %v909 = vunpack.c.h.b16 %v615
    %v910 = vunpack.c.l.b16 %v616
    %v911 = vunpack.c.h.b16 %v616
    %v912 = vunpack.c.l.b16 %v617
    %v913 = vunpack.c.h.b16 %v617
    %v914 = vunpack.c.l.b16 %v618
    %v915 = vunpack.c.h.b16 %v618
    %v916 = vunpack.c.l.b16 %v619
    %v917 = vunpack.c.h.b16 %v619
    %v918 = vunpack.c.l.b16 %v620
    %v919 = vunpack.c.h.b16 %v620
    %v920 = vunpack.c.l.b16 %v621
    %v921 = vunpack.c.h.b16 %v621
    %v922 = vpack.c.b16 %v726, %v722
    %v923 = vpack.c.b16 %v727, %v723
    %v924 = vpack.c.b16 %v728, %v724
    %v925 = vpack.c.b16 %v729, %v725
    %v926 = vpack.c.b16 %v734, %v730
    %v927 = vpack.c.b16 %v735, %v731
    %v928 = vpack.c.b16 %v736, %v732
    %v929 = vpack.c.b16 %v737, %v733
    %v930 = vpack.c.b16 %v742, %v738
    %v931 = vpack.c.b16 %v743, %v739
    %v932 = vpack.c.b16 %v744, %v740
    %v933 = vpack.c.b16 %v745, %v741
    %v934 = vpack.c.b16 %v750, %v746
    %v935 = vpack.c.b16 %v751, %v747
    %v936 = vpack.c.b16 %v752, %v748
    %v937 = vpack.c.b16 %v753, %v749
    %v938 = vpack.c.b16 %v758, %v754
    %v939 = vpack.c.b16 %v759, %v755
    %v940 = vpack.c.b16 %v760, %v756
    %v941 = vpack.c.b16 %v761, %v757
    %v942 = vpack.c.b16 %v766, %v762
    %v943 = vpack.c.b16 %v767, %v763
    %v944 = vpack.c.b16 %v768, %v764
    %v945 = vpack.c.b16 %v769, %v765
    %v946 = vpack.c.b16 %v774, %v770
    %v947 = vpack.c.b16 %v775, %v771
    %v948 = vpack.c.b16 %v776, %v772
    %v949 = vpack.c.b16 %v777, %v773
    %v950 = vpack.c.b16 %v782, %v778
    %v951 = vpack.c.b16 %v783, %v779
    %v952 = vpack.c.b16 %v784, %v780
    %v953 = vpack.c.b16 %v785, %v781
    %v954 = vpack.c.b16 %v790, %v786
    %v955 = vpack.c.b16 %v791, %v787
    %v956 = vpack.c.b16 %v792, %v788
    %v957 = vpack.c.b16 %v793, %v789
    %v958 = vpack.c.b16 %v798, %v794
    %v959 = vpack.c.b16 %v799, %v795
    %v960 = vpack.c.b16 %v800, %v796
    %v961 = vpack.c.b16 %v801, %v797
    %v962 = vpack.c.b16 %v806, %v802
    %v963 = vpack.c.b16 %v807, %v803
    %v964 = vpack.c.b16 %v808, %v804
    %v965 = vpack.c.b16 %v809, %v805
    %v966 = vpack.c.b16 %v814, %v810
    %v967 = vpack.c.b16 %v815, %v811
    %v968 = vpack.c.b16 %v816, %v812
    %v969 = vpack.c.b16 %v817, %v813
    %v970 = vpack.c.b16 %v822, %v818
    %v971 = vpack.c.b16 %v823, %v819
    %v972 = vpack.c.b16 %v824, %v820
    %v973 = vpack.c.b16 %v825, %v821
    %v974 = vpack.c.b16 %v830, %v826
    %v975 = vpack.c.b16 %v831, %v827
    %v976 = vpack.c.b16 %v832, %v828
    %v977 = vpack.c.b16 %v833, %v829
    %v978 = vpack.c.b16 %v838, %v834
    %v979 = vpack.c.b16 %v839, %v835
    %v980 = vpack.c.b16 %v840, %v836
    %v981 = vpack.c.b16 %v841, %v837
    %v982 = vpack.c.b16 %v846, %v842
    %v983 = vpack.c.b16 %v847, %v843
    %v984 = vpack.c.b16 %v848, %v844
    %v985 = vpack.c.b16 %v849, %v845
    %v986 = vpack.c.b16 %v854, %v850
    %v987 = vpack.c.b16 %v855, %v851
    %v988 = vpack.c.b16 %v856, %v852
    %v989 = vpack.c.b16 %v857, %v853
    %v990 = vpack.c.b16 %v862, %v858
    %v991 = vpack.c.b16 %v863, %v859
    %v992 = vpack.c.b16 %v864, %v860
    %v993 = vpack.c.b16 %v865, %v861
    %v994 = vpack.c.b16 %v870, %v866
    %v995 = vpack.c.b16 %v871, %v867
    %v996 = vpack.c.b16 %v872, %v868
    %v997 = vpack.c.b16 %v873, %v869
    %v998 = vpack.c.b16 %v878, %v874
    %v999 = vpack.c.b16 %v879, %v875
    %v1000 = vpack.c.b16 %v880, %v876
    %v1001 = vpack.c.b16 %v881, %v877
    %v1002 = vpack.c.b16 %v886, %v882
    %v1003 = vpack.c.b16 %v887, %v883
    %v1004 = vpack.c.b16 %v888, %v884
    %v1005 = vpack.c.b16 %v889, %v885
    %v1006 = vpack.c.b16 %v894, %v890
    %v1007 = vpack.c.b16 %v895, %v891
    %v1008 = vpack.c.b16 %v896, %v892
    %v1009 = vpack.c.b16 %v897, %v893
    %v1010 = vpack.c.b16 %v902, %v898
    %v1011 = vpack.c.b16 %v903, %v899
    %v1012 = vpack.c.b16 %v904, %v900
    %v1013 = vpack.c.b16 %v905, %v901
    %v1014 = vpack.c.b16 %v910, %v906
    %v1015 = vpack.c.b16 %v911, %v907
    %v1016 = vpack.c.b16 %v912, %v908
    %v1017 = vpack.c.b16 %v913, %v909
    %v1018 = vpack.c.b16 %v918, %v914
    %v1019 = vpack.c.b16 %v919, %v915
    %v1020 = vpack.c.b16 %v920, %v916
    %v1021 = vpack.c.b16 %v921, %v917
    %vm1122 = vcmask 130048
    %v1124 = vsel %vm1122, %v461, 0
    %v1127 = vsel %vm1122, %v465, 0
    %v1130 = vsel %vm1122, %v469, 0
    %v1133 = vsel %vm1122, %v473, 0
    %v1136 = vsel %vm1122, %v477, 0
    %v1139 = vsel %vm1122, %v481, 0
    %v1142 = vsel %vm1122, %v485, 0
    %v1145 = vsel %vm1122, %v489, 0
    %v1148 = vsel %vm1122, %v493, 0
    %v1151 = vsel %vm1122, %v497, 0
    %v1154 = vsel %vm1122, %v501, 0
    %v1157 = vsel %vm1122, %v505, 0
    %v1160 = vsel %vm1122, %v509, 0
    %v1163 = vsel %vm1122, %v513, 0
    %v1166 = vsel %vm1122, %v517, 0
    %v1169 = vsel %vm1122, %v521, 0
    %1171 = vmatpush.bf16.msra.mxu0 %v950
    %1172 = vmatpush.bf16.msra.mxu0 %v946
    %1173 = vmatpush.bf16.msra.mxu0 %v942
    %1174 = vmatpush.bf16.msra.mxu0 %v938
    %1175 = vmatpush.bf16.msra.mxu0 %v934
    %1176 = vmatpush.bf16.msra.mxu0 %v930
    %1177 = vmatpush.bf16.msra.mxu0 %v926
    %1178 = vmatpush.bf16.msra.mxu0 %v922
    %1179 = vmatmul.bf16.gmra.mxu0 %v458
    %v1180 = vpop.f32.mrf.mxu0
    %v1181 = vadd.f32 0.0, %v1180
    %v1182 = vpop.f32.mrf.mxu0
    %v1183 = vadd.f32 0.0, %v1182
    %1184 = vmatmul.bf16.gmra.mxu0 %v462
    %v1185 = vpop.f32.mrf.mxu0
    %v1186 = vadd.f32 0.0, %v1185
    %v1187 = vpop.f32.mrf.mxu0
    %v1188 = vadd.f32 0.0, %v1187
    %1189 = vmatmul.bf16.gmra.mxu0 %v466
    %v1190 = vpop.f32.mrf.mxu0
    %v1191 = vadd.f32 0.0, %v1190
    %v1192 = vpop.f32.mrf.mxu0
    %v1193 = vadd.f32 0.0, %v1192
    %1194 = vmatmul.bf16.gmra.mxu0 %v470
    %v1195 = vpop.f32.mrf.mxu0
    %v1196 = vadd.f32 0.0, %v1195
    %v1197 = vpop.f32.mrf.mxu0
    %v1198 = vadd.f32 0.0, %v1197
    %1199 = vmatmul.bf16.gmra.mxu0 %v474
    %v1200 = vpop.f32.mrf.mxu0
    %v1201 = vadd.f32 0.0, %v1200
    %v1202 = vpop.f32.mrf.mxu0
    %v1203 = vadd.f32 0.0, %v1202
    %1204 = vmatmul.bf16.gmra.mxu0 %v478
    %v1205 = vpop.f32.mrf.mxu0
    %v1206 = vadd.f32 0.0, %v1205
    %v1207 = vpop.f32.mrf.mxu0
    %v1208 = vadd.f32 0.0, %v1207
    %1209 = vmatmul.bf16.gmra.mxu0 %v482
    %v1210 = vpop.f32.mrf.mxu0
    %v1211 = vadd.f32 0.0, %v1210
    %v1212 = vpop.f32.mrf.mxu0
    %v1213 = vadd.f32 0.0, %v1212
    %1214 = vmatmul.bf16.gmra.mxu0 %v486
    %v1215 = vpop.f32.mrf.mxu0
    %v1216 = vadd.f32 0.0, %v1215
    %v1217 = vpop.f32.mrf.mxu0
    %v1218 = vadd.f32 0.0, %v1217
    %1219 = vmatmul.bf16.gmra.mxu0 %v490
    %v1220 = vpop.f32.mrf.mxu0
    %v1221 = vadd.f32 0.0, %v1220
    %v1222 = vpop.f32.mrf.mxu0
    %v1223 = vadd.f32 0.0, %v1222
    %1224 = vmatmul.bf16.gmra.mxu0 %v494
    %v1225 = vpop.f32.mrf.mxu0
    %v1226 = vadd.f32 0.0, %v1225
    %v1227 = vpop.f32.mrf.mxu0
    %v1228 = vadd.f32 0.0, %v1227
    %1229 = vmatmul.bf16.gmra.mxu0 %v498
    %v1230 = vpop.f32.mrf.mxu0
    %v1231 = vadd.f32 0.0, %v1230
    %v1232 = vpop.f32.mrf.mxu0
    %v1233 = vadd.f32 0.0, %v1232
    %1234 = vmatmul.bf16.gmra.mxu0 %v502
    %v1235 = vpop.f32.mrf.mxu0
    %v1236 = vadd.f32 0.0, %v1235
    %v1237 = vpop.f32.mrf.mxu0
    %v1238 = vadd.f32 0.0, %v1237
    %1239 = vmatmul.bf16.gmra.mxu0 %v506
    %v1240 = vpop.f32.mrf.mxu0
    %v1241 = vadd.f32 0.0, %v1240
    %v1242 = vpop.f32.mrf.mxu0
    %v1243 = vadd.f32 0.0, %v1242
    %1244 = vmatmul.bf16.gmra.mxu0 %v510
    %v1245 = vpop.f32.mrf.mxu0
    %v1246 = vadd.f32 0.0, %v1245
    %v1247 = vpop.f32.mrf.mxu0
    %v1248 = vadd.f32 0.0, %v1247
    %1249 = vmatmul.bf16.gmra.mxu0 %v514
    %v1250 = vpop.f32.mrf.mxu0
    %v1251 = vadd.f32 0.0, %v1250
    %v1252 = vpop.f32.mrf.mxu0
    %v1253 = vadd.f32 0.0, %v1252
    %1254 = vmatmul.bf16.gmra.mxu0 %v518
    %v1255 = vpop.f32.mrf.mxu0
    %v1256 = vadd.f32 0.0, %v1255
    %v1257 = vpop.f32.mrf.mxu0
    %v1258 = vadd.f32 0.0, %v1257
    %1259 = vdwg.mxu0
    %1260 = vmatpush.bf16.msra.mxu0 %v982
    %1261 = vmatpush.bf16.msra.mxu0 %v978
    %1262 = vmatpush.bf16.msra.mxu0 %v974
    %1263 = vmatpush.bf16.msra.mxu0 %v970
    %1264 = vmatpush.bf16.msra.mxu0 %v966
    %1265 = vmatpush.bf16.msra.mxu0 %v962
    %1266 = vmatpush.bf16.msra.mxu0 %v958
    %1267 = vmatpush.bf16.msra.mxu0 %v954
    %1268 = vmatmul.bf16.gmra.mxu0 %v459
    %v1269 = vpop.f32.mrf.mxu0
    %v1270 = vadd.f32 %v1181, %v1269
    %v1271 = vpop.f32.mrf.mxu0
    %v1272 = vadd.f32 %v1183, %v1271
    %1273 = vmatmul.bf16.gmra.mxu0 %v463
    %v1274 = vpop.f32.mrf.mxu0
    %v1275 = vadd.f32 %v1186, %v1274
    %v1276 = vpop.f32.mrf.mxu0
    %v1277 = vadd.f32 %v1188, %v1276
    %1278 = vmatmul.bf16.gmra.mxu0 %v467
    %v1279 = vpop.f32.mrf.mxu0
    %v1280 = vadd.f32 %v1191, %v1279
    %v1281 = vpop.f32.mrf.mxu0
    %v1282 = vadd.f32 %v1193, %v1281
    %1283 = vmatmul.bf16.gmra.mxu0 %v471
    %v1284 = vpop.f32.mrf.mxu0
    %v1285 = vadd.f32 %v1196, %v1284
    %v1286 = vpop.f32.mrf.mxu0
    %v1287 = vadd.f32 %v1198, %v1286
    %1288 = vmatmul.bf16.gmra.mxu0 %v475
    %v1289 = vpop.f32.mrf.mxu0
    %v1290 = vadd.f32 %v1201, %v1289
    %v1291 = vpop.f32.mrf.mxu0
    %v1292 = vadd.f32 %v1203, %v1291
    %1293 = vmatmul.bf16.gmra.mxu0 %v479
    %v1294 = vpop.f32.mrf.mxu0
    %v1295 = vadd.f32 %v1206, %v1294
    %v1296 = vpop.f32.mrf.mxu0
    %v1297 = vadd.f32 %v1208, %v1296
    %1298 = vmatmul.bf16.gmra.mxu0 %v483
    %v1299 = vpop.f32.mrf.mxu0
    %v1300 = vadd.f32 %v1211, %v1299
    %v1301 = vpop.f32.mrf.mxu0
    %v1302 = vadd.f32 %v1213, %v1301
    %1303 = vmatmul.bf16.gmra.mxu0 %v487
    %v1304 = vpop.f32.mrf.mxu0
    %v1305 = vadd.f32 %v1216, %v1304
    %v1306 = vpop.f32.mrf.mxu0
    %v1307 = vadd.f32 %v1218, %v1306
    %1308 = vmatmul.bf16.gmra.mxu0 %v491
    %v1309 = vpop.f32.mrf.mxu0
    %v1310 = vadd.f32 %v1221, %v1309
    %v1311 = vpop.f32.mrf.mxu0
    %v1312 = vadd.f32 %v1223, %v1311
    %1313 = vmatmul.bf16.gmra.mxu0 %v495
    %v1314 = vpop.f32.mrf.mxu0
    %v1315 = vadd.f32 %v1226, %v1314
    %v1316 = vpop.f32.mrf.mxu0
    %v1317 = vadd.f32 %v1228, %v1316
    %1318 = vmatmul.bf16.gmra.mxu0 %v499
    %v1319 = vpop.f32.mrf.mxu0
    %v1320 = vadd.f32 %v1231, %v1319
    %v1321 = vpop.f32.mrf.mxu0
    %v1322 = vadd.f32 %v1233, %v1321
    %1323 = vmatmul.bf16.gmra.mxu0 %v503
    %v1324 = vpop.f32.mrf.mxu0
    %v1325 = vadd.f32 %v1236, %v1324
    %v1326 = vpop.f32.mrf.mxu0
    %v1327 = vadd.f32 %v1238, %v1326
    %1328 = vmatmul.bf16.gmra.mxu0 %v507
    %v1329 = vpop.f32.mrf.mxu0
    %v1330 = vadd.f32 %v1241, %v1329
    %v1331 = vpop.f32.mrf.mxu0
    %v1332 = vadd.f32 %v1243, %v1331
    %1333 = vmatmul.bf16.gmra.mxu0 %v511
    %v1334 = vpop.f32.mrf.mxu0
    %v1335 = vadd.f32 %v1246, %v1334
    %v1336 = vpop.f32.mrf.mxu0
    %v1337 = vadd.f32 %v1248, %v1336
    %1338 = vmatmul.bf16.gmra.mxu0 %v515
    %v1339 = vpop.f32.mrf.mxu0
    %v1340 = vadd.f32 %v1251, %v1339
    %v1341 = vpop.f32.mrf.mxu0
    %v1342 = vadd.f32 %v1253, %v1341
    %1343 = vmatmul.bf16.gmra.mxu0 %v519
    %v1344 = vpop.f32.mrf.mxu0
    %v1345 = vadd.f32 %v1256, %v1344
    %v1346 = vpop.f32.mrf.mxu0
    %v1347 = vadd.f32 %v1258, %v1346
    %1348 = vdwg.mxu0
    %1349 = vmatpush.bf16.msra.mxu0 %v1014
    %1350 = vmatpush.bf16.msra.mxu0 %v1010
    %1351 = vmatpush.bf16.msra.mxu0 %v1006
    %1352 = vmatpush.bf16.msra.mxu0 %v1002
    %1353 = vmatpush.bf16.msra.mxu0 %v998
    %1354 = vmatpush.bf16.msra.mxu0 %v994
    %1355 = vmatpush.bf16.msra.mxu0 %v990
    %1356 = vmatpush.bf16.msra.mxu0 %v986
    %1357 = vmatmul.bf16.gmra.mxu0 %v460
    %v1358 = vpop.f32.mrf.mxu0
    %v1359 = vadd.f32 %v1270, %v1358
    %v1360 = vpop.f32.mrf.mxu0
    %v1361 = vadd.f32 %v1272, %v1360
    %1362 = vmatmul.bf16.gmra.mxu0 %v464
    %v1363 = vpop.f32.mrf.mxu0
    %v1364 = vadd.f32 %v1275, %v1363
    %v1365 = vpop.f32.mrf.mxu0
    %v1366 = vadd.f32 %v1277, %v1365
    %1367 = vmatmul.bf16.gmra.mxu0 %v468
    %v1368 = vpop.f32.mrf.mxu0
    %v1369 = vadd.f32 %v1280, %v1368
    %v1370 = vpop.f32.mrf.mxu0
    %v1371 = vadd.f32 %v1282, %v1370
    %1372 = vmatmul.bf16.gmra.mxu0 %v472
    %v1373 = vpop.f32.mrf.mxu0
    %v1374 = vadd.f32 %v1285, %v1373
    %v1375 = vpop.f32.mrf.mxu0
    %v1376 = vadd.f32 %v1287, %v1375
    %1377 = vmatmul.bf16.gmra.mxu0 %v476
    %v1378 = vpop.f32.mrf.mxu0
    %v1379 = vadd.f32 %v1290, %v1378
    %v1380 = vpop.f32.mrf.mxu0
    %v1381 = vadd.f32 %v1292, %v1380
    %1382 = vmatmul.bf16.gmra.mxu0 %v480
    %v1383 = vpop.f32.mrf.mxu0
    %v1384 = vadd.f32 %v1295, %v1383
    %v1385 = vpop.f32.mrf.mxu0
    %v1386 = vadd.f32 %v1297, %v1385
    %1387 = vmatmul.bf16.gmra.mxu0 %v484
    %v1388 = vpop.f32.mrf.mxu0
    %v1389 = vadd.f32 %v1300, %v1388
    %v1390 = vpop.f32.mrf.mxu0
    %v1391 = vadd.f32 %v1302, %v1390
    %1392 = vmatmul.bf16.gmra.mxu0 %v488
    %v1393 = vpop.f32.mrf.mxu0
    %v1394 = vadd.f32 %v1305, %v1393
    %v1395 = vpop.f32.mrf.mxu0
    %v1396 = vadd.f32 %v1307, %v1395
    %1397 = vmatmul.bf16.gmra.mxu0 %v492
    %v1398 = vpop.f32.mrf.mxu0
    %v1399 = vadd.f32 %v1310, %v1398
    %v1400 = vpop.f32.mrf.mxu0
    %v1401 = vadd.f32 %v1312, %v1400
    %1402 = vmatmul.bf16.gmra.mxu0 %v496
    %v1403 = vpop.f32.mrf.mxu0
    %v1404 = vadd.f32 %v1315, %v1403
    %v1405 = vpop.f32.mrf.mxu0
    %v1406 = vadd.f32 %v1317, %v1405
    %1407 = vmatmul.bf16.gmra.mxu0 %v500
    %v1408 = vpop.f32.mrf.mxu0
    %v1409 = vadd.f32 %v1320, %v1408
    %v1410 = vpop.f32.mrf.mxu0
    %v1411 = vadd.f32 %v1322, %v1410
    %1412 = vmatmul.bf16.gmra.mxu0 %v504
    %v1413 = vpop.f32.mrf.mxu0
    %v1414 = vadd.f32 %v1325, %v1413
    %v1415 = vpop.f32.mrf.mxu0
    %v1416 = vadd.f32 %v1327, %v1415
    %1417 = vmatmul.bf16.gmra.mxu0 %v508
    %v1418 = vpop.f32.mrf.mxu0
    %v1419 = vadd.f32 %v1330, %v1418
    %v1420 = vpop.f32.mrf.mxu0
    %v1421 = vadd.f32 %v1332, %v1420
    %1422 = vmatmul.bf16.gmra.mxu0 %v512
    %v1423 = vpop.f32.mrf.mxu0
    %v1424 = vadd.f32 %v1335, %v1423
    %v1425 = vpop.f32.mrf.mxu0
    %v1426 = vadd.f32 %v1337, %v1425
    %1427 = vmatmul.bf16.gmra.mxu0 %v516
    %v1428 = vpop.f32.mrf.mxu0
    %v1429 = vadd.f32 %v1340, %v1428
    %v1430 = vpop.f32.mrf.mxu0
    %v1431 = vadd.f32 %v1342, %v1430
    %1432 = vmatmul.bf16.gmra.mxu0 %v520
    %v1433 = vpop.f32.mrf.mxu0
    %v1434 = vadd.f32 %v1345, %v1433
    %v1435 = vpop.f32.mrf.mxu0
    %v1436 = vadd.f32 %v1347, %v1435
    %1437 = vdwg.mxu0
    %1438 = vmatpush.bf16.msra.mxu0 0
    %1439 = vmatpush.bf16.msra.mxu0 0
    %1440 = vmatpush.bf16.msra.mxu0 0
    %1441 = vmatpush.bf16.msra.mxu0 0
    %1442 = vmatpush.bf16.msra.mxu0 0
    %1443 = vmatpush.bf16.msra.mxu0 0
    %1444 = vmatpush.bf16.msra.mxu0 0
    %1445 = vmatpush.bf16.msra.mxu0 %v1018
    %1446 = vmatmul.bf16.gmra.mxu0 %v1124
    %v1447 = vpop.f32.mrf.mxu0
    %v1448 = vadd.f32 %v1359, %v1447
    %v1449 = vpop.f32.mrf.mxu0
    %v1450 = vadd.f32 %v1361, %v1449
    %1451 = vmatmul.bf16.gmra.mxu0 %v1127
    %v1452 = vpop.f32.mrf.mxu0
    %v1453 = vadd.f32 %v1364, %v1452
    %v1454 = vpop.f32.mrf.mxu0
    %v1455 = vadd.f32 %v1366, %v1454
    %1456 = vmatmul.bf16.gmra.mxu0 %v1130
    %v1457 = vpop.f32.mrf.mxu0
    %v1458 = vadd.f32 %v1369, %v1457
    %v1459 = vpop.f32.mrf.mxu0
    %v1460 = vadd.f32 %v1371, %v1459
    %1461 = vmatmul.bf16.gmra.mxu0 %v1133
    %v1462 = vpop.f32.mrf.mxu0
    %v1463 = vadd.f32 %v1374, %v1462
    %v1464 = vpop.f32.mrf.mxu0
    %v1465 = vadd.f32 %v1376, %v1464
    %1466 = vmatmul.bf16.gmra.mxu0 %v1136
    %v1467 = vpop.f32.mrf.mxu0
    %v1468 = vadd.f32 %v1379, %v1467
    %v1469 = vpop.f32.mrf.mxu0
    %v1470 = vadd.f32 %v1381, %v1469
    %1471 = vmatmul.bf16.gmra.mxu0 %v1139
    %v1472 = vpop.f32.mrf.mxu0
    %v1473 = vadd.f32 %v1384, %v1472
    %v1474 = vpop.f32.mrf.mxu0
    %v1475 = vadd.f32 %v1386, %v1474
    %1476 = vmatmul.bf16.gmra.mxu0 %v1142
    %v1477 = vpop.f32.mrf.mxu0
    %v1478 = vadd.f32 %v1389, %v1477
    %v1479 = vpop.f32.mrf.mxu0
    %v1480 = vadd.f32 %v1391, %v1479
    %1481 = vmatmul.bf16.gmra.mxu0 %v1145
    %v1482 = vpop.f32.mrf.mxu0
    %v1483 = vadd.f32 %v1394, %v1482
    %v1484 = vpop.f32.mrf.mxu0
    %v1485 = vadd.f32 %v1396, %v1484
    %1486 = vmatmul.bf16.gmra.mxu0 %v1148
    %v1487 = vpop.f32.mrf.mxu0
    %v1488 = vadd.f32 %v1399, %v1487
    %v1489 = vpop.f32.mrf.mxu0
    %v1490 = vadd.f32 %v1401, %v1489
    %1491 = vmatmul.bf16.gmra.mxu0 %v1151
    %v1492 = vpop.f32.mrf.mxu0
    %v1493 = vadd.f32 %v1404, %v1492
    %v1494 = vpop.f32.mrf.mxu0
    %v1495 = vadd.f32 %v1406, %v1494
    %1496 = vmatmul.bf16.gmra.mxu0 %v1154
    %v1497 = vpop.f32.mrf.mxu0
    %v1498 = vadd.f32 %v1409, %v1497
    %v1499 = vpop.f32.mrf.mxu0
    %v1500 = vadd.f32 %v1411, %v1499
    %1501 = vmatmul.bf16.gmra.mxu0 %v1157
    %v1502 = vpop.f32.mrf.mxu0
    %v1503 = vadd.f32 %v1414, %v1502
    %v1504 = vpop.f32.mrf.mxu0
    %v1505 = vadd.f32 %v1416, %v1504
    %1506 = vmatmul.bf16.gmra.mxu0 %v1160
    %v1507 = vpop.f32.mrf.mxu0
    %v1508 = vadd.f32 %v1419, %v1507
    %v1509 = vpop.f32.mrf.mxu0
    %v1510 = vadd.f32 %v1421, %v1509
    %1511 = vmatmul.bf16.gmra.mxu0 %v1163
    %v1512 = vpop.f32.mrf.mxu0
    %v1513 = vadd.f32 %v1424, %v1512
    %v1514 = vpop.f32.mrf.mxu0
    %v1515 = vadd.f32 %v1426, %v1514
    %1516 = vmatmul.bf16.gmra.mxu0 %v1166
    %v1517 = vpop.f32.mrf.mxu0
    %v1518 = vadd.f32 %v1429, %v1517
    %v1519 = vpop.f32.mrf.mxu0
    %v1520 = vadd.f32 %v1431, %v1519
    %1521 = vmatmul.bf16.gmra.mxu0 %v1169
    %v1522 = vpop.f32.mrf.mxu0
    %v1523 = vadd.f32 %v1434, %v1522
    %v1524 = vpop.f32.mrf.mxu0
    %v1525 = vadd.f32 %v1436, %v1524
    %1526 = vdwg.mxu0
    %1527 = vmatpush.bf16.msra.mxu0 %v951
    %1528 = vmatpush.bf16.msra.mxu0 %v947
    %1529 = vmatpush.bf16.msra.mxu0 %v943
    %1530 = vmatpush.bf16.msra.mxu0 %v939
    %1531 = vmatpush.bf16.msra.mxu0 %v935
    %1532 = vmatpush.bf16.msra.mxu0 %v931
    %1533 = vmatpush.bf16.msra.mxu0 %v927
    %1534 = vmatpush.bf16.msra.mxu0 %v923
    %1535 = vmatmul.bf16.gmra.mxu0 %v458
    %v1536 = vpop.f32.mrf.mxu0
    %v1537 = vadd.f32 0.0, %v1536
    %v1538 = vpop.f32.mrf.mxu0
    %v1539 = vadd.f32 0.0, %v1538
    %1540 = vmatmul.bf16.gmra.mxu0 %v462
    %v1541 = vpop.f32.mrf.mxu0
    %v1542 = vadd.f32 0.0, %v1541
    %v1543 = vpop.f32.mrf.mxu0
    %v1544 = vadd.f32 0.0, %v1543
    %1545 = vmatmul.bf16.gmra.mxu0 %v466
    %v1546 = vpop.f32.mrf.mxu0
    %v1547 = vadd.f32 0.0, %v1546
    %v1548 = vpop.f32.mrf.mxu0
    %v1549 = vadd.f32 0.0, %v1548
    %1550 = vmatmul.bf16.gmra.mxu0 %v470
    %v1551 = vpop.f32.mrf.mxu0
    %v1552 = vadd.f32 0.0, %v1551
    %v1553 = vpop.f32.mrf.mxu0
    %v1554 = vadd.f32 0.0, %v1553
    %1555 = vmatmul.bf16.gmra.mxu0 %v474
    %v1556 = vpop.f32.mrf.mxu0
    %v1557 = vadd.f32 0.0, %v1556
    %v1558 = vpop.f32.mrf.mxu0
    %v1559 = vadd.f32 0.0, %v1558
    %1560 = vmatmul.bf16.gmra.mxu0 %v478
    %v1561 = vpop.f32.mrf.mxu0
    %v1562 = vadd.f32 0.0, %v1561
    %v1563 = vpop.f32.mrf.mxu0
    %v1564 = vadd.f32 0.0, %v1563
    %1565 = vmatmul.bf16.gmra.mxu0 %v482
    %v1566 = vpop.f32.mrf.mxu0
    %v1567 = vadd.f32 0.0, %v1566
    %v1568 = vpop.f32.mrf.mxu0
    %v1569 = vadd.f32 0.0, %v1568
    %1570 = vmatmul.bf16.gmra.mxu0 %v486
    %v1571 = vpop.f32.mrf.mxu0
    %v1572 = vadd.f32 0.0, %v1571
    %v1573 = vpop.f32.mrf.mxu0
    %v1574 = vadd.f32 0.0, %v1573
    %1575 = vmatmul.bf16.gmra.mxu0 %v490
    %v1576 = vpop.f32.mrf.mxu0
    %v1577 = vadd.f32 0.0, %v1576
    %v1578 = vpop.f32.mrf.mxu0
    %v1579 = vadd.f32 0.0, %v1578
    %1580 = vmatmul.bf16.gmra.mxu0 %v494
    %v1581 = vpop.f32.mrf.mxu0
    %v1582 = vadd.f32 0.0, %v1581
    %v1583 = vpop.f32.mrf.mxu0
    %v1584 = vadd.f32 0.0, %v1583
    %1585 = vmatmul.bf16.gmra.mxu0 %v498
    %v1586 = vpop.f32.mrf.mxu0
    %v1587 = vadd.f32 0.0, %v1586
    %v1588 = vpop.f32.mrf.mxu0
    %v1589 = vadd.f32 0.0, %v1588
    %1590 = vmatmul.bf16.gmra.mxu0 %v502
    %v1591 = vpop.f32.mrf.mxu0
    %v1592 = vadd.f32 0.0, %v1591
    %v1593 = vpop.f32.mrf.mxu0
    %v1594 = vadd.f32 0.0, %v1593
    %1595 = vmatmul.bf16.gmra.mxu0 %v506
    %v1596 = vpop.f32.mrf.mxu0
    %v1597 = vadd.f32 0.0, %v1596
    %v1598 = vpop.f32.mrf.mxu0
    %v1599 = vadd.f32 0.0, %v1598
    %1600 = vmatmul.bf16.gmra.mxu0 %v510
    %v1601 = vpop.f32.mrf.mxu0
    %v1602 = vadd.f32 0.0, %v1601
    %v1603 = vpop.f32.mrf.mxu0
    %v1604 = vadd.f32 0.0, %v1603
    %1605 = vmatmul.bf16.gmra.mxu0 %v514
    %v1606 = vpop.f32.mrf.mxu0
    %v1607 = vadd.f32 0.0, %v1606
    %v1608 = vpop.f32.mrf.mxu0
    %v1609 = vadd.f32 0.0, %v1608
    %1610 = vmatmul.bf16.gmra.mxu0 %v518
    %v1611 = vpop.f32.mrf.mxu0
    %v1612 = vadd.f32 0.0, %v1611
    %v1613 = vpop.f32.mrf.mxu0
    %v1614 = vadd.f32 0.0, %v1613
    %1615 = vdwg.mxu0
    %1616 = vmatpush.bf16.msra.mxu0 %v983
    %1617 = vmatpush.bf16.msra.mxu0 %v979
    %1618 = vmatpush.bf16.msra.mxu0 %v975
    %1619 = vmatpush.bf16.msra.mxu0 %v971
    %1620 = vmatpush.bf16.msra.mxu0 %v967
    %1621 = vmatpush.bf16.msra.mxu0 %v963
    %1622 = vmatpush.bf16.msra.mxu0 %v959
    %1623 = vmatpush.bf16.msra.mxu0 %v955
    %1624 = vmatmul.bf16.gmra.mxu0 %v459
    %v1625 = vpop.f32.mrf.mxu0
    %v1626 = vadd.f32 %v1537, %v1625
    %v1627 = vpop.f32.mrf.mxu0
    %v1628 = vadd.f32 %v1539, %v1627
    %1629 = vmatmul.bf16.gmra.mxu0 %v463
    %v1630 = vpop.f32.mrf.mxu0
    %v1631 = vadd.f32 %v1542, %v1630
    %v1632 = vpop.f32.mrf.mxu0
    %v1633 = vadd.f32 %v1544, %v1632
    %1634 = vmatmul.bf16.gmra.mxu0 %v467
    %v1635 = vpop.f32.mrf.mxu0
    %v1636 = vadd.f32 %v1547, %v1635
    %v1637 = vpop.f32.mrf.mxu0
    %v1638 = vadd.f32 %v1549, %v1637
    %1639 = vmatmul.bf16.gmra.mxu0 %v471
    %v1640 = vpop.f32.mrf.mxu0
    %v1641 = vadd.f32 %v1552, %v1640
    %v1642 = vpop.f32.mrf.mxu0
    %v1643 = vadd.f32 %v1554, %v1642
    %1644 = vmatmul.bf16.gmra.mxu0 %v475
    %v1645 = vpop.f32.mrf.mxu0
    %v1646 = vadd.f32 %v1557, %v1645
    %v1647 = vpop.f32.mrf.mxu0
    %v1648 = vadd.f32 %v1559, %v1647
    %1649 = vmatmul.bf16.gmra.mxu0 %v479
    %v1650 = vpop.f32.mrf.mxu0
    %v1651 = vadd.f32 %v1562, %v1650
    %v1652 = vpop.f32.mrf.mxu0
    %v1653 = vadd.f32 %v1564, %v1652
    %1654 = vmatmul.bf16.gmra.mxu0 %v483
    %v1655 = vpop.f32.mrf.mxu0
    %v1656 = vadd.f32 %v1567, %v1655
    %v1657 = vpop.f32.mrf.mxu0
    %v1658 = vadd.f32 %v1569, %v1657
    %1659 = vmatmul.bf16.gmra.mxu0 %v487
    %v1660 = vpop.f32.mrf.mxu0
    %v1661 = vadd.f32 %v1572, %v1660
    %v1662 = vpop.f32.mrf.mxu0
    %v1663 = vadd.f32 %v1574, %v1662
    %1664 = vmatmul.bf16.gmra.mxu0 %v491
    %v1665 = vpop.f32.mrf.mxu0
    %v1666 = vadd.f32 %v1577, %v1665
    %v1667 = vpop.f32.mrf.mxu0
    %v1668 = vadd.f32 %v1579, %v1667
    %1669 = vmatmul.bf16.gmra.mxu0 %v495
    %v1670 = vpop.f32.mrf.mxu0
    %v1671 = vadd.f32 %v1582, %v1670
    %v1672 = vpop.f32.mrf.mxu0
    %v1673 = vadd.f32 %v1584, %v1672
    %1674 = vmatmul.bf16.gmra.mxu0 %v499
    %v1675 = vpop.f32.mrf.mxu0
    %v1676 = vadd.f32 %v1587, %v1675
    %v1677 = vpop.f32.mrf.mxu0
    %v1678 = vadd.f32 %v1589, %v1677
    %1679 = vmatmul.bf16.gmra.mxu0 %v503
    %v1680 = vpop.f32.mrf.mxu0
    %v1681 = vadd.f32 %v1592, %v1680
    %v1682 = vpop.f32.mrf.mxu0
    %v1683 = vadd.f32 %v1594, %v1682
    %1684 = vmatmul.bf16.gmra.mxu0 %v507
    %v1685 = vpop.f32.mrf.mxu0
    %v1686 = vadd.f32 %v1597, %v1685
    %v1687 = vpop.f32.mrf.mxu0
    %v1688 = vadd.f32 %v1599, %v1687
    %1689 = vmatmul.bf16.gmra.mxu0 %v511
    %v1690 = vpop.f32.mrf.mxu0
    %v1691 = vadd.f32 %v1602, %v1690
    %v1692 = vpop.f32.mrf.mxu0
    %v1693 = vadd.f32 %v1604, %v1692
    %1694 = vmatmul.bf16.gmra.mxu0 %v515
    %v1695 = vpop.f32.mrf.mxu0
    %v1696 = vadd.f32 %v1607, %v1695
    %v1697 = vpop.f32.mrf.mxu0
    %v1698 = vadd.f32 %v1609, %v1697
    %1699 = vmatmul.bf16.gmra.mxu0 %v519
    %v1700 = vpop.f32.mrf.mxu0
    %v1701 = vadd.f32 %v1612, %v1700
    %v1702 = vpop.f32.mrf.mxu0
    %v1703 = vadd.f32 %v1614, %v1702
    %1704 = vdwg.mxu0
    %1705 = vmatpush.bf16.msra.mxu0 %v1015
    %1706 = vmatpush.bf16.msra.mxu0 %v1011
    %1707 = vmatpush.bf16.msra.mxu0 %v1007
    %1708 = vmatpush.bf16.msra.mxu0 %v1003
    %1709 = vmatpush.bf16.msra.mxu0 %v999
    %1710 = vmatpush.bf16.msra.mxu0 %v995
    %1711 = vmatpush.bf16.msra.mxu0 %v991
    %1712 = vmatpush.bf16.msra.mxu0 %v987
    %1713 = vmatmul.bf16.gmra.mxu0 %v460
    %v1714 = vpop.f32.mrf.mxu0
    %v1715 = vadd.f32 %v1626, %v1714
    %v1716 = vpop.f32.mrf.mxu0
    %v1717 = vadd.f32 %v1628, %v1716
    %1718 = vmatmul.bf16.gmra.mxu0 %v464
    %v1719 = vpop.f32.mrf.mxu0
    %v1720 = vadd.f32 %v1631, %v1719
    %v1721 = vpop.f32.mrf.mxu0
    %v1722 = vadd.f32 %v1633, %v1721
    %1723 = vmatmul.bf16.gmra.mxu0 %v468
    %v1724 = vpop.f32.mrf.mxu0
    %v1725 = vadd.f32 %v1636, %v1724
    %v1726 = vpop.f32.mrf.mxu0
    %v1727 = vadd.f32 %v1638, %v1726
    %1728 = vmatmul.bf16.gmra.mxu0 %v472
    %v1729 = vpop.f32.mrf.mxu0
    %v1730 = vadd.f32 %v1641, %v1729
    %v1731 = vpop.f32.mrf.mxu0
    %v1732 = vadd.f32 %v1643, %v1731
    %1733 = vmatmul.bf16.gmra.mxu0 %v476
    %v1734 = vpop.f32.mrf.mxu0
    %v1735 = vadd.f32 %v1646, %v1734
    %v1736 = vpop.f32.mrf.mxu0
    %v1737 = vadd.f32 %v1648, %v1736
    %1738 = vmatmul.bf16.gmra.mxu0 %v480
    %v1739 = vpop.f32.mrf.mxu0
    %v1740 = vadd.f32 %v1651, %v1739
    %v1741 = vpop.f32.mrf.mxu0
    %v1742 = vadd.f32 %v1653, %v1741
    %1743 = vmatmul.bf16.gmra.mxu0 %v484
    %v1744 = vpop.f32.mrf.mxu0
    %v1745 = vadd.f32 %v1656, %v1744
    %v1746 = vpop.f32.mrf.mxu0
    %v1747 = vadd.f32 %v1658, %v1746
    %1748 = vmatmul.bf16.gmra.mxu0 %v488
    %v1749 = vpop.f32.mrf.mxu0
    %v1750 = vadd.f32 %v1661, %v1749
    %v1751 = vpop.f32.mrf.mxu0
    %v1752 = vadd.f32 %v1663, %v1751
    %1753 = vmatmul.bf16.gmra.mxu0 %v492
    %v1754 = vpop.f32.mrf.mxu0
    %v1755 = vadd.f32 %v1666, %v1754
    %v1756 = vpop.f32.mrf.mxu0
    %v1757 = vadd.f32 %v1668, %v1756
    %1758 = vmatmul.bf16.gmra.mxu0 %v496
    %v1759 = vpop.f32.mrf.mxu0
    %v1760 = vadd.f32 %v1671, %v1759
    %v1761 = vpop.f32.mrf.mxu0
    %v1762 = vadd.f32 %v1673, %v1761
    %1763 = vmatmul.bf16.gmra.mxu0 %v500
    %v1764 = vpop.f32.mrf.mxu0
    %v1765 = vadd.f32 %v1676, %v1764
    %v1766 = vpop.f32.mrf.mxu0
    %v1767 = vadd.f32 %v1678, %v1766
    %1768 = vmatmul.bf16.gmra.mxu0 %v504
    %v1769 = vpop.f32.mrf.mxu0
    %v1770 = vadd.f32 %v1681, %v1769
    %v1771 = vpop.f32.mrf.mxu0
    %v1772 = vadd.f32 %v1683, %v1771
    %1773 = vmatmul.bf16.gmra.mxu0 %v508
    %v1774 = vpop.f32.mrf.mxu0
    %v1775 = vadd.f32 %v1686, %v1774
    %v1776 = vpop.f32.mrf.mxu0
    %v1777 = vadd.f32 %v1688, %v1776
    %1778 = vmatmul.bf16.gmra.mxu0 %v512
    %v1779 = vpop.f32.mrf.mxu0
    %v1780 = vadd.f32 %v1691, %v1779
    %v1781 = vpop.f32.mrf.mxu0
    %v1782 = vadd.f32 %v1693, %v1781
    %1783 = vmatmul.bf16.gmra.mxu0 %v516
    %v1784 = vpop.f32.mrf.mxu0
    %v1785 = vadd.f32 %v1696, %v1784
    %v1786 = vpop.f32.mrf.mxu0
    %v1787 = vadd.f32 %v1698, %v1786
    %1788 = vmatmul.bf16.gmra.mxu0 %v520
    %v1789 = vpop.f32.mrf.mxu0
    %v1790 = vadd.f32 %v1701, %v1789
    %v1791 = vpop.f32.mrf.mxu0
    %v1792 = vadd.f32 %v1703, %v1791
    %1793 = vdwg.mxu0
    %1794 = vmatpush.bf16.msra.mxu0 0
    %1795 = vmatpush.bf16.msra.mxu0 0
    %1796 = vmatpush.bf16.msra.mxu0 0
    %1797 = vmatpush.bf16.msra.mxu0 0
    %1798 = vmatpush.bf16.msra.mxu0 0
    %1799 = vmatpush.bf16.msra.mxu0 0
    %1800 = vmatpush.bf16.msra.mxu0 0
    %1801 = vmatpush.bf16.msra.mxu0 %v1019
    %1802 = vmatmul.bf16.gmra.mxu0 %v1124
    %v1803 = vpop.f32.mrf.mxu0
    %v1804 = vadd.f32 %v1715, %v1803
    %v1805 = vpop.f32.mrf.mxu0
    %v1806 = vadd.f32 %v1717, %v1805
    %1807 = vmatmul.bf16.gmra.mxu0 %v1127
    %v1808 = vpop.f32.mrf.mxu0
    %v1809 = vadd.f32 %v1720, %v1808
    %v1810 = vpop.f32.mrf.mxu0
    %v1811 = vadd.f32 %v1722, %v1810
    %1812 = vmatmul.bf16.gmra.mxu0 %v1130
    %v1813 = vpop.f32.mrf.mxu0
    %v1814 = vadd.f32 %v1725, %v1813
    %v1815 = vpop.f32.mrf.mxu0
    %v1816 = vadd.f32 %v1727, %v1815
    %1817 = vmatmul.bf16.gmra.mxu0 %v1133
    %v1818 = vpop.f32.mrf.mxu0
    %v1819 = vadd.f32 %v1730, %v1818
    %v1820 = vpop.f32.mrf.mxu0
    %v1821 = vadd.f32 %v1732, %v1820
    %1822 = vmatmul.bf16.gmra.mxu0 %v1136
    %v1823 = vpop.f32.mrf.mxu0
    %v1824 = vadd.f32 %v1735, %v1823
    %v1825 = vpop.f32.mrf.mxu0
    %v1826 = vadd.f32 %v1737, %v1825
    %1827 = vmatmul.bf16.gmra.mxu0 %v1139
    %v1828 = vpop.f32.mrf.mxu0
    %v1829 = vadd.f32 %v1740, %v1828
    %v1830 = vpop.f32.mrf.mxu0
    %v1831 = vadd.f32 %v1742, %v1830
    %1832 = vmatmul.bf16.gmra.mxu0 %v1142
    %v1833 = vpop.f32.mrf.mxu0
    %v1834 = vadd.f32 %v1745, %v1833
    %v1835 = vpop.f32.mrf.mxu0
    %v1836 = vadd.f32 %v1747, %v1835
    %1837 = vmatmul.bf16.gmra.mxu0 %v1145
    %v1838 = vpop.f32.mrf.mxu0
    %v1839 = vadd.f32 %v1750, %v1838
    %v1840 = vpop.f32.mrf.mxu0
    %v1841 = vadd.f32 %v1752, %v1840
    %1842 = vmatmul.bf16.gmra.mxu0 %v1148
    %v1843 = vpop.f32.mrf.mxu0
    %v1844 = vadd.f32 %v1755, %v1843
    %v1845 = vpop.f32.mrf.mxu0
    %v1846 = vadd.f32 %v1757, %v1845
    %1847 = vmatmul.bf16.gmra.mxu0 %v1151
    %v1848 = vpop.f32.mrf.mxu0
    %v1849 = vadd.f32 %v1760, %v1848
    %v1850 = vpop.f32.mrf.mxu0
    %v1851 = vadd.f32 %v1762, %v1850
    %1852 = vmatmul.bf16.gmra.mxu0 %v1154
    %v1853 = vpop.f32.mrf.mxu0
    %v1854 = vadd.f32 %v1765, %v1853
    %v1855 = vpop.f32.mrf.mxu0
    %v1856 = vadd.f32 %v1767, %v1855
    %1857 = vmatmul.bf16.gmra.mxu0 %v1157
    %v1858 = vpop.f32.mrf.mxu0
    %v1859 = vadd.f32 %v1770, %v1858
    %v1860 = vpop.f32.mrf.mxu0
    %v1861 = vadd.f32 %v1772, %v1860
    %1862 = vmatmul.bf16.gmra.mxu0 %v1160
    %v1863 = vpop.f32.mrf.mxu0
    %v1864 = vadd.f32 %v1775, %v1863
    %v1865 = vpop.f32.mrf.mxu0
    %v1866 = vadd.f32 %v1777, %v1865
    %1867 = vmatmul.bf16.gmra.mxu0 %v1163
    %v1868 = vpop.f32.mrf.mxu0
    %v1869 = vadd.f32 %v1780, %v1868
    %v1870 = vpop.f32.mrf.mxu0
    %v1871 = vadd.f32 %v1782, %v1870
    %1872 = vmatmul.bf16.gmra.mxu0 %v1166
    %v1873 = vpop.f32.mrf.mxu0
    %v1874 = vadd.f32 %v1785, %v1873
    %v1875 = vpop.f32.mrf.mxu0
    %v1876 = vadd.f32 %v1787, %v1875
    %1877 = vmatmul.bf16.gmra.mxu0 %v1169
    %v1878 = vpop.f32.mrf.mxu0
    %v1879 = vadd.f32 %v1790, %v1878
    %v1880 = vpop.f32.mrf.mxu0
    %v1881 = vadd.f32 %v1792, %v1880
    %1882 = vdwg.mxu0
    %1883 = vmatpush.bf16.msra.mxu0 %v952
    %1884 = vmatpush.bf16.msra.mxu0 %v948
    %1885 = vmatpush.bf16.msra.mxu0 %v944
    %1886 = vmatpush.bf16.msra.mxu0 %v940
    %1887 = vmatpush.bf16.msra.mxu0 %v936
    %1888 = vmatpush.bf16.msra.mxu0 %v932
    %1889 = vmatpush.bf16.msra.mxu0 %v928
    %1890 = vmatpush.bf16.msra.mxu0 %v924
    %1891 = vmatmul.bf16.gmra.mxu0 %v458
    %v1892 = vpop.f32.mrf.mxu0
    %v1893 = vadd.f32 0.0, %v1892
    %v1894 = vpop.f32.mrf.mxu0
    %v1895 = vadd.f32 0.0, %v1894
    %1896 = vmatmul.bf16.gmra.mxu0 %v462
    %v1897 = vpop.f32.mrf.mxu0
    %v1898 = vadd.f32 0.0, %v1897
    %v1899 = vpop.f32.mrf.mxu0
    %v1900 = vadd.f32 0.0, %v1899
    %1901 = vmatmul.bf16.gmra.mxu0 %v466
    %v1902 = vpop.f32.mrf.mxu0
    %v1903 = vadd.f32 0.0, %v1902
    %v1904 = vpop.f32.mrf.mxu0
    %v1905 = vadd.f32 0.0, %v1904
    %1906 = vmatmul.bf16.gmra.mxu0 %v470
    %v1907 = vpop.f32.mrf.mxu0
    %v1908 = vadd.f32 0.0, %v1907
    %v1909 = vpop.f32.mrf.mxu0
    %v1910 = vadd.f32 0.0, %v1909
    %1911 = vmatmul.bf16.gmra.mxu0 %v474
    %v1912 = vpop.f32.mrf.mxu0
    %v1913 = vadd.f32 0.0, %v1912
    %v1914 = vpop.f32.mrf.mxu0
    %v1915 = vadd.f32 0.0, %v1914
    %1916 = vmatmul.bf16.gmra.mxu0 %v478
    %v1917 = vpop.f32.mrf.mxu0
    %v1918 = vadd.f32 0.0, %v1917
    %v1919 = vpop.f32.mrf.mxu0
    %v1920 = vadd.f32 0.0, %v1919
    %1921 = vmatmul.bf16.gmra.mxu0 %v482
    %v1922 = vpop.f32.mrf.mxu0
    %v1923 = vadd.f32 0.0, %v1922
    %v1924 = vpop.f32.mrf.mxu0
    %v1925 = vadd.f32 0.0, %v1924
    %1926 = vmatmul.bf16.gmra.mxu0 %v486
    %v1927 = vpop.f32.mrf.mxu0
    %v1928 = vadd.f32 0.0, %v1927
    %v1929 = vpop.f32.mrf.mxu0
    %v1930 = vadd.f32 0.0, %v1929
    %1931 = vmatmul.bf16.gmra.mxu0 %v490
    %v1932 = vpop.f32.mrf.mxu0
    %v1933 = vadd.f32 0.0, %v1932
    %v1934 = vpop.f32.mrf.mxu0
    %v1935 = vadd.f32 0.0, %v1934
    %1936 = vmatmul.bf16.gmra.mxu0 %v494
    %v1937 = vpop.f32.mrf.mxu0
    %v1938 = vadd.f32 0.0, %v1937
    %v1939 = vpop.f32.mrf.mxu0
    %v1940 = vadd.f32 0.0, %v1939
    %1941 = vmatmul.bf16.gmra.mxu0 %v498
    %v1942 = vpop.f32.mrf.mxu0
    %v1943 = vadd.f32 0.0, %v1942
    %v1944 = vpop.f32.mrf.mxu0
    %v1945 = vadd.f32 0.0, %v1944
    %1946 = vmatmul.bf16.gmra.mxu0 %v502
    %v1947 = vpop.f32.mrf.mxu0
    %v1948 = vadd.f32 0.0, %v1947
    %v1949 = vpop.f32.mrf.mxu0
    %v1950 = vadd.f32 0.0, %v1949
    %1951 = vmatmul.bf16.gmra.mxu0 %v506
    %v1952 = vpop.f32.mrf.mxu0
    %v1953 = vadd.f32 0.0, %v1952
    %v1954 = vpop.f32.mrf.mxu0
    %v1955 = vadd.f32 0.0, %v1954
    %1956 = vmatmul.bf16.gmra.mxu0 %v510
    %v1957 = vpop.f32.mrf.mxu0
    %v1958 = vadd.f32 0.0, %v1957
    %v1959 = vpop.f32.mrf.mxu0
    %v1960 = vadd.f32 0.0, %v1959
    %1961 = vmatmul.bf16.gmra.mxu0 %v514
    %v1962 = vpop.f32.mrf.mxu0
    %v1963 = vadd.f32 0.0, %v1962
    %v1964 = vpop.f32.mrf.mxu0
    %v1965 = vadd.f32 0.0, %v1964
    %1966 = vmatmul.bf16.gmra.mxu0 %v518
    %v1967 = vpop.f32.mrf.mxu0
    %v1968 = vadd.f32 0.0, %v1967
    %v1969 = vpop.f32.mrf.mxu0
    %v1970 = vadd.f32 0.0, %v1969
    %1971 = vdwg.mxu0
    %1972 = vmatpush.bf16.msra.mxu0 %v984
    %1973 = vmatpush.bf16.msra.mxu0 %v980
    %1974 = vmatpush.bf16.msra.mxu0 %v976
    %1975 = vmatpush.bf16.msra.mxu0 %v972
    %1976 = vmatpush.bf16.msra.mxu0 %v968
    %1977 = vmatpush.bf16.msra.mxu0 %v964
    %1978 = vmatpush.bf16.msra.mxu0 %v960
    %1979 = vmatpush.bf16.msra.mxu0 %v956
    %1980 = vmatmul.bf16.gmra.mxu0 %v459
    %v1981 = vpop.f32.mrf.mxu0
    %v1982 = vadd.f32 %v1893, %v1981
    %v1983 = vpop.f32.mrf.mxu0
    %v1984 = vadd.f32 %v1895, %v1983
    %1985 = vmatmul.bf16.gmra.mxu0 %v463
    %v1986 = vpop.f32.mrf.mxu0
    %v1987 = vadd.f32 %v1898, %v1986
    %v1988 = vpop.f32.mrf.mxu0
    %v1989 = vadd.f32 %v1900, %v1988
    %1990 = vmatmul.bf16.gmra.mxu0 %v467
    %v1991 = vpop.f32.mrf.mxu0
    %v1992 = vadd.f32 %v1903, %v1991
    %v1993 = vpop.f32.mrf.mxu0
    %v1994 = vadd.f32 %v1905, %v1993
    %1995 = vmatmul.bf16.gmra.mxu0 %v471
    %v1996 = vpop.f32.mrf.mxu0
    %v1997 = vadd.f32 %v1908, %v1996
    %v1998 = vpop.f32.mrf.mxu0
    %v1999 = vadd.f32 %v1910, %v1998
    %2000 = vmatmul.bf16.gmra.mxu0 %v475
    %v2001 = vpop.f32.mrf.mxu0
    %v2002 = vadd.f32 %v1913, %v2001
    %v2003 = vpop.f32.mrf.mxu0
    %v2004 = vadd.f32 %v1915, %v2003
    %2005 = vmatmul.bf16.gmra.mxu0 %v479
    %v2006 = vpop.f32.mrf.mxu0
    %v2007 = vadd.f32 %v1918, %v2006
    %v2008 = vpop.f32.mrf.mxu0
    %v2009 = vadd.f32 %v1920, %v2008
    %2010 = vmatmul.bf16.gmra.mxu0 %v483
    %v2011 = vpop.f32.mrf.mxu0
    %v2012 = vadd.f32 %v1923, %v2011
    %v2013 = vpop.f32.mrf.mxu0
    %v2014 = vadd.f32 %v1925, %v2013
    %2015 = vmatmul.bf16.gmra.mxu0 %v487
    %v2016 = vpop.f32.mrf.mxu0
    %v2017 = vadd.f32 %v1928, %v2016
    %v2018 = vpop.f32.mrf.mxu0
    %v2019 = vadd.f32 %v1930, %v2018
    %2020 = vmatmul.bf16.gmra.mxu0 %v491
    %v2021 = vpop.f32.mrf.mxu0
    %v2022 = vadd.f32 %v1933, %v2021
    %v2023 = vpop.f32.mrf.mxu0
    %v2024 = vadd.f32 %v1935, %v2023
    %2025 = vmatmul.bf16.gmra.mxu0 %v495
    %v2026 = vpop.f32.mrf.mxu0
    %v2027 = vadd.f32 %v1938, %v2026
    %v2028 = vpop.f32.mrf.mxu0
    %v2029 = vadd.f32 %v1940, %v2028
    %2030 = vmatmul.bf16.gmra.mxu0 %v499
    %v2031 = vpop.f32.mrf.mxu0
    %v2032 = vadd.f32 %v1943, %v2031
    %v2033 = vpop.f32.mrf.mxu0
    %v2034 = vadd.f32 %v1945, %v2033
    %2035 = vmatmul.bf16.gmra.mxu0 %v503
    %v2036 = vpop.f32.mrf.mxu0
    %v2037 = vadd.f32 %v1948, %v2036
    %v2038 = vpop.f32.mrf.mxu0
    %v2039 = vadd.f32 %v1950, %v2038
    %2040 = vmatmul.bf16.gmra.mxu0 %v507
    %v2041 = vpop.f32.mrf.mxu0
    %v2042 = vadd.f32 %v1953, %v2041
    %v2043 = vpop.f32.mrf.mxu0
    %v2044 = vadd.f32 %v1955, %v2043
    %2045 = vmatmul.bf16.gmra.mxu0 %v511
    %v2046 = vpop.f32.mrf.mxu0
    %v2047 = vadd.f32 %v1958, %v2046
    %v2048 = vpop.f32.mrf.mxu0
    %v2049 = vadd.f32 %v1960, %v2048
    %2050 = vmatmul.bf16.gmra.mxu0 %v515
    %v2051 = vpop.f32.mrf.mxu0
    %v2052 = vadd.f32 %v1963, %v2051
    %v2053 = vpop.f32.mrf.mxu0
    %v2054 = vadd.f32 %v1965, %v2053
    %2055 = vmatmul.bf16.gmra.mxu0 %v519
    %v2056 = vpop.f32.mrf.mxu0
    %v2057 = vadd.f32 %v1968, %v2056
    %v2058 = vpop.f32.mrf.mxu0
    %v2059 = vadd.f32 %v1970, %v2058
    %2060 = vdwg.mxu0
    %2061 = vmatpush.bf16.msra.mxu0 %v1016
    %2062 = vmatpush.bf16.msra.mxu0 %v1012
    %2063 = vmatpush.bf16.msra.mxu0 %v1008
    %2064 = vmatpush.bf16.msra.mxu0 %v1004
    %2065 = vmatpush.bf16.msra.mxu0 %v1000
    %2066 = vmatpush.bf16.msra.mxu0 %v996
    %2067 = vmatpush.bf16.msra.mxu0 %v992
    %2068 = vmatpush.bf16.msra.mxu0 %v988
    %2069 = vmatmul.bf16.gmra.mxu0 %v460
    %v2070 = vpop.f32.mrf.mxu0
    %v2071 = vadd.f32 %v1982, %v2070
    %v2072 = vpop.f32.mrf.mxu0
    %v2073 = vadd.f32 %v1984, %v2072
    %2074 = vmatmul.bf16.gmra.mxu0 %v464
    %v2075 = vpop.f32.mrf.mxu0
    %v2076 = vadd.f32 %v1987, %v2075
    %v2077 = vpop.f32.mrf.mxu0
    %v2078 = vadd.f32 %v1989, %v2077
    %2079 = vmatmul.bf16.gmra.mxu0 %v468
    %v2080 = vpop.f32.mrf.mxu0
    %v2081 = vadd.f32 %v1992, %v2080
    %v2082 = vpop.f32.mrf.mxu0
    %v2083 = vadd.f32 %v1994, %v2082
    %2084 = vmatmul.bf16.gmra.mxu0 %v472
    %v2085 = vpop.f32.mrf.mxu0
    %v2086 = vadd.f32 %v1997, %v2085
    %v2087 = vpop.f32.mrf.mxu0
    %v2088 = vadd.f32 %v1999, %v2087
    %2089 = vmatmul.bf16.gmra.mxu0 %v476
    %v2090 = vpop.f32.mrf.mxu0
    %v2091 = vadd.f32 %v2002, %v2090
    %v2092 = vpop.f32.mrf.mxu0
    %v2093 = vadd.f32 %v2004, %v2092
    %2094 = vmatmul.bf16.gmra.mxu0 %v480
    %v2095 = vpop.f32.mrf.mxu0
    %v2096 = vadd.f32 %v2007, %v2095
    %v2097 = vpop.f32.mrf.mxu0
    %v2098 = vadd.f32 %v2009, %v2097
    %2099 = vmatmul.bf16.gmra.mxu0 %v484
    %v2100 = vpop.f32.mrf.mxu0
    %v2101 = vadd.f32 %v2012, %v2100
    %v2102 = vpop.f32.mrf.mxu0
    %v2103 = vadd.f32 %v2014, %v2102
    %2104 = vmatmul.bf16.gmra.mxu0 %v488
    %v2105 = vpop.f32.mrf.mxu0
    %v2106 = vadd.f32 %v2017, %v2105
    %v2107 = vpop.f32.mrf.mxu0
    %v2108 = vadd.f32 %v2019, %v2107
    %2109 = vmatmul.bf16.gmra.mxu0 %v492
    %v2110 = vpop.f32.mrf.mxu0
    %v2111 = vadd.f32 %v2022, %v2110
    %v2112 = vpop.f32.mrf.mxu0
    %v2113 = vadd.f32 %v2024, %v2112
    %2114 = vmatmul.bf16.gmra.mxu0 %v496
    %v2115 = vpop.f32.mrf.mxu0
    %v2116 = vadd.f32 %v2027, %v2115
    %v2117 = vpop.f32.mrf.mxu0
    %v2118 = vadd.f32 %v2029, %v2117
    %2119 = vmatmul.bf16.gmra.mxu0 %v500
    %v2120 = vpop.f32.mrf.mxu0
    %v2121 = vadd.f32 %v2032, %v2120
    %v2122 = vpop.f32.mrf.mxu0
    %v2123 = vadd.f32 %v2034, %v2122
    %2124 = vmatmul.bf16.gmra.mxu0 %v504
    %v2125 = vpop.f32.mrf.mxu0
    %v2126 = vadd.f32 %v2037, %v2125
    %v2127 = vpop.f32.mrf.mxu0
    %v2128 = vadd.f32 %v2039, %v2127
    %2129 = vmatmul.bf16.gmra.mxu0 %v508
    %v2130 = vpop.f32.mrf.mxu0
    %v2131 = vadd.f32 %v2042, %v2130
    %v2132 = vpop.f32.mrf.mxu0
    %v2133 = vadd.f32 %v2044, %v2132
    %2134 = vmatmul.bf16.gmra.mxu0 %v512
    %v2135 = vpop.f32.mrf.mxu0
    %v2136 = vadd.f32 %v2047, %v2135
    %v2137 = vpop.f32.mrf.mxu0
    %v2138 = vadd.f32 %v2049, %v2137
    %2139 = vmatmul.bf16.gmra.mxu0 %v516
    %v2140 = vpop.f32.mrf.mxu0
    %v2141 = vadd.f32 %v2052, %v2140
    %v2142 = vpop.f32.mrf.mxu0
    %v2143 = vadd.f32 %v2054, %v2142
    %2144 = vmatmul.bf16.gmra.mxu0 %v520
    %v2145 = vpop.f32.mrf.mxu0
    %v2146 = vadd.f32 %v2057, %v2145
    %v2147 = vpop.f32.mrf.mxu0
    %v2148 = vadd.f32 %v2059, %v2147
    %2149 = vdwg.mxu0
    %2150 = vmatpush.bf16.msra.mxu0 0
    %2151 = vmatpush.bf16.msra.mxu0 0
    %2152 = vmatpush.bf16.msra.mxu0 0
    %2153 = vmatpush.bf16.msra.mxu0 0
    %2154 = vmatpush.bf16.msra.mxu0 0
    %2155 = vmatpush.bf16.msra.mxu0 0
    %2156 = vmatpush.bf16.msra.mxu0 0
    %2157 = vmatpush.bf16.msra.mxu0 %v1020
    %2158 = vmatmul.bf16.gmra.mxu0 %v1124
    %v2159 = vpop.f32.mrf.mxu0
    %v2160 = vadd.f32 %v2071, %v2159
    %v2161 = vpop.f32.mrf.mxu0
    %v2162 = vadd.f32 %v2073, %v2161
    %2163 = vmatmul.bf16.gmra.mxu0 %v1127
    %v2164 = vpop.f32.mrf.mxu0
    %v2165 = vadd.f32 %v2076, %v2164
    %v2166 = vpop.f32.mrf.mxu0
    %v2167 = vadd.f32 %v2078, %v2166
    %2168 = vmatmul.bf16.gmra.mxu0 %v1130
    %v2169 = vpop.f32.mrf.mxu0
    %v2170 = vadd.f32 %v2081, %v2169
    %v2171 = vpop.f32.mrf.mxu0
    %v2172 = vadd.f32 %v2083, %v2171
    %2173 = vmatmul.bf16.gmra.mxu0 %v1133
    %v2174 = vpop.f32.mrf.mxu0
    %v2175 = vadd.f32 %v2086, %v2174
    %v2176 = vpop.f32.mrf.mxu0
    %v2177 = vadd.f32 %v2088, %v2176
    %2178 = vmatmul.bf16.gmra.mxu0 %v1136
    %v2179 = vpop.f32.mrf.mxu0
    %v2180 = vadd.f32 %v2091, %v2179
    %v2181 = vpop.f32.mrf.mxu0
    %v2182 = vadd.f32 %v2093, %v2181
    %2183 = vmatmul.bf16.gmra.mxu0 %v1139
    %v2184 = vpop.f32.mrf.mxu0
    %v2185 = vadd.f32 %v2096, %v2184
    %v2186 = vpop.f32.mrf.mxu0
    %v2187 = vadd.f32 %v2098, %v2186
    %2188 = vmatmul.bf16.gmra.mxu0 %v1142
    %v2189 = vpop.f32.mrf.mxu0
    %v2190 = vadd.f32 %v2101, %v2189
    %v2191 = vpop.f32.mrf.mxu0
    %v2192 = vadd.f32 %v2103, %v2191
    %2193 = vmatmul.bf16.gmra.mxu0 %v1145
    %v2194 = vpop.f32.mrf.mxu0
    %v2195 = vadd.f32 %v2106, %v2194
    %v2196 = vpop.f32.mrf.mxu0
    %v2197 = vadd.f32 %v2108, %v2196
    %2198 = vmatmul.bf16.gmra.mxu0 %v1148
    %v2199 = vpop.f32.mrf.mxu0
    %v2200 = vadd.f32 %v2111, %v2199
    %v2201 = vpop.f32.mrf.mxu0
    %v2202 = vadd.f32 %v2113, %v2201
    %2203 = vmatmul.bf16.gmra.mxu0 %v1151
    %v2204 = vpop.f32.mrf.mxu0
    %v2205 = vadd.f32 %v2116, %v2204
    %v2206 = vpop.f32.mrf.mxu0
    %v2207 = vadd.f32 %v2118, %v2206
    %2208 = vmatmul.bf16.gmra.mxu0 %v1154
    %v2209 = vpop.f32.mrf.mxu0
    %v2210 = vadd.f32 %v2121, %v2209
    %v2211 = vpop.f32.mrf.mxu0
    %v2212 = vadd.f32 %v2123, %v2211
    %2213 = vmatmul.bf16.gmra.mxu0 %v1157
    %v2214 = vpop.f32.mrf.mxu0
    %v2215 = vadd.f32 %v2126, %v2214
    %v2216 = vpop.f32.mrf.mxu0
    %v2217 = vadd.f32 %v2128, %v2216
    %2218 = vmatmul.bf16.gmra.mxu0 %v1160
    %v2219 = vpop.f32.mrf.mxu0
    %v2220 = vadd.f32 %v2131, %v2219
    %v2221 = vpop.f32.mrf.mxu0
    %v2222 = vadd.f32 %v2133, %v2221
    %2223 = vmatmul.bf16.gmra.mxu0 %v1163
    %v2224 = vpop.f32.mrf.mxu0
    %v2225 = vadd.f32 %v2136, %v2224
    %v2226 = vpop.f32.mrf.mxu0
    %v2227 = vadd.f32 %v2138, %v2226
    %2228 = vmatmul.bf16.gmra.mxu0 %v1166
    %v2229 = vpop.f32.mrf.mxu0
    %v2230 = vadd.f32 %v2141, %v2229
    %v2231 = vpop.f32.mrf.mxu0
    %v2232 = vadd.f32 %v2143, %v2231
    %2233 = vmatmul.bf16.gmra.mxu0 %v1169
    %v2234 = vpop.f32.mrf.mxu0
    %v2235 = vadd.f32 %v2146, %v2234
    %v2236 = vpop.f32.mrf.mxu0
    %v2237 = vadd.f32 %v2148, %v2236
    %2238 = vdwg.mxu0
    %2239 = vmatpush.bf16.msra.mxu0 %v953
    %2240 = vmatpush.bf16.msra.mxu0 %v949
    %2241 = vmatpush.bf16.msra.mxu0 %v945
    %2242 = vmatpush.bf16.msra.mxu0 %v941
    %2243 = vmatpush.bf16.msra.mxu0 %v937
    %2244 = vmatpush.bf16.msra.mxu0 %v933
    %2245 = vmatpush.bf16.msra.mxu0 %v929
    %2246 = vmatpush.bf16.msra.mxu0 %v925
    %2247 = vmatmul.bf16.gmra.mxu0 %v458
    %v2248 = vpop.f32.mrf.mxu0
    %v2249 = vadd.f32 0.0, %v2248
    %v2250 = vpop.f32.mrf.mxu0
    %v2251 = vadd.f32 0.0, %v2250
    %2252 = vmatmul.bf16.gmra.mxu0 %v462
    %v2253 = vpop.f32.mrf.mxu0
    %v2254 = vadd.f32 0.0, %v2253
    %v2255 = vpop.f32.mrf.mxu0
    %v2256 = vadd.f32 0.0, %v2255
    %2257 = vmatmul.bf16.gmra.mxu0 %v466
    %v2258 = vpop.f32.mrf.mxu0
    %v2259 = vadd.f32 0.0, %v2258
    %v2260 = vpop.f32.mrf.mxu0
    %v2261 = vadd.f32 0.0, %v2260
    %2262 = vmatmul.bf16.gmra.mxu0 %v470
    %v2263 = vpop.f32.mrf.mxu0
    %v2264 = vadd.f32 0.0, %v2263
    %v2265 = vpop.f32.mrf.mxu0
    %v2266 = vadd.f32 0.0, %v2265
    %2267 = vmatmul.bf16.gmra.mxu0 %v474
    %v2268 = vpop.f32.mrf.mxu0
    %v2269 = vadd.f32 0.0, %v2268
    %v2270 = vpop.f32.mrf.mxu0
    %v2271 = vadd.f32 0.0, %v2270
    %2272 = vmatmul.bf16.gmra.mxu0 %v478
    %v2273 = vpop.f32.mrf.mxu0
    %v2274 = vadd.f32 0.0, %v2273
    %v2275 = vpop.f32.mrf.mxu0
    %v2276 = vadd.f32 0.0, %v2275
    %2277 = vmatmul.bf16.gmra.mxu0 %v482
    %v2278 = vpop.f32.mrf.mxu0
    %v2279 = vadd.f32 0.0, %v2278
    %v2280 = vpop.f32.mrf.mxu0
    %v2281 = vadd.f32 0.0, %v2280
    %2282 = vmatmul.bf16.gmra.mxu0 %v486
    %v2283 = vpop.f32.mrf.mxu0
    %v2284 = vadd.f32 0.0, %v2283
    %v2285 = vpop.f32.mrf.mxu0
    %v2286 = vadd.f32 0.0, %v2285
    %2287 = vmatmul.bf16.gmra.mxu0 %v490
    %v2288 = vpop.f32.mrf.mxu0
    %v2289 = vadd.f32 0.0, %v2288
    %v2290 = vpop.f32.mrf.mxu0
    %v2291 = vadd.f32 0.0, %v2290
    %2292 = vmatmul.bf16.gmra.mxu0 %v494
    %v2293 = vpop.f32.mrf.mxu0
    %v2294 = vadd.f32 0.0, %v2293
    %v2295 = vpop.f32.mrf.mxu0
    %v2296 = vadd.f32 0.0, %v2295
    %2297 = vmatmul.bf16.gmra.mxu0 %v498
    %v2298 = vpop.f32.mrf.mxu0
    %v2299 = vadd.f32 0.0, %v2298
    %v2300 = vpop.f32.mrf.mxu0
    %v2301 = vadd.f32 0.0, %v2300
    %2302 = vmatmul.bf16.gmra.mxu0 %v502
    %v2303 = vpop.f32.mrf.mxu0
    %v2304 = vadd.f32 0.0, %v2303
    %v2305 = vpop.f32.mrf.mxu0
    %v2306 = vadd.f32 0.0, %v2305
    %2307 = vmatmul.bf16.gmra.mxu0 %v506
    %v2308 = vpop.f32.mrf.mxu0
    %v2309 = vadd.f32 0.0, %v2308
    %v2310 = vpop.f32.mrf.mxu0
    %v2311 = vadd.f32 0.0, %v2310
    %2312 = vmatmul.bf16.gmra.mxu0 %v510
    %v2313 = vpop.f32.mrf.mxu0
    %v2314 = vadd.f32 0.0, %v2313
    %v2315 = vpop.f32.mrf.mxu0
    %v2316 = vadd.f32 0.0, %v2315
    %2317 = vmatmul.bf16.gmra.mxu0 %v514
    %v2318 = vpop.f32.mrf.mxu0
    %v2319 = vadd.f32 0.0, %v2318
    %v2320 = vpop.f32.mrf.mxu0
    %v2321 = vadd.f32 0.0, %v2320
    %2322 = vmatmul.bf16.gmra.mxu0 %v518
    %v2323 = vpop.f32.mrf.mxu0
    %v2324 = vadd.f32 0.0, %v2323
    %v2325 = vpop.f32.mrf.mxu0
    %v2326 = vadd.f32 0.0, %v2325
    %2327 = vdwg.mxu0
    %2328 = vmatpush.bf16.msra.mxu0 %v985
    %2329 = vmatpush.bf16.msra.mxu0 %v981
    %2330 = vmatpush.bf16.msra.mxu0 %v977
    %2331 = vmatpush.bf16.msra.mxu0 %v973
    %2332 = vmatpush.bf16.msra.mxu0 %v969
    %2333 = vmatpush.bf16.msra.mxu0 %v965
    %2334 = vmatpush.bf16.msra.mxu0 %v961
    %2335 = vmatpush.bf16.msra.mxu0 %v957
    %2336 = vmatmul.bf16.gmra.mxu0 %v459
    %v2337 = vpop.f32.mrf.mxu0
    %v2338 = vadd.f32 %v2249, %v2337
    %v2339 = vpop.f32.mrf.mxu0
    %v2340 = vadd.f32 %v2251, %v2339
    %2341 = vmatmul.bf16.gmra.mxu0 %v463
    %v2342 = vpop.f32.mrf.mxu0
    %v2343 = vadd.f32 %v2254, %v2342
    %v2344 = vpop.f32.mrf.mxu0
    %v2345 = vadd.f32 %v2256, %v2344
    %2346 = vmatmul.bf16.gmra.mxu0 %v467
    %v2347 = vpop.f32.mrf.mxu0
    %v2348 = vadd.f32 %v2259, %v2347
    %v2349 = vpop.f32.mrf.mxu0
    %v2350 = vadd.f32 %v2261, %v2349
    %2351 = vmatmul.bf16.gmra.mxu0 %v471
    %v2352 = vpop.f32.mrf.mxu0
    %v2353 = vadd.f32 %v2264, %v2352
    %v2354 = vpop.f32.mrf.mxu0
    %v2355 = vadd.f32 %v2266, %v2354
    %2356 = vmatmul.bf16.gmra.mxu0 %v475
    %v2357 = vpop.f32.mrf.mxu0
    %v2358 = vadd.f32 %v2269, %v2357
    %v2359 = vpop.f32.mrf.mxu0
    %v2360 = vadd.f32 %v2271, %v2359
    %2361 = vmatmul.bf16.gmra.mxu0 %v479
    %v2362 = vpop.f32.mrf.mxu0
    %v2363 = vadd.f32 %v2274, %v2362
    %v2364 = vpop.f32.mrf.mxu0
    %v2365 = vadd.f32 %v2276, %v2364
    %2366 = vmatmul.bf16.gmra.mxu0 %v483
    %v2367 = vpop.f32.mrf.mxu0
    %v2368 = vadd.f32 %v2279, %v2367
    %v2369 = vpop.f32.mrf.mxu0
    %v2370 = vadd.f32 %v2281, %v2369
    %2371 = vmatmul.bf16.gmra.mxu0 %v487
    %v2372 = vpop.f32.mrf.mxu0
    %v2373 = vadd.f32 %v2284, %v2372
    %v2374 = vpop.f32.mrf.mxu0
    %v2375 = vadd.f32 %v2286, %v2374
    %2376 = vmatmul.bf16.gmra.mxu0 %v491
    %v2377 = vpop.f32.mrf.mxu0
    %v2378 = vadd.f32 %v2289, %v2377
    %v2379 = vpop.f32.mrf.mxu0
    %v2380 = vadd.f32 %v2291, %v2379
    %2381 = vmatmul.bf16.gmra.mxu0 %v495
    %v2382 = vpop.f32.mrf.mxu0
    %v2383 = vadd.f32 %v2294, %v2382
    %v2384 = vpop.f32.mrf.mxu0
    %v2385 = vadd.f32 %v2296, %v2384
    %2386 = vmatmul.bf16.gmra.mxu0 %v499
    %v2387 = vpop.f32.mrf.mxu0
    %v2388 = vadd.f32 %v2299, %v2387
    %v2389 = vpop.f32.mrf.mxu0
    %v2390 = vadd.f32 %v2301, %v2389
    %2391 = vmatmul.bf16.gmra.mxu0 %v503
    %v2392 = vpop.f32.mrf.mxu0
    %v2393 = vadd.f32 %v2304, %v2392
    %v2394 = vpop.f32.mrf.mxu0
    %v2395 = vadd.f32 %v2306, %v2394
    %2396 = vmatmul.bf16.gmra.mxu0 %v507
    %v2397 = vpop.f32.mrf.mxu0
    %v2398 = vadd.f32 %v2309, %v2397
    %v2399 = vpop.f32.mrf.mxu0
    %v2400 = vadd.f32 %v2311, %v2399
    %2401 = vmatmul.bf16.gmra.mxu0 %v511
    %v2402 = vpop.f32.mrf.mxu0
    %v2403 = vadd.f32 %v2314, %v2402
    %v2404 = vpop.f32.mrf.mxu0
    %v2405 = vadd.f32 %v2316, %v2404
    %2406 = vmatmul.bf16.gmra.mxu0 %v515
    %v2407 = vpop.f32.mrf.mxu0
    %v2408 = vadd.f32 %v2319, %v2407
    %v2409 = vpop.f32.mrf.mxu0
    %v2410 = vadd.f32 %v2321, %v2409
    %2411 = vmatmul.bf16.gmra.mxu0 %v519
    %v2412 = vpop.f32.mrf.mxu0
    %v2413 = vadd.f32 %v2324, %v2412
    %v2414 = vpop.f32.mrf.mxu0
    %v2415 = vadd.f32 %v2326, %v2414
    %2416 = vdwg.mxu0
    %2417 = vmatpush.bf16.msra.mxu0 %v1017
    %2418 = vmatpush.bf16.msra.mxu0 %v1013
    %2419 = vmatpush.bf16.msra.mxu0 %v1009
    %2420 = vmatpush.bf16.msra.mxu0 %v1005
    %2421 = vmatpush.bf16.msra.mxu0 %v1001
    %2422 = vmatpush.bf16.msra.mxu0 %v997
    %2423 = vmatpush.bf16.msra.mxu0 %v993
    %2424 = vmatpush.bf16.msra.mxu0 %v989
    %2425 = vmatmul.bf16.gmra.mxu0 %v460
    %v2426 = vpop.f32.mrf.mxu0
    %v2427 = vadd.f32 %v2338, %v2426
    %v2428 = vpop.f32.mrf.mxu0
    %v2429 = vadd.f32 %v2340, %v2428
    %2430 = vmatmul.bf16.gmra.mxu0 %v464
    %v2431 = vpop.f32.mrf.mxu0
    %v2432 = vadd.f32 %v2343, %v2431
    %v2433 = vpop.f32.mrf.mxu0
    %v2434 = vadd.f32 %v2345, %v2433
    %2435 = vmatmul.bf16.gmra.mxu0 %v468
    %v2436 = vpop.f32.mrf.mxu0
    %v2437 = vadd.f32 %v2348, %v2436
    %v2438 = vpop.f32.mrf.mxu0
    %v2439 = vadd.f32 %v2350, %v2438
    %2440 = vmatmul.bf16.gmra.mxu0 %v472
    %v2441 = vpop.f32.mrf.mxu0
    %v2442 = vadd.f32 %v2353, %v2441
    %v2443 = vpop.f32.mrf.mxu0
    %v2444 = vadd.f32 %v2355, %v2443
    %2445 = vmatmul.bf16.gmra.mxu0 %v476
    %v2446 = vpop.f32.mrf.mxu0
    %v2447 = vadd.f32 %v2358, %v2446
    %v2448 = vpop.f32.mrf.mxu0
    %v2449 = vadd.f32 %v2360, %v2448
    %2450 = vmatmul.bf16.gmra.mxu0 %v480
    %v2451 = vpop.f32.mrf.mxu0
    %v2452 = vadd.f32 %v2363, %v2451
    %v2453 = vpop.f32.mrf.mxu0
    %v2454 = vadd.f32 %v2365, %v2453
    %2455 = vmatmul.bf16.gmra.mxu0 %v484
    %v2456 = vpop.f32.mrf.mxu0
    %v2457 = vadd.f32 %v2368, %v2456
    %v2458 = vpop.f32.mrf.mxu0
    %v2459 = vadd.f32 %v2370, %v2458
    %2460 = vmatmul.bf16.gmra.mxu0 %v488
    %v2461 = vpop.f32.mrf.mxu0
    %v2462 = vadd.f32 %v2373, %v2461
    %v2463 = vpop.f32.mrf.mxu0
    %v2464 = vadd.f32 %v2375, %v2463
    %2465 = vmatmul.bf16.gmra.mxu0 %v492
    %v2466 = vpop.f32.mrf.mxu0
    %v2467 = vadd.f32 %v2378, %v2466
    %v2468 = vpop.f32.mrf.mxu0
    %v2469 = vadd.f32 %v2380, %v2468
    %2470 = vmatmul.bf16.gmra.mxu0 %v496
    %v2471 = vpop.f32.mrf.mxu0
    %v2472 = vadd.f32 %v2383, %v2471
    %v2473 = vpop.f32.mrf.mxu0
    %v2474 = vadd.f32 %v2385, %v2473
    %2475 = vmatmul.bf16.gmra.mxu0 %v500
    %v2476 = vpop.f32.mrf.mxu0
    %v2477 = vadd.f32 %v2388, %v2476
    %v2478 = vpop.f32.mrf.mxu0
    %v2479 = vadd.f32 %v2390, %v2478
    %2480 = vmatmul.bf16.gmra.mxu0 %v504
    %v2481 = vpop.f32.mrf.mxu0
    %v2482 = vadd.f32 %v2393, %v2481
    %v2483 = vpop.f32.mrf.mxu0
    %v2484 = vadd.f32 %v2395, %v2483
    %2485 = vmatmul.bf16.gmra.mxu0 %v508
    %v2486 = vpop.f32.mrf.mxu0
    %v2487 = vadd.f32 %v2398, %v2486
    %v2488 = vpop.f32.mrf.mxu0
    %v2489 = vadd.f32 %v2400, %v2488
    %2490 = vmatmul.bf16.gmra.mxu0 %v512
    %v2491 = vpop.f32.mrf.mxu0
    %v2492 = vadd.f32 %v2403, %v2491
    %v2493 = vpop.f32.mrf.mxu0
    %v2494 = vadd.f32 %v2405, %v2493
    %2495 = vmatmul.bf16.gmra.mxu0 %v516
    %v2496 = vpop.f32.mrf.mxu0
    %v2497 = vadd.f32 %v2408, %v2496
    %v2498 = vpop.f32.mrf.mxu0
    %v2499 = vadd.f32 %v2410, %v2498
    %2500 = vmatmul.bf16.gmra.mxu0 %v520
    %v2501 = vpop.f32.mrf.mxu0
    %v2502 = vadd.f32 %v2413, %v2501
    %v2503 = vpop.f32.mrf.mxu0
    %v2504 = vadd.f32 %v2415, %v2503
    %2505 = vdwg.mxu0
    %2506 = vmatpush.bf16.msra.mxu0 0
    %2507 = vmatpush.bf16.msra.mxu0 0
    %2508 = vmatpush.bf16.msra.mxu0 0
    %2509 = vmatpush.bf16.msra.mxu0 0
    %2510 = vmatpush.bf16.msra.mxu0 0
    %2511 = vmatpush.bf16.msra.mxu0 0
    %2512 = vmatpush.bf16.msra.mxu0 0
    %2513 = vmatpush.bf16.msra.mxu0 %v1021
    %2514 = vmatmul.bf16.gmra.mxu0 %v1124
    %v2515 = vpop.f32.mrf.mxu0
    %v2516 = vadd.f32 %v2427, %v2515
    %v2517 = vpop.f32.mrf.mxu0
    %v2518 = vadd.f32 %v2429, %v2517
    %2519 = vmatmul.bf16.gmra.mxu0 %v1127
    %v2520 = vpop.f32.mrf.mxu0
    %v2521 = vadd.f32 %v2432, %v2520
    %v2522 = vpop.f32.mrf.mxu0
    %v2523 = vadd.f32 %v2434, %v2522
    %2524 = vmatmul.bf16.gmra.mxu0 %v1130
    %v2525 = vpop.f32.mrf.mxu0
    %v2526 = vadd.f32 %v2437, %v2525
    %v2527 = vpop.f32.mrf.mxu0
    %v2528 = vadd.f32 %v2439, %v2527
    %2529 = vmatmul.bf16.gmra.mxu0 %v1133
    %v2530 = vpop.f32.mrf.mxu0
    %v2531 = vadd.f32 %v2442, %v2530
    %v2532 = vpop.f32.mrf.mxu0
    %v2533 = vadd.f32 %v2444, %v2532
    %2534 = vmatmul.bf16.gmra.mxu0 %v1136
    %v2535 = vpop.f32.mrf.mxu0
    %v2536 = vadd.f32 %v2447, %v2535
    %v2537 = vpop.f32.mrf.mxu0
    %v2538 = vadd.f32 %v2449, %v2537
    %2539 = vmatmul.bf16.gmra.mxu0 %v1139
    %v2540 = vpop.f32.mrf.mxu0
    %v2541 = vadd.f32 %v2452, %v2540
    %v2542 = vpop.f32.mrf.mxu0
    %v2543 = vadd.f32 %v2454, %v2542
    %2544 = vmatmul.bf16.gmra.mxu0 %v1142
    %v2545 = vpop.f32.mrf.mxu0
    %v2546 = vadd.f32 %v2457, %v2545
    %v2547 = vpop.f32.mrf.mxu0
    %v2548 = vadd.f32 %v2459, %v2547
    %2549 = vmatmul.bf16.gmra.mxu0 %v1145
    %v2550 = vpop.f32.mrf.mxu0
    %v2551 = vadd.f32 %v2462, %v2550
    %v2552 = vpop.f32.mrf.mxu0
    %v2553 = vadd.f32 %v2464, %v2552
    %2554 = vmatmul.bf16.gmra.mxu0 %v1148
    %v2555 = vpop.f32.mrf.mxu0
    %v2556 = vadd.f32 %v2467, %v2555
    %v2557 = vpop.f32.mrf.mxu0
    %v2558 = vadd.f32 %v2469, %v2557
    %2559 = vmatmul.bf16.gmra.mxu0 %v1151
    %v2560 = vpop.f32.mrf.mxu0
    %v2561 = vadd.f32 %v2472, %v2560
    %v2562 = vpop.f32.mrf.mxu0
    %v2563 = vadd.f32 %v2474, %v2562
    %2564 = vmatmul.bf16.gmra.mxu0 %v1154
    %v2565 = vpop.f32.mrf.mxu0
    %v2566 = vadd.f32 %v2477, %v2565
    %v2567 = vpop.f32.mrf.mxu0
    %v2568 = vadd.f32 %v2479, %v2567
    %2569 = vmatmul.bf16.gmra.mxu0 %v1157
    %v2570 = vpop.f32.mrf.mxu0
    %v2571 = vadd.f32 %v2482, %v2570
    %v2572 = vpop.f32.mrf.mxu0
    %v2573 = vadd.f32 %v2484, %v2572
    %2574 = vmatmul.bf16.gmra.mxu0 %v1160
    %v2575 = vpop.f32.mrf.mxu0
    %v2576 = vadd.f32 %v2487, %v2575
    %v2577 = vpop.f32.mrf.mxu0
    %v2578 = vadd.f32 %v2489, %v2577
    %2579 = vmatmul.bf16.gmra.mxu0 %v1163
    %v2580 = vpop.f32.mrf.mxu0
    %v2581 = vadd.f32 %v2492, %v2580
    %v2582 = vpop.f32.mrf.mxu0
    %v2583 = vadd.f32 %v2494, %v2582
    %2584 = vmatmul.bf16.gmra.mxu0 %v1166
    %v2585 = vpop.f32.mrf.mxu0
    %v2586 = vadd.f32 %v2497, %v2585
    %v2587 = vpop.f32.mrf.mxu0
    %v2588 = vadd.f32 %v2499, %v2587
    %2589 = vmatmul.bf16.gmra.mxu0 %v1169
    %v2590 = vpop.f32.mrf.mxu0
    %v2591 = vadd.f32 %v2502, %v2590
    %v2592 = vpop.f32.mrf.mxu0
    %v2593 = vadd.f32 %v2504, %v2592
    %2594 = vdwg.mxu0
    %v2595 = vadd.f32 %v1448, %v1450
    %v2596 = vadd.f32 %v2595, %v1453
    %v2597 = vadd.f32 %v2596, %v1455
    %v2598 = vadd.f32 %v2597, %v1458
    %v2599 = vadd.f32 %v2598, %v1460
    %v2600 = vadd.f32 %v2599, %v1463
    %v2601 = vadd.f32 %v2600, %v1465
    %v2602 = vadd.f32 %v2601, %v1468
    %v2603 = vadd.f32 %v2602, %v1470
    %v2604 = vadd.f32 %v2603, %v1473
    %v2605 = vadd.f32 %v2604, %v1475
    %v2606 = vadd.f32 %v2605, %v1478
    %v2607 = vadd.f32 %v2606, %v1480
    %v2608 = vadd.f32 %v2607, %v1483
    %v2609 = vadd.f32 %v2608, %v1485
    %v2610 = vadd.f32 %v2609, %v1488
    %v2611 = vadd.f32 %v2610, %v1490
    %v2612 = vadd.f32 %v2611, %v1493
    %v2613 = vadd.f32 %v2612, %v1495
    %v2614 = vadd.f32 %v2613, %v1498
    %v2615 = vadd.f32 %v2614, %v1500
    %v2616 = vadd.f32 %v2615, %v1503
    %v2617 = vadd.f32 %v2616, %v1505
    %v2618 = vadd.f32 %v2617, %v1508
    %v2619 = vadd.f32 %v2618, %v1510
    %v2620 = vadd.f32 %v2619, %v1513
    %v2621 = vadd.f32 %v2620, %v1515
    %v2622 = vadd.f32 %v2621, %v1518
    %v2623 = vadd.f32 %v2622, %v1520
    %v2624 = vadd.f32 %v2623, %v1523
    %v2625 = vadd.f32 %v2624, %v1525
    %v2626 = vrot.slane %v2625, 4
    %v2627 = vadd.f32 %v2625, %v2626
    %v2628 = vrot.slane %v2627, 2
    %v2629 = vadd.f32 %v2627, %v2628
    %v2630 = vrot.slane %v2629, 1
    %v2631 = vadd.f32 %v2629, %v2630
    %v2632 = vadd.f32 %v1804, %v1806
    %v2633 = vadd.f32 %v2632, %v1809
    %v2634 = vadd.f32 %v2633, %v1811
    %v2635 = vadd.f32 %v2634, %v1814
    %v2636 = vadd.f32 %v2635, %v1816
    %v2637 = vadd.f32 %v2636, %v1819
    %v2638 = vadd.f32 %v2637, %v1821
    %v2639 = vadd.f32 %v2638, %v1824
    %v2640 = vadd.f32 %v2639, %v1826
    %v2641 = vadd.f32 %v2640, %v1829
    %v2642 = vadd.f32 %v2641, %v1831
    %v2643 = vadd.f32 %v2642, %v1834
    %v2644 = vadd.f32 %v2643, %v1836
    %v2645 = vadd.f32 %v2644, %v1839
    %v2646 = vadd.f32 %v2645, %v1841
    %v2647 = vadd.f32 %v2646, %v1844
    %v2648 = vadd.f32 %v2647, %v1846
    %v2649 = vadd.f32 %v2648, %v1849
    %v2650 = vadd.f32 %v2649, %v1851
    %v2651 = vadd.f32 %v2650, %v1854
    %v2652 = vadd.f32 %v2651, %v1856
    %v2653 = vadd.f32 %v2652, %v1859
    %v2654 = vadd.f32 %v2653, %v1861
    %v2655 = vadd.f32 %v2654, %v1864
    %v2656 = vadd.f32 %v2655, %v1866
    %v2657 = vadd.f32 %v2656, %v1869
    %v2658 = vadd.f32 %v2657, %v1871
    %v2659 = vadd.f32 %v2658, %v1874
    %v2660 = vadd.f32 %v2659, %v1876
    %v2661 = vadd.f32 %v2660, %v1879
    %v2662 = vadd.f32 %v2661, %v1881
    %v2663 = vrot.slane %v2662, 4
    %v2664 = vadd.f32 %v2662, %v2663
    %v2665 = vrot.slane %v2664, 2
    %v2666 = vadd.f32 %v2664, %v2665
    %v2667 = vrot.slane %v2666, 1
    %v2668 = vadd.f32 %v2666, %v2667
    %v2669 = vadd.f32 %v2160, %v2162
    %v2670 = vadd.f32 %v2669, %v2165
    %v2671 = vadd.f32 %v2670, %v2167
    %v2672 = vadd.f32 %v2671, %v2170
    %v2673 = vadd.f32 %v2672, %v2172
    %v2674 = vadd.f32 %v2673, %v2175
    %v2675 = vadd.f32 %v2674, %v2177
    %v2676 = vadd.f32 %v2675, %v2180
    %v2677 = vadd.f32 %v2676, %v2182
    %v2678 = vadd.f32 %v2677, %v2185
    %v2679 = vadd.f32 %v2678, %v2187
    %v2680 = vadd.f32 %v2679, %v2190
    %v2681 = vadd.f32 %v2680, %v2192
    %v2682 = vadd.f32 %v2681, %v2195
    %v2683 = vadd.f32 %v2682, %v2197
    %v2684 = vadd.f32 %v2683, %v2200
    %v2685 = vadd.f32 %v2684, %v2202
    %v2686 = vadd.f32 %v2685, %v2205
    %v2687 = vadd.f32 %v2686, %v2207
    %v2688 = vadd.f32 %v2687, %v2210
    %v2689 = vadd.f32 %v2688, %v2212
    %v2690 = vadd.f32 %v2689, %v2215
    %v2691 = vadd.f32 %v2690, %v2217
    %v2692 = vadd.f32 %v2691, %v2220
    %v2693 = vadd.f32 %v2692, %v2222
    %v2694 = vadd.f32 %v2693, %v2225
    %v2695 = vadd.f32 %v2694, %v2227
    %v2696 = vadd.f32 %v2695, %v2230
    %v2697 = vadd.f32 %v2696, %v2232
    %v2698 = vadd.f32 %v2697, %v2235
    %v2699 = vadd.f32 %v2698, %v2237
    %v2700 = vrot.slane %v2699, 4
    %v2701 = vadd.f32 %v2699, %v2700
    %v2702 = vrot.slane %v2701, 2
    %v2703 = vadd.f32 %v2701, %v2702
    %v2704 = vrot.slane %v2703, 1
    %v2705 = vadd.f32 %v2703, %v2704
    %v2706 = vadd.f32 %v2516, %v2518
    %v2707 = vadd.f32 %v2706, %v2521
    %v2708 = vadd.f32 %v2707, %v2523
    %v2709 = vadd.f32 %v2708, %v2526
    %v2710 = vadd.f32 %v2709, %v2528
    %v2711 = vadd.f32 %v2710, %v2531
    %v2712 = vadd.f32 %v2711, %v2533
    %v2713 = vadd.f32 %v2712, %v2536
    %v2714 = vadd.f32 %v2713, %v2538
    %v2715 = vadd.f32 %v2714, %v2541
    %v2716 = vadd.f32 %v2715, %v2543
    %v2717 = vadd.f32 %v2716, %v2546
    %v2718 = vadd.f32 %v2717, %v2548
    %v2719 = vadd.f32 %v2718, %v2551
    %v2720 = vadd.f32 %v2719, %v2553
    %v2721 = vadd.f32 %v2720, %v2556
    %v2722 = vadd.f32 %v2721, %v2558
    %v2723 = vadd.f32 %v2722, %v2561
    %v2724 = vadd.f32 %v2723, %v2563
    %v2725 = vadd.f32 %v2724, %v2566
    %v2726 = vadd.f32 %v2725, %v2568
    %v2727 = vadd.f32 %v2726, %v2571
    %v2728 = vadd.f32 %v2727, %v2573
    %v2729 = vadd.f32 %v2728, %v2576
    %v2730 = vadd.f32 %v2729, %v2578
    %v2731 = vadd.f32 %v2730, %v2581
    %v2732 = vadd.f32 %v2731, %v2583
    %v2733 = vadd.f32 %v2732, %v2586
    %v2734 = vadd.f32 %v2733, %v2588
    %v2735 = vadd.f32 %v2734, %v2591
    %v2736 = vadd.f32 %v2735, %v2593
    %v2737 = vrot.slane %v2736, 4
    %v2738 = vadd.f32 %v2736, %v2737
    %v2739 = vrot.slane %v2738, 2
    %v2740 = vadd.f32 %v2738, %v2739
    %v2741 = vrot.slane %v2740, 1
    %v2742 = vadd.f32 %v2740, %v2741
    %v2743 = vmul.f32 %v2631, 0.00390625
    %v2744 = vmul.f32 %v2668, 0.00390625
    %v2745 = vmul.f32 %v2705, 0.00390625
    %v2746 = vmul.f32 %v2742, 0.00390625
    %v2747 = vmul.f32 %v1448, %v1448
    %v2748 = vmul.f32 %v1804, %v1804
    %v2749 = vmul.f32 %v2160, %v2160
    %v2750 = vmul.f32 %v2516, %v2516
    %v2751 = vmul.f32 %v1450, %v1450
    %v2752 = vmul.f32 %v1806, %v1806
    %v2753 = vmul.f32 %v2162, %v2162
    %v2754 = vmul.f32 %v2518, %v2518
    %v2755 = vmul.f32 %v1453, %v1453
    %v2756 = vmul.f32 %v1809, %v1809
    %v2757 = vmul.f32 %v2165, %v2165
    %v2758 = vmul.f32 %v2521, %v2521
    %v2759 = vmul.f32 %v1455, %v1455
    %v2760 = vmul.f32 %v1811, %v1811
    %v2761 = vmul.f32 %v2167, %v2167
    %v2762 = vmul.f32 %v2523, %v2523
    %v2763 = vmul.f32 %v1458, %v1458
    %v2764 = vmul.f32 %v1814, %v1814
    %v2765 = vmul.f32 %v2170, %v2170
    %v2766 = vmul.f32 %v2526, %v2526
    %v2767 = vmul.f32 %v1460, %v1460
    %v2768 = vmul.f32 %v1816, %v1816
    %v2769 = vmul.f32 %v2172, %v2172
    %v2770 = vmul.f32 %v2528, %v2528
    %v2771 = vmul.f32 %v1463, %v1463
    %v2772 = vmul.f32 %v1819, %v1819
    %v2773 = vmul.f32 %v2175, %v2175
    %v2774 = vmul.f32 %v2531, %v2531
    %v2775 = vmul.f32 %v1465, %v1465
    %v2776 = vmul.f32 %v1821, %v1821
    %v2777 = vmul.f32 %v2177, %v2177
    %v2778 = vmul.f32 %v2533, %v2533
    %v2779 = vmul.f32 %v1468, %v1468
    %v2780 = vmul.f32 %v1824, %v1824
    %v2781 = vmul.f32 %v2180, %v2180
    %v2782 = vmul.f32 %v2536, %v2536
    %v2783 = vmul.f32 %v1470, %v1470
    %v2784 = vmul.f32 %v1826, %v1826
    %v2785 = vmul.f32 %v2182, %v2182
    %v2786 = vmul.f32 %v2538, %v2538
    %v2787 = vmul.f32 %v1473, %v1473
    %v2788 = vmul.f32 %v1829, %v1829
    %v2789 = vmul.f32 %v2185, %v2185
    %v2790 = vmul.f32 %v2541, %v2541
    %v2791 = vmul.f32 %v1475, %v1475
    %v2792 = vmul.f32 %v1831, %v1831
    %v2793 = vmul.f32 %v2187, %v2187
    %v2794 = vmul.f32 %v2543, %v2543
    %v2795 = vmul.f32 %v1478, %v1478
    %v2796 = vmul.f32 %v1834, %v1834
    %v2797 = vmul.f32 %v2190, %v2190
    %v2798 = vmul.f32 %v2546, %v2546
    %v2799 = vmul.f32 %v1480, %v1480
    %v2800 = vmul.f32 %v1836, %v1836
    %v2801 = vmul.f32 %v2192, %v2192
    %v2802 = vmul.f32 %v2548, %v2548
    %v2803 = vmul.f32 %v1483, %v1483
    %v2804 = vmul.f32 %v1839, %v1839
    %v2805 = vmul.f32 %v2195, %v2195
    %v2806 = vmul.f32 %v2551, %v2551
    %v2807 = vmul.f32 %v1485, %v1485
    %v2808 = vmul.f32 %v1841, %v1841
    %v2809 = vmul.f32 %v2197, %v2197
    %v2810 = vmul.f32 %v2553, %v2553
    %v2811 = vmul.f32 %v1488, %v1488
    %v2812 = vmul.f32 %v1844, %v1844
    %v2813 = vmul.f32 %v2200, %v2200
    %v2814 = vmul.f32 %v2556, %v2556
    %v2815 = vmul.f32 %v1490, %v1490
    %v2816 = vmul.f32 %v1846, %v1846
    %v2817 = vmul.f32 %v2202, %v2202
    %v2818 = vmul.f32 %v2558, %v2558
    %v2819 = vmul.f32 %v1493, %v1493
    %v2820 = vmul.f32 %v1849, %v1849
    %v2821 = vmul.f32 %v2205, %v2205
    %v2822 = vmul.f32 %v2561, %v2561
    %v2823 = vmul.f32 %v1495, %v1495
    %v2824 = vmul.f32 %v1851, %v1851
    %v2825 = vmul.f32 %v2207, %v2207
    %v2826 = vmul.f32 %v2563, %v2563
    %v2827 = vmul.f32 %v1498, %v1498
    %v2828 = vmul.f32 %v1854, %v1854
    %v2829 = vmul.f32 %v2210, %v2210
    %v2830 = vmul.f32 %v2566, %v2566
    %v2831 = vmul.f32 %v1500, %v1500
    %v2832 = vmul.f32 %v1856, %v1856
    %v2833 = vmul.f32 %v2212, %v2212
    %v2834 = vmul.f32 %v2568, %v2568
    %v2835 = vmul.f32 %v1503, %v1503
    %v2836 = vmul.f32 %v1859, %v1859
    %v2837 = vmul.f32 %v2215, %v2215
    %v2838 = vmul.f32 %v2571, %v2571
    %v2839 = vmul.f32 %v1505, %v1505
    %v2840 = vmul.f32 %v1861, %v1861
    %v2841 = vmul.f32 %v2217, %v2217
    %v2842 = vmul.f32 %v2573, %v2573
    %v2843 = vmul.f32 %v1508, %v1508
    %v2844 = vmul.f32 %v1864, %v1864
    %v2845 = vmul.f32 %v2220, %v2220
    %v2846 = vmul.f32 %v2576, %v2576
    %v2847 = vmul.f32 %v1510, %v1510
    %v2848 = vmul.f32 %v1866, %v1866
    %v2849 = vmul.f32 %v2222, %v2222
    %v2850 = vmul.f32 %v2578, %v2578
    %v2851 = vmul.f32 %v1513, %v1513
    %v2852 = vmul.f32 %v1869, %v1869
    %v2853 = vmul.f32 %v2225, %v2225
    %v2854 = vmul.f32 %v2581, %v2581
    %v2855 = vmul.f32 %v1515, %v1515
    %v2856 = vmul.f32 %v1871, %v1871
    %v2857 = vmul.f32 %v2227, %v2227
    %v2858 = vmul.f32 %v2583, %v2583
    %v2859 = vmul.f32 %v1518, %v1518
    %v2860 = vmul.f32 %v1874, %v1874
    %v2861 = vmul.f32 %v2230, %v2230
    %v2862 = vmul.f32 %v2586, %v2586
    %v2863 = vmul.f32 %v1520, %v1520
    %v2864 = vmul.f32 %v1876, %v1876
    %v2865 = vmul.f32 %v2232, %v2232
    %v2866 = vmul.f32 %v2588, %v2588
    %v2867 = vmul.f32 %v1523, %v1523
    %v2868 = vmul.f32 %v1879, %v1879
    %v2869 = vmul.f32 %v2235, %v2235
    %v2870 = vmul.f32 %v2591, %v2591
    %v2871 = vmul.f32 %v1525, %v1525
    %v2872 = vmul.f32 %v1881, %v1881
    %v2873 = vmul.f32 %v2237, %v2237
    %v2874 = vmul.f32 %v2593, %v2593
    %v2875 = vadd.f32 %v2747, %v2751
    %v2876 = vadd.f32 %v2875, %v2755
    %v2877 = vadd.f32 %v2876, %v2759
    %v2878 = vadd.f32 %v2877, %v2763
    %v2879 = vadd.f32 %v2878, %v2767
    %v2880 = vadd.f32 %v2879, %v2771
    %v2881 = vadd.f32 %v2880, %v2775
    %v2882 = vadd.f32 %v2881, %v2779
    %v2883 = vadd.f32 %v2882, %v2783
    %v2884 = vadd.f32 %v2883, %v2787
    %v2885 = vadd.f32 %v2884, %v2791
    %v2886 = vadd.f32 %v2885, %v2795
    %v2887 = vadd.f32 %v2886, %v2799
    %v2888 = vadd.f32 %v2887, %v2803
    %v2889 = vadd.f32 %v2888, %v2807
    %v2890 = vadd.f32 %v2889, %v2811
    %v2891 = vadd.f32 %v2890, %v2815
    %v2892 = vadd.f32 %v2891, %v2819
    %v2893 = vadd.f32 %v2892, %v2823
    %v2894 = vadd.f32 %v2893, %v2827
    %v2895 = vadd.f32 %v2894, %v2831
    %v2896 = vadd.f32 %v2895, %v2835
    %v2897 = vadd.f32 %v2896, %v2839
    %v2898 = vadd.f32 %v2897, %v2843
    %v2899 = vadd.f32 %v2898, %v2847
    %v2900 = vadd.f32 %v2899, %v2851
    %v2901 = vadd.f32 %v2900, %v2855
    %v2902 = vadd.f32 %v2901, %v2859
    %v2903 = vadd.f32 %v2902, %v2863
    %v2904 = vadd.f32 %v2903, %v2867
    %v2905 = vadd.f32 %v2904, %v2871
    %v2906 = vrot.slane %v2905, 4
    %v2907 = vadd.f32 %v2905, %v2906
    %v2908 = vrot.slane %v2907, 2
    %v2909 = vadd.f32 %v2907, %v2908
    %v2910 = vrot.slane %v2909, 1
    %v2911 = vadd.f32 %v2909, %v2910
    %v2912 = vadd.f32 %v2748, %v2752
    %v2913 = vadd.f32 %v2912, %v2756
    %v2914 = vadd.f32 %v2913, %v2760
    %v2915 = vadd.f32 %v2914, %v2764
    %v2916 = vadd.f32 %v2915, %v2768
    %v2917 = vadd.f32 %v2916, %v2772
    %v2918 = vadd.f32 %v2917, %v2776
    %v2919 = vadd.f32 %v2918, %v2780
    %v2920 = vadd.f32 %v2919, %v2784
    %v2921 = vadd.f32 %v2920, %v2788
    %v2922 = vadd.f32 %v2921, %v2792
    %v2923 = vadd.f32 %v2922, %v2796
    %v2924 = vadd.f32 %v2923, %v2800
    %v2925 = vadd.f32 %v2924, %v2804
    %v2926 = vadd.f32 %v2925, %v2808
    %v2927 = vadd.f32 %v2926, %v2812
    %v2928 = vadd.f32 %v2927, %v2816
    %v2929 = vadd.f32 %v2928, %v2820
    %v2930 = vadd.f32 %v2929, %v2824
    %v2931 = vadd.f32 %v2930, %v2828
    %v2932 = vadd.f32 %v2931, %v2832
    %v2933 = vadd.f32 %v2932, %v2836
    %v2934 = vadd.f32 %v2933, %v2840
    %v2935 = vadd.f32 %v2934, %v2844
    %v2936 = vadd.f32 %v2935, %v2848
    %v2937 = vadd.f32 %v2936, %v2852
    %v2938 = vadd.f32 %v2937, %v2856
    %v2939 = vadd.f32 %v2938, %v2860
    %v2940 = vadd.f32 %v2939, %v2864
    %v2941 = vadd.f32 %v2940, %v2868
    %v2942 = vadd.f32 %v2941, %v2872
    %v2943 = vrot.slane %v2942, 4
    %v2944 = vadd.f32 %v2942, %v2943
    %v2945 = vrot.slane %v2944, 2
    %v2946 = vadd.f32 %v2944, %v2945
    %v2947 = vrot.slane %v2946, 1
    %v2948 = vadd.f32 %v2946, %v2947
    %v2949 = vadd.f32 %v2749, %v2753
    %v2950 = vadd.f32 %v2949, %v2757
    %v2951 = vadd.f32 %v2950, %v2761
    %v2952 = vadd.f32 %v2951, %v2765
    %v2953 = vadd.f32 %v2952, %v2769
    %v2954 = vadd.f32 %v2953, %v2773
    %v2955 = vadd.f32 %v2954, %v2777
    %v2956 = vadd.f32 %v2955, %v2781
    %v2957 = vadd.f32 %v2956, %v2785
    %v2958 = vadd.f32 %v2957, %v2789
    %v2959 = vadd.f32 %v2958, %v2793
    %v2960 = vadd.f32 %v2959, %v2797
    %v2961 = vadd.f32 %v2960, %v2801
    %v2962 = vadd.f32 %v2961, %v2805
    %v2963 = vadd.f32 %v2962, %v2809
    %v2964 = vadd.f32 %v2963, %v2813
    %v2965 = vadd.f32 %v2964, %v2817
    %v2966 = vadd.f32 %v2965, %v2821
    %v2967 = vadd.f32 %v2966, %v2825
    %v2968 = vadd.f32 %v2967, %v2829
    %v2969 = vadd.f32 %v2968, %v2833
    %v2970 = vadd.f32 %v2969, %v2837
    %v2971 = vadd.f32 %v2970, %v2841
    %v2972 = vadd.f32 %v2971, %v2845
    %v2973 = vadd.f32 %v2972, %v2849
    %v2974 = vadd.f32 %v2973, %v2853
    %v2975 = vadd.f32 %v2974, %v2857
    %v2976 = vadd.f32 %v2975, %v2861
    %v2977 = vadd.f32 %v2976, %v2865
    %v2978 = vadd.f32 %v2977, %v2869
    %v2979 = vadd.f32 %v2978, %v2873
    %v2980 = vrot.slane %v2979, 4
    %v2981 = vadd.f32 %v2979, %v2980
    %v2982 = vrot.slane %v2981, 2
    %v2983 = vadd.f32 %v2981, %v2982
    %v2984 = vrot.slane %v2983, 1
    %v2985 = vadd.f32 %v2983, %v2984
    %v2986 = vadd.f32 %v2750, %v2754
    %v2987 = vadd.f32 %v2986, %v2758
    %v2988 = vadd.f32 %v2987, %v2762
    %v2989 = vadd.f32 %v2988, %v2766
    %v2990 = vadd.f32 %v2989, %v2770
    %v2991 = vadd.f32 %v2990, %v2774
    %v2992 = vadd.f32 %v2991, %v2778
    %v2993 = vadd.f32 %v2992, %v2782
    %v2994 = vadd.f32 %v2993, %v2786
    %v2995 = vadd.f32 %v2994, %v2790
    %v2996 = vadd.f32 %v2995, %v2794
    %v2997 = vadd.f32 %v2996, %v2798
    %v2998 = vadd.f32 %v2997, %v2802
    %v2999 = vadd.f32 %v2998, %v2806
    %v3000 = vadd.f32 %v2999, %v2810
    %v3001 = vadd.f32 %v3000, %v2814
    %v3002 = vadd.f32 %v3001, %v2818
    %v3003 = vadd.f32 %v3002, %v2822
    %v3004 = vadd.f32 %v3003, %v2826
    %v3005 = vadd.f32 %v3004, %v2830
    %v3006 = vadd.f32 %v3005, %v2834
    %v3007 = vadd.f32 %v3006, %v2838
    %v3008 = vadd.f32 %v3007, %v2842
    %v3009 = vadd.f32 %v3008, %v2846
    %v3010 = vadd.f32 %v3009, %v2850
    %v3011 = vadd.f32 %v3010, %v2854
    %v3012 = vadd.f32 %v3011, %v2858
    %v3013 = vadd.f32 %v3012, %v2862
    %v3014 = vadd.f32 %v3013, %v2866
    %v3015 = vadd.f32 %v3014, %v2870
    %v3016 = vadd.f32 %v3015, %v2874
    %v3017 = vrot.slane %v3016, 4
    %v3018 = vadd.f32 %v3016, %v3017
    %v3019 = vrot.slane %v3018, 2
    %v3020 = vadd.f32 %v3018, %v3019
    %v3021 = vrot.slane %v3020, 1
    %v3022 = vadd.f32 %v3020, %v3021
    %v3023 = vmul.f32 %v2911, 0.00390625
    %v3024 = vmul.f32 %v2948, 0.00390625
    %v3025 = vmul.f32 %v2985, 0.00390625
    %v3026 = vmul.f32 %v3022, 0.00390625
    %v3027 = vmul.f32 %v2743, %v2743
    %v3028 = vmul.f32 %v2744, %v2744
    %v3029 = vmul.f32 %v2745, %v2745
    %v3030 = vmul.f32 %v2746, %v2746
    %v3031 = vsub.f32 %v3023, %v3027
    %v3032 = vsub.f32 %v3024, %v3028
    %v3033 = vsub.f32 %v3025, %v3029
    %v3034 = vsub.f32 %v3026, %v3030
    %v3035 = vmax.f32 %v3031, 0.0
    %v3036 = vmax.f32 %v3032, 0.0
    %v3037 = vmax.f32 %v3033, 0.0
    %v3038 = vmax.f32 %v3034, 0.0
    %v3039 = vadd.f32 %v3035, 1e-05
    %v3040 = vadd.f32 %v3036, 1e-05
    %v3041 = vadd.f32 %v3037, 1e-05
    %v3042 = vadd.f32 %v3038, 1e-05
    %v3043 = vrsqrt.pop %v3039
    %v3044 = vmul.f32 %v3043, %v3039
    %v3045 = vmul.f32 %v3044, %v3043
    %v3046 = vmul.f32 0.5, %v3045
    %v3047 = vsub.f32 1.5, %v3046
    %v3048 = vmul.f32 %v3043, %v3047
    %vm3049 = vweird.f32 %v3039
    %vm3050 = vweird.f32 %v3043
    %vm3051 = vmor %vm3049, %vm3050
    %v3052 = vsel %vm3051, %v3043, %v3048
    %v3053 = vrsqrt.pop %v3040
    %v3054 = vmul.f32 %v3053, %v3040
    %v3055 = vmul.f32 %v3054, %v3053
    %v3056 = vmul.f32 0.5, %v3055
    %v3057 = vsub.f32 1.5, %v3056
    %v3058 = vmul.f32 %v3053, %v3057
    %vm3059 = vweird.f32 %v3040
    %vm3060 = vweird.f32 %v3053
    %vm3061 = vmor %vm3059, %vm3060
    %v3062 = vsel %vm3061, %v3053, %v3058
    %v3063 = vrsqrt.pop %v3041
    %v3064 = vmul.f32 %v3063, %v3041
    %v3065 = vmul.f32 %v3064, %v3063
    %v3066 = vmul.f32 0.5, %v3065
    %v3067 = vsub.f32 1.5, %v3066
    %v3068 = vmul.f32 %v3063, %v3067
    %vm3069 = vweird.f32 %v3041
    %vm3070 = vweird.f32 %v3063
    %vm3071 = vmor %vm3069, %vm3070
    %v3072 = vsel %vm3071, %v3063, %v3068
    %v3073 = vrsqrt.pop %v3042
    %v3074 = vmul.f32 %v3073, %v3042
    %v3075 = vmul.f32 %v3074, %v3073
    %v3076 = vmul.f32 0.5, %v3075
    %v3077 = vsub.f32 1.5, %v3076
    %v3078 = vmul.f32 %v3073, %v3077
    %vm3079 = vweird.f32 %v3042
    %vm3080 = vweird.f32 %v3073
    %vm3081 = vmor %vm3079, %vm3080
    %v3082 = vsel %vm3081, %v3073, %v3078
    %v3083 = vmul.f32 %v3039, 0.5
    %v3084 = vmul.f32 %v3040, 0.5
    %v3085 = vmul.f32 %v3041, 0.5
    %v3086 = vmul.f32 %v3042, 0.5
    %v3087 = vmul.f32 %v3083, %v3052
    %v3088 = vmul.f32 %v3084, %v3062
    %v3089 = vmul.f32 %v3085, %v3072
    %v3090 = vmul.f32 %v3086, %v3082
    %v3091 = vmul.f32 %v3087, %v3052
    %v3092 = vmul.f32 %v3088, %v3062
    %v3093 = vmul.f32 %v3089, %v3072
    %v3094 = vmul.f32 %v3090, %v3082
    %v3095 = vsub.f32 1.5, %v3091
    %v3096 = vsub.f32 1.5, %v3092
    %v3097 = vsub.f32 1.5, %v3093
    %v3098 = vsub.f32 1.5, %v3094
    %v3099 = vmul.f32 %v3052, %v3095
    %v3100 = vmul.f32 %v3062, %v3096
    %v3101 = vmul.f32 %v3072, %v3097
    %v3102 = vmul.f32 %v3082, %v3098
    %v3107 = vrot.slane %v3100, 7
    %v3108 = vrot.slane %v3101, 6
    %v3109 = vrot.slane %v3102, 5
    %vm3110 = vcmask 1040384
    %v3111 = vsel %vm3110, %v3099, %v3107
    %vm3112 = vcmask 1042434
    %v3113 = vsel %vm3112, %v3108, %v3109
    %vm3114 = vcmask 1041408
    %v3115 = vsel %vm3114, %v3111, %v3113
    %v3117 = vmul.f32 %v321, %v3115
    %v3119 = vperm.slane %v3117, 0
    %v3120 = vperm.slane %v3117, 1
    %v3121 = vperm.slane %v3117, 2
    %v3122 = vperm.slane %v3117, 3
    %v3127 = vmul.f32 %v2743, %v3119
    %v3128 = vmul.f32 %v2744, %v3120
    %v3129 = vmul.f32 %v2745, %v3121
    %v3130 = vmul.f32 %v2746, %v3122
    %v3135 = vrot.slane %v3128, 7
    %v3136 = vrot.slane %v3129, 6
    %v3137 = vrot.slane %v3130, 5
    %v3138 = vsel %vm3110, %v3127, %v3135
    %v3139 = vsel %vm3112, %v3136, %v3137
    %v3140 = vsel %vm3114, %v3138, %v3139
    %v3142 = vsub.f32 %v323, %v3140
    %v3143 = vmul.f32 %v1448, %v3119
    %v3144 = vmul.f32 %v1804, %v3120
    %v3145 = vmul.f32 %v2160, %v3121
    %v3146 = vmul.f32 %v2516, %v3122
    %v3147 = vmul.f32 %v1450, %v3119
    %v3148 = vmul.f32 %v1806, %v3120
    %v3149 = vmul.f32 %v2162, %v3121
    %v3150 = vmul.f32 %v2518, %v3122
    %v3151 = vmul.f32 %v1453, %v3119
    %v3152 = vmul.f32 %v1809, %v3120
    %v3153 = vmul.f32 %v2165, %v3121
    %v3154 = vmul.f32 %v2521, %v3122
    %v3155 = vmul.f32 %v1455, %v3119
    %v3156 = vmul.f32 %v1811, %v3120
    %v3157 = vmul.f32 %v2167, %v3121
    %v3158 = vmul.f32 %v2523, %v3122
    %v3159 = vmul.f32 %v1458, %v3119
    %v3160 = vmul.f32 %v1814, %v3120
    %v3161 = vmul.f32 %v2170, %v3121
    %v3162 = vmul.f32 %v2526, %v3122
    %v3163 = vmul.f32 %v1460, %v3119
    %v3164 = vmul.f32 %v1816, %v3120
    %v3165 = vmul.f32 %v2172, %v3121
    %v3166 = vmul.f32 %v2528, %v3122
    %v3167 = vmul.f32 %v1463, %v3119
    %v3168 = vmul.f32 %v1819, %v3120
    %v3169 = vmul.f32 %v2175, %v3121
    %v3170 = vmul.f32 %v2531, %v3122
    %v3171 = vmul.f32 %v1465, %v3119
    %v3172 = vmul.f32 %v1821, %v3120
    %v3173 = vmul.f32 %v2177, %v3121
    %v3174 = vmul.f32 %v2533, %v3122
    %v3175 = vmul.f32 %v1468, %v3119
    %v3176 = vmul.f32 %v1824, %v3120
    %v3177 = vmul.f32 %v2180, %v3121
    %v3178 = vmul.f32 %v2536, %v3122
    %v3179 = vmul.f32 %v1470, %v3119
    %v3180 = vmul.f32 %v1826, %v3120
    %v3181 = vmul.f32 %v2182, %v3121
    %v3182 = vmul.f32 %v2538, %v3122
    %v3183 = vmul.f32 %v1473, %v3119
    %v3184 = vmul.f32 %v1829, %v3120
    %v3185 = vmul.f32 %v2185, %v3121
    %v3186 = vmul.f32 %v2541, %v3122
    %v3187 = vmul.f32 %v1475, %v3119
    %v3188 = vmul.f32 %v1831, %v3120
    %v3189 = vmul.f32 %v2187, %v3121
    %v3190 = vmul.f32 %v2543, %v3122
    %v3191 = vmul.f32 %v1478, %v3119
    %v3192 = vmul.f32 %v1834, %v3120
    %v3193 = vmul.f32 %v2190, %v3121
    %v3194 = vmul.f32 %v2546, %v3122
    %v3195 = vmul.f32 %v1480, %v3119
    %v3196 = vmul.f32 %v1836, %v3120
    %v3197 = vmul.f32 %v2192, %v3121
    %v3198 = vmul.f32 %v2548, %v3122
    %v3199 = vmul.f32 %v1483, %v3119
    %v3200 = vmul.f32 %v1839, %v3120
    %v3201 = vmul.f32 %v2195, %v3121
    %v3202 = vmul.f32 %v2551, %v3122
    %v3203 = vmul.f32 %v1485, %v3119
    %v3204 = vmul.f32 %v1841, %v3120
    %v3205 = vmul.f32 %v2197, %v3121
    %v3206 = vmul.f32 %v2553, %v3122
    %v3207 = vmul.f32 %v1488, %v3119
    %v3208 = vmul.f32 %v1844, %v3120
    %v3209 = vmul.f32 %v2200, %v3121
    %v3210 = vmul.f32 %v2556, %v3122
    %v3211 = vmul.f32 %v1490, %v3119
    %v3212 = vmul.f32 %v1846, %v3120
    %v3213 = vmul.f32 %v2202, %v3121
    %v3214 = vmul.f32 %v2558, %v3122
    %v3215 = vmul.f32 %v1493, %v3119
    %v3216 = vmul.f32 %v1849, %v3120
    %v3217 = vmul.f32 %v2205, %v3121
    %v3218 = vmul.f32 %v2561, %v3122
    %v3219 = vmul.f32 %v1495, %v3119
    %v3220 = vmul.f32 %v1851, %v3120
    %v3221 = vmul.f32 %v2207, %v3121
    %v3222 = vmul.f32 %v2563, %v3122
    %v3223 = vmul.f32 %v1498, %v3119
    %v3224 = vmul.f32 %v1854, %v3120
    %v3225 = vmul.f32 %v2210, %v3121
    %v3226 = vmul.f32 %v2566, %v3122
    %v3227 = vmul.f32 %v1500, %v3119
    %v3228 = vmul.f32 %v1856, %v3120
    %v3229 = vmul.f32 %v2212, %v3121
    %v3230 = vmul.f32 %v2568, %v3122
    %v3231 = vmul.f32 %v1503, %v3119
    %v3232 = vmul.f32 %v1859, %v3120
    %v3233 = vmul.f32 %v2215, %v3121
    %v3234 = vmul.f32 %v2571, %v3122
    %v3235 = vmul.f32 %v1505, %v3119
    %v3236 = vmul.f32 %v1861, %v3120
    %v3237 = vmul.f32 %v2217, %v3121
    %v3238 = vmul.f32 %v2573, %v3122
    %v3239 = vmul.f32 %v1508, %v3119
    %v3240 = vmul.f32 %v1864, %v3120
    %v3241 = vmul.f32 %v2220, %v3121
    %v3242 = vmul.f32 %v2576, %v3122
    %v3243 = vmul.f32 %v1510, %v3119
    %v3244 = vmul.f32 %v1866, %v3120
    %v3245 = vmul.f32 %v2222, %v3121
    %v3246 = vmul.f32 %v2578, %v3122
    %v3247 = vmul.f32 %v1513, %v3119
    %v3248 = vmul.f32 %v1869, %v3120
    %v3249 = vmul.f32 %v2225, %v3121
    %v3250 = vmul.f32 %v2581, %v3122
    %v3251 = vmul.f32 %v1515, %v3119
    %v3252 = vmul.f32 %v1871, %v3120
    %v3253 = vmul.f32 %v2227, %v3121
    %v3254 = vmul.f32 %v2583, %v3122
    %v3255 = vmul.f32 %v1518, %v3119
    %v3256 = vmul.f32 %v1874, %v3120
    %v3257 = vmul.f32 %v2230, %v3121
    %v3258 = vmul.f32 %v2586, %v3122
    %v3259 = vmul.f32 %v1520, %v3119
    %v3260 = vmul.f32 %v1876, %v3120
    %v3261 = vmul.f32 %v2232, %v3121
    %v3262 = vmul.f32 %v2588, %v3122
    %v3263 = vmul.f32 %v1523, %v3119
    %v3264 = vmul.f32 %v1879, %v3120
    %v3265 = vmul.f32 %v2235, %v3121
    %v3266 = vmul.f32 %v2591, %v3122
    %v3267 = vmul.f32 %v1525, %v3119
    %v3268 = vmul.f32 %v1881, %v3120
    %v3269 = vmul.f32 %v2237, %v3121
    %v3270 = vmul.f32 %v2593, %v3122
    %v3272 = vperm.slane %v3142, 0
    %v3273 = vperm.slane %v3142, 1
    %v3274 = vperm.slane %v3142, 2
    %v3275 = vperm.slane %v3142, 3
    %v3280 = vadd.f32 %v3143, %v3272
    %v3281 = vadd.f32 %v3144, %v3273
    %v3282 = vadd.f32 %v3145, %v3274
    %v3283 = vadd.f32 %v3146, %v3275
    %v3284 = vadd.f32 %v3147, %v3272
    %v3285 = vadd.f32 %v3148, %v3273
    %v3286 = vadd.f32 %v3149, %v3274
    %v3287 = vadd.f32 %v3150, %v3275
    %v3288 = vadd.f32 %v3151, %v3272
    %v3289 = vadd.f32 %v3152, %v3273
    %v3290 = vadd.f32 %v3153, %v3274
    %v3291 = vadd.f32 %v3154, %v3275
    %v3292 = vadd.f32 %v3155, %v3272
    %v3293 = vadd.f32 %v3156, %v3273
    %v3294 = vadd.f32 %v3157, %v3274
    %v3295 = vadd.f32 %v3158, %v3275
    %v3296 = vadd.f32 %v3159, %v3272
    %v3297 = vadd.f32 %v3160, %v3273
    %v3298 = vadd.f32 %v3161, %v3274
    %v3299 = vadd.f32 %v3162, %v3275
    %v3300 = vadd.f32 %v3163, %v3272
    %v3301 = vadd.f32 %v3164, %v3273
    %v3302 = vadd.f32 %v3165, %v3274
    %v3303 = vadd.f32 %v3166, %v3275
    %v3304 = vadd.f32 %v3167, %v3272
    %v3305 = vadd.f32 %v3168, %v3273
    %v3306 = vadd.f32 %v3169, %v3274
    %v3307 = vadd.f32 %v3170, %v3275
    %v3308 = vadd.f32 %v3171, %v3272
    %v3309 = vadd.f32 %v3172, %v3273
    %v3310 = vadd.f32 %v3173, %v3274
    %v3311 = vadd.f32 %v3174, %v3275
    %v3312 = vadd.f32 %v3175, %v3272
    %v3313 = vadd.f32 %v3176, %v3273
    %v3314 = vadd.f32 %v3177, %v3274
    %v3315 = vadd.f32 %v3178, %v3275
    %v3316 = vadd.f32 %v3179, %v3272
    %v3317 = vadd.f32 %v3180, %v3273
    %v3318 = vadd.f32 %v3181, %v3274
    %v3319 = vadd.f32 %v3182, %v3275
    %v3320 = vadd.f32 %v3183, %v3272
    %v3321 = vadd.f32 %v3184, %v3273
    %v3322 = vadd.f32 %v3185, %v3274
    %v3323 = vadd.f32 %v3186, %v3275
    %v3324 = vadd.f32 %v3187, %v3272
    %v3325 = vadd.f32 %v3188, %v3273
    %v3326 = vadd.f32 %v3189, %v3274
    %v3327 = vadd.f32 %v3190, %v3275
    %v3328 = vadd.f32 %v3191, %v3272
    %v3329 = vadd.f32 %v3192, %v3273
    %v3330 = vadd.f32 %v3193, %v3274
    %v3331 = vadd.f32 %v3194, %v3275
    %v3332 = vadd.f32 %v3195, %v3272
    %v3333 = vadd.f32 %v3196, %v3273
    %v3334 = vadd.f32 %v3197, %v3274
    %v3335 = vadd.f32 %v3198, %v3275
    %v3336 = vadd.f32 %v3199, %v3272
    %v3337 = vadd.f32 %v3200, %v3273
    %v3338 = vadd.f32 %v3201, %v3274
    %v3339 = vadd.f32 %v3202, %v3275
    %v3340 = vadd.f32 %v3203, %v3272
    %v3341 = vadd.f32 %v3204, %v3273
    %v3342 = vadd.f32 %v3205, %v3274
    %v3343 = vadd.f32 %v3206, %v3275
    %v3344 = vadd.f32 %v3207, %v3272
    %v3345 = vadd.f32 %v3208, %v3273
    %v3346 = vadd.f32 %v3209, %v3274
    %v3347 = vadd.f32 %v3210, %v3275
    %v3348 = vadd.f32 %v3211, %v3272
    %v3349 = vadd.f32 %v3212, %v3273
    %v3350 = vadd.f32 %v3213, %v3274
    %v3351 = vadd.f32 %v3214, %v3275
    %v3352 = vadd.f32 %v3215, %v3272
    %v3353 = vadd.f32 %v3216, %v3273
    %v3354 = vadd.f32 %v3217, %v3274
    %v3355 = vadd.f32 %v3218, %v3275
    %v3356 = vadd.f32 %v3219, %v3272
    %v3357 = vadd.f32 %v3220, %v3273
    %v3358 = vadd.f32 %v3221, %v3274
    %v3359 = vadd.f32 %v3222, %v3275
    %v3360 = vadd.f32 %v3223, %v3272
    %v3361 = vadd.f32 %v3224, %v3273
    %v3362 = vadd.f32 %v3225, %v3274
    %v3363 = vadd.f32 %v3226, %v3275
    %v3364 = vadd.f32 %v3227, %v3272
    %v3365 = vadd.f32 %v3228, %v3273
    %v3366 = vadd.f32 %v3229, %v3274
    %v3367 = vadd.f32 %v3230, %v3275
    %v3368 = vadd.f32 %v3231, %v3272
    %v3369 = vadd.f32 %v3232, %v3273
    %v3370 = vadd.f32 %v3233, %v3274
    %v3371 = vadd.f32 %v3234, %v3275
    %v3372 = vadd.f32 %v3235, %v3272
    %v3373 = vadd.f32 %v3236, %v3273
    %v3374 = vadd.f32 %v3237, %v3274
    %v3375 = vadd.f32 %v3238, %v3275
    %v3376 = vadd.f32 %v3239, %v3272
    %v3377 = vadd.f32 %v3240, %v3273
    %v3378 = vadd.f32 %v3241, %v3274
    %v3379 = vadd.f32 %v3242, %v3275
    %v3380 = vadd.f32 %v3243, %v3272
    %v3381 = vadd.f32 %v3244, %v3273
    %v3382 = vadd.f32 %v3245, %v3274
    %v3383 = vadd.f32 %v3246, %v3275
    %v3384 = vadd.f32 %v3247, %v3272
    %v3385 = vadd.f32 %v3248, %v3273
    %v3386 = vadd.f32 %v3249, %v3274
    %v3387 = vadd.f32 %v3250, %v3275
    %v3388 = vadd.f32 %v3251, %v3272
    %v3389 = vadd.f32 %v3252, %v3273
    %v3390 = vadd.f32 %v3253, %v3274
    %v3391 = vadd.f32 %v3254, %v3275
    %v3392 = vadd.f32 %v3255, %v3272
    %v3393 = vadd.f32 %v3256, %v3273
    %v3394 = vadd.f32 %v3257, %v3274
    %v3395 = vadd.f32 %v3258, %v3275
    %v3396 = vadd.f32 %v3259, %v3272
    %v3397 = vadd.f32 %v3260, %v3273
    %v3398 = vadd.f32 %v3261, %v3274
    %v3399 = vadd.f32 %v3262, %v3275
    %v3400 = vadd.f32 %v3263, %v3272
    %v3401 = vadd.f32 %v3264, %v3273
    %v3402 = vadd.f32 %v3265, %v3274
    %v3403 = vadd.f32 %v3266, %v3275
    %v3404 = vadd.f32 %v3267, %v3272
    %v3405 = vadd.f32 %v3268, %v3273
    %v3406 = vadd.f32 %v3269, %v3274
    %v3407 = vadd.f32 %v3270, %v3275
    %v3408 = vmax.f32 %v3280, 0.0
    %v3409 = vmax.f32 %v3281, 0.0
    %v3410 = vmax.f32 %v3282, 0.0
    %v3411 = vmax.f32 %v3283, 0.0
    %v3412 = vmax.f32 %v3284, 0.0
    %v3413 = vmax.f32 %v3285, 0.0
    %v3414 = vmax.f32 %v3286, 0.0
    %v3415 = vmax.f32 %v3287, 0.0
    %v3416 = vmax.f32 %v3288, 0.0
    %v3417 = vmax.f32 %v3289, 0.0
    %v3418 = vmax.f32 %v3290, 0.0
    %v3419 = vmax.f32 %v3291, 0.0
    %v3420 = vmax.f32 %v3292, 0.0
    %v3421 = vmax.f32 %v3293, 0.0
    %v3422 = vmax.f32 %v3294, 0.0
    %v3423 = vmax.f32 %v3295, 0.0
    %v3424 = vmax.f32 %v3296, 0.0
    %v3425 = vmax.f32 %v3297, 0.0
    %v3426 = vmax.f32 %v3298, 0.0
    %v3427 = vmax.f32 %v3299, 0.0
    %v3428 = vmax.f32 %v3300, 0.0
    %v3429 = vmax.f32 %v3301, 0.0
    %v3430 = vmax.f32 %v3302, 0.0
    %v3431 = vmax.f32 %v3303, 0.0
    %v3432 = vmax.f32 %v3304, 0.0
    %v3433 = vmax.f32 %v3305, 0.0
    %v3434 = vmax.f32 %v3306, 0.0
    %v3435 = vmax.f32 %v3307, 0.0
    %v3436 = vmax.f32 %v3308, 0.0
    %v3437 = vmax.f32 %v3309, 0.0
    %v3438 = vmax.f32 %v3310, 0.0
    %v3439 = vmax.f32 %v3311, 0.0
    %v3440 = vmax.f32 %v3312, 0.0
    %v3441 = vmax.f32 %v3313, 0.0
    %v3442 = vmax.f32 %v3314, 0.0
    %v3443 = vmax.f32 %v3315, 0.0
    %v3444 = vmax.f32 %v3316, 0.0
    %v3445 = vmax.f32 %v3317, 0.0
    %v3446 = vmax.f32 %v3318, 0.0
    %v3447 = vmax.f32 %v3319, 0.0
    %v3448 = vmax.f32 %v3320, 0.0
    %v3449 = vmax.f32 %v3321, 0.0
    %v3450 = vmax.f32 %v3322, 0.0
    %v3451 = vmax.f32 %v3323, 0.0
    %v3452 = vmax.f32 %v3324, 0.0
    %v3453 = vmax.f32 %v3325, 0.0
    %v3454 = vmax.f32 %v3326, 0.0
    %v3455 = vmax.f32 %v3327, 0.0
    %v3456 = vmax.f32 %v3328, 0.0
    %v3457 = vmax.f32 %v3329, 0.0
    %v3458 = vmax.f32 %v3330, 0.0
    %v3459 = vmax.f32 %v3331, 0.0
    %v3460 = vmax.f32 %v3332, 0.0
    %v3461 = vmax.f32 %v3333, 0.0
    %v3462 = vmax.f32 %v3334, 0.0
    %v3463 = vmax.f32 %v3335, 0.0
    %v3464 = vmax.f32 %v3336, 0.0
    %v3465 = vmax.f32 %v3337, 0.0
    %v3466 = vmax.f32 %v3338, 0.0
    %v3467 = vmax.f32 %v3339, 0.0
    %v3468 = vmax.f32 %v3340, 0.0
    %v3469 = vmax.f32 %v3341, 0.0
    %v3470 = vmax.f32 %v3342, 0.0
    %v3471 = vmax.f32 %v3343, 0.0
    %v3472 = vmax.f32 %v3344, 0.0
    %v3473 = vmax.f32 %v3345, 0.0
    %v3474 = vmax.f32 %v3346, 0.0
    %v3475 = vmax.f32 %v3347, 0.0
    %v3476 = vmax.f32 %v3348, 0.0
    %v3477 = vmax.f32 %v3349, 0.0
    %v3478 = vmax.f32 %v3350, 0.0
    %v3479 = vmax.f32 %v3351, 0.0
    %v3480 = vmax.f32 %v3352, 0.0
    %v3481 = vmax.f32 %v3353, 0.0
    %v3482 = vmax.f32 %v3354, 0.0
    %v3483 = vmax.f32 %v3355, 0.0
    %v3484 = vmax.f32 %v3356, 0.0
    %v3485 = vmax.f32 %v3357, 0.0
    %v3486 = vmax.f32 %v3358, 0.0
    %v3487 = vmax.f32 %v3359, 0.0
    %v3488 = vmax.f32 %v3360, 0.0
    %v3489 = vmax.f32 %v3361, 0.0
    %v3490 = vmax.f32 %v3362, 0.0
    %v3491 = vmax.f32 %v3363, 0.0
    %v3492 = vmax.f32 %v3364, 0.0
    %v3493 = vmax.f32 %v3365, 0.0
    %v3494 = vmax.f32 %v3366, 0.0
    %v3495 = vmax.f32 %v3367, 0.0
    %v3496 = vmax.f32 %v3368, 0.0
    %v3497 = vmax.f32 %v3369, 0.0
    %v3498 = vmax.f32 %v3370, 0.0
    %v3499 = vmax.f32 %v3371, 0.0
    %v3500 = vmax.f32 %v3372, 0.0
    %v3501 = vmax.f32 %v3373, 0.0
    %v3502 = vmax.f32 %v3374, 0.0
    %v3503 = vmax.f32 %v3375, 0.0
    %v3504 = vmax.f32 %v3376, 0.0
    %v3505 = vmax.f32 %v3377, 0.0
    %v3506 = vmax.f32 %v3378, 0.0
    %v3507 = vmax.f32 %v3379, 0.0
    %v3508 = vmax.f32 %v3380, 0.0
    %v3509 = vmax.f32 %v3381, 0.0
    %v3510 = vmax.f32 %v3382, 0.0
    %v3511 = vmax.f32 %v3383, 0.0
    %v3512 = vmax.f32 %v3384, 0.0
    %v3513 = vmax.f32 %v3385, 0.0
    %v3514 = vmax.f32 %v3386, 0.0
    %v3515 = vmax.f32 %v3387, 0.0
    %v3516 = vmax.f32 %v3388, 0.0
    %v3517 = vmax.f32 %v3389, 0.0
    %v3518 = vmax.f32 %v3390, 0.0
    %v3519 = vmax.f32 %v3391, 0.0
    %v3520 = vmax.f32 %v3392, 0.0
    %v3521 = vmax.f32 %v3393, 0.0
    %v3522 = vmax.f32 %v3394, 0.0
    %v3523 = vmax.f32 %v3395, 0.0
    %v3524 = vmax.f32 %v3396, 0.0
    %v3525 = vmax.f32 %v3397, 0.0
    %v3526 = vmax.f32 %v3398, 0.0
    %v3527 = vmax.f32 %v3399, 0.0
    %v3528 = vmax.f32 %v3400, 0.0
    %v3529 = vmax.f32 %v3401, 0.0
    %v3530 = vmax.f32 %v3402, 0.0
    %v3531 = vmax.f32 %v3403, 0.0
    %v3532 = vmax.f32 %v3404, 0.0
    %v3533 = vmax.f32 %v3405, 0.0
    %v3534 = vmax.f32 %v3406, 0.0
    %v3535 = vmax.f32 %v3407, 0.0
    %s3536 = smul.u32 4, 64
    %s3537 = smul.u32 %s3536, 4
    %s3538 = sshll.u32 %s3537, 4
    %3539 = dma.done [#allocation4], %s3538
    %v3540 = vpack.c.bf16 %v3412, %v3408
    %v3541 = vpack.c.bf16 %v3413, %v3409
    %v3542 = vpack.c.bf16 %v3414, %v3410
    %v3543 = vpack.c.bf16 %v3415, %v3411
    %v3544 = vpack.c.bf16 %v3420, %v3416
    %v3545 = vpack.c.bf16 %v3421, %v3417
    %v3546 = vpack.c.bf16 %v3422, %v3418
    %v3547 = vpack.c.bf16 %v3423, %v3419
    %v3548 = vpack.c.bf16 %v3428, %v3424
    %v3549 = vpack.c.bf16 %v3429, %v3425
    %v3550 = vpack.c.bf16 %v3430, %v3426
    %v3551 = vpack.c.bf16 %v3431, %v3427
    %v3552 = vpack.c.bf16 %v3436, %v3432
    %v3553 = vpack.c.bf16 %v3437, %v3433
    %v3554 = vpack.c.bf16 %v3438, %v3434
    %v3555 = vpack.c.bf16 %v3439, %v3435
    %v3556 = vpack.c.bf16 %v3444, %v3440
    %v3557 = vpack.c.bf16 %v3445, %v3441
    %v3558 = vpack.c.bf16 %v3446, %v3442
    %v3559 = vpack.c.bf16 %v3447, %v3443
    %v3560 = vpack.c.bf16 %v3452, %v3448
    %v3561 = vpack.c.bf16 %v3453, %v3449
    %v3562 = vpack.c.bf16 %v3454, %v3450
    %v3563 = vpack.c.bf16 %v3455, %v3451
    %v3564 = vpack.c.bf16 %v3460, %v3456
    %v3565 = vpack.c.bf16 %v3461, %v3457
    %v3566 = vpack.c.bf16 %v3462, %v3458
    %v3567 = vpack.c.bf16 %v3463, %v3459
    %v3568 = vpack.c.bf16 %v3468, %v3464
    %v3569 = vpack.c.bf16 %v3469, %v3465
    %v3570 = vpack.c.bf16 %v3470, %v3466
    %v3571 = vpack.c.bf16 %v3471, %v3467
    %v3572 = vpack.c.bf16 %v3476, %v3472
    %v3573 = vpack.c.bf16 %v3477, %v3473
    %v3574 = vpack.c.bf16 %v3478, %v3474
    %v3575 = vpack.c.bf16 %v3479, %v3475
    %v3576 = vpack.c.bf16 %v3484, %v3480
    %v3577 = vpack.c.bf16 %v3485, %v3481
    %v3578 = vpack.c.bf16 %v3486, %v3482
    %v3579 = vpack.c.bf16 %v3487, %v3483
    %v3580 = vpack.c.bf16 %v3492, %v3488
    %v3581 = vpack.c.bf16 %v3493, %v3489
    %v3582 = vpack.c.bf16 %v3494, %v3490
    %v3583 = vpack.c.bf16 %v3495, %v3491
    %v3584 = vpack.c.bf16 %v3500, %v3496
    %v3585 = vpack.c.bf16 %v3501, %v3497
    %v3586 = vpack.c.bf16 %v3502, %v3498
    %v3587 = vpack.c.bf16 %v3503, %v3499
    %v3588 = vpack.c.bf16 %v3508, %v3504
    %v3589 = vpack.c.bf16 %v3509, %v3505
    %v3590 = vpack.c.bf16 %v3510, %v3506
    %v3591 = vpack.c.bf16 %v3511, %v3507
    %v3592 = vpack.c.bf16 %v3516, %v3512
    %v3593 = vpack.c.bf16 %v3517, %v3513
    %v3594 = vpack.c.bf16 %v3518, %v3514
    %v3595 = vpack.c.bf16 %v3519, %v3515
    %v3596 = vpack.c.bf16 %v3524, %v3520
    %v3597 = vpack.c.bf16 %v3525, %v3521
    %v3598 = vpack.c.bf16 %v3526, %v3522
    %v3599 = vpack.c.bf16 %v3527, %v3523
    %v3600 = vpack.c.bf16 %v3532, %v3528
    %v3601 = vpack.c.bf16 %v3533, %v3529
    %v3602 = vpack.c.bf16 %v3534, %v3530
    %v3603 = vpack.c.bf16 %v3535, %v3531
    %v3604 = vld [vmem:[#allocation2] sm:$0xff]
    %v3605 = vld [vmem:[#allocation2 + $0x8] sm:$0xff]
    %v3606 = vld [vmem:[#allocation2 + $0x10] sm:$0xff]
    %v3607 = vld [vmem:[#allocation2 + $0x18] sm:$0xff]
    %v3608 = vld [vmem:[#allocation2 + $0x20] sm:$0xff]
    %v3609 = vld [vmem:[#allocation2 + $0x28] sm:$0xff]
    %v3610 = vld [vmem:[#allocation2 + $0x30] sm:$0xff]
    %v3611 = vld [vmem:[#allocation2 + $0x38] sm:$0xff]
    %v3612 = vld [vmem:[#allocation2 + $0x40] sm:$0xff]
    %v3613 = vld [vmem:[#allocation2 + $0x48] sm:$0xff]
    %v3614 = vld [vmem:[#allocation2 + $0x50] sm:$0xff]
    %v3615 = vld [vmem:[#allocation2 + $0x58] sm:$0xff]
    %v3616 = vld [vmem:[#allocation2 + $0x60] sm:$0xff]
    %v3617 = vld [vmem:[#allocation2 + $0x68] sm:$0xff]
    %v3618 = vld [vmem:[#allocation2 + $0x70] sm:$0xff]
    %v3619 = vld [vmem:[#allocation2 + $0x78] sm:$0xff]
    %v3620 = vld [vmem:[#allocation2 + $0x80] sm:$0xff]
    %v3621 = vld [vmem:[#allocation2 + $0x88] sm:$0xff]
    %v3622 = vld [vmem:[#allocation2 + $0x90] sm:$0xff]
    %v3623 = vld [vmem:[#allocation2 + $0x98] sm:$0xff]
    %v3624 = vld [vmem:[#allocation2 + $0xa0] sm:$0xff]
    %v3625 = vld [vmem:[#allocation2 + $0xa8] sm:$0xff]
    %v3626 = vld [vmem:[#allocation2 + $0xb0] sm:$0xff]
    %v3627 = vld [vmem:[#allocation2 + $0xb8] sm:$0xff]
    %v3628 = vld [vmem:[#allocation2 + $0xc0] sm:$0xff]
    %v3629 = vld [vmem:[#allocation2 + $0xc8] sm:$0xff]
    %v3630 = vld [vmem:[#allocation2 + $0xd0] sm:$0xff]
    %v3631 = vld [vmem:[#allocation2 + $0xd8] sm:$0xff]
    %v3632 = vld [vmem:[#allocation2 + $0xe0] sm:$0xff]
    %v3633 = vld [vmem:[#allocation2 + $0xe8] sm:$0xff]
    %v3634 = vld [vmem:[#allocation2 + $0xf0] sm:$0xff]
    %v3635 = vld [vmem:[#allocation2 + $0xf8] sm:$0xff]
    %v3636 = vld [vmem:[#allocation2 + $0x100] sm:$0xff]
    %v3637 = vld [vmem:[#allocation2 + $0x108] sm:$0xff]
    %v3638 = vld [vmem:[#allocation2 + $0x110] sm:$0xff]
    %v3639 = vld [vmem:[#allocation2 + $0x118] sm:$0xff]
    %v3640 = vld [vmem:[#allocation2 + $0x120] sm:$0xff]
    %v3641 = vld [vmem:[#allocation2 + $0x128] sm:$0xff]
    %v3642 = vld [vmem:[#allocation2 + $0x130] sm:$0xff]
    %v3643 = vld [vmem:[#allocation2 + $0x138] sm:$0xff]
    %v3644 = vld [vmem:[#allocation2 + $0x140] sm:$0xff]
    %v3645 = vld [vmem:[#allocation2 + $0x148] sm:$0xff]
    %v3646 = vld [vmem:[#allocation2 + $0x150] sm:$0xff]
    %v3647 = vld [vmem:[#allocation2 + $0x158] sm:$0xff]
    %v3648 = vld [vmem:[#allocation2 + $0x160] sm:$0xff]
    %v3649 = vld [vmem:[#allocation2 + $0x168] sm:$0xff]
    %v3650 = vld [vmem:[#allocation2 + $0x170] sm:$0xff]
    %v3651 = vld [vmem:[#allocation2 + $0x178] sm:$0xff]
    %v3652 = vld [vmem:[#allocation2 + $0x180] sm:$0xff]
    %v3653 = vld [vmem:[#allocation2 + $0x188] sm:$0xff]
    %v3654 = vld [vmem:[#allocation2 + $0x190] sm:$0xff]
    %v3655 = vld [vmem:[#allocation2 + $0x198] sm:$0xff]
    %v3656 = vld [vmem:[#allocation2 + $0x1a0] sm:$0xff]
    %v3657 = vld [vmem:[#allocation2 + $0x1a8] sm:$0xff]
    %v3658 = vld [vmem:[#allocation2 + $0x1b0] sm:$0xff]
    %v3659 = vld [vmem:[#allocation2 + $0x1b8] sm:$0xff]
    %v3660 = vld [vmem:[#allocation2 + $0x1c0] sm:$0xff]
    %v3661 = vld [vmem:[#allocation2 + $0x1c8] sm:$0xff]
    %v3662 = vld [vmem:[#allocation2 + $0x1d0] sm:$0xff]
    %v3663 = vld [vmem:[#allocation2 + $0x1d8] sm:$0xff]
    %v3664 = vld [vmem:[#allocation2 + $0x1e0] sm:$0xff]
    %v3665 = vld [vmem:[#allocation2 + $0x1e8] sm:$0xff]
    %v3666 = vld [vmem:[#allocation2 + $0x1f0] sm:$0xff]
    %v3667 = vld [vmem:[#allocation2 + $0x1f8] sm:$0xff]
    %v3668 = vld [vmem:[#allocation2 + $0x200] sm:$0xff]
    %v3669 = vld [vmem:[#allocation2 + $0x208] sm:$0xff]
    %v3670 = vld [vmem:[#allocation2 + $0x210] sm:$0xff]
    %v3671 = vld [vmem:[#allocation2 + $0x218] sm:$0xff]
    %v3672 = vld [vmem:[#allocation2 + $0x220] sm:$0xff]
    %v3673 = vld [vmem:[#allocation2 + $0x228] sm:$0xff]
    %v3674 = vld [vmem:[#allocation2 + $0x230] sm:$0xff]
    %v3675 = vld [vmem:[#allocation2 + $0x238] sm:$0xff]
    %v3676 = vld [vmem:[#allocation2 + $0x240] sm:$0xff]
    %v3677 = vld [vmem:[#allocation2 + $0x248] sm:$0xff]
    %v3678 = vld [vmem:[#allocation2 + $0x250] sm:$0xff]
    %v3679 = vld [vmem:[#allocation2 + $0x258] sm:$0xff]
    %v3680 = vld [vmem:[#allocation2 + $0x260] sm:$0xff]
    %v3681 = vld [vmem:[#allocation2 + $0x268] sm:$0xff]
    %v3682 = vld [vmem:[#allocation2 + $0x270] sm:$0xff]
    %v3683 = vld [vmem:[#allocation2 + $0x278] sm:$0xff]
    %v3684 = vld [vmem:[#allocation2 + $0x280] sm:$0xff]
    %v3685 = vld [vmem:[#allocation2 + $0x288] sm:$0xff]
    %v3686 = vld [vmem:[#allocation2 + $0x290] sm:$0xff]
    %v3687 = vld [vmem:[#allocation2 + $0x298] sm:$0xff]
    %v3688 = vld [vmem:[#allocation2 + $0x2a0] sm:$0xff]
    %v3689 = vld [vmem:[#allocation2 + $0x2a8] sm:$0xff]
    %v3690 = vld [vmem:[#allocation2 + $0x2b0] sm:$0xff]
    %v3691 = vld [vmem:[#allocation2 + $0x2b8] sm:$0xff]
    %v3692 = vld [vmem:[#allocation2 + $0x2c0] sm:$0xff]
    %v3693 = vld [vmem:[#allocation2 + $0x2c8] sm:$0xff]
    %v3694 = vld [vmem:[#allocation2 + $0x2d0] sm:$0xff]
    %v3695 = vld [vmem:[#allocation2 + $0x2d8] sm:$0xff]
    %v3696 = vld [vmem:[#allocation2 + $0x2e0] sm:$0xff]
    %v3697 = vld [vmem:[#allocation2 + $0x2e8] sm:$0xff]
    %v3698 = vld [vmem:[#allocation2 + $0x2f0] sm:$0xff]
    %v3699 = vld [vmem:[#allocation2 + $0x2f8] sm:$0xff]
    %v3700 = vld [vmem:[#allocation2 + $0x300] sm:$0xff]
    %v3701 = vld [vmem:[#allocation2 + $0x308] sm:$0xff]
    %v3702 = vld [vmem:[#allocation2 + $0x310] sm:$0xff]
    %v3703 = vld [vmem:[#allocation2 + $0x318] sm:$0xff]
    %v3704 = vld [vmem:[#allocation2 + $0x320] sm:$0xff]
    %v3705 = vld [vmem:[#allocation2 + $0x328] sm:$0xff]
    %v3706 = vld [vmem:[#allocation2 + $0x330] sm:$0xff]
    %v3707 = vld [vmem:[#allocation2 + $0x338] sm:$0xff]
    %v3708 = vld [vmem:[#allocation2 + $0x340] sm:$0xff]
    %v3709 = vld [vmem:[#allocation2 + $0x348] sm:$0xff]
    %v3710 = vld [vmem:[#allocation2 + $0x350] sm:$0xff]
    %v3711 = vld [vmem:[#allocation2 + $0x358] sm:$0xff]
    %v3712 = vld [vmem:[#allocation2 + $0x360] sm:$0xff]
    %v3713 = vld [vmem:[#allocation2 + $0x368] sm:$0xff]
    %v3714 = vld [vmem:[#allocation2 + $0x370] sm:$0xff]
    %v3715 = vld [vmem:[#allocation2 + $0x378] sm:$0xff]
    %v3716 = vld [vmem:[#allocation2 + $0x380] sm:$0xff]
    %v3717 = vld [vmem:[#allocation2 + $0x388] sm:$0xff]
    %v3718 = vld [vmem:[#allocation2 + $0x390] sm:$0xff]
    %v3719 = vld [vmem:[#allocation2 + $0x398] sm:$0xff]
    %v3720 = vld [vmem:[#allocation2 + $0x3a0] sm:$0xff]
    %v3721 = vld [vmem:[#allocation2 + $0x3a8] sm:$0xff]
    %v3722 = vld [vmem:[#allocation2 + $0x3b0] sm:$0xff]
    %v3723 = vld [vmem:[#allocation2 + $0x3b8] sm:$0xff]
    %v3724 = vld [vmem:[#allocation2 + $0x3c0] sm:$0xff]
    %v3725 = vld [vmem:[#allocation2 + $0x3c8] sm:$0xff]
    %v3726 = vld [vmem:[#allocation2 + $0x3d0] sm:$0xff]
    %v3727 = vld [vmem:[#allocation2 + $0x3d8] sm:$0xff]
    %v3728 = vld [vmem:[#allocation2 + $0x3e0] sm:$0xff]
    %v3729 = vld [vmem:[#allocation2 + $0x3e8] sm:$0xff]
    %v3730 = vld [vmem:[#allocation2 + $0x3f0] sm:$0xff]
    %v3731 = vld [vmem:[#allocation2 + $0x3f8] sm:$0xff]
    %v3860 = vunpack.c.l.b16 %v3604
    %v3861 = vunpack.c.h.b16 %v3604
    %v3862 = vunpack.c.l.b16 %v3605
    %v3863 = vunpack.c.h.b16 %v3605
    %v3864 = vunpack.c.l.b16 %v3606
    %v3865 = vunpack.c.h.b16 %v3606
    %v3866 = vunpack.c.l.b16 %v3607
    %v3867 = vunpack.c.h.b16 %v3607
    %v3868 = vunpack.c.l.b16 %v3608
    %v3869 = vunpack.c.h.b16 %v3608
    %v3870 = vunpack.c.l.b16 %v3609
    %v3871 = vunpack.c.h.b16 %v3609
    %v3872 = vunpack.c.l.b16 %v3610
    %v3873 = vunpack.c.h.b16 %v3610
    %v3874 = vunpack.c.l.b16 %v3611
    %v3875 = vunpack.c.h.b16 %v3611
    %v3876 = vunpack.c.l.b16 %v3612
    %v3877 = vunpack.c.h.b16 %v3612
    %v3878 = vunpack.c.l.b16 %v3613
    %v3879 = vunpack.c.h.b16 %v3613
    %v3880 = vunpack.c.l.b16 %v3614
    %v3881 = vunpack.c.h.b16 %v3614
    %v3882 = vunpack.c.l.b16 %v3615
    %v3883 = vunpack.c.h.b16 %v3615
    %v3884 = vunpack.c.l.b16 %v3616
    %v3885 = vunpack.c.h.b16 %v3616
    %v3886 = vunpack.c.l.b16 %v3617
    %v3887 = vunpack.c.h.b16 %v3617
    %v3888 = vunpack.c.l.b16 %v3618
    %v3889 = vunpack.c.h.b16 %v3618
    %v3890 = vunpack.c.l.b16 %v3619
    %v3891 = vunpack.c.h.b16 %v3619
    %v3892 = vunpack.c.l.b16 %v3620
    %v3893 = vunpack.c.h.b16 %v3620
    %v3894 = vunpack.c.l.b16 %v3621
    %v3895 = vunpack.c.h.b16 %v3621
    %v3896 = vunpack.c.l.b16 %v3622
    %v3897 = vunpack.c.h.b16 %v3622
    %v3898 = vunpack.c.l.b16 %v3623
    %v3899 = vunpack.c.h.b16 %v3623
    %v3900 = vunpack.c.l.b16 %v3624
    %v3901 = vunpack.c.h.b16 %v3624
    %v3902 = vunpack.c.l.b16 %v3625
    %v3903 = vunpack.c.h.b16 %v3625
    %v3904 = vunpack.c.l.b16 %v3626
    %v3905 = vunpack.c.h.b16 %v3626
    %v3906 = vunpack.c.l.b16 %v3627
    %v3907 = vunpack.c.h.b16 %v3627
    %v3908 = vunpack.c.l.b16 %v3628
    %v3909 = vunpack.c.h.b16 %v3628
    %v3910 = vunpack.c.l.b16 %v3629
    %v3911 = vunpack.c.h.b16 %v3629
    %v3912 = vunpack.c.l.b16 %v3630
    %v3913 = vunpack.c.h.b16 %v3630
    %v3914 = vunpack.c.l.b16 %v3631
    %v3915 = vunpack.c.h.b16 %v3631
    %v3916 = vunpack.c.l.b16 %v3632
    %v3917 = vunpack.c.h.b16 %v3632
    %v3918 = vunpack.c.l.b16 %v3633
    %v3919 = vunpack.c.h.b16 %v3633
    %v3920 = vunpack.c.l.b16 %v3634
    %v3921 = vunpack.c.h.b16 %v3634
    %v3922 = vunpack.c.l.b16 %v3635
    %v3923 = vunpack.c.h.b16 %v3635
    %v3924 = vunpack.c.l.b16 %v3636
    %v3925 = vunpack.c.h.b16 %v3636
    %v3926 = vunpack.c.l.b16 %v3637
    %v3927 = vunpack.c.h.b16 %v3637
    %v3928 = vunpack.c.l.b16 %v3638
    %v3929 = vunpack.c.h.b16 %v3638
    %v3930 = vunpack.c.l.b16 %v3639
    %v3931 = vunpack.c.h.b16 %v3639
    %v3932 = vunpack.c.l.b16 %v3640
    %v3933 = vunpack.c.h.b16 %v3640
    %v3934 = vunpack.c.l.b16 %v3641
    %v3935 = vunpack.c.h.b16 %v3641
    %v3936 = vunpack.c.l.b16 %v3642
    %v3937 = vunpack.c.h.b16 %v3642
    %v3938 = vunpack.c.l.b16 %v3643
    %v3939 = vunpack.c.h.b16 %v3643
    %v3940 = vunpack.c.l.b16 %v3644
    %v3941 = vunpack.c.h.b16 %v3644
    %v3942 = vunpack.c.l.b16 %v3645
    %v3943 = vunpack.c.h.b16 %v3645
    %v3944 = vunpack.c.l.b16 %v3646
    %v3945 = vunpack.c.h.b16 %v3646
    %v3946 = vunpack.c.l.b16 %v3647
    %v3947 = vunpack.c.h.b16 %v3647
    %v3948 = vunpack.c.l.b16 %v3648
    %v3949 = vunpack.c.h.b16 %v3648
    %v3950 = vunpack.c.l.b16 %v3649
    %v3951 = vunpack.c.h.b16 %v3649
    %v3952 = vunpack.c.l.b16 %v3650
    %v3953 = vunpack.c.h.b16 %v3650
    %v3954 = vunpack.c.l.b16 %v3651
    %v3955 = vunpack.c.h.b16 %v3651
    %v3956 = vunpack.c.l.b16 %v3652
    %v3957 = vunpack.c.h.b16 %v3652
    %v3958 = vunpack.c.l.b16 %v3653
    %v3959 = vunpack.c.h.b16 %v3653
    %v3960 = vunpack.c.l.b16 %v3654
    %v3961 = vunpack.c.h.b16 %v3654
    %v3962 = vunpack.c.l.b16 %v3655
    %v3963 = vunpack.c.h.b16 %v3655
    %v3964 = vunpack.c.l.b16 %v3656
    %v3965 = vunpack.c.h.b16 %v3656
    %v3966 = vunpack.c.l.b16 %v3657
    %v3967 = vunpack.c.h.b16 %v3657
    %v3968 = vunpack.c.l.b16 %v3658
    %v3969 = vunpack.c.h.b16 %v3658
    %v3970 = vunpack.c.l.b16 %v3659
    %v3971 = vunpack.c.h.b16 %v3659
    %v3972 = vunpack.c.l.b16 %v3660
    %v3973 = vunpack.c.h.b16 %v3660
    %v3974 = vunpack.c.l.b16 %v3661
    %v3975 = vunpack.c.h.b16 %v3661
    %v3976 = vunpack.c.l.b16 %v3662
    %v3977 = vunpack.c.h.b16 %v3662
    %v3978 = vunpack.c.l.b16 %v3663
    %v3979 = vunpack.c.h.b16 %v3663
    %v3980 = vunpack.c.l.b16 %v3664
    %v3981 = vunpack.c.h.b16 %v3664
    %v3982 = vunpack.c.l.b16 %v3665
    %v3983 = vunpack.c.h.b16 %v3665
    %v3984 = vunpack.c.l.b16 %v3666
    %v3985 = vunpack.c.h.b16 %v3666
    %v3986 = vunpack.c.l.b16 %v3667
    %v3987 = vunpack.c.h.b16 %v3667
    %v3988 = vunpack.c.l.b16 %v3668
    %v3989 = vunpack.c.h.b16 %v3668
    %v3990 = vunpack.c.l.b16 %v3669
    %v3991 = vunpack.c.h.b16 %v3669
    %v3992 = vunpack.c.l.b16 %v3670
    %v3993 = vunpack.c.h.b16 %v3670
    %v3994 = vunpack.c.l.b16 %v3671
    %v3995 = vunpack.c.h.b16 %v3671
    %v3996 = vunpack.c.l.b16 %v3672
    %v3997 = vunpack.c.h.b16 %v3672
    %v3998 = vunpack.c.l.b16 %v3673
    %v3999 = vunpack.c.h.b16 %v3673
    %v4000 = vunpack.c.l.b16 %v3674
    %v4001 = vunpack.c.h.b16 %v3674
    %v4002 = vunpack.c.l.b16 %v3675
    %v4003 = vunpack.c.h.b16 %v3675
    %v4004 = vunpack.c.l.b16 %v3676
    %v4005 = vunpack.c.h.b16 %v3676
    %v4006 = vunpack.c.l.b16 %v3677
    %v4007 = vunpack.c.h.b16 %v3677
    %v4008 = vunpack.c.l.b16 %v3678
    %v4009 = vunpack.c.h.b16 %v3678
    %v4010 = vunpack.c.l.b16 %v3679
    %v4011 = vunpack.c.h.b16 %v3679
    %v4012 = vunpack.c.l.b16 %v3680
    %v4013 = vunpack.c.h.b16 %v3680
    %v4014 = vunpack.c.l.b16 %v3681
    %v4015 = vunpack.c.h.b16 %v3681
    %v4016 = vunpack.c.l.b16 %v3682
    %v4017 = vunpack.c.h.b16 %v3682
    %v4018 = vunpack.c.l.b16 %v3683
    %v4019 = vunpack.c.h.b16 %v3683
    %v4020 = vunpack.c.l.b16 %v3684
    %v4021 = vunpack.c.h.b16 %v3684
    %v4022 = vunpack.c.l.b16 %v3685
    %v4023 = vunpack.c.h.b16 %v3685
    %v4024 = vunpack.c.l.b16 %v3686
    %v4025 = vunpack.c.h.b16 %v3686
    %v4026 = vunpack.c.l.b16 %v3687
    %v4027 = vunpack.c.h.b16 %v3687
    %v4028 = vunpack.c.l.b16 %v3688
    %v4029 = vunpack.c.h.b16 %v3688
    %v4030 = vunpack.c.l.b16 %v3689
    %v4031 = vunpack.c.h.b16 %v3689
    %v4032 = vunpack.c.l.b16 %v3690
    %v4033 = vunpack.c.h.b16 %v3690
    %v4034 = vunpack.c.l.b16 %v3691
    %v4035 = vunpack.c.h.b16 %v3691
    %v4036 = vunpack.c.l.b16 %v3692
    %v4037 = vunpack.c.h.b16 %v3692
    %v4038 = vunpack.c.l.b16 %v3693
    %v4039 = vunpack.c.h.b16 %v3693
    %v4040 = vunpack.c.l.b16 %v3694
    %v4041 = vunpack.c.h.b16 %v3694
    %v4042 = vunpack.c.l.b16 %v3695
    %v4043 = vunpack.c.h.b16 %v3695
    %v4044 = vunpack.c.l.b16 %v3696
    %v4045 = vunpack.c.h.b16 %v3696
    %v4046 = vunpack.c.l.b16 %v3697
    %v4047 = vunpack.c.h.b16 %v3697
    %v4048 = vunpack.c.l.b16 %v3698
    %v4049 = vunpack.c.h.b16 %v3698
    %v4050 = vunpack.c.l.b16 %v3699
    %v4051 = vunpack.c.h.b16 %v3699
    %v4052 = vunpack.c.l.b16 %v3700
    %v4053 = vunpack.c.h.b16 %v3700
    %v4054 = vunpack.c.l.b16 %v3701
    %v4055 = vunpack.c.h.b16 %v3701
    %v4056 = vunpack.c.l.b16 %v3702
    %v4057 = vunpack.c.h.b16 %v3702
    %v4058 = vunpack.c.l.b16 %v3703
    %v4059 = vunpack.c.h.b16 %v3703
    %v4060 = vunpack.c.l.b16 %v3704
    %v4061 = vunpack.c.h.b16 %v3704
    %v4062 = vunpack.c.l.b16 %v3705
    %v4063 = vunpack.c.h.b16 %v3705
    %v4064 = vunpack.c.l.b16 %v3706
    %v4065 = vunpack.c.h.b16 %v3706
    %v4066 = vunpack.c.l.b16 %v3707
    %v4067 = vunpack.c.h.b16 %v3707
    %v4068 = vunpack.c.l.b16 %v3708
    %v4069 = vunpack.c.h.b16 %v3708
    %v4070 = vunpack.c.l.b16 %v3709
    %v4071 = vunpack.c.h.b16 %v3709
    %v4072 = vunpack.c.l.b16 %v3710
    %v4073 = vunpack.c.h.b16 %v3710
    %v4074 = vunpack.c.l.b16 %v3711
    %v4075 = vunpack.c.h.b16 %v3711
    %v4076 = vunpack.c.l.b16 %v3712
    %v4077 = vunpack.c.h.b16 %v3712
    %v4078 = vunpack.c.l.b16 %v3713
    %v4079 = vunpack.c.h.b16 %v3713
    %v4080 = vunpack.c.l.b16 %v3714
    %v4081 = vunpack.c.h.b16 %v3714
    %v4082 = vunpack.c.l.b16 %v3715
    %v4083 = vunpack.c.h.b16 %v3715
    %v4084 = vunpack.c.l.b16 %v3716
    %v4085 = vunpack.c.h.b16 %v3716
    %v4086 = vunpack.c.l.b16 %v3717
    %v4087 = vunpack.c.h.b16 %v3717
    %v4088 = vunpack.c.l.b16 %v3718
    %v4089 = vunpack.c.h.b16 %v3718
    %v4090 = vunpack.c.l.b16 %v3719
    %v4091 = vunpack.c.h.b16 %v3719
    %v4092 = vunpack.c.l.b16 %v3720
    %v4093 = vunpack.c.h.b16 %v3720
    %v4094 = vunpack.c.l.b16 %v3721
    %v4095 = vunpack.c.h.b16 %v3721
    %v4096 = vunpack.c.l.b16 %v3722
    %v4097 = vunpack.c.h.b16 %v3722
    %v4098 = vunpack.c.l.b16 %v3723
    %v4099 = vunpack.c.h.b16 %v3723
    %v4100 = vunpack.c.l.b16 %v3724
    %v4101 = vunpack.c.h.b16 %v3724
    %v4102 = vunpack.c.l.b16 %v3725
    %v4103 = vunpack.c.h.b16 %v3725
    %v4104 = vunpack.c.l.b16 %v3726
    %v4105 = vunpack.c.h.b16 %v3726
    %v4106 = vunpack.c.l.b16 %v3727
    %v4107 = vunpack.c.h.b16 %v3727
    %v4108 = vunpack.c.l.b16 %v3728
    %v4109 = vunpack.c.h.b16 %v3728
    %v4110 = vunpack.c.l.b16 %v3729
    %v4111 = vunpack.c.h.b16 %v3729
    %v4112 = vunpack.c.l.b16 %v3730
    %v4113 = vunpack.c.h.b16 %v3730
    %v4114 = vunpack.c.l.b16 %v3731
    %v4115 = vunpack.c.h.b16 %v3731
    %v4116 = vpack.c.b16 %v3864, %v3860
    %v4117 = vpack.c.b16 %v3865, %v3861
    %v4118 = vpack.c.b16 %v3866, %v3862
    %v4119 = vpack.c.b16 %v3867, %v3863
    %v4120 = vpack.c.b16 %v3872, %v3868
    %v4121 = vpack.c.b16 %v3873, %v3869
    %v4122 = vpack.c.b16 %v3874, %v3870
    %v4123 = vpack.c.b16 %v3875, %v3871
    %v4124 = vpack.c.b16 %v3880, %v3876
    %v4125 = vpack.c.b16 %v3881, %v3877
    %v4126 = vpack.c.b16 %v3882, %v3878
    %v4127 = vpack.c.b16 %v3883, %v3879
    %v4128 = vpack.c.b16 %v3888, %v3884
    %v4129 = vpack.c.b16 %v3889, %v3885
    %v4130 = vpack.c.b16 %v3890, %v3886
    %v4131 = vpack.c.b16 %v3891, %v3887
    %v4132 = vpack.c.b16 %v3896, %v3892
    %v4133 = vpack.c.b16 %v3897, %v3893
    %v4134 = vpack.c.b16 %v3898, %v3894
    %v4135 = vpack.c.b16 %v3899, %v3895
    %v4136 = vpack.c.b16 %v3904, %v3900
    %v4137 = vpack.c.b16 %v3905, %v3901
    %v4138 = vpack.c.b16 %v3906, %v3902
    %v4139 = vpack.c.b16 %v3907, %v3903
    %v4140 = vpack.c.b16 %v3912, %v3908
    %v4141 = vpack.c.b16 %v3913, %v3909
    %v4142 = vpack.c.b16 %v3914, %v3910
    %v4143 = vpack.c.b16 %v3915, %v3911
    %v4144 = vpack.c.b16 %v3920, %v3916
    %v4145 = vpack.c.b16 %v3921, %v3917
    %v4146 = vpack.c.b16 %v3922, %v3918
    %v4147 = vpack.c.b16 %v3923, %v3919
    %v4148 = vpack.c.b16 %v3928, %v3924
    %v4149 = vpack.c.b16 %v3929, %v3925
    %v4150 = vpack.c.b16 %v3930, %v3926
    %v4151 = vpack.c.b16 %v3931, %v3927
    %v4152 = vpack.c.b16 %v3936, %v3932
    %v4153 = vpack.c.b16 %v3937, %v3933
    %v4154 = vpack.c.b16 %v3938, %v3934
    %v4155 = vpack.c.b16 %v3939, %v3935
    %v4156 = vpack.c.b16 %v3944, %v3940
    %v4157 = vpack.c.b16 %v3945, %v3941
    %v4158 = vpack.c.b16 %v3946, %v3942
    %v4159 = vpack.c.b16 %v3947, %v3943
    %v4160 = vpack.c.b16 %v3952, %v3948
    %v4161 = vpack.c.b16 %v3953, %v3949
    %v4162 = vpack.c.b16 %v3954, %v3950
    %v4163 = vpack.c.b16 %v3955, %v3951
    %v4164 = vpack.c.b16 %v3960, %v3956
    %v4165 = vpack.c.b16 %v3961, %v3957
    %v4166 = vpack.c.b16 %v3962, %v3958
    %v4167 = vpack.c.b16 %v3963, %v3959
    %v4168 = vpack.c.b16 %v3968, %v3964
    %v4169 = vpack.c.b16 %v3969, %v3965
    %v4170 = vpack.c.b16 %v3970, %v3966
    %v4171 = vpack.c.b16 %v3971, %v3967
    %v4172 = vpack.c.b16 %v3976, %v3972
    %v4173 = vpack.c.b16 %v3977, %v3973
    %v4174 = vpack.c.b16 %v3978, %v3974
    %v4175 = vpack.c.b16 %v3979, %v3975
    %v4176 = vpack.c.b16 %v3984, %v3980
    %v4177 = vpack.c.b16 %v3985, %v3981
    %v4178 = vpack.c.b16 %v3986, %v3982
    %v4179 = vpack.c.b16 %v3987, %v3983
    %v4180 = vpack.c.b16 %v3992, %v3988
    %v4181 = vpack.c.b16 %v3993, %v3989
    %v4182 = vpack.c.b16 %v3994, %v3990
    %v4183 = vpack.c.b16 %v3995, %v3991
    %v4184 = vpack.c.b16 %v4000, %v3996
    %v4185 = vpack.c.b16 %v4001, %v3997
    %v4186 = vpack.c.b16 %v4002, %v3998
    %v4187 = vpack.c.b16 %v4003, %v3999
    %v4188 = vpack.c.b16 %v4008, %v4004
    %v4189 = vpack.c.b16 %v4009, %v4005
    %v4190 = vpack.c.b16 %v4010, %v4006
    %v4191 = vpack.c.b16 %v4011, %v4007
    %v4192 = vpack.c.b16 %v4016, %v4012
    %v4193 = vpack.c.b16 %v4017, %v4013
    %v4194 = vpack.c.b16 %v4018, %v4014
    %v4195 = vpack.c.b16 %v4019, %v4015
    %v4196 = vpack.c.b16 %v4024, %v4020
    %v4197 = vpack.c.b16 %v4025, %v4021
    %v4198 = vpack.c.b16 %v4026, %v4022
    %v4199 = vpack.c.b16 %v4027, %v4023
    %v4200 = vpack.c.b16 %v4032, %v4028
    %v4201 = vpack.c.b16 %v4033, %v4029
    %v4202 = vpack.c.b16 %v4034, %v4030
    %v4203 = vpack.c.b16 %v4035, %v4031
    %v4204 = vpack.c.b16 %v4040, %v4036
    %v4205 = vpack.c.b16 %v4041, %v4037
    %v4206 = vpack.c.b16 %v4042, %v4038
    %v4207 = vpack.c.b16 %v4043, %v4039
    %v4208 = vpack.c.b16 %v4048, %v4044
    %v4209 = vpack.c.b16 %v4049, %v4045
    %v4210 = vpack.c.b16 %v4050, %v4046
    %v4211 = vpack.c.b16 %v4051, %v4047
    %v4212 = vpack.c.b16 %v4056, %v4052
    %v4213 = vpack.c.b16 %v4057, %v4053
    %v4214 = vpack.c.b16 %v4058, %v4054
    %v4215 = vpack.c.b16 %v4059, %v4055
    %v4216 = vpack.c.b16 %v4064, %v4060
    %v4217 = vpack.c.b16 %v4065, %v4061
    %v4218 = vpack.c.b16 %v4066, %v4062
    %v4219 = vpack.c.b16 %v4067, %v4063
    %v4220 = vpack.c.b16 %v4072, %v4068
    %v4221 = vpack.c.b16 %v4073, %v4069
    %v4222 = vpack.c.b16 %v4074, %v4070
    %v4223 = vpack.c.b16 %v4075, %v4071
    %v4224 = vpack.c.b16 %v4080, %v4076
    %v4225 = vpack.c.b16 %v4081, %v4077
    %v4226 = vpack.c.b16 %v4082, %v4078
    %v4227 = vpack.c.b16 %v4083, %v4079
    %v4228 = vpack.c.b16 %v4088, %v4084
    %v4229 = vpack.c.b16 %v4089, %v4085
    %v4230 = vpack.c.b16 %v4090, %v4086
    %v4231 = vpack.c.b16 %v4091, %v4087
    %v4232 = vpack.c.b16 %v4096, %v4092
    %v4233 = vpack.c.b16 %v4097, %v4093
    %v4234 = vpack.c.b16 %v4098, %v4094
    %v4235 = vpack.c.b16 %v4099, %v4095
    %v4236 = vpack.c.b16 %v4104, %v4100
    %v4237 = vpack.c.b16 %v4105, %v4101
    %v4238 = vpack.c.b16 %v4106, %v4102
    %v4239 = vpack.c.b16 %v4107, %v4103
    %v4240 = vpack.c.b16 %v4112, %v4108
    %v4241 = vpack.c.b16 %v4113, %v4109
    %v4242 = vpack.c.b16 %v4114, %v4110
    %v4243 = vpack.c.b16 %v4115, %v4111
    %4372 = vmatpush.bf16.msra.mxu0 %v4144
    %4373 = vmatpush.bf16.msra.mxu0 %v4140
    %4374 = vmatpush.bf16.msra.mxu0 %v4136
    %4375 = vmatpush.bf16.msra.mxu0 %v4132
    %4376 = vmatpush.bf16.msra.mxu0 %v4128
    %4377 = vmatpush.bf16.msra.mxu0 %v4124
    %4378 = vmatpush.bf16.msra.mxu0 %v4120
    %4379 = vmatpush.bf16.msra.mxu0 %v4116
    %4380 = vmatmul.bf16.gmra.mxu0 %v3540
    %v4381 = vpop.f32.mrf.mxu0
    %v4382 = vadd.f32 0.0, %v4381
    %v4383 = vpop.f32.mrf.mxu0
    %v4384 = vadd.f32 0.0, %v4383
    %4385 = vmatmul.bf16.gmra.mxu0 %v3544
    %v4386 = vpop.f32.mrf.mxu0
    %v4387 = vadd.f32 0.0, %v4386
    %v4388 = vpop.f32.mrf.mxu0
    %v4389 = vadd.f32 0.0, %v4388
    %4390 = vmatmul.bf16.gmra.mxu0 %v3548
    %v4391 = vpop.f32.mrf.mxu0
    %v4392 = vadd.f32 0.0, %v4391
    %v4393 = vpop.f32.mrf.mxu0
    %v4394 = vadd.f32 0.0, %v4393
    %4395 = vmatmul.bf16.gmra.mxu0 %v3552
    %v4396 = vpop.f32.mrf.mxu0
    %v4397 = vadd.f32 0.0, %v4396
    %v4398 = vpop.f32.mrf.mxu0
    %v4399 = vadd.f32 0.0, %v4398
    %4400 = vmatmul.bf16.gmra.mxu0 %v3556
    %v4401 = vpop.f32.mrf.mxu0
    %v4402 = vadd.f32 0.0, %v4401
    %v4403 = vpop.f32.mrf.mxu0
    %v4404 = vadd.f32 0.0, %v4403
    %4405 = vmatmul.bf16.gmra.mxu0 %v3560
    %v4406 = vpop.f32.mrf.mxu0
    %v4407 = vadd.f32 0.0, %v4406
    %v4408 = vpop.f32.mrf.mxu0
    %v4409 = vadd.f32 0.0, %v4408
    %4410 = vmatmul.bf16.gmra.mxu0 %v3564
    %v4411 = vpop.f32.mrf.mxu0
    %v4412 = vadd.f32 0.0, %v4411
    %v4413 = vpop.f32.mrf.mxu0
    %v4414 = vadd.f32 0.0, %v4413
    %4415 = vmatmul.bf16.gmra.mxu0 %v3568
    %v4416 = vpop.f32.mrf.mxu0
    %v4417 = vadd.f32 0.0, %v4416
    %v4418 = vpop.f32.mrf.mxu0
    %v4419 = vadd.f32 0.0, %v4418
    %4420 = vmatmul.bf16.gmra.mxu0 %v3572
    %v4421 = vpop.f32.mrf.mxu0
    %v4422 = vadd.f32 0.0, %v4421
    %v4423 = vpop.f32.mrf.mxu0
    %v4424 = vadd.f32 0.0, %v4423
    %4425 = vmatmul.bf16.gmra.mxu0 %v3576
    %v4426 = vpop.f32.mrf.mxu0
    %v4427 = vadd.f32 0.0, %v4426
    %v4428 = vpop.f32.mrf.mxu0
    %v4429 = vadd.f32 0.0, %v4428
    %4430 = vmatmul.bf16.gmra.mxu0 %v3580
    %v4431 = vpop.f32.mrf.mxu0
    %v4432 = vadd.f32 0.0, %v4431
    %v4433 = vpop.f32.mrf.mxu0
    %v4434 = vadd.f32 0.0, %v4433
    %4435 = vmatmul.bf16.gmra.mxu0 %v3584
    %v4436 = vpop.f32.mrf.mxu0
    %v4437 = vadd.f32 0.0, %v4436
    %v4438 = vpop.f32.mrf.mxu0
    %v4439 = vadd.f32 0.0, %v4438
    %4440 = vmatmul.bf16.gmra.mxu0 %v3588
    %v4441 = vpop.f32.mrf.mxu0
    %v4442 = vadd.f32 0.0, %v4441
    %v4443 = vpop.f32.mrf.mxu0
    %v4444 = vadd.f32 0.0, %v4443
    %4445 = vmatmul.bf16.gmra.mxu0 %v3592
    %v4446 = vpop.f32.mrf.mxu0
    %v4447 = vadd.f32 0.0, %v4446
    %v4448 = vpop.f32.mrf.mxu0
    %v4449 = vadd.f32 0.0, %v4448
    %4450 = vmatmul.bf16.gmra.mxu0 %v3596
    %v4451 = vpop.f32.mrf.mxu0
    %v4452 = vadd.f32 0.0, %v4451
    %v4453 = vpop.f32.mrf.mxu0
    %v4454 = vadd.f32 0.0, %v4453
    %4455 = vmatmul.bf16.gmra.mxu0 %v3600
    %v4456 = vpop.f32.mrf.mxu0
    %v4457 = vadd.f32 0.0, %v4456
    %v4458 = vpop.f32.mrf.mxu0
    %v4459 = vadd.f32 0.0, %v4458
    %4460 = vdwg.mxu0
    %4461 = vmatpush.bf16.msra.mxu0 %v4176
    %4462 = vmatpush.bf16.msra.mxu0 %v4172
    %4463 = vmatpush.bf16.msra.mxu0 %v4168
    %4464 = vmatpush.bf16.msra.mxu0 %v4164
    %4465 = vmatpush.bf16.msra.mxu0 %v4160
    %4466 = vmatpush.bf16.msra.mxu0 %v4156
    %4467 = vmatpush.bf16.msra.mxu0 %v4152
    %4468 = vmatpush.bf16.msra.mxu0 %v4148
    %4469 = vmatmul.bf16.gmra.mxu0 %v3541
    %v4470 = vpop.f32.mrf.mxu0
    %v4471 = vadd.f32 %v4382, %v4470
    %v4472 = vpop.f32.mrf.mxu0
    %v4473 = vadd.f32 %v4384, %v4472
    %4474 = vmatmul.bf16.gmra.mxu0 %v3545
    %v4475 = vpop.f32.mrf.mxu0
    %v4476 = vadd.f32 %v4387, %v4475
    %v4477 = vpop.f32.mrf.mxu0
    %v4478 = vadd.f32 %v4389, %v4477
    %4479 = vmatmul.bf16.gmra.mxu0 %v3549
    %v4480 = vpop.f32.mrf.mxu0
    %v4481 = vadd.f32 %v4392, %v4480
    %v4482 = vpop.f32.mrf.mxu0
    %v4483 = vadd.f32 %v4394, %v4482
    %4484 = vmatmul.bf16.gmra.mxu0 %v3553
    %v4485 = vpop.f32.mrf.mxu0
    %v4486 = vadd.f32 %v4397, %v4485
    %v4487 = vpop.f32.mrf.mxu0
    %v4488 = vadd.f32 %v4399, %v4487
    %4489 = vmatmul.bf16.gmra.mxu0 %v3557
    %v4490 = vpop.f32.mrf.mxu0
    %v4491 = vadd.f32 %v4402, %v4490
    %v4492 = vpop.f32.mrf.mxu0
    %v4493 = vadd.f32 %v4404, %v4492
    %4494 = vmatmul.bf16.gmra.mxu0 %v3561
    %v4495 = vpop.f32.mrf.mxu0
    %v4496 = vadd.f32 %v4407, %v4495
    %v4497 = vpop.f32.mrf.mxu0
    %v4498 = vadd.f32 %v4409, %v4497
    %4499 = vmatmul.bf16.gmra.mxu0 %v3565
    %v4500 = vpop.f32.mrf.mxu0
    %v4501 = vadd.f32 %v4412, %v4500
    %v4502 = vpop.f32.mrf.mxu0
    %v4503 = vadd.f32 %v4414, %v4502
    %4504 = vmatmul.bf16.gmra.mxu0 %v3569
    %v4505 = vpop.f32.mrf.mxu0
    %v4506 = vadd.f32 %v4417, %v4505
    %v4507 = vpop.f32.mrf.mxu0
    %v4508 = vadd.f32 %v4419, %v4507
    %4509 = vmatmul.bf16.gmra.mxu0 %v3573
    %v4510 = vpop.f32.mrf.mxu0
    %v4511 = vadd.f32 %v4422, %v4510
    %v4512 = vpop.f32.mrf.mxu0
    %v4513 = vadd.f32 %v4424, %v4512
    %4514 = vmatmul.bf16.gmra.mxu0 %v3577
    %v4515 = vpop.f32.mrf.mxu0
    %v4516 = vadd.f32 %v4427, %v4515
    %v4517 = vpop.f32.mrf.mxu0
    %v4518 = vadd.f32 %v4429, %v4517
    %4519 = vmatmul.bf16.gmra.mxu0 %v3581
    %v4520 = vpop.f32.mrf.mxu0
    %v4521 = vadd.f32 %v4432, %v4520
    %v4522 = vpop.f32.mrf.mxu0
    %v4523 = vadd.f32 %v4434, %v4522
    %4524 = vmatmul.bf16.gmra.mxu0 %v3585
    %v4525 = vpop.f32.mrf.mxu0
    %v4526 = vadd.f32 %v4437, %v4525
    %v4527 = vpop.f32.mrf.mxu0
    %v4528 = vadd.f32 %v4439, %v4527
    %4529 = vmatmul.bf16.gmra.mxu0 %v3589
    %v4530 = vpop.f32.mrf.mxu0
    %v4531 = vadd.f32 %v4442, %v4530
    %v4532 = vpop.f32.mrf.mxu0
    %v4533 = vadd.f32 %v4444, %v4532
    %4534 = vmatmul.bf16.gmra.mxu0 %v3593
    %v4535 = vpop.f32.mrf.mxu0
    %v4536 = vadd.f32 %v4447, %v4535
    %v4537 = vpop.f32.mrf.mxu0
    %v4538 = vadd.f32 %v4449, %v4537
    %4539 = vmatmul.bf16.gmra.mxu0 %v3597
    %v4540 = vpop.f32.mrf.mxu0
    %v4541 = vadd.f32 %v4452, %v4540
    %v4542 = vpop.f32.mrf.mxu0
    %v4543 = vadd.f32 %v4454, %v4542
    %4544 = vmatmul.bf16.gmra.mxu0 %v3601
    %v4545 = vpop.f32.mrf.mxu0
    %v4546 = vadd.f32 %v4457, %v4545
    %v4547 = vpop.f32.mrf.mxu0
    %v4548 = vadd.f32 %v4459, %v4547
    %4549 = vdwg.mxu0
    %4550 = vmatpush.bf16.msra.mxu0 %v4208
    %4551 = vmatpush.bf16.msra.mxu0 %v4204
    %4552 = vmatpush.bf16.msra.mxu0 %v4200
    %4553 = vmatpush.bf16.msra.mxu0 %v4196
    %4554 = vmatpush.bf16.msra.mxu0 %v4192
    %4555 = vmatpush.bf16.msra.mxu0 %v4188
    %4556 = vmatpush.bf16.msra.mxu0 %v4184
    %4557 = vmatpush.bf16.msra.mxu0 %v4180
    %4558 = vmatmul.bf16.gmra.mxu0 %v3542
    %v4559 = vpop.f32.mrf.mxu0
    %v4560 = vadd.f32 %v4471, %v4559
    %v4561 = vpop.f32.mrf.mxu0
    %v4562 = vadd.f32 %v4473, %v4561
    %4563 = vmatmul.bf16.gmra.mxu0 %v3546
    %v4564 = vpop.f32.mrf.mxu0
    %v4565 = vadd.f32 %v4476, %v4564
    %v4566 = vpop.f32.mrf.mxu0
    %v4567 = vadd.f32 %v4478, %v4566
    %4568 = vmatmul.bf16.gmra.mxu0 %v3550
    %v4569 = vpop.f32.mrf.mxu0
    %v4570 = vadd.f32 %v4481, %v4569
    %v4571 = vpop.f32.mrf.mxu0
    %v4572 = vadd.f32 %v4483, %v4571
    %4573 = vmatmul.bf16.gmra.mxu0 %v3554
    %v4574 = vpop.f32.mrf.mxu0
    %v4575 = vadd.f32 %v4486, %v4574
    %v4576 = vpop.f32.mrf.mxu0
    %v4577 = vadd.f32 %v4488, %v4576
    %4578 = vmatmul.bf16.gmra.mxu0 %v3558
    %v4579 = vpop.f32.mrf.mxu0
    %v4580 = vadd.f32 %v4491, %v4579
    %v4581 = vpop.f32.mrf.mxu0
    %v4582 = vadd.f32 %v4493, %v4581
    %4583 = vmatmul.bf16.gmra.mxu0 %v3562
    %v4584 = vpop.f32.mrf.mxu0
    %v4585 = vadd.f32 %v4496, %v4584
    %v4586 = vpop.f32.mrf.mxu0
    %v4587 = vadd.f32 %v4498, %v4586
    %4588 = vmatmul.bf16.gmra.mxu0 %v3566
    %v4589 = vpop.f32.mrf.mxu0
    %v4590 = vadd.f32 %v4501, %v4589
    %v4591 = vpop.f32.mrf.mxu0
    %v4592 = vadd.f32 %v4503, %v4591
    %4593 = vmatmul.bf16.gmra.mxu0 %v3570
    %v4594 = vpop.f32.mrf.mxu0
    %v4595 = vadd.f32 %v4506, %v4594
    %v4596 = vpop.f32.mrf.mxu0
    %v4597 = vadd.f32 %v4508, %v4596
    %4598 = vmatmul.bf16.gmra.mxu0 %v3574
    %v4599 = vpop.f32.mrf.mxu0
    %v4600 = vadd.f32 %v4511, %v4599
    %v4601 = vpop.f32.mrf.mxu0
    %v4602 = vadd.f32 %v4513, %v4601
    %4603 = vmatmul.bf16.gmra.mxu0 %v3578
    %v4604 = vpop.f32.mrf.mxu0
    %v4605 = vadd.f32 %v4516, %v4604
    %v4606 = vpop.f32.mrf.mxu0
    %v4607 = vadd.f32 %v4518, %v4606
    %4608 = vmatmul.bf16.gmra.mxu0 %v3582
    %v4609 = vpop.f32.mrf.mxu0
    %v4610 = vadd.f32 %v4521, %v4609
    %v4611 = vpop.f32.mrf.mxu0
    %v4612 = vadd.f32 %v4523, %v4611
    %4613 = vmatmul.bf16.gmra.mxu0 %v3586
    %v4614 = vpop.f32.mrf.mxu0
    %v4615 = vadd.f32 %v4526, %v4614
    %v4616 = vpop.f32.mrf.mxu0
    %v4617 = vadd.f32 %v4528, %v4616
    %4618 = vmatmul.bf16.gmra.mxu0 %v3590
    %v4619 = vpop.f32.mrf.mxu0
    %v4620 = vadd.f32 %v4531, %v4619
    %v4621 = vpop.f32.mrf.mxu0
    %v4622 = vadd.f32 %v4533, %v4621
    %4623 = vmatmul.bf16.gmra.mxu0 %v3594
    %v4624 = vpop.f32.mrf.mxu0
    %v4625 = vadd.f32 %v4536, %v4624
    %v4626 = vpop.f32.mrf.mxu0
    %v4627 = vadd.f32 %v4538, %v4626
    %4628 = vmatmul.bf16.gmra.mxu0 %v3598
    %v4629 = vpop.f32.mrf.mxu0
    %v4630 = vadd.f32 %v4541, %v4629
    %v4631 = vpop.f32.mrf.mxu0
    %v4632 = vadd.f32 %v4543, %v4631
    %4633 = vmatmul.bf16.gmra.mxu0 %v3602
    %v4634 = vpop.f32.mrf.mxu0
    %v4635 = vadd.f32 %v4546, %v4634
    %v4636 = vpop.f32.mrf.mxu0
    %v4637 = vadd.f32 %v4548, %v4636
    %4638 = vdwg.mxu0
    %4639 = vmatpush.bf16.msra.mxu0 %v4240
    %4640 = vmatpush.bf16.msra.mxu0 %v4236
    %4641 = vmatpush.bf16.msra.mxu0 %v4232
    %4642 = vmatpush.bf16.msra.mxu0 %v4228
    %4643 = vmatpush.bf16.msra.mxu0 %v4224
    %4644 = vmatpush.bf16.msra.mxu0 %v4220
    %4645 = vmatpush.bf16.msra.mxu0 %v4216
    %4646 = vmatpush.bf16.msra.mxu0 %v4212
    %4647 = vmatmul.bf16.gmra.mxu0 %v3543
    %v4648 = vpop.f32.mrf.mxu0
    %v4649 = vadd.f32 %v4560, %v4648
    %v4650 = vpop.f32.mrf.mxu0
    %v4651 = vadd.f32 %v4562, %v4650
    %4652 = vmatmul.bf16.gmra.mxu0 %v3547
    %v4653 = vpop.f32.mrf.mxu0
    %v4654 = vadd.f32 %v4565, %v4653
    %v4655 = vpop.f32.mrf.mxu0
    %v4656 = vadd.f32 %v4567, %v4655
    %4657 = vmatmul.bf16.gmra.mxu0 %v3551
    %v4658 = vpop.f32.mrf.mxu0
    %v4659 = vadd.f32 %v4570, %v4658
    %v4660 = vpop.f32.mrf.mxu0
    %v4661 = vadd.f32 %v4572, %v4660
    %4662 = vmatmul.bf16.gmra.mxu0 %v3555
    %v4663 = vpop.f32.mrf.mxu0
    %v4664 = vadd.f32 %v4575, %v4663
    %v4665 = vpop.f32.mrf.mxu0
    %v4666 = vadd.f32 %v4577, %v4665
    %4667 = vmatmul.bf16.gmra.mxu0 %v3559
    %v4668 = vpop.f32.mrf.mxu0
    %v4669 = vadd.f32 %v4580, %v4668
    %v4670 = vpop.f32.mrf.mxu0
    %v4671 = vadd.f32 %v4582, %v4670
    %4672 = vmatmul.bf16.gmra.mxu0 %v3563
    %v4673 = vpop.f32.mrf.mxu0
    %v4674 = vadd.f32 %v4585, %v4673
    %v4675 = vpop.f32.mrf.mxu0
    %v4676 = vadd.f32 %v4587, %v4675
    %4677 = vmatmul.bf16.gmra.mxu0 %v3567
    %v4678 = vpop.f32.mrf.mxu0
    %v4679 = vadd.f32 %v4590, %v4678
    %v4680 = vpop.f32.mrf.mxu0
    %v4681 = vadd.f32 %v4592, %v4680
    %4682 = vmatmul.bf16.gmra.mxu0 %v3571
    %v4683 = vpop.f32.mrf.mxu0
    %v4684 = vadd.f32 %v4595, %v4683
    %v4685 = vpop.f32.mrf.mxu0
    %v4686 = vadd.f32 %v4597, %v4685
    %4687 = vmatmul.bf16.gmra.mxu0 %v3575
    %v4688 = vpop.f32.mrf.mxu0
    %v4689 = vadd.f32 %v4600, %v4688
    %v4690 = vpop.f32.mrf.mxu0
    %v4691 = vadd.f32 %v4602, %v4690
    %4692 = vmatmul.bf16.gmra.mxu0 %v3579
    %v4693 = vpop.f32.mrf.mxu0
    %v4694 = vadd.f32 %v4605, %v4693
    %v4695 = vpop.f32.mrf.mxu0
    %v4696 = vadd.f32 %v4607, %v4695
    %4697 = vmatmul.bf16.gmra.mxu0 %v3583
    %v4698 = vpop.f32.mrf.mxu0
    %v4699 = vadd.f32 %v4610, %v4698
    %v4700 = vpop.f32.mrf.mxu0
    %v4701 = vadd.f32 %v4612, %v4700
    %4702 = vmatmul.bf16.gmra.mxu0 %v3587
    %v4703 = vpop.f32.mrf.mxu0
    %v4704 = vadd.f32 %v4615, %v4703
    %v4705 = vpop.f32.mrf.mxu0
    %v4706 = vadd.f32 %v4617, %v4705
    %4707 = vmatmul.bf16.gmra.mxu0 %v3591
    %v4708 = vpop.f32.mrf.mxu0
    %v4709 = vadd.f32 %v4620, %v4708
    %v4710 = vpop.f32.mrf.mxu0
    %v4711 = vadd.f32 %v4622, %v4710
    %4712 = vmatmul.bf16.gmra.mxu0 %v3595
    %v4713 = vpop.f32.mrf.mxu0
    %v4714 = vadd.f32 %v4625, %v4713
    %v4715 = vpop.f32.mrf.mxu0
    %v4716 = vadd.f32 %v4627, %v4715
    %4717 = vmatmul.bf16.gmra.mxu0 %v3599
    %v4718 = vpop.f32.mrf.mxu0
    %v4719 = vadd.f32 %v4630, %v4718
    %v4720 = vpop.f32.mrf.mxu0
    %v4721 = vadd.f32 %v4632, %v4720
    %4722 = vmatmul.bf16.gmra.mxu0 %v3603
    %v4723 = vpop.f32.mrf.mxu0
    %v4724 = vadd.f32 %v4635, %v4723
    %v4725 = vpop.f32.mrf.mxu0
    %v4726 = vadd.f32 %v4637, %v4725
    %4727 = vdwg.mxu0
    %4728 = vmatpush.bf16.msra.mxu0 %v4145
    %4729 = vmatpush.bf16.msra.mxu0 %v4141
    %4730 = vmatpush.bf16.msra.mxu0 %v4137
    %4731 = vmatpush.bf16.msra.mxu0 %v4133
    %4732 = vmatpush.bf16.msra.mxu0 %v4129
    %4733 = vmatpush.bf16.msra.mxu0 %v4125
    %4734 = vmatpush.bf16.msra.mxu0 %v4121
    %4735 = vmatpush.bf16.msra.mxu0 %v4117
    %4736 = vmatmul.bf16.gmra.mxu0 %v3540
    %v4737 = vpop.f32.mrf.mxu0
    %v4738 = vadd.f32 0.0, %v4737
    %v4739 = vpop.f32.mrf.mxu0
    %v4740 = vadd.f32 0.0, %v4739
    %4741 = vmatmul.bf16.gmra.mxu0 %v3544
    %v4742 = vpop.f32.mrf.mxu0
    %v4743 = vadd.f32 0.0, %v4742
    %v4744 = vpop.f32.mrf.mxu0
    %v4745 = vadd.f32 0.0, %v4744
    %4746 = vmatmul.bf16.gmra.mxu0 %v3548
    %v4747 = vpop.f32.mrf.mxu0
    %v4748 = vadd.f32 0.0, %v4747
    %v4749 = vpop.f32.mrf.mxu0
    %v4750 = vadd.f32 0.0, %v4749
    %4751 = vmatmul.bf16.gmra.mxu0 %v3552
    %v4752 = vpop.f32.mrf.mxu0
    %v4753 = vadd.f32 0.0, %v4752
    %v4754 = vpop.f32.mrf.mxu0
    %v4755 = vadd.f32 0.0, %v4754
    %4756 = vmatmul.bf16.gmra.mxu0 %v3556
    %v4757 = vpop.f32.mrf.mxu0
    %v4758 = vadd.f32 0.0, %v4757
    %v4759 = vpop.f32.mrf.mxu0
    %v4760 = vadd.f32 0.0, %v4759
    %4761 = vmatmul.bf16.gmra.mxu0 %v3560
    %v4762 = vpop.f32.mrf.mxu0
    %v4763 = vadd.f32 0.0, %v4762
    %v4764 = vpop.f32.mrf.mxu0
    %v4765 = vadd.f32 0.0, %v4764
    %4766 = vmatmul.bf16.gmra.mxu0 %v3564
    %v4767 = vpop.f32.mrf.mxu0
    %v4768 = vadd.f32 0.0, %v4767
    %v4769 = vpop.f32.mrf.mxu0
    %v4770 = vadd.f32 0.0, %v4769
    %4771 = vmatmul.bf16.gmra.mxu0 %v3568
    %v4772 = vpop.f32.mrf.mxu0
    %v4773 = vadd.f32 0.0, %v4772
    %v4774 = vpop.f32.mrf.mxu0
    %v4775 = vadd.f32 0.0, %v4774
    %4776 = vmatmul.bf16.gmra.mxu0 %v3572
    %v4777 = vpop.f32.mrf.mxu0
    %v4778 = vadd.f32 0.0, %v4777
    %v4779 = vpop.f32.mrf.mxu0
    %v4780 = vadd.f32 0.0, %v4779
    %4781 = vmatmul.bf16.gmra.mxu0 %v3576
    %v4782 = vpop.f32.mrf.mxu0
    %v4783 = vadd.f32 0.0, %v4782
    %v4784 = vpop.f32.mrf.mxu0
    %v4785 = vadd.f32 0.0, %v4784
    %4786 = vmatmul.bf16.gmra.mxu0 %v3580
    %v4787 = vpop.f32.mrf.mxu0
    %v4788 = vadd.f32 0.0, %v4787
    %v4789 = vpop.f32.mrf.mxu0
    %v4790 = vadd.f32 0.0, %v4789
    %4791 = vmatmul.bf16.gmra.mxu0 %v3584
    %v4792 = vpop.f32.mrf.mxu0
    %v4793 = vadd.f32 0.0, %v4792
    %v4794 = vpop.f32.mrf.mxu0
    %v4795 = vadd.f32 0.0, %v4794
    %4796 = vmatmul.bf16.gmra.mxu0 %v3588
    %v4797 = vpop.f32.mrf.mxu0
    %v4798 = vadd.f32 0.0, %v4797
    %v4799 = vpop.f32.mrf.mxu0
    %v4800 = vadd.f32 0.0, %v4799
    %4801 = vmatmul.bf16.gmra.mxu0 %v3592
    %v4802 = vpop.f32.mrf.mxu0
    %v4803 = vadd.f32 0.0, %v4802
    %v4804 = vpop.f32.mrf.mxu0
    %v4805 = vadd.f32 0.0, %v4804
    %4806 = vmatmul.bf16.gmra.mxu0 %v3596
    %v4807 = vpop.f32.mrf.mxu0
    %v4808 = vadd.f32 0.0, %v4807
    %v4809 = vpop.f32.mrf.mxu0
    %v4810 = vadd.f32 0.0, %v4809
    %4811 = vmatmul.bf16.gmra.mxu0 %v3600
    %v4812 = vpop.f32.mrf.mxu0
    %v4813 = vadd.f32 0.0, %v4812
    %v4814 = vpop.f32.mrf.mxu0
    %v4815 = vadd.f32 0.0, %v4814
    %4816 = vdwg.mxu0
    %4817 = vmatpush.bf16.msra.mxu0 %v4177
    %4818 = vmatpush.bf16.msra.mxu0 %v4173
    %4819 = vmatpush.bf16.msra.mxu0 %v4169
    %4820 = vmatpush.bf16.msra.mxu0 %v4165
    %4821 = vmatpush.bf16.msra.mxu0 %v4161
    %4822 = vmatpush.bf16.msra.mxu0 %v4157
    %4823 = vmatpush.bf16.msra.mxu0 %v4153
    %4824 = vmatpush.bf16.msra.mxu0 %v4149
    %4825 = vmatmul.bf16.gmra.mxu0 %v3541
    %v4826 = vpop.f32.mrf.mxu0
    %v4827 = vadd.f32 %v4738, %v4826
    %v4828 = vpop.f32.mrf.mxu0
    %v4829 = vadd.f32 %v4740, %v4828
    %4830 = vmatmul.bf16.gmra.mxu0 %v3545
    %v4831 = vpop.f32.mrf.mxu0
    %v4832 = vadd.f32 %v4743, %v4831
    %v4833 = vpop.f32.mrf.mxu0
    %v4834 = vadd.f32 %v4745, %v4833
    %4835 = vmatmul.bf16.gmra.mxu0 %v3549
    %v4836 = vpop.f32.mrf.mxu0
    %v4837 = vadd.f32 %v4748, %v4836
    %v4838 = vpop.f32.mrf.mxu0
    %v4839 = vadd.f32 %v4750, %v4838
    %4840 = vmatmul.bf16.gmra.mxu0 %v3553
    %v4841 = vpop.f32.mrf.mxu0
    %v4842 = vadd.f32 %v4753, %v4841
    %v4843 = vpop.f32.mrf.mxu0
    %v4844 = vadd.f32 %v4755, %v4843
    %4845 = vmatmul.bf16.gmra.mxu0 %v3557
    %v4846 = vpop.f32.mrf.mxu0
    %v4847 = vadd.f32 %v4758, %v4846
    %v4848 = vpop.f32.mrf.mxu0
    %v4849 = vadd.f32 %v4760, %v4848
    %4850 = vmatmul.bf16.gmra.mxu0 %v3561
    %v4851 = vpop.f32.mrf.mxu0
    %v4852 = vadd.f32 %v4763, %v4851
    %v4853 = vpop.f32.mrf.mxu0
    %v4854 = vadd.f32 %v4765, %v4853
    %4855 = vmatmul.bf16.gmra.mxu0 %v3565
    %v4856 = vpop.f32.mrf.mxu0
    %v4857 = vadd.f32 %v4768, %v4856
    %v4858 = vpop.f32.mrf.mxu0
    %v4859 = vadd.f32 %v4770, %v4858
    %4860 = vmatmul.bf16.gmra.mxu0 %v3569
    %v4861 = vpop.f32.mrf.mxu0
    %v4862 = vadd.f32 %v4773, %v4861
    %v4863 = vpop.f32.mrf.mxu0
    %v4864 = vadd.f32 %v4775, %v4863
    %4865 = vmatmul.bf16.gmra.mxu0 %v3573
    %v4866 = vpop.f32.mrf.mxu0
    %v4867 = vadd.f32 %v4778, %v4866
    %v4868 = vpop.f32.mrf.mxu0
    %v4869 = vadd.f32 %v4780, %v4868
    %4870 = vmatmul.bf16.gmra.mxu0 %v3577
    %v4871 = vpop.f32.mrf.mxu0
    %v4872 = vadd.f32 %v4783, %v4871
    %v4873 = vpop.f32.mrf.mxu0
    %v4874 = vadd.f32 %v4785, %v4873
    %4875 = vmatmul.bf16.gmra.mxu0 %v3581
    %v4876 = vpop.f32.mrf.mxu0
    %v4877 = vadd.f32 %v4788, %v4876
    %v4878 = vpop.f32.mrf.mxu0
    %v4879 = vadd.f32 %v4790, %v4878
    %4880 = vmatmul.bf16.gmra.mxu0 %v3585
    %v4881 = vpop.f32.mrf.mxu0
    %v4882 = vadd.f32 %v4793, %v4881
    %v4883 = vpop.f32.mrf.mxu0
    %v4884 = vadd.f32 %v4795, %v4883
    %4885 = vmatmul.bf16.gmra.mxu0 %v3589
    %v4886 = vpop.f32.mrf.mxu0
    %v4887 = vadd.f32 %v4798, %v4886
    %v4888 = vpop.f32.mrf.mxu0
    %v4889 = vadd.f32 %v4800, %v4888
    %4890 = vmatmul.bf16.gmra.mxu0 %v3593
    %v4891 = vpop.f32.mrf.mxu0
    %v4892 = vadd.f32 %v4803, %v4891
    %v4893 = vpop.f32.mrf.mxu0
    %v4894 = vadd.f32 %v4805, %v4893
    %4895 = vmatmul.bf16.gmra.mxu0 %v3597
    %v4896 = vpop.f32.mrf.mxu0
    %v4897 = vadd.f32 %v4808, %v4896
    %v4898 = vpop.f32.mrf.mxu0
    %v4899 = vadd.f32 %v4810, %v4898
    %4900 = vmatmul.bf16.gmra.mxu0 %v3601
    %v4901 = vpop.f32.mrf.mxu0
    %v4902 = vadd.f32 %v4813, %v4901
    %v4903 = vpop.f32.mrf.mxu0
    %v4904 = vadd.f32 %v4815, %v4903
    %4905 = vdwg.mxu0
    %4906 = vmatpush.bf16.msra.mxu0 %v4209
    %4907 = vmatpush.bf16.msra.mxu0 %v4205
    %4908 = vmatpush.bf16.msra.mxu0 %v4201
    %4909 = vmatpush.bf16.msra.mxu0 %v4197
    %4910 = vmatpush.bf16.msra.mxu0 %v4193
    %4911 = vmatpush.bf16.msra.mxu0 %v4189
    %4912 = vmatpush.bf16.msra.mxu0 %v4185
    %4913 = vmatpush.bf16.msra.mxu0 %v4181
    %4914 = vmatmul.bf16.gmra.mxu0 %v3542
    %v4915 = vpop.f32.mrf.mxu0
    %v4916 = vadd.f32 %v4827, %v4915
    %v4917 = vpop.f32.mrf.mxu0
    %v4918 = vadd.f32 %v4829, %v4917
    %4919 = vmatmul.bf16.gmra.mxu0 %v3546
    %v4920 = vpop.f32.mrf.mxu0
    %v4921 = vadd.f32 %v4832, %v4920
    %v4922 = vpop.f32.mrf.mxu0
    %v4923 = vadd.f32 %v4834, %v4922
    %4924 = vmatmul.bf16.gmra.mxu0 %v3550
    %v4925 = vpop.f32.mrf.mxu0
    %v4926 = vadd.f32 %v4837, %v4925
    %v4927 = vpop.f32.mrf.mxu0
    %v4928 = vadd.f32 %v4839, %v4927
    %4929 = vmatmul.bf16.gmra.mxu0 %v3554
    %v4930 = vpop.f32.mrf.mxu0
    %v4931 = vadd.f32 %v4842, %v4930
    %v4932 = vpop.f32.mrf.mxu0
    %v4933 = vadd.f32 %v4844, %v4932
    %4934 = vmatmul.bf16.gmra.mxu0 %v3558
    %v4935 = vpop.f32.mrf.mxu0
    %v4936 = vadd.f32 %v4847, %v4935
    %v4937 = vpop.f32.mrf.mxu0
    %v4938 = vadd.f32 %v4849, %v4937
    %4939 = vmatmul.bf16.gmra.mxu0 %v3562
    %v4940 = vpop.f32.mrf.mxu0
    %v4941 = vadd.f32 %v4852, %v4940
    %v4942 = vpop.f32.mrf.mxu0
    %v4943 = vadd.f32 %v4854, %v4942
    %4944 = vmatmul.bf16.gmra.mxu0 %v3566
    %v4945 = vpop.f32.mrf.mxu0
    %v4946 = vadd.f32 %v4857, %v4945
    %v4947 = vpop.f32.mrf.mxu0
    %v4948 = vadd.f32 %v4859, %v4947
    %4949 = vmatmul.bf16.gmra.mxu0 %v3570
    %v4950 = vpop.f32.mrf.mxu0
    %v4951 = vadd.f32 %v4862, %v4950
    %v4952 = vpop.f32.mrf.mxu0
    %v4953 = vadd.f32 %v4864, %v4952
    %4954 = vmatmul.bf16.gmra.mxu0 %v3574
    %v4955 = vpop.f32.mrf.mxu0
    %v4956 = vadd.f32 %v4867, %v4955
    %v4957 = vpop.f32.mrf.mxu0
    %v4958 = vadd.f32 %v4869, %v4957
    %4959 = vmatmul.bf16.gmra.mxu0 %v3578
    %v4960 = vpop.f32.mrf.mxu0
    %v4961 = vadd.f32 %v4872, %v4960
    %v4962 = vpop.f32.mrf.mxu0
    %v4963 = vadd.f32 %v4874, %v4962
    %4964 = vmatmul.bf16.gmra.mxu0 %v3582
    %v4965 = vpop.f32.mrf.mxu0
    %v4966 = vadd.f32 %v4877, %v4965
    %v4967 = vpop.f32.mrf.mxu0
    %v4968 = vadd.f32 %v4879, %v4967
    %4969 = vmatmul.bf16.gmra.mxu0 %v3586
    %v4970 = vpop.f32.mrf.mxu0
    %v4971 = vadd.f32 %v4882, %v4970
    %v4972 = vpop.f32.mrf.mxu0
    %v4973 = vadd.f32 %v4884, %v4972
    %4974 = vmatmul.bf16.gmra.mxu0 %v3590
    %v4975 = vpop.f32.mrf.mxu0
    %v4976 = vadd.f32 %v4887, %v4975
    %v4977 = vpop.f32.mrf.mxu0
    %v4978 = vadd.f32 %v4889, %v4977
    %4979 = vmatmul.bf16.gmra.mxu0 %v3594
    %v4980 = vpop.f32.mrf.mxu0
    %v4981 = vadd.f32 %v4892, %v4980
    %v4982 = vpop.f32.mrf.mxu0
    %v4983 = vadd.f32 %v4894, %v4982
    %4984 = vmatmul.bf16.gmra.mxu0 %v3598
    %v4985 = vpop.f32.mrf.mxu0
    %v4986 = vadd.f32 %v4897, %v4985
    %v4987 = vpop.f32.mrf.mxu0
    %v4988 = vadd.f32 %v4899, %v4987
    %4989 = vmatmul.bf16.gmra.mxu0 %v3602
    %v4990 = vpop.f32.mrf.mxu0
    %v4991 = vadd.f32 %v4902, %v4990
    %v4992 = vpop.f32.mrf.mxu0
    %v4993 = vadd.f32 %v4904, %v4992
    %4994 = vdwg.mxu0
    %4995 = vmatpush.bf16.msra.mxu0 %v4241
    %4996 = vmatpush.bf16.msra.mxu0 %v4237
    %4997 = vmatpush.bf16.msra.mxu0 %v4233
    %4998 = vmatpush.bf16.msra.mxu0 %v4229
    %4999 = vmatpush.bf16.msra.mxu0 %v4225
    %5000 = vmatpush.bf16.msra.mxu0 %v4221
    %5001 = vmatpush.bf16.msra.mxu0 %v4217
    %5002 = vmatpush.bf16.msra.mxu0 %v4213
    %5003 = vmatmul.bf16.gmra.mxu0 %v3543
    %v5004 = vpop.f32.mrf.mxu0
    %v5005 = vadd.f32 %v4916, %v5004
    %v5006 = vpop.f32.mrf.mxu0
    %v5007 = vadd.f32 %v4918, %v5006
    %5008 = vmatmul.bf16.gmra.mxu0 %v3547
    %v5009 = vpop.f32.mrf.mxu0
    %v5010 = vadd.f32 %v4921, %v5009
    %v5011 = vpop.f32.mrf.mxu0
    %v5012 = vadd.f32 %v4923, %v5011
    %5013 = vmatmul.bf16.gmra.mxu0 %v3551
    %v5014 = vpop.f32.mrf.mxu0
    %v5015 = vadd.f32 %v4926, %v5014
    %v5016 = vpop.f32.mrf.mxu0
    %v5017 = vadd.f32 %v4928, %v5016
    %5018 = vmatmul.bf16.gmra.mxu0 %v3555
    %v5019 = vpop.f32.mrf.mxu0
    %v5020 = vadd.f32 %v4931, %v5019
    %v5021 = vpop.f32.mrf.mxu0
    %v5022 = vadd.f32 %v4933, %v5021
    %5023 = vmatmul.bf16.gmra.mxu0 %v3559
    %v5024 = vpop.f32.mrf.mxu0
    %v5025 = vadd.f32 %v4936, %v5024
    %v5026 = vpop.f32.mrf.mxu0
    %v5027 = vadd.f32 %v4938, %v5026
    %5028 = vmatmul.bf16.gmra.mxu0 %v3563
    %v5029 = vpop.f32.mrf.mxu0
    %v5030 = vadd.f32 %v4941, %v5029
    %v5031 = vpop.f32.mrf.mxu0
    %v5032 = vadd.f32 %v4943, %v5031
    %5033 = vmatmul.bf16.gmra.mxu0 %v3567
    %v5034 = vpop.f32.mrf.mxu0
    %v5035 = vadd.f32 %v4946, %v5034
    %v5036 = vpop.f32.mrf.mxu0
    %v5037 = vadd.f32 %v4948, %v5036
    %5038 = vmatmul.bf16.gmra.mxu0 %v3571
    %v5039 = vpop.f32.mrf.mxu0
    %v5040 = vadd.f32 %v4951, %v5039
    %v5041 = vpop.f32.mrf.mxu0
    %v5042 = vadd.f32 %v4953, %v5041
    %5043 = vmatmul.bf16.gmra.mxu0 %v3575
    %v5044 = vpop.f32.mrf.mxu0
    %v5045 = vadd.f32 %v4956, %v5044
    %v5046 = vpop.f32.mrf.mxu0
    %v5047 = vadd.f32 %v4958, %v5046
    %5048 = vmatmul.bf16.gmra.mxu0 %v3579
    %v5049 = vpop.f32.mrf.mxu0
    %v5050 = vadd.f32 %v4961, %v5049
    %v5051 = vpop.f32.mrf.mxu0
    %v5052 = vadd.f32 %v4963, %v5051
    %5053 = vmatmul.bf16.gmra.mxu0 %v3583
    %v5054 = vpop.f32.mrf.mxu0
    %v5055 = vadd.f32 %v4966, %v5054
    %v5056 = vpop.f32.mrf.mxu0
    %v5057 = vadd.f32 %v4968, %v5056
    %5058 = vmatmul.bf16.gmra.mxu0 %v3587
    %v5059 = vpop.f32.mrf.mxu0
    %v5060 = vadd.f32 %v4971, %v5059
    %v5061 = vpop.f32.mrf.mxu0
    %v5062 = vadd.f32 %v4973, %v5061
    %5063 = vmatmul.bf16.gmra.mxu0 %v3591
    %v5064 = vpop.f32.mrf.mxu0
    %v5065 = vadd.f32 %v4976, %v5064
    %v5066 = vpop.f32.mrf.mxu0
    %v5067 = vadd.f32 %v4978, %v5066
    %5068 = vmatmul.bf16.gmra.mxu0 %v3595
    %v5069 = vpop.f32.mrf.mxu0
    %v5070 = vadd.f32 %v4981, %v5069
    %v5071 = vpop.f32.mrf.mxu0
    %v5072 = vadd.f32 %v4983, %v5071
    %5073 = vmatmul.bf16.gmra.mxu0 %v3599
    %v5074 = vpop.f32.mrf.mxu0
    %v5075 = vadd.f32 %v4986, %v5074
    %v5076 = vpop.f32.mrf.mxu0
    %v5077 = vadd.f32 %v4988, %v5076
    %5078 = vmatmul.bf16.gmra.mxu0 %v3603
    %v5079 = vpop.f32.mrf.mxu0
    %v5080 = vadd.f32 %v4991, %v5079
    %v5081 = vpop.f32.mrf.mxu0
    %v5082 = vadd.f32 %v4993, %v5081
    %5083 = vdwg.mxu0
    %5084 = vmatpush.bf16.msra.mxu0 %v4146
    %5085 = vmatpush.bf16.msra.mxu0 %v4142
    %5086 = vmatpush.bf16.msra.mxu0 %v4138
    %5087 = vmatpush.bf16.msra.mxu0 %v4134
    %5088 = vmatpush.bf16.msra.mxu0 %v4130
    %5089 = vmatpush.bf16.msra.mxu0 %v4126
    %5090 = vmatpush.bf16.msra.mxu0 %v4122
    %5091 = vmatpush.bf16.msra.mxu0 %v4118
    %5092 = vmatmul.bf16.gmra.mxu0 %v3540
    %v5093 = vpop.f32.mrf.mxu0
    %v5094 = vadd.f32 0.0, %v5093
    %v5095 = vpop.f32.mrf.mxu0
    %v5096 = vadd.f32 0.0, %v5095
    %5097 = vmatmul.bf16.gmra.mxu0 %v3544
    %v5098 = vpop.f32.mrf.mxu0
    %v5099 = vadd.f32 0.0, %v5098
    %v5100 = vpop.f32.mrf.mxu0
    %v5101 = vadd.f32 0.0, %v5100
    %5102 = vmatmul.bf16.gmra.mxu0 %v3548
    %v5103 = vpop.f32.mrf.mxu0
    %v5104 = vadd.f32 0.0, %v5103
    %v5105 = vpop.f32.mrf.mxu0
    %v5106 = vadd.f32 0.0, %v5105
    %5107 = vmatmul.bf16.gmra.mxu0 %v3552
    %v5108 = vpop.f32.mrf.mxu0
    %v5109 = vadd.f32 0.0, %v5108
    %v5110 = vpop.f32.mrf.mxu0
    %v5111 = vadd.f32 0.0, %v5110
    %5112 = vmatmul.bf16.gmra.mxu0 %v3556
    %v5113 = vpop.f32.mrf.mxu0
    %v5114 = vadd.f32 0.0, %v5113
    %v5115 = vpop.f32.mrf.mxu0
    %v5116 = vadd.f32 0.0, %v5115
    %5117 = vmatmul.bf16.gmra.mxu0 %v3560
    %v5118 = vpop.f32.mrf.mxu0
    %v5119 = vadd.f32 0.0, %v5118
    %v5120 = vpop.f32.mrf.mxu0
    %v5121 = vadd.f32 0.0, %v5120
    %5122 = vmatmul.bf16.gmra.mxu0 %v3564
    %v5123 = vpop.f32.mrf.mxu0
    %v5124 = vadd.f32 0.0, %v5123
    %v5125 = vpop.f32.mrf.mxu0
    %v5126 = vadd.f32 0.0, %v5125
    %5127 = vmatmul.bf16.gmra.mxu0 %v3568
    %v5128 = vpop.f32.mrf.mxu0
    %v5129 = vadd.f32 0.0, %v5128
    %v5130 = vpop.f32.mrf.mxu0
    %v5131 = vadd.f32 0.0, %v5130
    %5132 = vmatmul.bf16.gmra.mxu0 %v3572
    %v5133 = vpop.f32.mrf.mxu0
    %v5134 = vadd.f32 0.0, %v5133
    %v5135 = vpop.f32.mrf.mxu0
    %v5136 = vadd.f32 0.0, %v5135
    %5137 = vmatmul.bf16.gmra.mxu0 %v3576
    %v5138 = vpop.f32.mrf.mxu0
    %v5139 = vadd.f32 0.0, %v5138
    %v5140 = vpop.f32.mrf.mxu0
    %v5141 = vadd.f32 0.0, %v5140
    %5142 = vmatmul.bf16.gmra.mxu0 %v3580
    %v5143 = vpop.f32.mrf.mxu0
    %v5144 = vadd.f32 0.0, %v5143
    %v5145 = vpop.f32.mrf.mxu0
    %v5146 = vadd.f32 0.0, %v5145
    %5147 = vmatmul.bf16.gmra.mxu0 %v3584
    %v5148 = vpop.f32.mrf.mxu0
    %v5149 = vadd.f32 0.0, %v5148
    %v5150 = vpop.f32.mrf.mxu0
    %v5151 = vadd.f32 0.0, %v5150
    %5152 = vmatmul.bf16.gmra.mxu0 %v3588
    %v5153 = vpop.f32.mrf.mxu0
    %v5154 = vadd.f32 0.0, %v5153
    %v5155 = vpop.f32.mrf.mxu0
    %v5156 = vadd.f32 0.0, %v5155
    %5157 = vmatmul.bf16.gmra.mxu0 %v3592
    %v5158 = vpop.f32.mrf.mxu0
    %v5159 = vadd.f32 0.0, %v5158
    %v5160 = vpop.f32.mrf.mxu0
    %v5161 = vadd.f32 0.0, %v5160
    %5162 = vmatmul.bf16.gmra.mxu0 %v3596
    %v5163 = vpop.f32.mrf.mxu0
    %v5164 = vadd.f32 0.0, %v5163
    %v5165 = vpop.f32.mrf.mxu0
    %v5166 = vadd.f32 0.0, %v5165
    %5167 = vmatmul.bf16.gmra.mxu0 %v3600
    %v5168 = vpop.f32.mrf.mxu0
    %v5169 = vadd.f32 0.0, %v5168
    %v5170 = vpop.f32.mrf.mxu0
    %v5171 = vadd.f32 0.0, %v5170
    %5172 = vdwg.mxu0
    %5173 = vmatpush.bf16.msra.mxu0 %v4178
    %5174 = vmatpush.bf16.msra.mxu0 %v4174
    %5175 = vmatpush.bf16.msra.mxu0 %v4170
    %5176 = vmatpush.bf16.msra.mxu0 %v4166
    %5177 = vmatpush.bf16.msra.mxu0 %v4162
    %5178 = vmatpush.bf16.msra.mxu0 %v4158
    %5179 = vmatpush.bf16.msra.mxu0 %v4154
    %5180 = vmatpush.bf16.msra.mxu0 %v4150
    %5181 = vmatmul.bf16.gmra.mxu0 %v3541
    %v5182 = vpop.f32.mrf.mxu0
    %v5183 = vadd.f32 %v5094, %v5182
    %v5184 = vpop.f32.mrf.mxu0
    %v5185 = vadd.f32 %v5096, %v5184
    %5186 = vmatmul.bf16.gmra.mxu0 %v3545
    %v5187 = vpop.f32.mrf.mxu0
    %v5188 = vadd.f32 %v5099, %v5187
    %v5189 = vpop.f32.mrf.mxu0
    %v5190 = vadd.f32 %v5101, %v5189
    %5191 = vmatmul.bf16.gmra.mxu0 %v3549
    %v5192 = vpop.f32.mrf.mxu0
    %v5193 = vadd.f32 %v5104, %v5192
    %v5194 = vpop.f32.mrf.mxu0
    %v5195 = vadd.f32 %v5106, %v5194
    %5196 = vmatmul.bf16.gmra.mxu0 %v3553
    %v5197 = vpop.f32.mrf.mxu0
    %v5198 = vadd.f32 %v5109, %v5197
    %v5199 = vpop.f32.mrf.mxu0
    %v5200 = vadd.f32 %v5111, %v5199
    %5201 = vmatmul.bf16.gmra.mxu0 %v3557
    %v5202 = vpop.f32.mrf.mxu0
    %v5203 = vadd.f32 %v5114, %v5202
    %v5204 = vpop.f32.mrf.mxu0
    %v5205 = vadd.f32 %v5116, %v5204
    %5206 = vmatmul.bf16.gmra.mxu0 %v3561
    %v5207 = vpop.f32.mrf.mxu0
    %v5208 = vadd.f32 %v5119, %v5207
    %v5209 = vpop.f32.mrf.mxu0
    %v5210 = vadd.f32 %v5121, %v5209
    %5211 = vmatmul.bf16.gmra.mxu0 %v3565
    %v5212 = vpop.f32.mrf.mxu0
    %v5213 = vadd.f32 %v5124, %v5212
    %v5214 = vpop.f32.mrf.mxu0
    %v5215 = vadd.f32 %v5126, %v5214
    %5216 = vmatmul.bf16.gmra.mxu0 %v3569
    %v5217 = vpop.f32.mrf.mxu0
    %v5218 = vadd.f32 %v5129, %v5217
    %v5219 = vpop.f32.mrf.mxu0
    %v5220 = vadd.f32 %v5131, %v5219
    %5221 = vmatmul.bf16.gmra.mxu0 %v3573
    %v5222 = vpop.f32.mrf.mxu0
    %v5223 = vadd.f32 %v5134, %v5222
    %v5224 = vpop.f32.mrf.mxu0
    %v5225 = vadd.f32 %v5136, %v5224
    %5226 = vmatmul.bf16.gmra.mxu0 %v3577
    %v5227 = vpop.f32.mrf.mxu0
    %v5228 = vadd.f32 %v5139, %v5227
    %v5229 = vpop.f32.mrf.mxu0
    %v5230 = vadd.f32 %v5141, %v5229
    %5231 = vmatmul.bf16.gmra.mxu0 %v3581
    %v5232 = vpop.f32.mrf.mxu0
    %v5233 = vadd.f32 %v5144, %v5232
    %v5234 = vpop.f32.mrf.mxu0
    %v5235 = vadd.f32 %v5146, %v5234
    %5236 = vmatmul.bf16.gmra.mxu0 %v3585
    %v5237 = vpop.f32.mrf.mxu0
    %v5238 = vadd.f32 %v5149, %v5237
    %v5239 = vpop.f32.mrf.mxu0
    %v5240 = vadd.f32 %v5151, %v5239
    %5241 = vmatmul.bf16.gmra.mxu0 %v3589
    %v5242 = vpop.f32.mrf.mxu0
    %v5243 = vadd.f32 %v5154, %v5242
    %v5244 = vpop.f32.mrf.mxu0
    %v5245 = vadd.f32 %v5156, %v5244
    %5246 = vmatmul.bf16.gmra.mxu0 %v3593
    %v5247 = vpop.f32.mrf.mxu0
    %v5248 = vadd.f32 %v5159, %v5247
    %v5249 = vpop.f32.mrf.mxu0
    %v5250 = vadd.f32 %v5161, %v5249
    %5251 = vmatmul.bf16.gmra.mxu0 %v3597
    %v5252 = vpop.f32.mrf.mxu0
    %v5253 = vadd.f32 %v5164, %v5252
    %v5254 = vpop.f32.mrf.mxu0
    %v5255 = vadd.f32 %v5166, %v5254
    %5256 = vmatmul.bf16.gmra.mxu0 %v3601
    %v5257 = vpop.f32.mrf.mxu0
    %v5258 = vadd.f32 %v5169, %v5257
    %v5259 = vpop.f32.mrf.mxu0
    %v5260 = vadd.f32 %v5171, %v5259
    %5261 = vdwg.mxu0
    %5262 = vmatpush.bf16.msra.mxu0 %v4210
    %5263 = vmatpush.bf16.msra.mxu0 %v4206
    %5264 = vmatpush.bf16.msra.mxu0 %v4202
    %5265 = vmatpush.bf16.msra.mxu0 %v4198
    %5266 = vmatpush.bf16.msra.mxu0 %v4194
    %5267 = vmatpush.bf16.msra.mxu0 %v4190
    %5268 = vmatpush.bf16.msra.mxu0 %v4186
    %5269 = vmatpush.bf16.msra.mxu0 %v4182
    %5270 = vmatmul.bf16.gmra.mxu0 %v3542
    %v5271 = vpop.f32.mrf.mxu0
    %v5272 = vadd.f32 %v5183, %v5271
    %v5273 = vpop.f32.mrf.mxu0
    %v5274 = vadd.f32 %v5185, %v5273
    %5275 = vmatmul.bf16.gmra.mxu0 %v3546
    %v5276 = vpop.f32.mrf.mxu0
    %v5277 = vadd.f32 %v5188, %v5276
    %v5278 = vpop.f32.mrf.mxu0
    %v5279 = vadd.f32 %v5190, %v5278
    %5280 = vmatmul.bf16.gmra.mxu0 %v3550
    %v5281 = vpop.f32.mrf.mxu0
    %v5282 = vadd.f32 %v5193, %v5281
    %v5283 = vpop.f32.mrf.mxu0
    %v5284 = vadd.f32 %v5195, %v5283
    %5285 = vmatmul.bf16.gmra.mxu0 %v3554
    %v5286 = vpop.f32.mrf.mxu0
    %v5287 = vadd.f32 %v5198, %v5286
    %v5288 = vpop.f32.mrf.mxu0
    %v5289 = vadd.f32 %v5200, %v5288
    %5290 = vmatmul.bf16.gmra.mxu0 %v3558
    %v5291 = vpop.f32.mrf.mxu0
    %v5292 = vadd.f32 %v5203, %v5291
    %v5293 = vpop.f32.mrf.mxu0
    %v5294 = vadd.f32 %v5205, %v5293
    %5295 = vmatmul.bf16.gmra.mxu0 %v3562
    %v5296 = vpop.f32.mrf.mxu0
    %v5297 = vadd.f32 %v5208, %v5296
    %v5298 = vpop.f32.mrf.mxu0
    %v5299 = vadd.f32 %v5210, %v5298
    %5300 = vmatmul.bf16.gmra.mxu0 %v3566
    %v5301 = vpop.f32.mrf.mxu0
    %v5302 = vadd.f32 %v5213, %v5301
    %v5303 = vpop.f32.mrf.mxu0
    %v5304 = vadd.f32 %v5215, %v5303
    %5305 = vmatmul.bf16.gmra.mxu0 %v3570
    %v5306 = vpop.f32.mrf.mxu0
    %v5307 = vadd.f32 %v5218, %v5306
    %v5308 = vpop.f32.mrf.mxu0
    %v5309 = vadd.f32 %v5220, %v5308
    %5310 = vmatmul.bf16.gmra.mxu0 %v3574
    %v5311 = vpop.f32.mrf.mxu0
    %v5312 = vadd.f32 %v5223, %v5311
    %v5313 = vpop.f32.mrf.mxu0
    %v5314 = vadd.f32 %v5225, %v5313
    %5315 = vmatmul.bf16.gmra.mxu0 %v3578
    %v5316 = vpop.f32.mrf.mxu0
    %v5317 = vadd.f32 %v5228, %v5316
    %v5318 = vpop.f32.mrf.mxu0
    %v5319 = vadd.f32 %v5230, %v5318
    %5320 = vmatmul.bf16.gmra.mxu0 %v3582
    %v5321 = vpop.f32.mrf.mxu0
    %v5322 = vadd.f32 %v5233, %v5321
    %v5323 = vpop.f32.mrf.mxu0
    %v5324 = vadd.f32 %v5235, %v5323
    %5325 = vmatmul.bf16.gmra.mxu0 %v3586
    %v5326 = vpop.f32.mrf.mxu0
    %v5327 = vadd.f32 %v5238, %v5326
    %v5328 = vpop.f32.mrf.mxu0
    %v5329 = vadd.f32 %v5240, %v5328
    %5330 = vmatmul.bf16.gmra.mxu0 %v3590
    %v5331 = vpop.f32.mrf.mxu0
    %v5332 = vadd.f32 %v5243, %v5331
    %v5333 = vpop.f32.mrf.mxu0
    %v5334 = vadd.f32 %v5245, %v5333
    %5335 = vmatmul.bf16.gmra.mxu0 %v3594
    %v5336 = vpop.f32.mrf.mxu0
    %v5337 = vadd.f32 %v5248, %v5336
    %v5338 = vpop.f32.mrf.mxu0
    %v5339 = vadd.f32 %v5250, %v5338
    %5340 = vmatmul.bf16.gmra.mxu0 %v3598
    %v5341 = vpop.f32.mrf.mxu0
    %v5342 = vadd.f32 %v5253, %v5341
    %v5343 = vpop.f32.mrf.mxu0
    %v5344 = vadd.f32 %v5255, %v5343
    %5345 = vmatmul.bf16.gmra.mxu0 %v3602
    %v5346 = vpop.f32.mrf.mxu0
    %v5347 = vadd.f32 %v5258, %v5346
    %v5348 = vpop.f32.mrf.mxu0
    %v5349 = vadd.f32 %v5260, %v5348
    %5350 = vdwg.mxu0
    %5351 = vmatpush.bf16.msra.mxu0 %v4242
    %5352 = vmatpush.bf16.msra.mxu0 %v4238
    %5353 = vmatpush.bf16.msra.mxu0 %v4234
    %5354 = vmatpush.bf16.msra.mxu0 %v4230
    %5355 = vmatpush.bf16.msra.mxu0 %v4226
    %5356 = vmatpush.bf16.msra.mxu0 %v4222
    %5357 = vmatpush.bf16.msra.mxu0 %v4218
    %5358 = vmatpush.bf16.msra.mxu0 %v4214
    %5359 = vmatmul.bf16.gmra.mxu0 %v3543
    %v5360 = vpop.f32.mrf.mxu0
    %v5361 = vadd.f32 %v5272, %v5360
    %v5362 = vpop.f32.mrf.mxu0
    %v5363 = vadd.f32 %v5274, %v5362
    %5364 = vmatmul.bf16.gmra.mxu0 %v3547
    %v5365 = vpop.f32.mrf.mxu0
    %v5366 = vadd.f32 %v5277, %v5365
    %v5367 = vpop.f32.mrf.mxu0
    %v5368 = vadd.f32 %v5279, %v5367
    %5369 = vmatmul.bf16.gmra.mxu0 %v3551
    %v5370 = vpop.f32.mrf.mxu0
    %v5371 = vadd.f32 %v5282, %v5370
    %v5372 = vpop.f32.mrf.mxu0
    %v5373 = vadd.f32 %v5284, %v5372
    %5374 = vmatmul.bf16.gmra.mxu0 %v3555
    %v5375 = vpop.f32.mrf.mxu0
    %v5376 = vadd.f32 %v5287, %v5375
    %v5377 = vpop.f32.mrf.mxu0
    %v5378 = vadd.f32 %v5289, %v5377
    %5379 = vmatmul.bf16.gmra.mxu0 %v3559
    %v5380 = vpop.f32.mrf.mxu0
    %v5381 = vadd.f32 %v5292, %v5380
    %v5382 = vpop.f32.mrf.mxu0
    %v5383 = vadd.f32 %v5294, %v5382
    %5384 = vmatmul.bf16.gmra.mxu0 %v3563
    %v5385 = vpop.f32.mrf.mxu0
    %v5386 = vadd.f32 %v5297, %v5385
    %v5387 = vpop.f32.mrf.mxu0
    %v5388 = vadd.f32 %v5299, %v5387
    %5389 = vmatmul.bf16.gmra.mxu0 %v3567
    %v5390 = vpop.f32.mrf.mxu0
    %v5391 = vadd.f32 %v5302, %v5390
    %v5392 = vpop.f32.mrf.mxu0
    %v5393 = vadd.f32 %v5304, %v5392
    %5394 = vmatmul.bf16.gmra.mxu0 %v3571
    %v5395 = vpop.f32.mrf.mxu0
    %v5396 = vadd.f32 %v5307, %v5395
    %v5397 = vpop.f32.mrf.mxu0
    %v5398 = vadd.f32 %v5309, %v5397
    %5399 = vmatmul.bf16.gmra.mxu0 %v3575
    %v5400 = vpop.f32.mrf.mxu0
    %v5401 = vadd.f32 %v5312, %v5400
    %v5402 = vpop.f32.mrf.mxu0
    %v5403 = vadd.f32 %v5314, %v5402
    %5404 = vmatmul.bf16.gmra.mxu0 %v3579
    %v5405 = vpop.f32.mrf.mxu0
    %v5406 = vadd.f32 %v5317, %v5405
    %v5407 = vpop.f32.mrf.mxu0
    %v5408 = vadd.f32 %v5319, %v5407
    %5409 = vmatmul.bf16.gmra.mxu0 %v3583
    %v5410 = vpop.f32.mrf.mxu0
    %v5411 = vadd.f32 %v5322, %v5410
    %v5412 = vpop.f32.mrf.mxu0
    %v5413 = vadd.f32 %v5324, %v5412
    %5414 = vmatmul.bf16.gmra.mxu0 %v3587
    %v5415 = vpop.f32.mrf.mxu0
    %v5416 = vadd.f32 %v5327, %v5415
    %v5417 = vpop.f32.mrf.mxu0
    %v5418 = vadd.f32 %v5329, %v5417
    %5419 = vmatmul.bf16.gmra.mxu0 %v3591
    %v5420 = vpop.f32.mrf.mxu0
    %v5421 = vadd.f32 %v5332, %v5420
    %v5422 = vpop.f32.mrf.mxu0
    %v5423 = vadd.f32 %v5334, %v5422
    %5424 = vmatmul.bf16.gmra.mxu0 %v3595
    %v5425 = vpop.f32.mrf.mxu0
    %v5426 = vadd.f32 %v5337, %v5425
    %v5427 = vpop.f32.mrf.mxu0
    %v5428 = vadd.f32 %v5339, %v5427
    %5429 = vmatmul.bf16.gmra.mxu0 %v3599
    %v5430 = vpop.f32.mrf.mxu0
    %v5431 = vadd.f32 %v5342, %v5430
    %v5432 = vpop.f32.mrf.mxu0
    %v5433 = vadd.f32 %v5344, %v5432
    %5434 = vmatmul.bf16.gmra.mxu0 %v3603
    %v5435 = vpop.f32.mrf.mxu0
    %v5436 = vadd.f32 %v5347, %v5435
    %v5437 = vpop.f32.mrf.mxu0
    %v5438 = vadd.f32 %v5349, %v5437
    %5439 = vdwg.mxu0
    %5440 = vmatpush.bf16.msra.mxu0 %v4147
    %5441 = vmatpush.bf16.msra.mxu0 %v4143
    %5442 = vmatpush.bf16.msra.mxu0 %v4139
    %5443 = vmatpush.bf16.msra.mxu0 %v4135
    %5444 = vmatpush.bf16.msra.mxu0 %v4131
    %5445 = vmatpush.bf16.msra.mxu0 %v4127
    %5446 = vmatpush.bf16.msra.mxu0 %v4123
    %5447 = vmatpush.bf16.msra.mxu0 %v4119
    %5448 = vmatmul.bf16.gmra.mxu0 %v3540
    %v5449 = vpop.f32.mrf.mxu0
    %v5450 = vadd.f32 0.0, %v5449
    %v5451 = vpop.f32.mrf.mxu0
    %v5452 = vadd.f32 0.0, %v5451
    %5453 = vmatmul.bf16.gmra.mxu0 %v3544
    %v5454 = vpop.f32.mrf.mxu0
    %v5455 = vadd.f32 0.0, %v5454
    %v5456 = vpop.f32.mrf.mxu0
    %v5457 = vadd.f32 0.0, %v5456
    %5458 = vmatmul.bf16.gmra.mxu0 %v3548
    %v5459 = vpop.f32.mrf.mxu0
    %v5460 = vadd.f32 0.0, %v5459
    %v5461 = vpop.f32.mrf.mxu0
    %v5462 = vadd.f32 0.0, %v5461
    %5463 = vmatmul.bf16.gmra.mxu0 %v3552
    %v5464 = vpop.f32.mrf.mxu0
    %v5465 = vadd.f32 0.0, %v5464
    %v5466 = vpop.f32.mrf.mxu0
    %v5467 = vadd.f32 0.0, %v5466
    %5468 = vmatmul.bf16.gmra.mxu0 %v3556
    %v5469 = vpop.f32.mrf.mxu0
    %v5470 = vadd.f32 0.0, %v5469
    %v5471 = vpop.f32.mrf.mxu0
    %v5472 = vadd.f32 0.0, %v5471
    %5473 = vmatmul.bf16.gmra.mxu0 %v3560
    %v5474 = vpop.f32.mrf.mxu0
    %v5475 = vadd.f32 0.0, %v5474
    %v5476 = vpop.f32.mrf.mxu0
    %v5477 = vadd.f32 0.0, %v5476
    %5478 = vmatmul.bf16.gmra.mxu0 %v3564
    %v5479 = vpop.f32.mrf.mxu0
    %v5480 = vadd.f32 0.0, %v5479
    %v5481 = vpop.f32.mrf.mxu0
    %v5482 = vadd.f32 0.0, %v5481
    %5483 = vmatmul.bf16.gmra.mxu0 %v3568
    %v5484 = vpop.f32.mrf.mxu0
    %v5485 = vadd.f32 0.0, %v5484
    %v5486 = vpop.f32.mrf.mxu0
    %v5487 = vadd.f32 0.0, %v5486
    %5488 = vmatmul.bf16.gmra.mxu0 %v3572
    %v5489 = vpop.f32.mrf.mxu0
    %v5490 = vadd.f32 0.0, %v5489
    %v5491 = vpop.f32.mrf.mxu0
    %v5492 = vadd.f32 0.0, %v5491
    %5493 = vmatmul.bf16.gmra.mxu0 %v3576
    %v5494 = vpop.f32.mrf.mxu0
    %v5495 = vadd.f32 0.0, %v5494
    %v5496 = vpop.f32.mrf.mxu0
    %v5497 = vadd.f32 0.0, %v5496
    %5498 = vmatmul.bf16.gmra.mxu0 %v3580
    %v5499 = vpop.f32.mrf.mxu0
    %v5500 = vadd.f32 0.0, %v5499
    %v5501 = vpop.f32.mrf.mxu0
    %v5502 = vadd.f32 0.0, %v5501
    %5503 = vmatmul.bf16.gmra.mxu0 %v3584
    %v5504 = vpop.f32.mrf.mxu0
    %v5505 = vadd.f32 0.0, %v5504
    %v5506 = vpop.f32.mrf.mxu0
    %v5507 = vadd.f32 0.0, %v5506
    %5508 = vmatmul.bf16.gmra.mxu0 %v3588
    %v5509 = vpop.f32.mrf.mxu0
    %v5510 = vadd.f32 0.0, %v5509
    %v5511 = vpop.f32.mrf.mxu0
    %v5512 = vadd.f32 0.0, %v5511
    %5513 = vmatmul.bf16.gmra.mxu0 %v3592
    %v5514 = vpop.f32.mrf.mxu0
    %v5515 = vadd.f32 0.0, %v5514
    %v5516 = vpop.f32.mrf.mxu0
    %v5517 = vadd.f32 0.0, %v5516
    %5518 = vmatmul.bf16.gmra.mxu0 %v3596
    %v5519 = vpop.f32.mrf.mxu0
    %v5520 = vadd.f32 0.0, %v5519
    %v5521 = vpop.f32.mrf.mxu0
    %v5522 = vadd.f32 0.0, %v5521
    %5523 = vmatmul.bf16.gmra.mxu0 %v3600
    %v5524 = vpop.f32.mrf.mxu0
    %v5525 = vadd.f32 0.0, %v5524
    %v5526 = vpop.f32.mrf.mxu0
    %v5527 = vadd.f32 0.0, %v5526
    %5528 = vdwg.mxu0
    %5529 = vmatpush.bf16.msra.mxu0 %v4179
    %5530 = vmatpush.bf16.msra.mxu0 %v4175
    %5531 = vmatpush.bf16.msra.mxu0 %v4171
    %5532 = vmatpush.bf16.msra.mxu0 %v4167
    %5533 = vmatpush.bf16.msra.mxu0 %v4163
    %5534 = vmatpush.bf16.msra.mxu0 %v4159
    %5535 = vmatpush.bf16.msra.mxu0 %v4155
    %5536 = vmatpush.bf16.msra.mxu0 %v4151
    %5537 = vmatmul.bf16.gmra.mxu0 %v3541
    %v5538 = vpop.f32.mrf.mxu0
    %v5539 = vadd.f32 %v5450, %v5538
    %v5540 = vpop.f32.mrf.mxu0
    %v5541 = vadd.f32 %v5452, %v5540
    %5542 = vmatmul.bf16.gmra.mxu0 %v3545
    %v5543 = vpop.f32.mrf.mxu0
    %v5544 = vadd.f32 %v5455, %v5543
    %v5545 = vpop.f32.mrf.mxu0
    %v5546 = vadd.f32 %v5457, %v5545
    %5547 = vmatmul.bf16.gmra.mxu0 %v3549
    %v5548 = vpop.f32.mrf.mxu0
    %v5549 = vadd.f32 %v5460, %v5548
    %v5550 = vpop.f32.mrf.mxu0
    %v5551 = vadd.f32 %v5462, %v5550
    %5552 = vmatmul.bf16.gmra.mxu0 %v3553
    %v5553 = vpop.f32.mrf.mxu0
    %v5554 = vadd.f32 %v5465, %v5553
    %v5555 = vpop.f32.mrf.mxu0
    %v5556 = vadd.f32 %v5467, %v5555
    %5557 = vmatmul.bf16.gmra.mxu0 %v3557
    %v5558 = vpop.f32.mrf.mxu0
    %v5559 = vadd.f32 %v5470, %v5558
    %v5560 = vpop.f32.mrf.mxu0
    %v5561 = vadd.f32 %v5472, %v5560
    %5562 = vmatmul.bf16.gmra.mxu0 %v3561
    %v5563 = vpop.f32.mrf.mxu0
    %v5564 = vadd.f32 %v5475, %v5563
    %v5565 = vpop.f32.mrf.mxu0
    %v5566 = vadd.f32 %v5477, %v5565
    %5567 = vmatmul.bf16.gmra.mxu0 %v3565
    %v5568 = vpop.f32.mrf.mxu0
    %v5569 = vadd.f32 %v5480, %v5568
    %v5570 = vpop.f32.mrf.mxu0
    %v5571 = vadd.f32 %v5482, %v5570
    %5572 = vmatmul.bf16.gmra.mxu0 %v3569
    %v5573 = vpop.f32.mrf.mxu0
    %v5574 = vadd.f32 %v5485, %v5573
    %v5575 = vpop.f32.mrf.mxu0
    %v5576 = vadd.f32 %v5487, %v5575
    %5577 = vmatmul.bf16.gmra.mxu0 %v3573
    %v5578 = vpop.f32.mrf.mxu0
    %v5579 = vadd.f32 %v5490, %v5578
    %v5580 = vpop.f32.mrf.mxu0
    %v5581 = vadd.f32 %v5492, %v5580
    %5582 = vmatmul.bf16.gmra.mxu0 %v3577
    %v5583 = vpop.f32.mrf.mxu0
    %v5584 = vadd.f32 %v5495, %v5583
    %v5585 = vpop.f32.mrf.mxu0
    %v5586 = vadd.f32 %v5497, %v5585
    %5587 = vmatmul.bf16.gmra.mxu0 %v3581
    %v5588 = vpop.f32.mrf.mxu0
    %v5589 = vadd.f32 %v5500, %v5588
    %v5590 = vpop.f32.mrf.mxu0
    %v5591 = vadd.f32 %v5502, %v5590
    %5592 = vmatmul.bf16.gmra.mxu0 %v3585
    %v5593 = vpop.f32.mrf.mxu0
    %v5594 = vadd.f32 %v5505, %v5593
    %v5595 = vpop.f32.mrf.mxu0
    %v5596 = vadd.f32 %v5507, %v5595
    %5597 = vmatmul.bf16.gmra.mxu0 %v3589
    %v5598 = vpop.f32.mrf.mxu0
    %v5599 = vadd.f32 %v5510, %v5598
    %v5600 = vpop.f32.mrf.mxu0
    %v5601 = vadd.f32 %v5512, %v5600
    %5602 = vmatmul.bf16.gmra.mxu0 %v3593
    %v5603 = vpop.f32.mrf.mxu0
    %v5604 = vadd.f32 %v5515, %v5603
    %v5605 = vpop.f32.mrf.mxu0
    %v5606 = vadd.f32 %v5517, %v5605
    %5607 = vmatmul.bf16.gmra.mxu0 %v3597
    %v5608 = vpop.f32.mrf.mxu0
    %v5609 = vadd.f32 %v5520, %v5608
    %v5610 = vpop.f32.mrf.mxu0
    %v5611 = vadd.f32 %v5522, %v5610
    %5612 = vmatmul.bf16.gmra.mxu0 %v3601
    %v5613 = vpop.f32.mrf.mxu0
    %v5614 = vadd.f32 %v5525, %v5613
    %v5615 = vpop.f32.mrf.mxu0
    %v5616 = vadd.f32 %v5527, %v5615
    %5617 = vdwg.mxu0
    %5618 = vmatpush.bf16.msra.mxu0 %v4211
    %5619 = vmatpush.bf16.msra.mxu0 %v4207
    %5620 = vmatpush.bf16.msra.mxu0 %v4203
    %5621 = vmatpush.bf16.msra.mxu0 %v4199
    %5622 = vmatpush.bf16.msra.mxu0 %v4195
    %5623 = vmatpush.bf16.msra.mxu0 %v4191
    %5624 = vmatpush.bf16.msra.mxu0 %v4187
    %5625 = vmatpush.bf16.msra.mxu0 %v4183
    %5626 = vmatmul.bf16.gmra.mxu0 %v3542
    %v5627 = vpop.f32.mrf.mxu0
    %v5628 = vadd.f32 %v5539, %v5627
    %v5629 = vpop.f32.mrf.mxu0
    %v5630 = vadd.f32 %v5541, %v5629
    %5631 = vmatmul.bf16.gmra.mxu0 %v3546
    %v5632 = vpop.f32.mrf.mxu0
    %v5633 = vadd.f32 %v5544, %v5632
    %v5634 = vpop.f32.mrf.mxu0
    %v5635 = vadd.f32 %v5546, %v5634
    %5636 = vmatmul.bf16.gmra.mxu0 %v3550
    %v5637 = vpop.f32.mrf.mxu0
    %v5638 = vadd.f32 %v5549, %v5637
    %v5639 = vpop.f32.mrf.mxu0
    %v5640 = vadd.f32 %v5551, %v5639
    %5641 = vmatmul.bf16.gmra.mxu0 %v3554
    %v5642 = vpop.f32.mrf.mxu0
    %v5643 = vadd.f32 %v5554, %v5642
    %v5644 = vpop.f32.mrf.mxu0
    %v5645 = vadd.f32 %v5556, %v5644
    %5646 = vmatmul.bf16.gmra.mxu0 %v3558
    %v5647 = vpop.f32.mrf.mxu0
    %v5648 = vadd.f32 %v5559, %v5647
    %v5649 = vpop.f32.mrf.mxu0
    %v5650 = vadd.f32 %v5561, %v5649
    %5651 = vmatmul.bf16.gmra.mxu0 %v3562
    %v5652 = vpop.f32.mrf.mxu0
    %v5653 = vadd.f32 %v5564, %v5652
    %v5654 = vpop.f32.mrf.mxu0
    %v5655 = vadd.f32 %v5566, %v5654
    %5656 = vmatmul.bf16.gmra.mxu0 %v3566
    %v5657 = vpop.f32.mrf.mxu0
    %v5658 = vadd.f32 %v5569, %v5657
    %v5659 = vpop.f32.mrf.mxu0
    %v5660 = vadd.f32 %v5571, %v5659
    %5661 = vmatmul.bf16.gmra.mxu0 %v3570
    %v5662 = vpop.f32.mrf.mxu0
    %v5663 = vadd.f32 %v5574, %v5662
    %v5664 = vpop.f32.mrf.mxu0
    %v5665 = vadd.f32 %v5576, %v5664
    %5666 = vmatmul.bf16.gmra.mxu0 %v3574
    %v5667 = vpop.f32.mrf.mxu0
    %v5668 = vadd.f32 %v5579, %v5667
    %v5669 = vpop.f32.mrf.mxu0
    %v5670 = vadd.f32 %v5581, %v5669
    %5671 = vmatmul.bf16.gmra.mxu0 %v3578
    %v5672 = vpop.f32.mrf.mxu0
    %v5673 = vadd.f32 %v5584, %v5672
    %v5674 = vpop.f32.mrf.mxu0
    %v5675 = vadd.f32 %v5586, %v5674
    %5676 = vmatmul.bf16.gmra.mxu0 %v3582
    %v5677 = vpop.f32.mrf.mxu0
    %v5678 = vadd.f32 %v5589, %v5677
    %v5679 = vpop.f32.mrf.mxu0
    %v5680 = vadd.f32 %v5591, %v5679
    %5681 = vmatmul.bf16.gmra.mxu0 %v3586
    %v5682 = vpop.f32.mrf.mxu0
    %v5683 = vadd.f32 %v5594, %v5682
    %v5684 = vpop.f32.mrf.mxu0
    %v5685 = vadd.f32 %v5596, %v5684
    %5686 = vmatmul.bf16.gmra.mxu0 %v3590
    %v5687 = vpop.f32.mrf.mxu0
    %v5688 = vadd.f32 %v5599, %v5687
    %v5689 = vpop.f32.mrf.mxu0
    %v5690 = vadd.f32 %v5601, %v5689
    %5691 = vmatmul.bf16.gmra.mxu0 %v3594
    %v5692 = vpop.f32.mrf.mxu0
    %v5693 = vadd.f32 %v5604, %v5692
    %v5694 = vpop.f32.mrf.mxu0
    %v5695 = vadd.f32 %v5606, %v5694
    %5696 = vmatmul.bf16.gmra.mxu0 %v3598
    %v5697 = vpop.f32.mrf.mxu0
    %v5698 = vadd.f32 %v5609, %v5697
    %v5699 = vpop.f32.mrf.mxu0
    %v5700 = vadd.f32 %v5611, %v5699
    %5701 = vmatmul.bf16.gmra.mxu0 %v3602
    %v5702 = vpop.f32.mrf.mxu0
    %v5703 = vadd.f32 %v5614, %v5702
    %v5704 = vpop.f32.mrf.mxu0
    %v5705 = vadd.f32 %v5616, %v5704
    %5706 = vdwg.mxu0
    %5707 = vmatpush.bf16.msra.mxu0 %v4243
    %5708 = vmatpush.bf16.msra.mxu0 %v4239
    %5709 = vmatpush.bf16.msra.mxu0 %v4235
    %5710 = vmatpush.bf16.msra.mxu0 %v4231
    %5711 = vmatpush.bf16.msra.mxu0 %v4227
    %5712 = vmatpush.bf16.msra.mxu0 %v4223
    %5713 = vmatpush.bf16.msra.mxu0 %v4219
    %5714 = vmatpush.bf16.msra.mxu0 %v4215
    %5715 = vmatmul.bf16.gmra.mxu0 %v3543
    %v5716 = vpop.f32.mrf.mxu0
    %v5717 = vadd.f32 %v5628, %v5716
    %v5718 = vpop.f32.mrf.mxu0
    %v5719 = vadd.f32 %v5630, %v5718
    %5720 = vmatmul.bf16.gmra.mxu0 %v3547
    %v5721 = vpop.f32.mrf.mxu0
    %v5722 = vadd.f32 %v5633, %v5721
    %v5723 = vpop.f32.mrf.mxu0
    %v5724 = vadd.f32 %v5635, %v5723
    %5725 = vmatmul.bf16.gmra.mxu0 %v3551
    %v5726 = vpop.f32.mrf.mxu0
    %v5727 = vadd.f32 %v5638, %v5726
    %v5728 = vpop.f32.mrf.mxu0
    %v5729 = vadd.f32 %v5640, %v5728
    %5730 = vmatmul.bf16.gmra.mxu0 %v3555
    %v5731 = vpop.f32.mrf.mxu0
    %v5732 = vadd.f32 %v5643, %v5731
    %v5733 = vpop.f32.mrf.mxu0
    %v5734 = vadd.f32 %v5645, %v5733
    %5735 = vmatmul.bf16.gmra.mxu0 %v3559
    %v5736 = vpop.f32.mrf.mxu0
    %v5737 = vadd.f32 %v5648, %v5736
    %v5738 = vpop.f32.mrf.mxu0
    %v5739 = vadd.f32 %v5650, %v5738
    %5740 = vmatmul.bf16.gmra.mxu0 %v3563
    %v5741 = vpop.f32.mrf.mxu0
    %v5742 = vadd.f32 %v5653, %v5741
    %v5743 = vpop.f32.mrf.mxu0
    %v5744 = vadd.f32 %v5655, %v5743
    %5745 = vmatmul.bf16.gmra.mxu0 %v3567
    %v5746 = vpop.f32.mrf.mxu0
    %v5747 = vadd.f32 %v5658, %v5746
    %v5748 = vpop.f32.mrf.mxu0
    %v5749 = vadd.f32 %v5660, %v5748
    %5750 = vmatmul.bf16.gmra.mxu0 %v3571
    %v5751 = vpop.f32.mrf.mxu0
    %v5752 = vadd.f32 %v5663, %v5751
    %v5753 = vpop.f32.mrf.mxu0
    %v5754 = vadd.f32 %v5665, %v5753
    %5755 = vmatmul.bf16.gmra.mxu0 %v3575
    %v5756 = vpop.f32.mrf.mxu0
    %v5757 = vadd.f32 %v5668, %v5756
    %v5758 = vpop.f32.mrf.mxu0
    %v5759 = vadd.f32 %v5670, %v5758
    %5760 = vmatmul.bf16.gmra.mxu0 %v3579
    %v5761 = vpop.f32.mrf.mxu0
    %v5762 = vadd.f32 %v5673, %v5761
    %v5763 = vpop.f32.mrf.mxu0
    %v5764 = vadd.f32 %v5675, %v5763
    %5765 = vmatmul.bf16.gmra.mxu0 %v3583
    %v5766 = vpop.f32.mrf.mxu0
    %v5767 = vadd.f32 %v5678, %v5766
    %v5768 = vpop.f32.mrf.mxu0
    %v5769 = vadd.f32 %v5680, %v5768
    %5770 = vmatmul.bf16.gmra.mxu0 %v3587
    %v5771 = vpop.f32.mrf.mxu0
    %v5772 = vadd.f32 %v5683, %v5771
    %v5773 = vpop.f32.mrf.mxu0
    %v5774 = vadd.f32 %v5685, %v5773
    %5775 = vmatmul.bf16.gmra.mxu0 %v3591
    %v5776 = vpop.f32.mrf.mxu0
    %v5777 = vadd.f32 %v5688, %v5776
    %v5778 = vpop.f32.mrf.mxu0
    %v5779 = vadd.f32 %v5690, %v5778
    %5780 = vmatmul.bf16.gmra.mxu0 %v3595
    %v5781 = vpop.f32.mrf.mxu0
    %v5782 = vadd.f32 %v5693, %v5781
    %v5783 = vpop.f32.mrf.mxu0
    %v5784 = vadd.f32 %v5695, %v5783
    %5785 = vmatmul.bf16.gmra.mxu0 %v3599
    %v5786 = vpop.f32.mrf.mxu0
    %v5787 = vadd.f32 %v5698, %v5786
    %v5788 = vpop.f32.mrf.mxu0
    %v5789 = vadd.f32 %v5700, %v5788
    %5790 = vmatmul.bf16.gmra.mxu0 %v3603
    %v5791 = vpop.f32.mrf.mxu0
    %v5792 = vadd.f32 %v5703, %v5791
    %v5793 = vpop.f32.mrf.mxu0
    %v5794 = vadd.f32 %v5705, %v5793
    %5795 = vdwg.mxu0
    %v5796 = vadd.f32 %v4649, %v4651
    %v5797 = vadd.f32 %v5796, %v4654
    %v5798 = vadd.f32 %v5797, %v4656
    %v5799 = vadd.f32 %v5798, %v4659
    %v5800 = vadd.f32 %v5799, %v4661
    %v5801 = vadd.f32 %v5800, %v4664
    %v5802 = vadd.f32 %v5801, %v4666
    %v5803 = vadd.f32 %v5802, %v4669
    %v5804 = vadd.f32 %v5803, %v4671
    %v5805 = vadd.f32 %v5804, %v4674
    %v5806 = vadd.f32 %v5805, %v4676
    %v5807 = vadd.f32 %v5806, %v4679
    %v5808 = vadd.f32 %v5807, %v4681
    %v5809 = vadd.f32 %v5808, %v4684
    %v5810 = vadd.f32 %v5809, %v4686
    %v5811 = vadd.f32 %v5810, %v4689
    %v5812 = vadd.f32 %v5811, %v4691
    %v5813 = vadd.f32 %v5812, %v4694
    %v5814 = vadd.f32 %v5813, %v4696
    %v5815 = vadd.f32 %v5814, %v4699
    %v5816 = vadd.f32 %v5815, %v4701
    %v5817 = vadd.f32 %v5816, %v4704
    %v5818 = vadd.f32 %v5817, %v4706
    %v5819 = vadd.f32 %v5818, %v4709
    %v5820 = vadd.f32 %v5819, %v4711
    %v5821 = vadd.f32 %v5820, %v4714
    %v5822 = vadd.f32 %v5821, %v4716
    %v5823 = vadd.f32 %v5822, %v4719
    %v5824 = vadd.f32 %v5823, %v4721
    %v5825 = vadd.f32 %v5824, %v4724
    %v5826 = vadd.f32 %v5825, %v4726
    %v5827 = vrot.slane %v5826, 4
    %v5828 = vadd.f32 %v5826, %v5827
    %v5829 = vrot.slane %v5828, 2
    %v5830 = vadd.f32 %v5828, %v5829
    %v5831 = vrot.slane %v5830, 1
    %v5832 = vadd.f32 %v5830, %v5831
    %v5833 = vadd.f32 %v5005, %v5007
    %v5834 = vadd.f32 %v5833, %v5010
    %v5835 = vadd.f32 %v5834, %v5012
    %v5836 = vadd.f32 %v5835, %v5015
    %v5837 = vadd.f32 %v5836, %v5017
    %v5838 = vadd.f32 %v5837, %v5020
    %v5839 = vadd.f32 %v5838, %v5022
    %v5840 = vadd.f32 %v5839, %v5025
    %v5841 = vadd.f32 %v5840, %v5027
    %v5842 = vadd.f32 %v5841, %v5030
    %v5843 = vadd.f32 %v5842, %v5032
    %v5844 = vadd.f32 %v5843, %v5035
    %v5845 = vadd.f32 %v5844, %v5037
    %v5846 = vadd.f32 %v5845, %v5040
    %v5847 = vadd.f32 %v5846, %v5042
    %v5848 = vadd.f32 %v5847, %v5045
    %v5849 = vadd.f32 %v5848, %v5047
    %v5850 = vadd.f32 %v5849, %v5050
    %v5851 = vadd.f32 %v5850, %v5052
    %v5852 = vadd.f32 %v5851, %v5055
    %v5853 = vadd.f32 %v5852, %v5057
    %v5854 = vadd.f32 %v5853, %v5060
    %v5855 = vadd.f32 %v5854, %v5062
    %v5856 = vadd.f32 %v5855, %v5065
    %v5857 = vadd.f32 %v5856, %v5067
    %v5858 = vadd.f32 %v5857, %v5070
    %v5859 = vadd.f32 %v5858, %v5072
    %v5860 = vadd.f32 %v5859, %v5075
    %v5861 = vadd.f32 %v5860, %v5077
    %v5862 = vadd.f32 %v5861, %v5080
    %v5863 = vadd.f32 %v5862, %v5082
    %v5864 = vrot.slane %v5863, 4
    %v5865 = vadd.f32 %v5863, %v5864
    %v5866 = vrot.slane %v5865, 2
    %v5867 = vadd.f32 %v5865, %v5866
    %v5868 = vrot.slane %v5867, 1
    %v5869 = vadd.f32 %v5867, %v5868
    %v5870 = vadd.f32 %v5361, %v5363
    %v5871 = vadd.f32 %v5870, %v5366
    %v5872 = vadd.f32 %v5871, %v5368
    %v5873 = vadd.f32 %v5872, %v5371
    %v5874 = vadd.f32 %v5873, %v5373
    %v5875 = vadd.f32 %v5874, %v5376
    %v5876 = vadd.f32 %v5875, %v5378
    %v5877 = vadd.f32 %v5876, %v5381
    %v5878 = vadd.f32 %v5877, %v5383
    %v5879 = vadd.f32 %v5878, %v5386
    %v5880 = vadd.f32 %v5879, %v5388
    %v5881 = vadd.f32 %v5880, %v5391
    %v5882 = vadd.f32 %v5881, %v5393
    %v5883 = vadd.f32 %v5882, %v5396
    %v5884 = vadd.f32 %v5883, %v5398
    %v5885 = vadd.f32 %v5884, %v5401
    %v5886 = vadd.f32 %v5885, %v5403
    %v5887 = vadd.f32 %v5886, %v5406
    %v5888 = vadd.f32 %v5887, %v5408
    %v5889 = vadd.f32 %v5888, %v5411
    %v5890 = vadd.f32 %v5889, %v5413
    %v5891 = vadd.f32 %v5890, %v5416
    %v5892 = vadd.f32 %v5891, %v5418
    %v5893 = vadd.f32 %v5892, %v5421
    %v5894 = vadd.f32 %v5893, %v5423
    %v5895 = vadd.f32 %v5894, %v5426
    %v5896 = vadd.f32 %v5895, %v5428
    %v5897 = vadd.f32 %v5896, %v5431
    %v5898 = vadd.f32 %v5897, %v5433
    %v5899 = vadd.f32 %v5898, %v5436
    %v5900 = vadd.f32 %v5899, %v5438
    %v5901 = vrot.slane %v5900, 4
    %v5902 = vadd.f32 %v5900, %v5901
    %v5903 = vrot.slane %v5902, 2
    %v5904 = vadd.f32 %v5902, %v5903
    %v5905 = vrot.slane %v5904, 1
    %v5906 = vadd.f32 %v5904, %v5905
    %v5907 = vadd.f32 %v5717, %v5719
    %v5908 = vadd.f32 %v5907, %v5722
    %v5909 = vadd.f32 %v5908, %v5724
    %v5910 = vadd.f32 %v5909, %v5727
    %v5911 = vadd.f32 %v5910, %v5729
    %v5912 = vadd.f32 %v5911, %v5732
    %v5913 = vadd.f32 %v5912, %v5734
    %v5914 = vadd.f32 %v5913, %v5737
    %v5915 = vadd.f32 %v5914, %v5739
    %v5916 = vadd.f32 %v5915, %v5742
    %v5917 = vadd.f32 %v5916, %v5744
    %v5918 = vadd.f32 %v5917, %v5747
    %v5919 = vadd.f32 %v5918, %v5749
    %v5920 = vadd.f32 %v5919, %v5752
    %v5921 = vadd.f32 %v5920, %v5754
    %v5922 = vadd.f32 %v5921, %v5757
    %v5923 = vadd.f32 %v5922, %v5759
    %v5924 = vadd.f32 %v5923, %v5762
    %v5925 = vadd.f32 %v5924, %v5764
    %v5926 = vadd.f32 %v5925, %v5767
    %v5927 = vadd.f32 %v5926, %v5769
    %v5928 = vadd.f32 %v5927, %v5772
    %v5929 = vadd.f32 %v5928, %v5774
    %v5930 = vadd.f32 %v5929, %v5777
    %v5931 = vadd.f32 %v5930, %v5779
    %v5932 = vadd.f32 %v5931, %v5782
    %v5933 = vadd.f32 %v5932, %v5784
    %v5934 = vadd.f32 %v5933, %v5787
    %v5935 = vadd.f32 %v5934, %v5789
    %v5936 = vadd.f32 %v5935, %v5792
    %v5937 = vadd.f32 %v5936, %v5794
    %v5938 = vrot.slane %v5937, 4
    %v5939 = vadd.f32 %v5937, %v5938
    %v5940 = vrot.slane %v5939, 2
    %v5941 = vadd.f32 %v5939, %v5940
    %v5942 = vrot.slane %v5941, 1
    %v5943 = vadd.f32 %v5941, %v5942
    %v5944 = vmul.f32 %v5832, 0.00390625
    %v5945 = vmul.f32 %v5869, 0.00390625
    %v5946 = vmul.f32 %v5906, 0.00390625
    %v5947 = vmul.f32 %v5943, 0.00390625
    %v5948 = vmul.f32 %v4649, %v4649
    %v5949 = vmul.f32 %v5005, %v5005
    %v5950 = vmul.f32 %v5361, %v5361
    %v5951 = vmul.f32 %v5717, %v5717
    %v5952 = vmul.f32 %v4651, %v4651
    %v5953 = vmul.f32 %v5007, %v5007
    %v5954 = vmul.f32 %v5363, %v5363
    %v5955 = vmul.f32 %v5719, %v5719
    %v5956 = vmul.f32 %v4654, %v4654
    %v5957 = vmul.f32 %v5010, %v5010
    %v5958 = vmul.f32 %v5366, %v5366
    %v5959 = vmul.f32 %v5722, %v5722
    %v5960 = vmul.f32 %v4656, %v4656
    %v5961 = vmul.f32 %v5012, %v5012
    %v5962 = vmul.f32 %v5368, %v5368
    %v5963 = vmul.f32 %v5724, %v5724
    %v5964 = vmul.f32 %v4659, %v4659
    %v5965 = vmul.f32 %v5015, %v5015
    %v5966 = vmul.f32 %v5371, %v5371
    %v5967 = vmul.f32 %v5727, %v5727
    %v5968 = vmul.f32 %v4661, %v4661
    %v5969 = vmul.f32 %v5017, %v5017
    %v5970 = vmul.f32 %v5373, %v5373
    %v5971 = vmul.f32 %v5729, %v5729
    %v5972 = vmul.f32 %v4664, %v4664
    %v5973 = vmul.f32 %v5020, %v5020
    %v5974 = vmul.f32 %v5376, %v5376
    %v5975 = vmul.f32 %v5732, %v5732
    %v5976 = vmul.f32 %v4666, %v4666
    %v5977 = vmul.f32 %v5022, %v5022
    %v5978 = vmul.f32 %v5378, %v5378
    %v5979 = vmul.f32 %v5734, %v5734
    %v5980 = vmul.f32 %v4669, %v4669
    %v5981 = vmul.f32 %v5025, %v5025
    %v5982 = vmul.f32 %v5381, %v5381
    %v5983 = vmul.f32 %v5737, %v5737
    %v5984 = vmul.f32 %v4671, %v4671
    %v5985 = vmul.f32 %v5027, %v5027
    %v5986 = vmul.f32 %v5383, %v5383
    %v5987 = vmul.f32 %v5739, %v5739
    %v5988 = vmul.f32 %v4674, %v4674
    %v5989 = vmul.f32 %v5030, %v5030
    %v5990 = vmul.f32 %v5386, %v5386
    %v5991 = vmul.f32 %v5742, %v5742
    %v5992 = vmul.f32 %v4676, %v4676
    %v5993 = vmul.f32 %v5032, %v5032
    %v5994 = vmul.f32 %v5388, %v5388
    %v5995 = vmul.f32 %v5744, %v5744
    %v5996 = vmul.f32 %v4679, %v4679
    %v5997 = vmul.f32 %v5035, %v5035
    %v5998 = vmul.f32 %v5391, %v5391
    %v5999 = vmul.f32 %v5747, %v5747
    %v6000 = vmul.f32 %v4681, %v4681
    %v6001 = vmul.f32 %v5037, %v5037
    %v6002 = vmul.f32 %v5393, %v5393
    %v6003 = vmul.f32 %v5749, %v5749
    %v6004 = vmul.f32 %v4684, %v4684
    %v6005 = vmul.f32 %v5040, %v5040
    %v6006 = vmul.f32 %v5396, %v5396
    %v6007 = vmul.f32 %v5752, %v5752
    %v6008 = vmul.f32 %v4686, %v4686
    %v6009 = vmul.f32 %v5042, %v5042
    %v6010 = vmul.f32 %v5398, %v5398
    %v6011 = vmul.f32 %v5754, %v5754
    %v6012 = vmul.f32 %v4689, %v4689
    %v6013 = vmul.f32 %v5045, %v5045
    %v6014 = vmul.f32 %v5401, %v5401
    %v6015 = vmul.f32 %v5757, %v5757
    %v6016 = vmul.f32 %v4691, %v4691
    %v6017 = vmul.f32 %v5047, %v5047
    %v6018 = vmul.f32 %v5403, %v5403
    %v6019 = vmul.f32 %v5759, %v5759
    %v6020 = vmul.f32 %v4694, %v4694
    %v6021 = vmul.f32 %v5050, %v5050
    %v6022 = vmul.f32 %v5406, %v5406
    %v6023 = vmul.f32 %v5762, %v5762
    %v6024 = vmul.f32 %v4696, %v4696
    %v6025 = vmul.f32 %v5052, %v5052
    %v6026 = vmul.f32 %v5408, %v5408
    %v6027 = vmul.f32 %v5764, %v5764
    %v6028 = vmul.f32 %v4699, %v4699
    %v6029 = vmul.f32 %v5055, %v5055
    %v6030 = vmul.f32 %v5411, %v5411
    %v6031 = vmul.f32 %v5767, %v5767
    %v6032 = vmul.f32 %v4701, %v4701
    %v6033 = vmul.f32 %v5057, %v5057
    %v6034 = vmul.f32 %v5413, %v5413
    %v6035 = vmul.f32 %v5769, %v5769
    %v6036 = vmul.f32 %v4704, %v4704
    %v6037 = vmul.f32 %v5060, %v5060
    %v6038 = vmul.f32 %v5416, %v5416
    %v6039 = vmul.f32 %v5772, %v5772
    %v6040 = vmul.f32 %v4706, %v4706
    %v6041 = vmul.f32 %v5062, %v5062
    %v6042 = vmul.f32 %v5418, %v5418
    %v6043 = vmul.f32 %v5774, %v5774
    %v6044 = vmul.f32 %v4709, %v4709
    %v6045 = vmul.f32 %v5065, %v5065
    %v6046 = vmul.f32 %v5421, %v5421
    %v6047 = vmul.f32 %v5777, %v5777
    %v6048 = vmul.f32 %v4711, %v4711
    %v6049 = vmul.f32 %v5067, %v5067
    %v6050 = vmul.f32 %v5423, %v5423
    %v6051 = vmul.f32 %v5779, %v5779
    %v6052 = vmul.f32 %v4714, %v4714
    %v6053 = vmul.f32 %v5070, %v5070
    %v6054 = vmul.f32 %v5426, %v5426
    %v6055 = vmul.f32 %v5782, %v5782
    %v6056 = vmul.f32 %v4716, %v4716
    %v6057 = vmul.f32 %v5072, %v5072
    %v6058 = vmul.f32 %v5428, %v5428
    %v6059 = vmul.f32 %v5784, %v5784
    %v6060 = vmul.f32 %v4719, %v4719
    %v6061 = vmul.f32 %v5075, %v5075
    %v6062 = vmul.f32 %v5431, %v5431
    %v6063 = vmul.f32 %v5787, %v5787
    %v6064 = vmul.f32 %v4721, %v4721
    %v6065 = vmul.f32 %v5077, %v5077
    %v6066 = vmul.f32 %v5433, %v5433
    %v6067 = vmul.f32 %v5789, %v5789
    %v6068 = vmul.f32 %v4724, %v4724
    %v6069 = vmul.f32 %v5080, %v5080
    %v6070 = vmul.f32 %v5436, %v5436
    %v6071 = vmul.f32 %v5792, %v5792
    %v6072 = vmul.f32 %v4726, %v4726
    %v6073 = vmul.f32 %v5082, %v5082
    %v6074 = vmul.f32 %v5438, %v5438
    %v6075 = vmul.f32 %v5794, %v5794
    %v6076 = vadd.f32 %v5948, %v5952
    %v6077 = vadd.f32 %v6076, %v5956
    %v6078 = vadd.f32 %v6077, %v5960
    %v6079 = vadd.f32 %v6078, %v5964
    %v6080 = vadd.f32 %v6079, %v5968
    %v6081 = vadd.f32 %v6080, %v5972
    %v6082 = vadd.f32 %v6081, %v5976
    %v6083 = vadd.f32 %v6082, %v5980
    %v6084 = vadd.f32 %v6083, %v5984
    %v6085 = vadd.f32 %v6084, %v5988
    %v6086 = vadd.f32 %v6085, %v5992
    %v6087 = vadd.f32 %v6086, %v5996
    %v6088 = vadd.f32 %v6087, %v6000
    %v6089 = vadd.f32 %v6088, %v6004
    %v6090 = vadd.f32 %v6089, %v6008
    %v6091 = vadd.f32 %v6090, %v6012
    %v6092 = vadd.f32 %v6091, %v6016
    %v6093 = vadd.f32 %v6092, %v6020
    %v6094 = vadd.f32 %v6093, %v6024
    %v6095 = vadd.f32 %v6094, %v6028
    %v6096 = vadd.f32 %v6095, %v6032
    %v6097 = vadd.f32 %v6096, %v6036
    %v6098 = vadd.f32 %v6097, %v6040
    %v6099 = vadd.f32 %v6098, %v6044
    %v6100 = vadd.f32 %v6099, %v6048
    %v6101 = vadd.f32 %v6100, %v6052
    %v6102 = vadd.f32 %v6101, %v6056
    %v6103 = vadd.f32 %v6102, %v6060
    %v6104 = vadd.f32 %v6103, %v6064
    %v6105 = vadd.f32 %v6104, %v6068
    %v6106 = vadd.f32 %v6105, %v6072
    %v6107 = vrot.slane %v6106, 4
    %v6108 = vadd.f32 %v6106, %v6107
    %v6109 = vrot.slane %v6108, 2
    %v6110 = vadd.f32 %v6108, %v6109
    %v6111 = vrot.slane %v6110, 1
    %v6112 = vadd.f32 %v6110, %v6111
    %v6113 = vadd.f32 %v5949, %v5953
    %v6114 = vadd.f32 %v6113, %v5957
    %v6115 = vadd.f32 %v6114, %v5961
    %v6116 = vadd.f32 %v6115, %v5965
    %v6117 = vadd.f32 %v6116, %v5969
    %v6118 = vadd.f32 %v6117, %v5973
    %v6119 = vadd.f32 %v6118, %v5977
    %v6120 = vadd.f32 %v6119, %v5981
    %v6121 = vadd.f32 %v6120, %v5985
    %v6122 = vadd.f32 %v6121, %v5989
    %v6123 = vadd.f32 %v6122, %v5993
    %v6124 = vadd.f32 %v6123, %v5997
    %v6125 = vadd.f32 %v6124, %v6001
    %v6126 = vadd.f32 %v6125, %v6005
    %v6127 = vadd.f32 %v6126, %v6009
    %v6128 = vadd.f32 %v6127, %v6013
    %v6129 = vadd.f32 %v6128, %v6017
    %v6130 = vadd.f32 %v6129, %v6021
    %v6131 = vadd.f32 %v6130, %v6025
    %v6132 = vadd.f32 %v6131, %v6029
    %v6133 = vadd.f32 %v6132, %v6033
    %v6134 = vadd.f32 %v6133, %v6037
    %v6135 = vadd.f32 %v6134, %v6041
    %v6136 = vadd.f32 %v6135, %v6045
    %v6137 = vadd.f32 %v6136, %v6049
    %v6138 = vadd.f32 %v6137, %v6053
    %v6139 = vadd.f32 %v6138, %v6057
    %v6140 = vadd.f32 %v6139, %v6061
    %v6141 = vadd.f32 %v6140, %v6065
    %v6142 = vadd.f32 %v6141, %v6069
    %v6143 = vadd.f32 %v6142, %v6073
    %v6144 = vrot.slane %v6143, 4
    %v6145 = vadd.f32 %v6143, %v6144
    %v6146 = vrot.slane %v6145, 2
    %v6147 = vadd.f32 %v6145, %v6146
    %v6148 = vrot.slane %v6147, 1
    %v6149 = vadd.f32 %v6147, %v6148
    %v6150 = vadd.f32 %v5950, %v5954
    %v6151 = vadd.f32 %v6150, %v5958
    %v6152 = vadd.f32 %v6151, %v5962
    %v6153 = vadd.f32 %v6152, %v5966
    %v6154 = vadd.f32 %v6153, %v5970
    %v6155 = vadd.f32 %v6154, %v5974
    %v6156 = vadd.f32 %v6155, %v5978
    %v6157 = vadd.f32 %v6156, %v5982
    %v6158 = vadd.f32 %v6157, %v5986
    %v6159 = vadd.f32 %v6158, %v5990
    %v6160 = vadd.f32 %v6159, %v5994
    %v6161 = vadd.f32 %v6160, %v5998
    %v6162 = vadd.f32 %v6161, %v6002
    %v6163 = vadd.f32 %v6162, %v6006
    %v6164 = vadd.f32 %v6163, %v6010
    %v6165 = vadd.f32 %v6164, %v6014
    %v6166 = vadd.f32 %v6165, %v6018
    %v6167 = vadd.f32 %v6166, %v6022
    %v6168 = vadd.f32 %v6167, %v6026
    %v6169 = vadd.f32 %v6168, %v6030
    %v6170 = vadd.f32 %v6169, %v6034
    %v6171 = vadd.f32 %v6170, %v6038
    %v6172 = vadd.f32 %v6171, %v6042
    %v6173 = vadd.f32 %v6172, %v6046
    %v6174 = vadd.f32 %v6173, %v6050
    %v6175 = vadd.f32 %v6174, %v6054
    %v6176 = vadd.f32 %v6175, %v6058
    %v6177 = vadd.f32 %v6176, %v6062
    %v6178 = vadd.f32 %v6177, %v6066
    %v6179 = vadd.f32 %v6178, %v6070
    %v6180 = vadd.f32 %v6179, %v6074
    %v6181 = vrot.slane %v6180, 4
    %v6182 = vadd.f32 %v6180, %v6181
    %v6183 = vrot.slane %v6182, 2
    %v6184 = vadd.f32 %v6182, %v6183
    %v6185 = vrot.slane %v6184, 1
    %v6186 = vadd.f32 %v6184, %v6185
    %v6187 = vadd.f32 %v5951, %v5955
    %v6188 = vadd.f32 %v6187, %v5959
    %v6189 = vadd.f32 %v6188, %v5963
    %v6190 = vadd.f32 %v6189, %v5967
    %v6191 = vadd.f32 %v6190, %v5971
    %v6192 = vadd.f32 %v6191, %v5975
    %v6193 = vadd.f32 %v6192, %v5979
    %v6194 = vadd.f32 %v6193, %v5983
    %v6195 = vadd.f32 %v6194, %v5987
    %v6196 = vadd.f32 %v6195, %v5991
    %v6197 = vadd.f32 %v6196, %v5995
    %v6198 = vadd.f32 %v6197, %v5999
    %v6199 = vadd.f32 %v6198, %v6003
    %v6200 = vadd.f32 %v6199, %v6007
    %v6201 = vadd.f32 %v6200, %v6011
    %v6202 = vadd.f32 %v6201, %v6015
    %v6203 = vadd.f32 %v6202, %v6019
    %v6204 = vadd.f32 %v6203, %v6023
    %v6205 = vadd.f32 %v6204, %v6027
    %v6206 = vadd.f32 %v6205, %v6031
    %v6207 = vadd.f32 %v6206, %v6035
    %v6208 = vadd.f32 %v6207, %v6039
    %v6209 = vadd.f32 %v6208, %v6043
    %v6210 = vadd.f32 %v6209, %v6047
    %v6211 = vadd.f32 %v6210, %v6051
    %v6212 = vadd.f32 %v6211, %v6055
    %v6213 = vadd.f32 %v6212, %v6059
    %v6214 = vadd.f32 %v6213, %v6063
    %v6215 = vadd.f32 %v6214, %v6067
    %v6216 = vadd.f32 %v6215, %v6071
    %v6217 = vadd.f32 %v6216, %v6075
    %v6218 = vrot.slane %v6217, 4
    %v6219 = vadd.f32 %v6217, %v6218
    %v6220 = vrot.slane %v6219, 2
    %v6221 = vadd.f32 %v6219, %v6220
    %v6222 = vrot.slane %v6221, 1
    %v6223 = vadd.f32 %v6221, %v6222
    %v6224 = vmul.f32 %v6112, 0.00390625
    %v6225 = vmul.f32 %v6149, 0.00390625
    %v6226 = vmul.f32 %v6186, 0.00390625
    %v6227 = vmul.f32 %v6223, 0.00390625
    %v6228 = vmul.f32 %v5944, %v5944
    %v6229 = vmul.f32 %v5945, %v5945
    %v6230 = vmul.f32 %v5946, %v5946
    %v6231 = vmul.f32 %v5947, %v5947
    %v6232 = vsub.f32 %v6224, %v6228
    %v6233 = vsub.f32 %v6225, %v6229
    %v6234 = vsub.f32 %v6226, %v6230
    %v6235 = vsub.f32 %v6227, %v6231
    %v6236 = vmax.f32 %v6232, 0.0
    %v6237 = vmax.f32 %v6233, 0.0
    %v6238 = vmax.f32 %v6234, 0.0
    %v6239 = vmax.f32 %v6235, 0.0
    %v6240 = vadd.f32 %v6236, 1e-05
    %v6241 = vadd.f32 %v6237, 1e-05
    %v6242 = vadd.f32 %v6238, 1e-05
    %v6243 = vadd.f32 %v6239, 1e-05
    %v6244 = vrsqrt.pop %v6240
    %v6245 = vmul.f32 %v6244, %v6240
    %v6246 = vmul.f32 %v6245, %v6244
    %v6247 = vmul.f32 0.5, %v6246
    %v6248 = vsub.f32 1.5, %v6247
    %v6249 = vmul.f32 %v6244, %v6248
    %vm6250 = vweird.f32 %v6240
    %vm6251 = vweird.f32 %v6244
    %vm6252 = vmor %vm6250, %vm6251
    %v6253 = vsel %vm6252, %v6244, %v6249
    %v6254 = vrsqrt.pop %v6241
    %v6255 = vmul.f32 %v6254, %v6241
    %v6256 = vmul.f32 %v6255, %v6254
    %v6257 = vmul.f32 0.5, %v6256
    %v6258 = vsub.f32 1.5, %v6257
    %v6259 = vmul.f32 %v6254, %v6258
    %vm6260 = vweird.f32 %v6241
    %vm6261 = vweird.f32 %v6254
    %vm6262 = vmor %vm6260, %vm6261
    %v6263 = vsel %vm6262, %v6254, %v6259
    %v6264 = vrsqrt.pop %v6242
    %v6265 = vmul.f32 %v6264, %v6242
    %v6266 = vmul.f32 %v6265, %v6264
    %v6267 = vmul.f32 0.5, %v6266
    %v6268 = vsub.f32 1.5, %v6267
    %v6269 = vmul.f32 %v6264, %v6268
    %vm6270 = vweird.f32 %v6242
    %vm6271 = vweird.f32 %v6264
    %vm6272 = vmor %vm6270, %vm6271
    %v6273 = vsel %vm6272, %v6264, %v6269
    %v6274 = vrsqrt.pop %v6243
    %v6275 = vmul.f32 %v6274, %v6243
    %v6276 = vmul.f32 %v6275, %v6274
    %v6277 = vmul.f32 0.5, %v6276
    %v6278 = vsub.f32 1.5, %v6277
    %v6279 = vmul.f32 %v6274, %v6278
    %vm6280 = vweird.f32 %v6243
    %vm6281 = vweird.f32 %v6274
    %vm6282 = vmor %vm6280, %vm6281
    %v6283 = vsel %vm6282, %v6274, %v6279
    %v6284 = vmul.f32 %v6240, 0.5
    %v6285 = vmul.f32 %v6241, 0.5
    %v6286 = vmul.f32 %v6242, 0.5
    %v6287 = vmul.f32 %v6243, 0.5
    %v6288 = vmul.f32 %v6284, %v6253
    %v6289 = vmul.f32 %v6285, %v6263
    %v6290 = vmul.f32 %v6286, %v6273
    %v6291 = vmul.f32 %v6287, %v6283
    %v6292 = vmul.f32 %v6288, %v6253
    %v6293 = vmul.f32 %v6289, %v6263
    %v6294 = vmul.f32 %v6290, %v6273
    %v6295 = vmul.f32 %v6291, %v6283
    %v6296 = vsub.f32 1.5, %v6292
    %v6297 = vsub.f32 1.5, %v6293
    %v6298 = vsub.f32 1.5, %v6294
    %v6299 = vsub.f32 1.5, %v6295
    %v6300 = vmul.f32 %v6253, %v6296
    %v6301 = vmul.f32 %v6263, %v6297
    %v6302 = vmul.f32 %v6273, %v6298
    %v6303 = vmul.f32 %v6283, %v6299
    %v6308 = vrot.slane %v6301, 7
    %v6309 = vrot.slane %v6302, 6
    %v6310 = vrot.slane %v6303, 5
    %v6311 = vsel %vm3110, %v6300, %v6308
    %v6312 = vsel %vm3112, %v6309, %v6310
    %v6313 = vsel %vm3114, %v6311, %v6312
    %v6315 = vmul.f32 %v325, %v6313
    %v6317 = vperm.slane %v6315, 0
    %v6318 = vperm.slane %v6315, 1
    %v6319 = vperm.slane %v6315, 2
    %v6320 = vperm.slane %v6315, 3
    %v6325 = vmul.f32 %v5944, %v6317
    %v6326 = vmul.f32 %v5945, %v6318
    %v6327 = vmul.f32 %v5946, %v6319
    %v6328 = vmul.f32 %v5947, %v6320
    %v6333 = vrot.slane %v6326, 7
    %v6334 = vrot.slane %v6327, 6
    %v6335 = vrot.slane %v6328, 5
    %v6336 = vsel %vm3110, %v6325, %v6333
    %v6337 = vsel %vm3112, %v6334, %v6335
    %v6338 = vsel %vm3114, %v6336, %v6337
    %v6340 = vsub.f32 %v327, %v6338
    %v6341 = vmul.f32 %v4649, %v6317
    %v6342 = vmul.f32 %v5005, %v6318
    %v6343 = vmul.f32 %v5361, %v6319
    %v6344 = vmul.f32 %v5717, %v6320
    %v6345 = vmul.f32 %v4651, %v6317
    %v6346 = vmul.f32 %v5007, %v6318
    %v6347 = vmul.f32 %v5363, %v6319
    %v6348 = vmul.f32 %v5719, %v6320
    %v6349 = vmul.f32 %v4654, %v6317
    %v6350 = vmul.f32 %v5010, %v6318
    %v6351 = vmul.f32 %v5366, %v6319
    %v6352 = vmul.f32 %v5722, %v6320
    %v6353 = vmul.f32 %v4656, %v6317
    %v6354 = vmul.f32 %v5012, %v6318
    %v6355 = vmul.f32 %v5368, %v6319
    %v6356 = vmul.f32 %v5724, %v6320
    %v6357 = vmul.f32 %v4659, %v6317
    %v6358 = vmul.f32 %v5015, %v6318
    %v6359 = vmul.f32 %v5371, %v6319
    %v6360 = vmul.f32 %v5727, %v6320
    %v6361 = vmul.f32 %v4661, %v6317
    %v6362 = vmul.f32 %v5017, %v6318
    %v6363 = vmul.f32 %v5373, %v6319
    %v6364 = vmul.f32 %v5729, %v6320
    %v6365 = vmul.f32 %v4664, %v6317
    %v6366 = vmul.f32 %v5020, %v6318
    %v6367 = vmul.f32 %v5376, %v6319
    %v6368 = vmul.f32 %v5732, %v6320
    %v6369 = vmul.f32 %v4666, %v6317
    %v6370 = vmul.f32 %v5022, %v6318
    %v6371 = vmul.f32 %v5378, %v6319
    %v6372 = vmul.f32 %v5734, %v6320
    %v6373 = vmul.f32 %v4669, %v6317
    %v6374 = vmul.f32 %v5025, %v6318
    %v6375 = vmul.f32 %v5381, %v6319
    %v6376 = vmul.f32 %v5737, %v6320
    %v6377 = vmul.f32 %v4671, %v6317
    %v6378 = vmul.f32 %v5027, %v6318
    %v6379 = vmul.f32 %v5383, %v6319
    %v6380 = vmul.f32 %v5739, %v6320
    %v6381 = vmul.f32 %v4674, %v6317
    %v6382 = vmul.f32 %v5030, %v6318
    %v6383 = vmul.f32 %v5386, %v6319
    %v6384 = vmul.f32 %v5742, %v6320
    %v6385 = vmul.f32 %v4676, %v6317
    %v6386 = vmul.f32 %v5032, %v6318
    %v6387 = vmul.f32 %v5388, %v6319
    %v6388 = vmul.f32 %v5744, %v6320
    %v6389 = vmul.f32 %v4679, %v6317
    %v6390 = vmul.f32 %v5035, %v6318
    %v6391 = vmul.f32 %v5391, %v6319
    %v6392 = vmul.f32 %v5747, %v6320
    %v6393 = vmul.f32 %v4681, %v6317
    %v6394 = vmul.f32 %v5037, %v6318
    %v6395 = vmul.f32 %v5393, %v6319
    %v6396 = vmul.f32 %v5749, %v6320
    %v6397 = vmul.f32 %v4684, %v6317
    %v6398 = vmul.f32 %v5040, %v6318
    %v6399 = vmul.f32 %v5396, %v6319
    %v6400 = vmul.f32 %v5752, %v6320
    %v6401 = vmul.f32 %v4686, %v6317
    %v6402 = vmul.f32 %v5042, %v6318
    %v6403 = vmul.f32 %v5398, %v6319
    %v6404 = vmul.f32 %v5754, %v6320
    %v6405 = vmul.f32 %v4689, %v6317
    %v6406 = vmul.f32 %v5045, %v6318
    %v6407 = vmul.f32 %v5401, %v6319
    %v6408 = vmul.f32 %v5757, %v6320
    %v6409 = vmul.f32 %v4691, %v6317
    %v6410 = vmul.f32 %v5047, %v6318
    %v6411 = vmul.f32 %v5403, %v6319
    %v6412 = vmul.f32 %v5759, %v6320
    %v6413 = vmul.f32 %v4694, %v6317
    %v6414 = vmul.f32 %v5050, %v6318
    %v6415 = vmul.f32 %v5406, %v6319
    %v6416 = vmul.f32 %v5762, %v6320
    %v6417 = vmul.f32 %v4696, %v6317
    %v6418 = vmul.f32 %v5052, %v6318
    %v6419 = vmul.f32 %v5408, %v6319
    %v6420 = vmul.f32 %v5764, %v6320
    %v6421 = vmul.f32 %v4699, %v6317
    %v6422 = vmul.f32 %v5055, %v6318
    %v6423 = vmul.f32 %v5411, %v6319
    %v6424 = vmul.f32 %v5767, %v6320
    %v6425 = vmul.f32 %v4701, %v6317
    %v6426 = vmul.f32 %v5057, %v6318
    %v6427 = vmul.f32 %v5413, %v6319
    %v6428 = vmul.f32 %v5769, %v6320
    %v6429 = vmul.f32 %v4704, %v6317
    %v6430 = vmul.f32 %v5060, %v6318
    %v6431 = vmul.f32 %v5416, %v6319
    %v6432 = vmul.f32 %v5772, %v6320
    %v6433 = vmul.f32 %v4706, %v6317
    %v6434 = vmul.f32 %v5062, %v6318
    %v6435 = vmul.f32 %v5418, %v6319
    %v6436 = vmul.f32 %v5774, %v6320
    %v6437 = vmul.f32 %v4709, %v6317
    %v6438 = vmul.f32 %v5065, %v6318
    %v6439 = vmul.f32 %v5421, %v6319
    %v6440 = vmul.f32 %v5777, %v6320
    %v6441 = vmul.f32 %v4711, %v6317
    %v6442 = vmul.f32 %v5067, %v6318
    %v6443 = vmul.f32 %v5423, %v6319
    %v6444 = vmul.f32 %v5779, %v6320
    %v6445 = vmul.f32 %v4714, %v6317
    %v6446 = vmul.f32 %v5070, %v6318
    %v6447 = vmul.f32 %v5426, %v6319
    %v6448 = vmul.f32 %v5782, %v6320
    %v6449 = vmul.f32 %v4716, %v6317
    %v6450 = vmul.f32 %v5072, %v6318
    %v6451 = vmul.f32 %v5428, %v6319
    %v6452 = vmul.f32 %v5784, %v6320
    %v6453 = vmul.f32 %v4719, %v6317
    %v6454 = vmul.f32 %v5075, %v6318
    %v6455 = vmul.f32 %v5431, %v6319
    %v6456 = vmul.f32 %v5787, %v6320
    %v6457 = vmul.f32 %v4721, %v6317
    %v6458 = vmul.f32 %v5077, %v6318
    %v6459 = vmul.f32 %v5433, %v6319
    %v6460 = vmul.f32 %v5789, %v6320
    %v6461 = vmul.f32 %v4724, %v6317
    %v6462 = vmul.f32 %v5080, %v6318
    %v6463 = vmul.f32 %v5436, %v6319
    %v6464 = vmul.f32 %v5792, %v6320
    %v6465 = vmul.f32 %v4726, %v6317
    %v6466 = vmul.f32 %v5082, %v6318
    %v6467 = vmul.f32 %v5438, %v6319
    %v6468 = vmul.f32 %v5794, %v6320
    %v6470 = vperm.slane %v6340, 0
    %v6471 = vperm.slane %v6340, 1
    %v6472 = vperm.slane %v6340, 2
    %v6473 = vperm.slane %v6340, 3
    %v6478 = vadd.f32 %v6341, %v6470
    %v6479 = vadd.f32 %v6342, %v6471
    %v6480 = vadd.f32 %v6343, %v6472
    %v6481 = vadd.f32 %v6344, %v6473
    %v6482 = vadd.f32 %v6345, %v6470
    %v6483 = vadd.f32 %v6346, %v6471
    %v6484 = vadd.f32 %v6347, %v6472
    %v6485 = vadd.f32 %v6348, %v6473
    %v6486 = vadd.f32 %v6349, %v6470
    %v6487 = vadd.f32 %v6350, %v6471
    %v6488 = vadd.f32 %v6351, %v6472
    %v6489 = vadd.f32 %v6352, %v6473
    %v6490 = vadd.f32 %v6353, %v6470
    %v6491 = vadd.f32 %v6354, %v6471
    %v6492 = vadd.f32 %v6355, %v6472
    %v6493 = vadd.f32 %v6356, %v6473
    %v6494 = vadd.f32 %v6357, %v6470
    %v6495 = vadd.f32 %v6358, %v6471
    %v6496 = vadd.f32 %v6359, %v6472
    %v6497 = vadd.f32 %v6360, %v6473
    %v6498 = vadd.f32 %v6361, %v6470
    %v6499 = vadd.f32 %v6362, %v6471
    %v6500 = vadd.f32 %v6363, %v6472
    %v6501 = vadd.f32 %v6364, %v6473
    %v6502 = vadd.f32 %v6365, %v6470
    %v6503 = vadd.f32 %v6366, %v6471
    %v6504 = vadd.f32 %v6367, %v6472
    %v6505 = vadd.f32 %v6368, %v6473
    %v6506 = vadd.f32 %v6369, %v6470
    %v6507 = vadd.f32 %v6370, %v6471
    %v6508 = vadd.f32 %v6371, %v6472
    %v6509 = vadd.f32 %v6372, %v6473
    %v6510 = vadd.f32 %v6373, %v6470
    %v6511 = vadd.f32 %v6374, %v6471
    %v6512 = vadd.f32 %v6375, %v6472
    %v6513 = vadd.f32 %v6376, %v6473
    %v6514 = vadd.f32 %v6377, %v6470
    %v6515 = vadd.f32 %v6378, %v6471
    %v6516 = vadd.f32 %v6379, %v6472
    %v6517 = vadd.f32 %v6380, %v6473
    %v6518 = vadd.f32 %v6381, %v6470
    %v6519 = vadd.f32 %v6382, %v6471
    %v6520 = vadd.f32 %v6383, %v6472
    %v6521 = vadd.f32 %v6384, %v6473
    %v6522 = vadd.f32 %v6385, %v6470
    %v6523 = vadd.f32 %v6386, %v6471
    %v6524 = vadd.f32 %v6387, %v6472
    %v6525 = vadd.f32 %v6388, %v6473
    %v6526 = vadd.f32 %v6389, %v6470
    %v6527 = vadd.f32 %v6390, %v6471
    %v6528 = vadd.f32 %v6391, %v6472
    %v6529 = vadd.f32 %v6392, %v6473
    %v6530 = vadd.f32 %v6393, %v6470
    %v6531 = vadd.f32 %v6394, %v6471
    %v6532 = vadd.f32 %v6395, %v6472
    %v6533 = vadd.f32 %v6396, %v6473
    %v6534 = vadd.f32 %v6397, %v6470
    %v6535 = vadd.f32 %v6398, %v6471
    %v6536 = vadd.f32 %v6399, %v6472
    %v6537 = vadd.f32 %v6400, %v6473
    %v6538 = vadd.f32 %v6401, %v6470
    %v6539 = vadd.f32 %v6402, %v6471
    %v6540 = vadd.f32 %v6403, %v6472
    %v6541 = vadd.f32 %v6404, %v6473
    %v6542 = vadd.f32 %v6405, %v6470
    %v6543 = vadd.f32 %v6406, %v6471
    %v6544 = vadd.f32 %v6407, %v6472
    %v6545 = vadd.f32 %v6408, %v6473
    %v6546 = vadd.f32 %v6409, %v6470
    %v6547 = vadd.f32 %v6410, %v6471
    %v6548 = vadd.f32 %v6411, %v6472
    %v6549 = vadd.f32 %v6412, %v6473
    %v6550 = vadd.f32 %v6413, %v6470
    %v6551 = vadd.f32 %v6414, %v6471
    %v6552 = vadd.f32 %v6415, %v6472
    %v6553 = vadd.f32 %v6416, %v6473
    %v6554 = vadd.f32 %v6417, %v6470
    %v6555 = vadd.f32 %v6418, %v6471
    %v6556 = vadd.f32 %v6419, %v6472
    %v6557 = vadd.f32 %v6420, %v6473
    %v6558 = vadd.f32 %v6421, %v6470
    %v6559 = vadd.f32 %v6422, %v6471
    %v6560 = vadd.f32 %v6423, %v6472
    %v6561 = vadd.f32 %v6424, %v6473
    %v6562 = vadd.f32 %v6425, %v6470
    %v6563 = vadd.f32 %v6426, %v6471
    %v6564 = vadd.f32 %v6427, %v6472
    %v6565 = vadd.f32 %v6428, %v6473
    %v6566 = vadd.f32 %v6429, %v6470
    %v6567 = vadd.f32 %v6430, %v6471
    %v6568 = vadd.f32 %v6431, %v6472
    %v6569 = vadd.f32 %v6432, %v6473
    %v6570 = vadd.f32 %v6433, %v6470
    %v6571 = vadd.f32 %v6434, %v6471
    %v6572 = vadd.f32 %v6435, %v6472
    %v6573 = vadd.f32 %v6436, %v6473
    %v6574 = vadd.f32 %v6437, %v6470
    %v6575 = vadd.f32 %v6438, %v6471
    %v6576 = vadd.f32 %v6439, %v6472
    %v6577 = vadd.f32 %v6440, %v6473
    %v6578 = vadd.f32 %v6441, %v6470
    %v6579 = vadd.f32 %v6442, %v6471
    %v6580 = vadd.f32 %v6443, %v6472
    %v6581 = vadd.f32 %v6444, %v6473
    %v6582 = vadd.f32 %v6445, %v6470
    %v6583 = vadd.f32 %v6446, %v6471
    %v6584 = vadd.f32 %v6447, %v6472
    %v6585 = vadd.f32 %v6448, %v6473
    %v6586 = vadd.f32 %v6449, %v6470
    %v6587 = vadd.f32 %v6450, %v6471
    %v6588 = vadd.f32 %v6451, %v6472
    %v6589 = vadd.f32 %v6452, %v6473
    %v6590 = vadd.f32 %v6453, %v6470
    %v6591 = vadd.f32 %v6454, %v6471
    %v6592 = vadd.f32 %v6455, %v6472
    %v6593 = vadd.f32 %v6456, %v6473
    %v6594 = vadd.f32 %v6457, %v6470
    %v6595 = vadd.f32 %v6458, %v6471
    %v6596 = vadd.f32 %v6459, %v6472
    %v6597 = vadd.f32 %v6460, %v6473
    %v6598 = vadd.f32 %v6461, %v6470
    %v6599 = vadd.f32 %v6462, %v6471
    %v6600 = vadd.f32 %v6463, %v6472
    %v6601 = vadd.f32 %v6464, %v6473
    %v6602 = vadd.f32 %v6465, %v6470
    %v6603 = vadd.f32 %v6466, %v6471
    %v6604 = vadd.f32 %v6467, %v6472
    %v6605 = vadd.f32 %v6468, %v6473
    %v6606 = vmax.f32 %v6478, 0.0
    %v6607 = vmax.f32 %v6479, 0.0
    %v6608 = vmax.f32 %v6480, 0.0
    %v6609 = vmax.f32 %v6481, 0.0
    %v6610 = vmax.f32 %v6482, 0.0
    %v6611 = vmax.f32 %v6483, 0.0
    %v6612 = vmax.f32 %v6484, 0.0
    %v6613 = vmax.f32 %v6485, 0.0
    %v6614 = vmax.f32 %v6486, 0.0
    %v6615 = vmax.f32 %v6487, 0.0
    %v6616 = vmax.f32 %v6488, 0.0
    %v6617 = vmax.f32 %v6489, 0.0
    %v6618 = vmax.f32 %v6490, 0.0
    %v6619 = vmax.f32 %v6491, 0.0
    %v6620 = vmax.f32 %v6492, 0.0
    %v6621 = vmax.f32 %v6493, 0.0
    %v6622 = vmax.f32 %v6494, 0.0
    %v6623 = vmax.f32 %v6495, 0.0
    %v6624 = vmax.f32 %v6496, 0.0
    %v6625 = vmax.f32 %v6497, 0.0
    %v6626 = vmax.f32 %v6498, 0.0
    %v6627 = vmax.f32 %v6499, 0.0
    %v6628 = vmax.f32 %v6500, 0.0
    %v6629 = vmax.f32 %v6501, 0.0
    %v6630 = vmax.f32 %v6502, 0.0
    %v6631 = vmax.f32 %v6503, 0.0
    %v6632 = vmax.f32 %v6504, 0.0
    %v6633 = vmax.f32 %v6505, 0.0
    %v6634 = vmax.f32 %v6506, 0.0
    %v6635 = vmax.f32 %v6507, 0.0
    %v6636 = vmax.f32 %v6508, 0.0
    %v6637 = vmax.f32 %v6509, 0.0
    %v6638 = vmax.f32 %v6510, 0.0
    %v6639 = vmax.f32 %v6511, 0.0
    %v6640 = vmax.f32 %v6512, 0.0
    %v6641 = vmax.f32 %v6513, 0.0
    %v6642 = vmax.f32 %v6514, 0.0
    %v6643 = vmax.f32 %v6515, 0.0
    %v6644 = vmax.f32 %v6516, 0.0
    %v6645 = vmax.f32 %v6517, 0.0
    %v6646 = vmax.f32 %v6518, 0.0
    %v6647 = vmax.f32 %v6519, 0.0
    %v6648 = vmax.f32 %v6520, 0.0
    %v6649 = vmax.f32 %v6521, 0.0
    %v6650 = vmax.f32 %v6522, 0.0
    %v6651 = vmax.f32 %v6523, 0.0
    %v6652 = vmax.f32 %v6524, 0.0
    %v6653 = vmax.f32 %v6525, 0.0
    %v6654 = vmax.f32 %v6526, 0.0
    %v6655 = vmax.f32 %v6527, 0.0
    %v6656 = vmax.f32 %v6528, 0.0
    %v6657 = vmax.f32 %v6529, 0.0
    %v6658 = vmax.f32 %v6530, 0.0
    %v6659 = vmax.f32 %v6531, 0.0
    %v6660 = vmax.f32 %v6532, 0.0
    %v6661 = vmax.f32 %v6533, 0.0
    %v6662 = vmax.f32 %v6534, 0.0
    %v6663 = vmax.f32 %v6535, 0.0
    %v6664 = vmax.f32 %v6536, 0.0
    %v6665 = vmax.f32 %v6537, 0.0
    %v6666 = vmax.f32 %v6538, 0.0
    %v6667 = vmax.f32 %v6539, 0.0
    %v6668 = vmax.f32 %v6540, 0.0
    %v6669 = vmax.f32 %v6541, 0.0
    %v6670 = vmax.f32 %v6542, 0.0
    %v6671 = vmax.f32 %v6543, 0.0
    %v6672 = vmax.f32 %v6544, 0.0
    %v6673 = vmax.f32 %v6545, 0.0
    %v6674 = vmax.f32 %v6546, 0.0
    %v6675 = vmax.f32 %v6547, 0.0
    %v6676 = vmax.f32 %v6548, 0.0
    %v6677 = vmax.f32 %v6549, 0.0
    %v6678 = vmax.f32 %v6550, 0.0
    %v6679 = vmax.f32 %v6551, 0.0
    %v6680 = vmax.f32 %v6552, 0.0
    %v6681 = vmax.f32 %v6553, 0.0
    %v6682 = vmax.f32 %v6554, 0.0
    %v6683 = vmax.f32 %v6555, 0.0
    %v6684 = vmax.f32 %v6556, 0.0
    %v6685 = vmax.f32 %v6557, 0.0
    %v6686 = vmax.f32 %v6558, 0.0
    %v6687 = vmax.f32 %v6559, 0.0
    %v6688 = vmax.f32 %v6560, 0.0
    %v6689 = vmax.f32 %v6561, 0.0
    %v6690 = vmax.f32 %v6562, 0.0
    %v6691 = vmax.f32 %v6563, 0.0
    %v6692 = vmax.f32 %v6564, 0.0
    %v6693 = vmax.f32 %v6565, 0.0
    %v6694 = vmax.f32 %v6566, 0.0
    %v6695 = vmax.f32 %v6567, 0.0
    %v6696 = vmax.f32 %v6568, 0.0
    %v6697 = vmax.f32 %v6569, 0.0
    %v6698 = vmax.f32 %v6570, 0.0
    %v6699 = vmax.f32 %v6571, 0.0
    %v6700 = vmax.f32 %v6572, 0.0
    %v6701 = vmax.f32 %v6573, 0.0
    %v6702 = vmax.f32 %v6574, 0.0
    %v6703 = vmax.f32 %v6575, 0.0
    %v6704 = vmax.f32 %v6576, 0.0
    %v6705 = vmax.f32 %v6577, 0.0
    %v6706 = vmax.f32 %v6578, 0.0
    %v6707 = vmax.f32 %v6579, 0.0
    %v6708 = vmax.f32 %v6580, 0.0
    %v6709 = vmax.f32 %v6581, 0.0
    %v6710 = vmax.f32 %v6582, 0.0
    %v6711 = vmax.f32 %v6583, 0.0
    %v6712 = vmax.f32 %v6584, 0.0
    %v6713 = vmax.f32 %v6585, 0.0
    %v6714 = vmax.f32 %v6586, 0.0
    %v6715 = vmax.f32 %v6587, 0.0
    %v6716 = vmax.f32 %v6588, 0.0
    %v6717 = vmax.f32 %v6589, 0.0
    %v6718 = vmax.f32 %v6590, 0.0
    %v6719 = vmax.f32 %v6591, 0.0
    %v6720 = vmax.f32 %v6592, 0.0
    %v6721 = vmax.f32 %v6593, 0.0
    %v6722 = vmax.f32 %v6594, 0.0
    %v6723 = vmax.f32 %v6595, 0.0
    %v6724 = vmax.f32 %v6596, 0.0
    %v6725 = vmax.f32 %v6597, 0.0
    %v6726 = vmax.f32 %v6598, 0.0
    %v6727 = vmax.f32 %v6599, 0.0
    %v6728 = vmax.f32 %v6600, 0.0
    %v6729 = vmax.f32 %v6601, 0.0
    %v6730 = vmax.f32 %v6602, 0.0
    %v6731 = vmax.f32 %v6603, 0.0
    %v6732 = vmax.f32 %v6604, 0.0
    %v6733 = vmax.f32 %v6605, 0.0
    %s6734 = sshll.u32 %s3537, 4
    %6735 = dma.done %s307, %s6734
    %v6736 = vpack.c.bf16 %v6610, %v6606
    %v6737 = vpack.c.bf16 %v6611, %v6607
    %v6738 = vpack.c.bf16 %v6612, %v6608
    %v6739 = vpack.c.bf16 %v6613, %v6609
    %v6740 = vpack.c.bf16 %v6618, %v6614
    %v6741 = vpack.c.bf16 %v6619, %v6615
    %v6742 = vpack.c.bf16 %v6620, %v6616
    %v6743 = vpack.c.bf16 %v6621, %v6617
    %v6744 = vpack.c.bf16 %v6626, %v6622
    %v6745 = vpack.c.bf16 %v6627, %v6623
    %v6746 = vpack.c.bf16 %v6628, %v6624
    %v6747 = vpack.c.bf16 %v6629, %v6625
    %v6748 = vpack.c.bf16 %v6634, %v6630
    %v6749 = vpack.c.bf16 %v6635, %v6631
    %v6750 = vpack.c.bf16 %v6636, %v6632
    %v6751 = vpack.c.bf16 %v6637, %v6633
    %v6752 = vpack.c.bf16 %v6642, %v6638
    %v6753 = vpack.c.bf16 %v6643, %v6639
    %v6754 = vpack.c.bf16 %v6644, %v6640
    %v6755 = vpack.c.bf16 %v6645, %v6641
    %v6756 = vpack.c.bf16 %v6650, %v6646
    %v6757 = vpack.c.bf16 %v6651, %v6647
    %v6758 = vpack.c.bf16 %v6652, %v6648
    %v6759 = vpack.c.bf16 %v6653, %v6649
    %v6760 = vpack.c.bf16 %v6658, %v6654
    %v6761 = vpack.c.bf16 %v6659, %v6655
    %v6762 = vpack.c.bf16 %v6660, %v6656
    %v6763 = vpack.c.bf16 %v6661, %v6657
    %v6764 = vpack.c.bf16 %v6666, %v6662
    %v6765 = vpack.c.bf16 %v6667, %v6663
    %v6766 = vpack.c.bf16 %v6668, %v6664
    %v6767 = vpack.c.bf16 %v6669, %v6665
    %v6768 = vpack.c.bf16 %v6674, %v6670
    %v6769 = vpack.c.bf16 %v6675, %v6671
    %v6770 = vpack.c.bf16 %v6676, %v6672
    %v6771 = vpack.c.bf16 %v6677, %v6673
    %v6772 = vpack.c.bf16 %v6682, %v6678
    %v6773 = vpack.c.bf16 %v6683, %v6679
    %v6774 = vpack.c.bf16 %v6684, %v6680
    %v6775 = vpack.c.bf16 %v6685, %v6681
    %v6776 = vpack.c.bf16 %v6690, %v6686
    %v6777 = vpack.c.bf16 %v6691, %v6687
    %v6778 = vpack.c.bf16 %v6692, %v6688
    %v6779 = vpack.c.bf16 %v6693, %v6689
    %v6780 = vpack.c.bf16 %v6698, %v6694
    %v6781 = vpack.c.bf16 %v6699, %v6695
    %v6782 = vpack.c.bf16 %v6700, %v6696
    %v6783 = vpack.c.bf16 %v6701, %v6697
    %v6784 = vpack.c.bf16 %v6706, %v6702
    %v6785 = vpack.c.bf16 %v6707, %v6703
    %v6786 = vpack.c.bf16 %v6708, %v6704
    %v6787 = vpack.c.bf16 %v6709, %v6705
    %v6788 = vpack.c.bf16 %v6714, %v6710
    %v6789 = vpack.c.bf16 %v6715, %v6711
    %v6790 = vpack.c.bf16 %v6716, %v6712
    %v6791 = vpack.c.bf16 %v6717, %v6713
    %v6792 = vpack.c.bf16 %v6722, %v6718
    %v6793 = vpack.c.bf16 %v6723, %v6719
    %v6794 = vpack.c.bf16 %v6724, %v6720
    %v6795 = vpack.c.bf16 %v6725, %v6721
    %v6796 = vpack.c.bf16 %v6730, %v6726
    %v6797 = vpack.c.bf16 %v6731, %v6727
    %v6798 = vpack.c.bf16 %v6732, %v6728
    %v6799 = vpack.c.bf16 %v6733, %v6729
    %v6800 = vld [vmem:[#allocation3] sm:$0xff]
    %v6801 = vld [vmem:[#allocation3 + $0x8] sm:$0xff]
    %v6802 = vld [vmem:[#allocation3 + $0x10] sm:$0xff]
    %v6803 = vld [vmem:[#allocation3 + $0x18] sm:$0xff]
    %v6804 = vld [vmem:[#allocation3 + $0x20] sm:$0xff]
    %v6805 = vld [vmem:[#allocation3 + $0x28] sm:$0xff]
    %v6806 = vld [vmem:[#allocation3 + $0x30] sm:$0xff]
    %v6807 = vld [vmem:[#allocation3 + $0x38] sm:$0xff]
    %v6808 = vld [vmem:[#allocation3 + $0x40] sm:$0xff]
    %v6809 = vld [vmem:[#allocation3 + $0x48] sm:$0xff]
    %v6810 = vld [vmem:[#allocation3 + $0x50] sm:$0xff]
    %v6811 = vld [vmem:[#allocation3 + $0x58] sm:$0xff]
    %v6812 = vld [vmem:[#allocation3 + $0x60] sm:$0xff]
    %v6813 = vld [vmem:[#allocation3 + $0x68] sm:$0xff]
    %v6814 = vld [vmem:[#allocation3 + $0x70] sm:$0xff]
    %v6815 = vld [vmem:[#allocation3 + $0x78] sm:$0xff]
    %v6816 = vld [vmem:[#allocation3 + $0x80] sm:$0xff]
    %v6817 = vld [vmem:[#allocation3 + $0x88] sm:$0xff]
    %v6818 = vld [vmem:[#allocation3 + $0x90] sm:$0xff]
    %v6819 = vld [vmem:[#allocation3 + $0x98] sm:$0xff]
    %v6820 = vld [vmem:[#allocation3 + $0xa0] sm:$0xff]
    %v6821 = vld [vmem:[#allocation3 + $0xa8] sm:$0xff]
    %v6822 = vld [vmem:[#allocation3 + $0xb0] sm:$0xff]
    %v6823 = vld [vmem:[#allocation3 + $0xb8] sm:$0xff]
    %v6824 = vld [vmem:[#allocation3 + $0xc0] sm:$0xff]
    %v6825 = vld [vmem:[#allocation3 + $0xc8] sm:$0xff]
    %v6826 = vld [vmem:[#allocation3 + $0xd0] sm:$0xff]
    %v6827 = vld [vmem:[#allocation3 + $0xd8] sm:$0xff]
    %v6828 = vld [vmem:[#allocation3 + $0xe0] sm:$0xff]
    %v6829 = vld [vmem:[#allocation3 + $0xe8] sm:$0xff]
    %v6830 = vld [vmem:[#allocation3 + $0xf0] sm:$0xff]
    %v6831 = vld [vmem:[#allocation3 + $0xf8] sm:$0xff]
    %v6832 = vld [vmem:[#allocation3 + $0x100] sm:$0xff]
    %v6833 = vld [vmem:[#allocation3 + $0x108] sm:$0xff]
    %v6834 = vld [vmem:[#allocation3 + $0x110] sm:$0xff]
    %v6835 = vld [vmem:[#allocation3 + $0x118] sm:$0xff]
    %v6836 = vld [vmem:[#allocation3 + $0x120] sm:$0xff]
    %v6837 = vld [vmem:[#allocation3 + $0x128] sm:$0xff]
    %v6838 = vld [vmem:[#allocation3 + $0x130] sm:$0xff]
    %v6839 = vld [vmem:[#allocation3 + $0x138] sm:$0xff]
    %v6840 = vld [vmem:[#allocation3 + $0x140] sm:$0xff]
    %v6841 = vld [vmem:[#allocation3 + $0x148] sm:$0xff]
    %v6842 = vld [vmem:[#allocation3 + $0x150] sm:$0xff]
    %v6843 = vld [vmem:[#allocation3 + $0x158] sm:$0xff]
    %v6844 = vld [vmem:[#allocation3 + $0x160] sm:$0xff]
    %v6845 = vld [vmem:[#allocation3 + $0x168] sm:$0xff]
    %v6846 = vld [vmem:[#allocation3 + $0x170] sm:$0xff]
    %v6847 = vld [vmem:[#allocation3 + $0x178] sm:$0xff]
    %v6848 = vld [vmem:[#allocation3 + $0x180] sm:$0xff]
    %v6849 = vld [vmem:[#allocation3 + $0x188] sm:$0xff]
    %v6850 = vld [vmem:[#allocation3 + $0x190] sm:$0xff]
    %v6851 = vld [vmem:[#allocation3 + $0x198] sm:$0xff]
    %v6852 = vld [vmem:[#allocation3 + $0x1a0] sm:$0xff]
    %v6853 = vld [vmem:[#allocation3 + $0x1a8] sm:$0xff]
    %v6854 = vld [vmem:[#allocation3 + $0x1b0] sm:$0xff]
    %v6855 = vld [vmem:[#allocation3 + $0x1b8] sm:$0xff]
    %v6856 = vld [vmem:[#allocation3 + $0x1c0] sm:$0xff]
    %v6857 = vld [vmem:[#allocation3 + $0x1c8] sm:$0xff]
    %v6858 = vld [vmem:[#allocation3 + $0x1d0] sm:$0xff]
    %v6859 = vld [vmem:[#allocation3 + $0x1d8] sm:$0xff]
    %v6860 = vld [vmem:[#allocation3 + $0x1e0] sm:$0xff]
    %v6861 = vld [vmem:[#allocation3 + $0x1e8] sm:$0xff]
    %v6862 = vld [vmem:[#allocation3 + $0x1f0] sm:$0xff]
    %v6863 = vld [vmem:[#allocation3 + $0x1f8] sm:$0xff]
    %v6864 = vld [vmem:[#allocation3 + $0x200] sm:$0xff]
    %v6865 = vld [vmem:[#allocation3 + $0x208] sm:$0xff]
    %v6866 = vld [vmem:[#allocation3 + $0x210] sm:$0xff]
    %v6867 = vld [vmem:[#allocation3 + $0x218] sm:$0xff]
    %v6868 = vld [vmem:[#allocation3 + $0x220] sm:$0xff]
    %v6869 = vld [vmem:[#allocation3 + $0x228] sm:$0xff]
    %v6870 = vld [vmem:[#allocation3 + $0x230] sm:$0xff]
    %v6871 = vld [vmem:[#allocation3 + $0x238] sm:$0xff]
    %v6872 = vld [vmem:[#allocation3 + $0x240] sm:$0xff]
    %v6873 = vld [vmem:[#allocation3 + $0x248] sm:$0xff]
    %v6874 = vld [vmem:[#allocation3 + $0x250] sm:$0xff]
    %v6875 = vld [vmem:[#allocation3 + $0x258] sm:$0xff]
    %v6876 = vld [vmem:[#allocation3 + $0x260] sm:$0xff]
    %v6877 = vld [vmem:[#allocation3 + $0x268] sm:$0xff]
    %v6878 = vld [vmem:[#allocation3 + $0x270] sm:$0xff]
    %v6879 = vld [vmem:[#allocation3 + $0x278] sm:$0xff]
    %v6880 = vld [vmem:[#allocation3 + $0x280] sm:$0xff]
    %v6881 = vld [vmem:[#allocation3 + $0x288] sm:$0xff]
    %v6882 = vld [vmem:[#allocation3 + $0x290] sm:$0xff]
    %v6883 = vld [vmem:[#allocation3 + $0x298] sm:$0xff]
    %v6884 = vld [vmem:[#allocation3 + $0x2a0] sm:$0xff]
    %v6885 = vld [vmem:[#allocation3 + $0x2a8] sm:$0xff]
    %v6886 = vld [vmem:[#allocation3 + $0x2b0] sm:$0xff]
    %v6887 = vld [vmem:[#allocation3 + $0x2b8] sm:$0xff]
    %v6888 = vld [vmem:[#allocation3 + $0x2c0] sm:$0xff]
    %v6889 = vld [vmem:[#allocation3 + $0x2c8] sm:$0xff]
    %v6890 = vld [vmem:[#allocation3 + $0x2d0] sm:$0xff]
    %v6891 = vld [vmem:[#allocation3 + $0x2d8] sm:$0xff]
    %v6892 = vld [vmem:[#allocation3 + $0x2e0] sm:$0xff]
    %v6893 = vld [vmem:[#allocation3 + $0x2e8] sm:$0xff]
    %v6894 = vld [vmem:[#allocation3 + $0x2f0] sm:$0xff]
    %v6895 = vld [vmem:[#allocation3 + $0x2f8] sm:$0xff]
    %v6896 = vld [vmem:[#allocation3 + $0x300] sm:$0xff]
    %v6897 = vld [vmem:[#allocation3 + $0x308] sm:$0xff]
    %v6898 = vld [vmem:[#allocation3 + $0x310] sm:$0xff]
    %v6899 = vld [vmem:[#allocation3 + $0x318] sm:$0xff]
    %v6900 = vld [vmem:[#allocation3 + $0x320] sm:$0xff]
    %v6901 = vld [vmem:[#allocation3 + $0x328] sm:$0xff]
    %v6902 = vld [vmem:[#allocation3 + $0x330] sm:$0xff]
    %v6903 = vld [vmem:[#allocation3 + $0x338] sm:$0xff]
    %v6904 = vld [vmem:[#allocation3 + $0x340] sm:$0xff]
    %v6905 = vld [vmem:[#allocation3 + $0x348] sm:$0xff]
    %v6906 = vld [vmem:[#allocation3 + $0x350] sm:$0xff]
    %v6907 = vld [vmem:[#allocation3 + $0x358] sm:$0xff]
    %v6908 = vld [vmem:[#allocation3 + $0x360] sm:$0xff]
    %v6909 = vld [vmem:[#allocation3 + $0x368] sm:$0xff]
    %v6910 = vld [vmem:[#allocation3 + $0x370] sm:$0xff]
    %v6911 = vld [vmem:[#allocation3 + $0x378] sm:$0xff]
    %v6912 = vld [vmem:[#allocation3 + $0x380] sm:$0xff]
    %v6913 = vld [vmem:[#allocation3 + $0x388] sm:$0xff]
    %v6914 = vld [vmem:[#allocation3 + $0x390] sm:$0xff]
    %v6915 = vld [vmem:[#allocation3 + $0x398] sm:$0xff]
    %v6916 = vld [vmem:[#allocation3 + $0x3a0] sm:$0xff]
    %v6917 = vld [vmem:[#allocation3 + $0x3a8] sm:$0xff]
    %v6918 = vld [vmem:[#allocation3 + $0x3b0] sm:$0xff]
    %v6919 = vld [vmem:[#allocation3 + $0x3b8] sm:$0xff]
    %v6920 = vld [vmem:[#allocation3 + $0x3c0] sm:$0xff]
    %v6921 = vld [vmem:[#allocation3 + $0x3c8] sm:$0xff]
    %v6922 = vld [vmem:[#allocation3 + $0x3d0] sm:$0xff]
    %v6923 = vld [vmem:[#allocation3 + $0x3d8] sm:$0xff]
    %v6924 = vld [vmem:[#allocation3 + $0x3e0] sm:$0xff]
    %v6925 = vld [vmem:[#allocation3 + $0x3e8] sm:$0xff]
    %v6926 = vld [vmem:[#allocation3 + $0x3f0] sm:$0xff]
    %v6927 = vld [vmem:[#allocation3 + $0x3f8] sm:$0xff]
    %v6929 = vperm.slane %v329, 0
    %v6930 = vperm.slane %v329, 1
    %v6931 = vperm.slane %v329, 2
    %v6932 = vperm.slane %v329, 3
    %v7065 = vunpack.c.l.b16 %v6800
    %v7066 = vunpack.c.h.b16 %v6800
    %v7067 = vunpack.c.l.b16 %v6801
    %v7068 = vunpack.c.h.b16 %v6801
    %v7069 = vunpack.c.l.b16 %v6802
    %v7070 = vunpack.c.h.b16 %v6802
    %v7071 = vunpack.c.l.b16 %v6803
    %v7072 = vunpack.c.h.b16 %v6803
    %v7073 = vunpack.c.l.b16 %v6804
    %v7074 = vunpack.c.h.b16 %v6804
    %v7075 = vunpack.c.l.b16 %v6805
    %v7076 = vunpack.c.h.b16 %v6805
    %v7077 = vunpack.c.l.b16 %v6806
    %v7078 = vunpack.c.h.b16 %v6806
    %v7079 = vunpack.c.l.b16 %v6807
    %v7080 = vunpack.c.h.b16 %v6807
    %v7081 = vunpack.c.l.b16 %v6808
    %v7082 = vunpack.c.h.b16 %v6808
    %v7083 = vunpack.c.l.b16 %v6809
    %v7084 = vunpack.c.h.b16 %v6809
    %v7085 = vunpack.c.l.b16 %v6810
    %v7086 = vunpack.c.h.b16 %v6810
    %v7087 = vunpack.c.l.b16 %v6811
    %v7088 = vunpack.c.h.b16 %v6811
    %v7089 = vunpack.c.l.b16 %v6812
    %v7090 = vunpack.c.h.b16 %v6812
    %v7091 = vunpack.c.l.b16 %v6813
    %v7092 = vunpack.c.h.b16 %v6813
    %v7093 = vunpack.c.l.b16 %v6814
    %v7094 = vunpack.c.h.b16 %v6814
    %v7095 = vunpack.c.l.b16 %v6815
    %v7096 = vunpack.c.h.b16 %v6815
    %v7097 = vunpack.c.l.b16 %v6816
    %v7098 = vunpack.c.h.b16 %v6816
    %v7099 = vunpack.c.l.b16 %v6817
    %v7100 = vunpack.c.h.b16 %v6817
    %v7101 = vunpack.c.l.b16 %v6818
    %v7102 = vunpack.c.h.b16 %v6818
    %v7103 = vunpack.c.l.b16 %v6819
    %v7104 = vunpack.c.h.b16 %v6819
    %v7105 = vunpack.c.l.b16 %v6820
    %v7106 = vunpack.c.h.b16 %v6820
    %v7107 = vunpack.c.l.b16 %v6821
    %v7108 = vunpack.c.h.b16 %v6821
    %v7109 = vunpack.c.l.b16 %v6822
    %v7110 = vunpack.c.h.b16 %v6822
    %v7111 = vunpack.c.l.b16 %v6823
    %v7112 = vunpack.c.h.b16 %v6823
    %v7113 = vunpack.c.l.b16 %v6824
    %v7114 = vunpack.c.h.b16 %v6824
    %v7115 = vunpack.c.l.b16 %v6825
    %v7116 = vunpack.c.h.b16 %v6825
    %v7117 = vunpack.c.l.b16 %v6826
    %v7118 = vunpack.c.h.b16 %v6826
    %v7119 = vunpack.c.l.b16 %v6827
    %v7120 = vunpack.c.h.b16 %v6827
    %v7121 = vunpack.c.l.b16 %v6828
    %v7122 = vunpack.c.h.b16 %v6828
    %v7123 = vunpack.c.l.b16 %v6829
    %v7124 = vunpack.c.h.b16 %v6829
    %v7125 = vunpack.c.l.b16 %v6830
    %v7126 = vunpack.c.h.b16 %v6830
    %v7127 = vunpack.c.l.b16 %v6831
    %v7128 = vunpack.c.h.b16 %v6831
    %v7129 = vunpack.c.l.b16 %v6832
    %v7130 = vunpack.c.h.b16 %v6832
    %v7131 = vunpack.c.l.b16 %v6833
    %v7132 = vunpack.c.h.b16 %v6833
    %v7133 = vunpack.c.l.b16 %v6834
    %v7134 = vunpack.c.h.b16 %v6834
    %v7135 = vunpack.c.l.b16 %v6835
    %v7136 = vunpack.c.h.b16 %v6835
    %v7137 = vunpack.c.l.b16 %v6836
    %v7138 = vunpack.c.h.b16 %v6836
    %v7139 = vunpack.c.l.b16 %v6837
    %v7140 = vunpack.c.h.b16 %v6837
    %v7141 = vunpack.c.l.b16 %v6838
    %v7142 = vunpack.c.h.b16 %v6838
    %v7143 = vunpack.c.l.b16 %v6839
    %v7144 = vunpack.c.h.b16 %v6839
    %v7145 = vunpack.c.l.b16 %v6840
    %v7146 = vunpack.c.h.b16 %v6840
    %v7147 = vunpack.c.l.b16 %v6841
    %v7148 = vunpack.c.h.b16 %v6841
    %v7149 = vunpack.c.l.b16 %v6842
    %v7150 = vunpack.c.h.b16 %v6842
    %v7151 = vunpack.c.l.b16 %v6843
    %v7152 = vunpack.c.h.b16 %v6843
    %v7153 = vunpack.c.l.b16 %v6844
    %v7154 = vunpack.c.h.b16 %v6844
    %v7155 = vunpack.c.l.b16 %v6845
    %v7156 = vunpack.c.h.b16 %v6845
    %v7157 = vunpack.c.l.b16 %v6846
    %v7158 = vunpack.c.h.b16 %v6846
    %v7159 = vunpack.c.l.b16 %v6847
    %v7160 = vunpack.c.h.b16 %v6847
    %v7161 = vunpack.c.l.b16 %v6848
    %v7162 = vunpack.c.h.b16 %v6848
    %v7163 = vunpack.c.l.b16 %v6849
    %v7164 = vunpack.c.h.b16 %v6849
    %v7165 = vunpack.c.l.b16 %v6850
    %v7166 = vunpack.c.h.b16 %v6850
    %v7167 = vunpack.c.l.b16 %v6851
    %v7168 = vunpack.c.h.b16 %v6851
    %v7169 = vunpack.c.l.b16 %v6852
    %v7170 = vunpack.c.h.b16 %v6852
    %v7171 = vunpack.c.l.b16 %v6853
    %v7172 = vunpack.c.h.b16 %v6853
    %v7173 = vunpack.c.l.b16 %v6854
    %v7174 = vunpack.c.h.b16 %v6854
    %v7175 = vunpack.c.l.b16 %v6855
    %v7176 = vunpack.c.h.b16 %v6855
    %v7177 = vunpack.c.l.b16 %v6856
    %v7178 = vunpack.c.h.b16 %v6856
    %v7179 = vunpack.c.l.b16 %v6857
    %v7180 = vunpack.c.h.b16 %v6857
    %v7181 = vunpack.c.l.b16 %v6858
    %v7182 = vunpack.c.h.b16 %v6858
    %v7183 = vunpack.c.l.b16 %v6859
    %v7184 = vunpack.c.h.b16 %v6859
    %v7185 = vunpack.c.l.b16 %v6860
    %v7186 = vunpack.c.h.b16 %v6860
    %v7187 = vunpack.c.l.b16 %v6861
    %v7188 = vunpack.c.h.b16 %v6861
    %v7189 = vunpack.c.l.b16 %v6862
    %v7190 = vunpack.c.h.b16 %v6862
    %v7191 = vunpack.c.l.b16 %v6863
    %v7192 = vunpack.c.h.b16 %v6863
    %v7193 = vunpack.c.l.b16 %v6864
    %v7194 = vunpack.c.h.b16 %v6864
    %v7195 = vunpack.c.l.b16 %v6865
    %v7196 = vunpack.c.h.b16 %v6865
    %v7197 = vunpack.c.l.b16 %v6866
    %v7198 = vunpack.c.h.b16 %v6866
    %v7199 = vunpack.c.l.b16 %v6867
    %v7200 = vunpack.c.h.b16 %v6867
    %v7201 = vunpack.c.l.b16 %v6868
    %v7202 = vunpack.c.h.b16 %v6868
    %v7203 = vunpack.c.l.b16 %v6869
    %v7204 = vunpack.c.h.b16 %v6869
    %v7205 = vunpack.c.l.b16 %v6870
    %v7206 = vunpack.c.h.b16 %v6870
    %v7207 = vunpack.c.l.b16 %v6871
    %v7208 = vunpack.c.h.b16 %v6871
    %v7209 = vunpack.c.l.b16 %v6872
    %v7210 = vunpack.c.h.b16 %v6872
    %v7211 = vunpack.c.l.b16 %v6873
    %v7212 = vunpack.c.h.b16 %v6873
    %v7213 = vunpack.c.l.b16 %v6874
    %v7214 = vunpack.c.h.b16 %v6874
    %v7215 = vunpack.c.l.b16 %v6875
    %v7216 = vunpack.c.h.b16 %v6875
    %v7217 = vunpack.c.l.b16 %v6876
    %v7218 = vunpack.c.h.b16 %v6876
    %v7219 = vunpack.c.l.b16 %v6877
    %v7220 = vunpack.c.h.b16 %v6877
    %v7221 = vunpack.c.l.b16 %v6878
    %v7222 = vunpack.c.h.b16 %v6878
    %v7223 = vunpack.c.l.b16 %v6879
    %v7224 = vunpack.c.h.b16 %v6879
    %v7225 = vunpack.c.l.b16 %v6880
    %v7226 = vunpack.c.h.b16 %v6880
    %v7227 = vunpack.c.l.b16 %v6881
    %v7228 = vunpack.c.h.b16 %v6881
    %v7229 = vunpack.c.l.b16 %v6882
    %v7230 = vunpack.c.h.b16 %v6882
    %v7231 = vunpack.c.l.b16 %v6883
    %v7232 = vunpack.c.h.b16 %v6883
    %v7233 = vunpack.c.l.b16 %v6884
    %v7234 = vunpack.c.h.b16 %v6884
    %v7235 = vunpack.c.l.b16 %v6885
    %v7236 = vunpack.c.h.b16 %v6885
    %v7237 = vunpack.c.l.b16 %v6886
    %v7238 = vunpack.c.h.b16 %v6886
    %v7239 = vunpack.c.l.b16 %v6887
    %v7240 = vunpack.c.h.b16 %v6887
    %v7241 = vunpack.c.l.b16 %v6888
    %v7242 = vunpack.c.h.b16 %v6888
    %v7243 = vunpack.c.l.b16 %v6889
    %v7244 = vunpack.c.h.b16 %v6889
    %v7245 = vunpack.c.l.b16 %v6890
    %v7246 = vunpack.c.h.b16 %v6890
    %v7247 = vunpack.c.l.b16 %v6891
    %v7248 = vunpack.c.h.b16 %v6891
    %v7249 = vunpack.c.l.b16 %v6892
    %v7250 = vunpack.c.h.b16 %v6892
    %v7251 = vunpack.c.l.b16 %v6893
    %v7252 = vunpack.c.h.b16 %v6893
    %v7253 = vunpack.c.l.b16 %v6894
    %v7254 = vunpack.c.h.b16 %v6894
    %v7255 = vunpack.c.l.b16 %v6895
    %v7256 = vunpack.c.h.b16 %v6895
    %v7257 = vunpack.c.l.b16 %v6896
    %v7258 = vunpack.c.h.b16 %v6896
    %v7259 = vunpack.c.l.b16 %v6897
    %v7260 = vunpack.c.h.b16 %v6897
    %v7261 = vunpack.c.l.b16 %v6898
    %v7262 = vunpack.c.h.b16 %v6898
    %v7263 = vunpack.c.l.b16 %v6899
    %v7264 = vunpack.c.h.b16 %v6899
    %v7265 = vunpack.c.l.b16 %v6900
    %v7266 = vunpack.c.h.b16 %v6900
    %v7267 = vunpack.c.l.b16 %v6901
    %v7268 = vunpack.c.h.b16 %v6901
    %v7269 = vunpack.c.l.b16 %v6902
    %v7270 = vunpack.c.h.b16 %v6902
    %v7271 = vunpack.c.l.b16 %v6903
    %v7272 = vunpack.c.h.b16 %v6903
    %v7273 = vunpack.c.l.b16 %v6904
    %v7274 = vunpack.c.h.b16 %v6904
    %v7275 = vunpack.c.l.b16 %v6905
    %v7276 = vunpack.c.h.b16 %v6905
    %v7277 = vunpack.c.l.b16 %v6906
    %v7278 = vunpack.c.h.b16 %v6906
    %v7279 = vunpack.c.l.b16 %v6907
    %v7280 = vunpack.c.h.b16 %v6907
    %v7281 = vunpack.c.l.b16 %v6908
    %v7282 = vunpack.c.h.b16 %v6908
    %v7283 = vunpack.c.l.b16 %v6909
    %v7284 = vunpack.c.h.b16 %v6909
    %v7285 = vunpack.c.l.b16 %v6910
    %v7286 = vunpack.c.h.b16 %v6910
    %v7287 = vunpack.c.l.b16 %v6911
    %v7288 = vunpack.c.h.b16 %v6911
    %v7289 = vunpack.c.l.b16 %v6912
    %v7290 = vunpack.c.h.b16 %v6912
    %v7291 = vunpack.c.l.b16 %v6913
    %v7292 = vunpack.c.h.b16 %v6913
    %v7293 = vunpack.c.l.b16 %v6914
    %v7294 = vunpack.c.h.b16 %v6914
    %v7295 = vunpack.c.l.b16 %v6915
    %v7296 = vunpack.c.h.b16 %v6915
    %v7297 = vunpack.c.l.b16 %v6916
    %v7298 = vunpack.c.h.b16 %v6916
    %v7299 = vunpack.c.l.b16 %v6917
    %v7300 = vunpack.c.h.b16 %v6917
    %v7301 = vunpack.c.l.b16 %v6918
    %v7302 = vunpack.c.h.b16 %v6918
    %v7303 = vunpack.c.l.b16 %v6919
    %v7304 = vunpack.c.h.b16 %v6919
    %v7305 = vunpack.c.l.b16 %v6920
    %v7306 = vunpack.c.h.b16 %v6920
    %v7307 = vunpack.c.l.b16 %v6921
    %v7308 = vunpack.c.h.b16 %v6921
    %v7309 = vunpack.c.l.b16 %v6922
    %v7310 = vunpack.c.h.b16 %v6922
    %v7311 = vunpack.c.l.b16 %v6923
    %v7312 = vunpack.c.h.b16 %v6923
    %v7313 = vunpack.c.l.b16 %v6924
    %v7314 = vunpack.c.h.b16 %v6924
    %v7315 = vunpack.c.l.b16 %v6925
    %v7316 = vunpack.c.h.b16 %v6925
    %v7317 = vunpack.c.l.b16 %v6926
    %v7318 = vunpack.c.h.b16 %v6926
    %v7319 = vunpack.c.l.b16 %v6927
    %v7320 = vunpack.c.h.b16 %v6927
    %v7321 = vpack.c.b16 %v7069, %v7065
    %v7322 = vpack.c.b16 %v7070, %v7066
    %v7323 = vpack.c.b16 %v7071, %v7067
    %v7324 = vpack.c.b16 %v7072, %v7068
    %v7325 = vpack.c.b16 %v7077, %v7073
    %v7326 = vpack.c.b16 %v7078, %v7074
    %v7327 = vpack.c.b16 %v7079, %v7075
    %v7328 = vpack.c.b16 %v7080, %v7076
    %v7329 = vpack.c.b16 %v7085, %v7081
    %v7330 = vpack.c.b16 %v7086, %v7082
    %v7331 = vpack.c.b16 %v7087, %v7083
    %v7332 = vpack.c.b16 %v7088, %v7084
    %v7333 = vpack.c.b16 %v7093, %v7089
    %v7334 = vpack.c.b16 %v7094, %v7090
    %v7335 = vpack.c.b16 %v7095, %v7091
    %v7336 = vpack.c.b16 %v7096, %v7092
    %v7337 = vpack.c.b16 %v7101, %v7097
    %v7338 = vpack.c.b16 %v7102, %v7098
    %v7339 = vpack.c.b16 %v7103, %v7099
    %v7340 = vpack.c.b16 %v7104, %v7100
    %v7341 = vpack.c.b16 %v7109, %v7105
    %v7342 = vpack.c.b16 %v7110, %v7106
    %v7343 = vpack.c.b16 %v7111, %v7107
    %v7344 = vpack.c.b16 %v7112, %v7108
    %v7345 = vpack.c.b16 %v7117, %v7113
    %v7346 = vpack.c.b16 %v7118, %v7114
    %v7347 = vpack.c.b16 %v7119, %v7115
    %v7348 = vpack.c.b16 %v7120, %v7116
    %v7349 = vpack.c.b16 %v7125, %v7121
    %v7350 = vpack.c.b16 %v7126, %v7122
    %v7351 = vpack.c.b16 %v7127, %v7123
    %v7352 = vpack.c.b16 %v7128, %v7124
    %v7353 = vpack.c.b16 %v7133, %v7129
    %v7354 = vpack.c.b16 %v7134, %v7130
    %v7355 = vpack.c.b16 %v7135, %v7131
    %v7356 = vpack.c.b16 %v7136, %v7132
    %v7357 = vpack.c.b16 %v7141, %v7137
    %v7358 = vpack.c.b16 %v7142, %v7138
    %v7359 = vpack.c.b16 %v7143, %v7139
    %v7360 = vpack.c.b16 %v7144, %v7140
    %v7361 = vpack.c.b16 %v7149, %v7145
    %v7362 = vpack.c.b16 %v7150, %v7146
    %v7363 = vpack.c.b16 %v7151, %v7147
    %v7364 = vpack.c.b16 %v7152, %v7148
    %v7365 = vpack.c.b16 %v7157, %v7153
    %v7366 = vpack.c.b16 %v7158, %v7154
    %v7367 = vpack.c.b16 %v7159, %v7155
    %v7368 = vpack.c.b16 %v7160, %v7156
    %v7369 = vpack.c.b16 %v7165, %v7161
    %v7370 = vpack.c.b16 %v7166, %v7162
    %v7371 = vpack.c.b16 %v7167, %v7163
    %v7372 = vpack.c.b16 %v7168, %v7164
    %v7373 = vpack.c.b16 %v7173, %v7169
    %v7374 = vpack.c.b16 %v7174, %v7170
    %v7375 = vpack.c.b16 %v7175, %v7171
    %v7376 = vpack.c.b16 %v7176, %v7172
    %v7377 = vpack.c.b16 %v7181, %v7177
    %v7378 = vpack.c.b16 %v7182, %v7178
    %v7379 = vpack.c.b16 %v7183, %v7179
    %v7380 = vpack.c.b16 %v7184, %v7180
    %v7381 = vpack.c.b16 %v7189, %v7185
    %v7382 = vpack.c.b16 %v7190, %v7186
    %v7383 = vpack.c.b16 %v7191, %v7187
    %v7384 = vpack.c.b16 %v7192, %v7188
    %v7385 = vpack.c.b16 %v7197, %v7193
    %v7386 = vpack.c.b16 %v7198, %v7194
    %v7387 = vpack.c.b16 %v7199, %v7195
    %v7388 = vpack.c.b16 %v7200, %v7196
    %v7389 = vpack.c.b16 %v7205, %v7201
    %v7390 = vpack.c.b16 %v7206, %v7202
    %v7391 = vpack.c.b16 %v7207, %v7203
    %v7392 = vpack.c.b16 %v7208, %v7204
    %v7393 = vpack.c.b16 %v7213, %v7209
    %v7394 = vpack.c.b16 %v7214, %v7210
    %v7395 = vpack.c.b16 %v7215, %v7211
    %v7396 = vpack.c.b16 %v7216, %v7212
    %v7397 = vpack.c.b16 %v7221, %v7217
    %v7398 = vpack.c.b16 %v7222, %v7218
    %v7399 = vpack.c.b16 %v7223, %v7219
    %v7400 = vpack.c.b16 %v7224, %v7220
    %v7401 = vpack.c.b16 %v7229, %v7225
    %v7402 = vpack.c.b16 %v7230, %v7226
    %v7403 = vpack.c.b16 %v7231, %v7227
    %v7404 = vpack.c.b16 %v7232, %v7228
    %v7405 = vpack.c.b16 %v7237, %v7233
    %v7406 = vpack.c.b16 %v7238, %v7234
    %v7407 = vpack.c.b16 %v7239, %v7235
    %v7408 = vpack.c.b16 %v7240, %v7236
    %v7409 = vpack.c.b16 %v7245, %v7241
    %v7410 = vpack.c.b16 %v7246, %v7242
    %v7411 = vpack.c.b16 %v7247, %v7243
    %v7412 = vpack.c.b16 %v7248, %v7244
    %v7413 = vpack.c.b16 %v7253, %v7249
    %v7414 = vpack.c.b16 %v7254, %v7250
    %v7415 = vpack.c.b16 %v7255, %v7251
    %v7416 = vpack.c.b16 %v7256, %v7252
    %v7417 = vpack.c.b16 %v7261, %v7257
    %v7418 = vpack.c.b16 %v7262, %v7258
    %v7419 = vpack.c.b16 %v7263, %v7259
    %v7420 = vpack.c.b16 %v7264, %v7260
    %v7421 = vpack.c.b16 %v7269, %v7265
    %v7422 = vpack.c.b16 %v7270, %v7266
    %v7423 = vpack.c.b16 %v7271, %v7267
    %v7424 = vpack.c.b16 %v7272, %v7268
    %v7425 = vpack.c.b16 %v7277, %v7273
    %v7426 = vpack.c.b16 %v7278, %v7274
    %v7427 = vpack.c.b16 %v7279, %v7275
    %v7428 = vpack.c.b16 %v7280, %v7276
    %v7429 = vpack.c.b16 %v7285, %v7281
    %v7430 = vpack.c.b16 %v7286, %v7282
    %v7431 = vpack.c.b16 %v7287, %v7283
    %v7432 = vpack.c.b16 %v7288, %v7284
    %v7433 = vpack.c.b16 %v7293, %v7289
    %v7434 = vpack.c.b16 %v7294, %v7290
    %v7435 = vpack.c.b16 %v7295, %v7291
    %v7436 = vpack.c.b16 %v7296, %v7292
    %v7437 = vpack.c.b16 %v7301, %v7297
    %v7438 = vpack.c.b16 %v7302, %v7298
    %v7439 = vpack.c.b16 %v7303, %v7299
    %v7440 = vpack.c.b16 %v7304, %v7300
    %v7441 = vpack.c.b16 %v7309, %v7305
    %v7442 = vpack.c.b16 %v7310, %v7306
    %v7443 = vpack.c.b16 %v7311, %v7307
    %v7444 = vpack.c.b16 %v7312, %v7308
    %v7445 = vpack.c.b16 %v7317, %v7313
    %v7446 = vpack.c.b16 %v7318, %v7314
    %v7447 = vpack.c.b16 %v7319, %v7315
    %v7448 = vpack.c.b16 %v7320, %v7316
    %7577 = vmatpush.bf16.msra.mxu0 %v7349
    %7578 = vmatpush.bf16.msra.mxu0 %v7345
    %7579 = vmatpush.bf16.msra.mxu0 %v7341
    %7580 = vmatpush.bf16.msra.mxu0 %v7337
    %7581 = vmatpush.bf16.msra.mxu0 %v7333
    %7582 = vmatpush.bf16.msra.mxu0 %v7329
    %7583 = vmatpush.bf16.msra.mxu0 %v7325
    %7584 = vmatpush.bf16.msra.mxu0 %v7321
    %7585 = vmatmul.bf16.gmra.mxu0 %v6736
    %v7586 = vpop.f32.mrf.mxu0
    %v7587 = vadd.f32 %v6929, %v7586
    %v7588 = vpop.f32.mrf.mxu0
    %v7589 = vadd.f32 %v6929, %v7588
    %7590 = vmatmul.bf16.gmra.mxu0 %v6740
    %v7591 = vpop.f32.mrf.mxu0
    %v7592 = vadd.f32 %v6929, %v7591
    %v7593 = vpop.f32.mrf.mxu0
    %v7594 = vadd.f32 %v6929, %v7593
    %7595 = vmatmul.bf16.gmra.mxu0 %v6744
    %v7596 = vpop.f32.mrf.mxu0
    %v7597 = vadd.f32 %v6929, %v7596
    %v7598 = vpop.f32.mrf.mxu0
    %v7599 = vadd.f32 %v6929, %v7598
    %7600 = vmatmul.bf16.gmra.mxu0 %v6748
    %v7601 = vpop.f32.mrf.mxu0
    %v7602 = vadd.f32 %v6929, %v7601
    %v7603 = vpop.f32.mrf.mxu0
    %v7604 = vadd.f32 %v6929, %v7603
    %7605 = vmatmul.bf16.gmra.mxu0 %v6752
    %v7606 = vpop.f32.mrf.mxu0
    %v7607 = vadd.f32 %v6929, %v7606
    %v7608 = vpop.f32.mrf.mxu0
    %v7609 = vadd.f32 %v6929, %v7608
    %7610 = vmatmul.bf16.gmra.mxu0 %v6756
    %v7611 = vpop.f32.mrf.mxu0
    %v7612 = vadd.f32 %v6929, %v7611
    %v7613 = vpop.f32.mrf.mxu0
    %v7614 = vadd.f32 %v6929, %v7613
    %7615 = vmatmul.bf16.gmra.mxu0 %v6760
    %v7616 = vpop.f32.mrf.mxu0
    %v7617 = vadd.f32 %v6929, %v7616
    %v7618 = vpop.f32.mrf.mxu0
    %v7619 = vadd.f32 %v6929, %v7618
    %7620 = vmatmul.bf16.gmra.mxu0 %v6764
    %v7621 = vpop.f32.mrf.mxu0
    %v7622 = vadd.f32 %v6929, %v7621
    %v7623 = vpop.f32.mrf.mxu0
    %v7624 = vadd.f32 %v6929, %v7623
    %7625 = vmatmul.bf16.gmra.mxu0 %v6768
    %v7626 = vpop.f32.mrf.mxu0
    %v7627 = vadd.f32 %v6929, %v7626
    %v7628 = vpop.f32.mrf.mxu0
    %v7629 = vadd.f32 %v6929, %v7628
    %7630 = vmatmul.bf16.gmra.mxu0 %v6772
    %v7631 = vpop.f32.mrf.mxu0
    %v7632 = vadd.f32 %v6929, %v7631
    %v7633 = vpop.f32.mrf.mxu0
    %v7634 = vadd.f32 %v6929, %v7633
    %7635 = vmatmul.bf16.gmra.mxu0 %v6776
    %v7636 = vpop.f32.mrf.mxu0
    %v7637 = vadd.f32 %v6929, %v7636
    %v7638 = vpop.f32.mrf.mxu0
    %v7639 = vadd.f32 %v6929, %v7638
    %7640 = vmatmul.bf16.gmra.mxu0 %v6780
    %v7641 = vpop.f32.mrf.mxu0
    %v7642 = vadd.f32 %v6929, %v7641
    %v7643 = vpop.f32.mrf.mxu0
    %v7644 = vadd.f32 %v6929, %v7643
    %7645 = vmatmul.bf16.gmra.mxu0 %v6784
    %v7646 = vpop.f32.mrf.mxu0
    %v7647 = vadd.f32 %v6929, %v7646
    %v7648 = vpop.f32.mrf.mxu0
    %v7649 = vadd.f32 %v6929, %v7648
    %7650 = vmatmul.bf16.gmra.mxu0 %v6788
    %v7651 = vpop.f32.mrf.mxu0
    %v7652 = vadd.f32 %v6929, %v7651
    %v7653 = vpop.f32.mrf.mxu0
    %v7654 = vadd.f32 %v6929, %v7653
    %7655 = vmatmul.bf16.gmra.mxu0 %v6792
    %v7656 = vpop.f32.mrf.mxu0
    %v7657 = vadd.f32 %v6929, %v7656
    %v7658 = vpop.f32.mrf.mxu0
    %v7659 = vadd.f32 %v6929, %v7658
    %7660 = vmatmul.bf16.gmra.mxu0 %v6796
    %v7661 = vpop.f32.mrf.mxu0
    %v7662 = vadd.f32 %v6929, %v7661
    %v7663 = vpop.f32.mrf.mxu0
    %v7664 = vadd.f32 %v6929, %v7663
    %7665 = vdwg.mxu0
    %7666 = vmatpush.bf16.msra.mxu0 %v7381
    %7667 = vmatpush.bf16.msra.mxu0 %v7377
    %7668 = vmatpush.bf16.msra.mxu0 %v7373
    %7669 = vmatpush.bf16.msra.mxu0 %v7369
    %7670 = vmatpush.bf16.msra.mxu0 %v7365
    %7671 = vmatpush.bf16.msra.mxu0 %v7361
    %7672 = vmatpush.bf16.msra.mxu0 %v7357
    %7673 = vmatpush.bf16.msra.mxu0 %v7353
    %7674 = vmatmul.bf16.gmra.mxu0 %v6737
    %v7675 = vpop.f32.mrf.mxu0
    %v7676 = vadd.f32 %v7587, %v7675
    %v7677 = vpop.f32.mrf.mxu0
    %v7678 = vadd.f32 %v7589, %v7677
    %7679 = vmatmul.bf16.gmra.mxu0 %v6741
    %v7680 = vpop.f32.mrf.mxu0
    %v7681 = vadd.f32 %v7592, %v7680
    %v7682 = vpop.f32.mrf.mxu0
    %v7683 = vadd.f32 %v7594, %v7682
    %7684 = vmatmul.bf16.gmra.mxu0 %v6745
    %v7685 = vpop.f32.mrf.mxu0
    %v7686 = vadd.f32 %v7597, %v7685
    %v7687 = vpop.f32.mrf.mxu0
    %v7688 = vadd.f32 %v7599, %v7687
    %7689 = vmatmul.bf16.gmra.mxu0 %v6749
    %v7690 = vpop.f32.mrf.mxu0
    %v7691 = vadd.f32 %v7602, %v7690
    %v7692 = vpop.f32.mrf.mxu0
    %v7693 = vadd.f32 %v7604, %v7692
    %7694 = vmatmul.bf16.gmra.mxu0 %v6753
    %v7695 = vpop.f32.mrf.mxu0
    %v7696 = vadd.f32 %v7607, %v7695
    %v7697 = vpop.f32.mrf.mxu0
    %v7698 = vadd.f32 %v7609, %v7697
    %7699 = vmatmul.bf16.gmra.mxu0 %v6757
    %v7700 = vpop.f32.mrf.mxu0
    %v7701 = vadd.f32 %v7612, %v7700
    %v7702 = vpop.f32.mrf.mxu0
    %v7703 = vadd.f32 %v7614, %v7702
    %7704 = vmatmul.bf16.gmra.mxu0 %v6761
    %v7705 = vpop.f32.mrf.mxu0
    %v7706 = vadd.f32 %v7617, %v7705
    %v7707 = vpop.f32.mrf.mxu0
    %v7708 = vadd.f32 %v7619, %v7707
    %7709 = vmatmul.bf16.gmra.mxu0 %v6765
    %v7710 = vpop.f32.mrf.mxu0
    %v7711 = vadd.f32 %v7622, %v7710
    %v7712 = vpop.f32.mrf.mxu0
    %v7713 = vadd.f32 %v7624, %v7712
    %7714 = vmatmul.bf16.gmra.mxu0 %v6769
    %v7715 = vpop.f32.mrf.mxu0
    %v7716 = vadd.f32 %v7627, %v7715
    %v7717 = vpop.f32.mrf.mxu0
    %v7718 = vadd.f32 %v7629, %v7717
    %7719 = vmatmul.bf16.gmra.mxu0 %v6773
    %v7720 = vpop.f32.mrf.mxu0
    %v7721 = vadd.f32 %v7632, %v7720
    %v7722 = vpop.f32.mrf.mxu0
    %v7723 = vadd.f32 %v7634, %v7722
    %7724 = vmatmul.bf16.gmra.mxu0 %v6777
    %v7725 = vpop.f32.mrf.mxu0
    %v7726 = vadd.f32 %v7637, %v7725
    %v7727 = vpop.f32.mrf.mxu0
    %v7728 = vadd.f32 %v7639, %v7727
    %7729 = vmatmul.bf16.gmra.mxu0 %v6781
    %v7730 = vpop.f32.mrf.mxu0
    %v7731 = vadd.f32 %v7642, %v7730
    %v7732 = vpop.f32.mrf.mxu0
    %v7733 = vadd.f32 %v7644, %v7732
    %7734 = vmatmul.bf16.gmra.mxu0 %v6785
    %v7735 = vpop.f32.mrf.mxu0
    %v7736 = vadd.f32 %v7647, %v7735
    %v7737 = vpop.f32.mrf.mxu0
    %v7738 = vadd.f32 %v7649, %v7737
    %7739 = vmatmul.bf16.gmra.mxu0 %v6789
    %v7740 = vpop.f32.mrf.mxu0
    %v7741 = vadd.f32 %v7652, %v7740
    %v7742 = vpop.f32.mrf.mxu0
    %v7743 = vadd.f32 %v7654, %v7742
    %7744 = vmatmul.bf16.gmra.mxu0 %v6793
    %v7745 = vpop.f32.mrf.mxu0
    %v7746 = vadd.f32 %v7657, %v7745
    %v7747 = vpop.f32.mrf.mxu0
    %v7748 = vadd.f32 %v7659, %v7747
    %7749 = vmatmul.bf16.gmra.mxu0 %v6797
    %v7750 = vpop.f32.mrf.mxu0
    %v7751 = vadd.f32 %v7662, %v7750
    %v7752 = vpop.f32.mrf.mxu0
    %v7753 = vadd.f32 %v7664, %v7752
    %7754 = vdwg.mxu0
    %7755 = vmatpush.bf16.msra.mxu0 %v7413
    %7756 = vmatpush.bf16.msra.mxu0 %v7409
    %7757 = vmatpush.bf16.msra.mxu0 %v7405
    %7758 = vmatpush.bf16.msra.mxu0 %v7401
    %7759 = vmatpush.bf16.msra.mxu0 %v7397
    %7760 = vmatpush.bf16.msra.mxu0 %v7393
    %7761 = vmatpush.bf16.msra.mxu0 %v7389
    %7762 = vmatpush.bf16.msra.mxu0 %v7385
    %7763 = vmatmul.bf16.gmra.mxu0 %v6738
    %v7764 = vpop.f32.mrf.mxu0
    %v7765 = vadd.f32 %v7676, %v7764
    %v7766 = vpop.f32.mrf.mxu0
    %v7767 = vadd.f32 %v7678, %v7766
    %7768 = vmatmul.bf16.gmra.mxu0 %v6742
    %v7769 = vpop.f32.mrf.mxu0
    %v7770 = vadd.f32 %v7681, %v7769
    %v7771 = vpop.f32.mrf.mxu0
    %v7772 = vadd.f32 %v7683, %v7771
    %7773 = vmatmul.bf16.gmra.mxu0 %v6746
    %v7774 = vpop.f32.mrf.mxu0
    %v7775 = vadd.f32 %v7686, %v7774
    %v7776 = vpop.f32.mrf.mxu0
    %v7777 = vadd.f32 %v7688, %v7776
    %7778 = vmatmul.bf16.gmra.mxu0 %v6750
    %v7779 = vpop.f32.mrf.mxu0
    %v7780 = vadd.f32 %v7691, %v7779
    %v7781 = vpop.f32.mrf.mxu0
    %v7782 = vadd.f32 %v7693, %v7781
    %7783 = vmatmul.bf16.gmra.mxu0 %v6754
    %v7784 = vpop.f32.mrf.mxu0
    %v7785 = vadd.f32 %v7696, %v7784
    %v7786 = vpop.f32.mrf.mxu0
    %v7787 = vadd.f32 %v7698, %v7786
    %7788 = vmatmul.bf16.gmra.mxu0 %v6758
    %v7789 = vpop.f32.mrf.mxu0
    %v7790 = vadd.f32 %v7701, %v7789
    %v7791 = vpop.f32.mrf.mxu0
    %v7792 = vadd.f32 %v7703, %v7791
    %7793 = vmatmul.bf16.gmra.mxu0 %v6762
    %v7794 = vpop.f32.mrf.mxu0
    %v7795 = vadd.f32 %v7706, %v7794
    %v7796 = vpop.f32.mrf.mxu0
    %v7797 = vadd.f32 %v7708, %v7796
    %7798 = vmatmul.bf16.gmra.mxu0 %v6766
    %v7799 = vpop.f32.mrf.mxu0
    %v7800 = vadd.f32 %v7711, %v7799
    %v7801 = vpop.f32.mrf.mxu0
    %v7802 = vadd.f32 %v7713, %v7801
    %7803 = vmatmul.bf16.gmra.mxu0 %v6770
    %v7804 = vpop.f32.mrf.mxu0
    %v7805 = vadd.f32 %v7716, %v7804
    %v7806 = vpop.f32.mrf.mxu0
    %v7807 = vadd.f32 %v7718, %v7806
    %7808 = vmatmul.bf16.gmra.mxu0 %v6774
    %v7809 = vpop.f32.mrf.mxu0
    %v7810 = vadd.f32 %v7721, %v7809
    %v7811 = vpop.f32.mrf.mxu0
    %v7812 = vadd.f32 %v7723, %v7811
    %7813 = vmatmul.bf16.gmra.mxu0 %v6778
    %v7814 = vpop.f32.mrf.mxu0
    %v7815 = vadd.f32 %v7726, %v7814
    %v7816 = vpop.f32.mrf.mxu0
    %v7817 = vadd.f32 %v7728, %v7816
    %7818 = vmatmul.bf16.gmra.mxu0 %v6782
    %v7819 = vpop.f32.mrf.mxu0
    %v7820 = vadd.f32 %v7731, %v7819
    %v7821 = vpop.f32.mrf.mxu0
    %v7822 = vadd.f32 %v7733, %v7821
    %7823 = vmatmul.bf16.gmra.mxu0 %v6786
    %v7824 = vpop.f32.mrf.mxu0
    %v7825 = vadd.f32 %v7736, %v7824
    %v7826 = vpop.f32.mrf.mxu0
    %v7827 = vadd.f32 %v7738, %v7826
    %7828 = vmatmul.bf16.gmra.mxu0 %v6790
    %v7829 = vpop.f32.mrf.mxu0
    %v7830 = vadd.f32 %v7741, %v7829
    %v7831 = vpop.f32.mrf.mxu0
    %v7832 = vadd.f32 %v7743, %v7831
    %7833 = vmatmul.bf16.gmra.mxu0 %v6794
    %v7834 = vpop.f32.mrf.mxu0
    %v7835 = vadd.f32 %v7746, %v7834
    %v7836 = vpop.f32.mrf.mxu0
    %v7837 = vadd.f32 %v7748, %v7836
    %7838 = vmatmul.bf16.gmra.mxu0 %v6798
    %v7839 = vpop.f32.mrf.mxu0
    %v7840 = vadd.f32 %v7751, %v7839
    %v7841 = vpop.f32.mrf.mxu0
    %v7842 = vadd.f32 %v7753, %v7841
    %7843 = vdwg.mxu0
    %7844 = vmatpush.bf16.msra.mxu0 %v7445
    %7845 = vmatpush.bf16.msra.mxu0 %v7441
    %7846 = vmatpush.bf16.msra.mxu0 %v7437
    %7847 = vmatpush.bf16.msra.mxu0 %v7433
    %7848 = vmatpush.bf16.msra.mxu0 %v7429
    %7849 = vmatpush.bf16.msra.mxu0 %v7425
    %7850 = vmatpush.bf16.msra.mxu0 %v7421
    %7851 = vmatpush.bf16.msra.mxu0 %v7417
    %7852 = vmatmul.bf16.gmra.mxu0 %v6739
    %v7853 = vpop.f32.mrf.mxu0
    %v7854 = vadd.f32 %v7765, %v7853
    %v7855 = vpop.f32.mrf.mxu0
    %v7856 = vadd.f32 %v7767, %v7855
    %7857 = vmatmul.bf16.gmra.mxu0 %v6743
    %v7858 = vpop.f32.mrf.mxu0
    %v7859 = vadd.f32 %v7770, %v7858
    %v7860 = vpop.f32.mrf.mxu0
    %v7861 = vadd.f32 %v7772, %v7860
    %7862 = vmatmul.bf16.gmra.mxu0 %v6747
    %v7863 = vpop.f32.mrf.mxu0
    %v7864 = vadd.f32 %v7775, %v7863
    %v7865 = vpop.f32.mrf.mxu0
    %v7866 = vadd.f32 %v7777, %v7865
    %7867 = vmatmul.bf16.gmra.mxu0 %v6751
    %v7868 = vpop.f32.mrf.mxu0
    %v7869 = vadd.f32 %v7780, %v7868
    %v7870 = vpop.f32.mrf.mxu0
    %v7871 = vadd.f32 %v7782, %v7870
    %7872 = vmatmul.bf16.gmra.mxu0 %v6755
    %v7873 = vpop.f32.mrf.mxu0
    %v7874 = vadd.f32 %v7785, %v7873
    %v7875 = vpop.f32.mrf.mxu0
    %v7876 = vadd.f32 %v7787, %v7875
    %7877 = vmatmul.bf16.gmra.mxu0 %v6759
    %v7878 = vpop.f32.mrf.mxu0
    %v7879 = vadd.f32 %v7790, %v7878
    %v7880 = vpop.f32.mrf.mxu0
    %v7881 = vadd.f32 %v7792, %v7880
    %7882 = vmatmul.bf16.gmra.mxu0 %v6763
    %v7883 = vpop.f32.mrf.mxu0
    %v7884 = vadd.f32 %v7795, %v7883
    %v7885 = vpop.f32.mrf.mxu0
    %v7886 = vadd.f32 %v7797, %v7885
    %7887 = vmatmul.bf16.gmra.mxu0 %v6767
    %v7888 = vpop.f32.mrf.mxu0
    %v7889 = vadd.f32 %v7800, %v7888
    %v7890 = vpop.f32.mrf.mxu0
    %v7891 = vadd.f32 %v7802, %v7890
    %7892 = vmatmul.bf16.gmra.mxu0 %v6771
    %v7893 = vpop.f32.mrf.mxu0
    %v7894 = vadd.f32 %v7805, %v7893
    %v7895 = vpop.f32.mrf.mxu0
    %v7896 = vadd.f32 %v7807, %v7895
    %7897 = vmatmul.bf16.gmra.mxu0 %v6775
    %v7898 = vpop.f32.mrf.mxu0
    %v7899 = vadd.f32 %v7810, %v7898
    %v7900 = vpop.f32.mrf.mxu0
    %v7901 = vadd.f32 %v7812, %v7900
    %7902 = vmatmul.bf16.gmra.mxu0 %v6779
    %v7903 = vpop.f32.mrf.mxu0
    %v7904 = vadd.f32 %v7815, %v7903
    %v7905 = vpop.f32.mrf.mxu0
    %v7906 = vadd.f32 %v7817, %v7905
    %7907 = vmatmul.bf16.gmra.mxu0 %v6783
    %v7908 = vpop.f32.mrf.mxu0
    %v7909 = vadd.f32 %v7820, %v7908
    %v7910 = vpop.f32.mrf.mxu0
    %v7911 = vadd.f32 %v7822, %v7910
    %7912 = vmatmul.bf16.gmra.mxu0 %v6787
    %v7913 = vpop.f32.mrf.mxu0
    %v7914 = vadd.f32 %v7825, %v7913
    %v7915 = vpop.f32.mrf.mxu0
    %v7916 = vadd.f32 %v7827, %v7915
    %7917 = vmatmul.bf16.gmra.mxu0 %v6791
    %v7918 = vpop.f32.mrf.mxu0
    %v7919 = vadd.f32 %v7830, %v7918
    %v7920 = vpop.f32.mrf.mxu0
    %v7921 = vadd.f32 %v7832, %v7920
    %7922 = vmatmul.bf16.gmra.mxu0 %v6795
    %v7923 = vpop.f32.mrf.mxu0
    %v7924 = vadd.f32 %v7835, %v7923
    %v7925 = vpop.f32.mrf.mxu0
    %v7926 = vadd.f32 %v7837, %v7925
    %7927 = vmatmul.bf16.gmra.mxu0 %v6799
    %v7928 = vpop.f32.mrf.mxu0
    %v7929 = vadd.f32 %v7840, %v7928
    %v7930 = vpop.f32.mrf.mxu0
    %v7931 = vadd.f32 %v7842, %v7930
    %7932 = vdwg.mxu0
    %7933 = vmatpush.bf16.msra.mxu0 %v7350
    %7934 = vmatpush.bf16.msra.mxu0 %v7346
    %7935 = vmatpush.bf16.msra.mxu0 %v7342
    %7936 = vmatpush.bf16.msra.mxu0 %v7338
    %7937 = vmatpush.bf16.msra.mxu0 %v7334
    %7938 = vmatpush.bf16.msra.mxu0 %v7330
    %7939 = vmatpush.bf16.msra.mxu0 %v7326
    %7940 = vmatpush.bf16.msra.mxu0 %v7322
    %7941 = vmatmul.bf16.gmra.mxu0 %v6736
    %v7942 = vpop.f32.mrf.mxu0
    %v7943 = vadd.f32 %v6930, %v7942
    %v7944 = vpop.f32.mrf.mxu0
    %v7945 = vadd.f32 %v6930, %v7944
    %7946 = vmatmul.bf16.gmra.mxu0 %v6740
    %v7947 = vpop.f32.mrf.mxu0
    %v7948 = vadd.f32 %v6930, %v7947
    %v7949 = vpop.f32.mrf.mxu0
    %v7950 = vadd.f32 %v6930, %v7949
    %7951 = vmatmul.bf16.gmra.mxu0 %v6744
    %v7952 = vpop.f32.mrf.mxu0
    %v7953 = vadd.f32 %v6930, %v7952
    %v7954 = vpop.f32.mrf.mxu0
    %v7955 = vadd.f32 %v6930, %v7954
    %7956 = vmatmul.bf16.gmra.mxu0 %v6748
    %v7957 = vpop.f32.mrf.mxu0
    %v7958 = vadd.f32 %v6930, %v7957
    %v7959 = vpop.f32.mrf.mxu0
    %v7960 = vadd.f32 %v6930, %v7959
    %7961 = vmatmul.bf16.gmra.mxu0 %v6752
    %v7962 = vpop.f32.mrf.mxu0
    %v7963 = vadd.f32 %v6930, %v7962
    %v7964 = vpop.f32.mrf.mxu0
    %v7965 = vadd.f32 %v6930, %v7964
    %7966 = vmatmul.bf16.gmra.mxu0 %v6756
    %v7967 = vpop.f32.mrf.mxu0
    %v7968 = vadd.f32 %v6930, %v7967
    %v7969 = vpop.f32.mrf.mxu0
    %v7970 = vadd.f32 %v6930, %v7969
    %7971 = vmatmul.bf16.gmra.mxu0 %v6760
    %v7972 = vpop.f32.mrf.mxu0
    %v7973 = vadd.f32 %v6930, %v7972
    %v7974 = vpop.f32.mrf.mxu0
    %v7975 = vadd.f32 %v6930, %v7974
    %7976 = vmatmul.bf16.gmra.mxu0 %v6764
    %v7977 = vpop.f32.mrf.mxu0
    %v7978 = vadd.f32 %v6930, %v7977
    %v7979 = vpop.f32.mrf.mxu0
    %v7980 = vadd.f32 %v6930, %v7979
    %7981 = vmatmul.bf16.gmra.mxu0 %v6768
    %v7982 = vpop.f32.mrf.mxu0
    %v7983 = vadd.f32 %v6930, %v7982
    %v7984 = vpop.f32.mrf.mxu0
    %v7985 = vadd.f32 %v6930, %v7984
    %7986 = vmatmul.bf16.gmra.mxu0 %v6772
    %v7987 = vpop.f32.mrf.mxu0
    %v7988 = vadd.f32 %v6930, %v7987
    %v7989 = vpop.f32.mrf.mxu0
    %v7990 = vadd.f32 %v6930, %v7989
    %7991 = vmatmul.bf16.gmra.mxu0 %v6776
    %v7992 = vpop.f32.mrf.mxu0
    %v7993 = vadd.f32 %v6930, %v7992
    %v7994 = vpop.f32.mrf.mxu0
    %v7995 = vadd.f32 %v6930, %v7994
    %7996 = vmatmul.bf16.gmra.mxu0 %v6780
    %v7997 = vpop.f32.mrf.mxu0
    %v7998 = vadd.f32 %v6930, %v7997
    %v7999 = vpop.f32.mrf.mxu0
    %v8000 = vadd.f32 %v6930, %v7999
    %8001 = vmatmul.bf16.gmra.mxu0 %v6784
    %v8002 = vpop.f32.mrf.mxu0
    %v8003 = vadd.f32 %v6930, %v8002
    %v8004 = vpop.f32.mrf.mxu0
    %v8005 = vadd.f32 %v6930, %v8004
    %8006 = vmatmul.bf16.gmra.mxu0 %v6788
    %v8007 = vpop.f32.mrf.mxu0
    %v8008 = vadd.f32 %v6930, %v8007
    %v8009 = vpop.f32.mrf.mxu0
    %v8010 = vadd.f32 %v6930, %v8009
    %8011 = vmatmul.bf16.gmra.mxu0 %v6792
    %v8012 = vpop.f32.mrf.mxu0
    %v8013 = vadd.f32 %v6930, %v8012
    %v8014 = vpop.f32.mrf.mxu0
    %v8015 = vadd.f32 %v6930, %v8014
    %8016 = vmatmul.bf16.gmra.mxu0 %v6796
    %v8017 = vpop.f32.mrf.mxu0
    %v8018 = vadd.f32 %v6930, %v8017
    %v8019 = vpop.f32.mrf.mxu0
    %v8020 = vadd.f32 %v6930, %v8019
    %8021 = vdwg.mxu0
    %8022 = vmatpush.bf16.msra.mxu0 %v7382
    %8023 = vmatpush.bf16.msra.mxu0 %v7378
    %8024 = vmatpush.bf16.msra.mxu0 %v7374
    %8025 = vmatpush.bf16.msra.mxu0 %v7370
    %8026 = vmatpush.bf16.msra.mxu0 %v7366
    %8027 = vmatpush.bf16.msra.mxu0 %v7362
    %8028 = vmatpush.bf16.msra.mxu0 %v7358
    %8029 = vmatpush.bf16.msra.mxu0 %v7354
    %8030 = vmatmul.bf16.gmra.mxu0 %v6737
    %v8031 = vpop.f32.mrf.mxu0
    %v8032 = vadd.f32 %v7943, %v8031
    %v8033 = vpop.f32.mrf.mxu0
    %v8034 = vadd.f32 %v7945, %v8033
    %8035 = vmatmul.bf16.gmra.mxu0 %v6741
    %v8036 = vpop.f32.mrf.mxu0
    %v8037 = vadd.f32 %v7948, %v8036
    %v8038 = vpop.f32.mrf.mxu0
    %v8039 = vadd.f32 %v7950, %v8038
    %8040 = vmatmul.bf16.gmra.mxu0 %v6745
    %v8041 = vpop.f32.mrf.mxu0
    %v8042 = vadd.f32 %v7953, %v8041
    %v8043 = vpop.f32.mrf.mxu0
    %v8044 = vadd.f32 %v7955, %v8043
    %8045 = vmatmul.bf16.gmra.mxu0 %v6749
    %v8046 = vpop.f32.mrf.mxu0
    %v8047 = vadd.f32 %v7958, %v8046
    %v8048 = vpop.f32.mrf.mxu0
    %v8049 = vadd.f32 %v7960, %v8048
    %8050 = vmatmul.bf16.gmra.mxu0 %v6753
    %v8051 = vpop.f32.mrf.mxu0
    %v8052 = vadd.f32 %v7963, %v8051
    %v8053 = vpop.f32.mrf.mxu0
    %v8054 = vadd.f32 %v7965, %v8053
    %8055 = vmatmul.bf16.gmra.mxu0 %v6757
    %v8056 = vpop.f32.mrf.mxu0
    %v8057 = vadd.f32 %v7968, %v8056
    %v8058 = vpop.f32.mrf.mxu0
    %v8059 = vadd.f32 %v7970, %v8058
    %8060 = vmatmul.bf16.gmra.mxu0 %v6761
    %v8061 = vpop.f32.mrf.mxu0
    %v8062 = vadd.f32 %v7973, %v8061
    %v8063 = vpop.f32.mrf.mxu0
    %v8064 = vadd.f32 %v7975, %v8063
    %8065 = vmatmul.bf16.gmra.mxu0 %v6765
    %v8066 = vpop.f32.mrf.mxu0
    %v8067 = vadd.f32 %v7978, %v8066
    %v8068 = vpop.f32.mrf.mxu0
    %v8069 = vadd.f32 %v7980, %v8068
    %8070 = vmatmul.bf16.gmra.mxu0 %v6769
    %v8071 = vpop.f32.mrf.mxu0
    %v8072 = vadd.f32 %v7983, %v8071
    %v8073 = vpop.f32.mrf.mxu0
    %v8074 = vadd.f32 %v7985, %v8073
    %8075 = vmatmul.bf16.gmra.mxu0 %v6773
    %v8076 = vpop.f32.mrf.mxu0
    %v8077 = vadd.f32 %v7988, %v8076
    %v8078 = vpop.f32.mrf.mxu0
    %v8079 = vadd.f32 %v7990, %v8078
    %8080 = vmatmul.bf16.gmra.mxu0 %v6777
    %v8081 = vpop.f32.mrf.mxu0
    %v8082 = vadd.f32 %v7993, %v8081
    %v8083 = vpop.f32.mrf.mxu0
    %v8084 = vadd.f32 %v7995, %v8083
    %8085 = vmatmul.bf16.gmra.mxu0 %v6781
    %v8086 = vpop.f32.mrf.mxu0
    %v8087 = vadd.f32 %v7998, %v8086
    %v8088 = vpop.f32.mrf.mxu0
    %v8089 = vadd.f32 %v8000, %v8088
    %8090 = vmatmul.bf16.gmra.mxu0 %v6785
    %v8091 = vpop.f32.mrf.mxu0
    %v8092 = vadd.f32 %v8003, %v8091
    %v8093 = vpop.f32.mrf.mxu0
    %v8094 = vadd.f32 %v8005, %v8093
    %8095 = vmatmul.bf16.gmra.mxu0 %v6789
    %v8096 = vpop.f32.mrf.mxu0
    %v8097 = vadd.f32 %v8008, %v8096
    %v8098 = vpop.f32.mrf.mxu0
    %v8099 = vadd.f32 %v8010, %v8098
    %8100 = vmatmul.bf16.gmra.mxu0 %v6793
    %v8101 = vpop.f32.mrf.mxu0
    %v8102 = vadd.f32 %v8013, %v8101
    %v8103 = vpop.f32.mrf.mxu0
    %v8104 = vadd.f32 %v8015, %v8103
    %8105 = vmatmul.bf16.gmra.mxu0 %v6797
    %v8106 = vpop.f32.mrf.mxu0
    %v8107 = vadd.f32 %v8018, %v8106
    %v8108 = vpop.f32.mrf.mxu0
    %v8109 = vadd.f32 %v8020, %v8108
    %8110 = vdwg.mxu0
    %8111 = vmatpush.bf16.msra.mxu0 %v7414
    %8112 = vmatpush.bf16.msra.mxu0 %v7410
    %8113 = vmatpush.bf16.msra.mxu0 %v7406
    %8114 = vmatpush.bf16.msra.mxu0 %v7402
    %8115 = vmatpush.bf16.msra.mxu0 %v7398
    %8116 = vmatpush.bf16.msra.mxu0 %v7394
    %8117 = vmatpush.bf16.msra.mxu0 %v7390
    %8118 = vmatpush.bf16.msra.mxu0 %v7386
    %8119 = vmatmul.bf16.gmra.mxu0 %v6738
    %v8120 = vpop.f32.mrf.mxu0
    %v8121 = vadd.f32 %v8032, %v8120
    %v8122 = vpop.f32.mrf.mxu0
    %v8123 = vadd.f32 %v8034, %v8122
    %8124 = vmatmul.bf16.gmra.mxu0 %v6742
    %v8125 = vpop.f32.mrf.mxu0
    %v8126 = vadd.f32 %v8037, %v8125
    %v8127 = vpop.f32.mrf.mxu0
    %v8128 = vadd.f32 %v8039, %v8127
    %8129 = vmatmul.bf16.gmra.mxu0 %v6746
    %v8130 = vpop.f32.mrf.mxu0
    %v8131 = vadd.f32 %v8042, %v8130
    %v8132 = vpop.f32.mrf.mxu0
    %v8133 = vadd.f32 %v8044, %v8132
    %8134 = vmatmul.bf16.gmra.mxu0 %v6750
    %v8135 = vpop.f32.mrf.mxu0
    %v8136 = vadd.f32 %v8047, %v8135
    %v8137 = vpop.f32.mrf.mxu0
    %v8138 = vadd.f32 %v8049, %v8137
    %8139 = vmatmul.bf16.gmra.mxu0 %v6754
    %v8140 = vpop.f32.mrf.mxu0
    %v8141 = vadd.f32 %v8052, %v8140
    %v8142 = vpop.f32.mrf.mxu0
    %v8143 = vadd.f32 %v8054, %v8142
    %8144 = vmatmul.bf16.gmra.mxu0 %v6758
    %v8145 = vpop.f32.mrf.mxu0
    %v8146 = vadd.f32 %v8057, %v8145
    %v8147 = vpop.f32.mrf.mxu0
    %v8148 = vadd.f32 %v8059, %v8147
    %8149 = vmatmul.bf16.gmra.mxu0 %v6762
    %v8150 = vpop.f32.mrf.mxu0
    %v8151 = vadd.f32 %v8062, %v8150
    %v8152 = vpop.f32.mrf.mxu0
    %v8153 = vadd.f32 %v8064, %v8152
    %8154 = vmatmul.bf16.gmra.mxu0 %v6766
    %v8155 = vpop.f32.mrf.mxu0
    %v8156 = vadd.f32 %v8067, %v8155
    %v8157 = vpop.f32.mrf.mxu0
    %v8158 = vadd.f32 %v8069, %v8157
    %8159 = vmatmul.bf16.gmra.mxu0 %v6770
    %v8160 = vpop.f32.mrf.mxu0
    %v8161 = vadd.f32 %v8072, %v8160
    %v8162 = vpop.f32.mrf.mxu0
    %v8163 = vadd.f32 %v8074, %v8162
    %8164 = vmatmul.bf16.gmra.mxu0 %v6774
    %v8165 = vpop.f32.mrf.mxu0
    %v8166 = vadd.f32 %v8077, %v8165
    %v8167 = vpop.f32.mrf.mxu0
    %v8168 = vadd.f32 %v8079, %v8167
    %8169 = vmatmul.bf16.gmra.mxu0 %v6778
    %v8170 = vpop.f32.mrf.mxu0
    %v8171 = vadd.f32 %v8082, %v8170
    %v8172 = vpop.f32.mrf.mxu0
    %v8173 = vadd.f32 %v8084, %v8172
    %8174 = vmatmul.bf16.gmra.mxu0 %v6782
    %v8175 = vpop.f32.mrf.mxu0
    %v8176 = vadd.f32 %v8087, %v8175
    %v8177 = vpop.f32.mrf.mxu0
    %v8178 = vadd.f32 %v8089, %v8177
    %8179 = vmatmul.bf16.gmra.mxu0 %v6786
    %v8180 = vpop.f32.mrf.mxu0
    %v8181 = vadd.f32 %v8092, %v8180
    %v8182 = vpop.f32.mrf.mxu0
    %v8183 = vadd.f32 %v8094, %v8182
    %8184 = vmatmul.bf16.gmra.mxu0 %v6790
    %v8185 = vpop.f32.mrf.mxu0
    %v8186 = vadd.f32 %v8097, %v8185
    %v8187 = vpop.f32.mrf.mxu0
    %v8188 = vadd.f32 %v8099, %v8187
    %8189 = vmatmul.bf16.gmra.mxu0 %v6794
    %v8190 = vpop.f32.mrf.mxu0
    %v8191 = vadd.f32 %v8102, %v8190
    %v8192 = vpop.f32.mrf.mxu0
    %v8193 = vadd.f32 %v8104, %v8192
    %8194 = vmatmul.bf16.gmra.mxu0 %v6798
    %v8195 = vpop.f32.mrf.mxu0
    %v8196 = vadd.f32 %v8107, %v8195
    %v8197 = vpop.f32.mrf.mxu0
    %v8198 = vadd.f32 %v8109, %v8197
    %8199 = vdwg.mxu0
    %8200 = vmatpush.bf16.msra.mxu0 %v7446
    %8201 = vmatpush.bf16.msra.mxu0 %v7442
    %8202 = vmatpush.bf16.msra.mxu0 %v7438
    %8203 = vmatpush.bf16.msra.mxu0 %v7434
    %8204 = vmatpush.bf16.msra.mxu0 %v7430
    %8205 = vmatpush.bf16.msra.mxu0 %v7426
    %8206 = vmatpush.bf16.msra.mxu0 %v7422
    %8207 = vmatpush.bf16.msra.mxu0 %v7418
    %8208 = vmatmul.bf16.gmra.mxu0 %v6739
    %v8209 = vpop.f32.mrf.mxu0
    %v8210 = vadd.f32 %v8121, %v8209
    %v8211 = vpop.f32.mrf.mxu0
    %v8212 = vadd.f32 %v8123, %v8211
    %8213 = vmatmul.bf16.gmra.mxu0 %v6743
    %v8214 = vpop.f32.mrf.mxu0
    %v8215 = vadd.f32 %v8126, %v8214
    %v8216 = vpop.f32.mrf.mxu0
    %v8217 = vadd.f32 %v8128, %v8216
    %8218 = vmatmul.bf16.gmra.mxu0 %v6747
    %v8219 = vpop.f32.mrf.mxu0
    %v8220 = vadd.f32 %v8131, %v8219
    %v8221 = vpop.f32.mrf.mxu0
    %v8222 = vadd.f32 %v8133, %v8221
    %8223 = vmatmul.bf16.gmra.mxu0 %v6751
    %v8224 = vpop.f32.mrf.mxu0
    %v8225 = vadd.f32 %v8136, %v8224
    %v8226 = vpop.f32.mrf.mxu0
    %v8227 = vadd.f32 %v8138, %v8226
    %8228 = vmatmul.bf16.gmra.mxu0 %v6755
    %v8229 = vpop.f32.mrf.mxu0
    %v8230 = vadd.f32 %v8141, %v8229
    %v8231 = vpop.f32.mrf.mxu0
    %v8232 = vadd.f32 %v8143, %v8231
    %8233 = vmatmul.bf16.gmra.mxu0 %v6759
    %v8234 = vpop.f32.mrf.mxu0
    %v8235 = vadd.f32 %v8146, %v8234
    %v8236 = vpop.f32.mrf.mxu0
    %v8237 = vadd.f32 %v8148, %v8236
    %8238 = vmatmul.bf16.gmra.mxu0 %v6763
    %v8239 = vpop.f32.mrf.mxu0
    %v8240 = vadd.f32 %v8151, %v8239
    %v8241 = vpop.f32.mrf.mxu0
    %v8242 = vadd.f32 %v8153, %v8241
    %8243 = vmatmul.bf16.gmra.mxu0 %v6767
    %v8244 = vpop.f32.mrf.mxu0
    %v8245 = vadd.f32 %v8156, %v8244
    %v8246 = vpop.f32.mrf.mxu0
    %v8247 = vadd.f32 %v8158, %v8246
    %8248 = vmatmul.bf16.gmra.mxu0 %v6771
    %v8249 = vpop.f32.mrf.mxu0
    %v8250 = vadd.f32 %v8161, %v8249
    %v8251 = vpop.f32.mrf.mxu0
    %v8252 = vadd.f32 %v8163, %v8251
    %8253 = vmatmul.bf16.gmra.mxu0 %v6775
    %v8254 = vpop.f32.mrf.mxu0
    %v8255 = vadd.f32 %v8166, %v8254
    %v8256 = vpop.f32.mrf.mxu0
    %v8257 = vadd.f32 %v8168, %v8256
    %8258 = vmatmul.bf16.gmra.mxu0 %v6779
    %v8259 = vpop.f32.mrf.mxu0
    %v8260 = vadd.f32 %v8171, %v8259
    %v8261 = vpop.f32.mrf.mxu0
    %v8262 = vadd.f32 %v8173, %v8261
    %8263 = vmatmul.bf16.gmra.mxu0 %v6783
    %v8264 = vpop.f32.mrf.mxu0
    %v8265 = vadd.f32 %v8176, %v8264
    %v8266 = vpop.f32.mrf.mxu0
    %v8267 = vadd.f32 %v8178, %v8266
    %8268 = vmatmul.bf16.gmra.mxu0 %v6787
    %v8269 = vpop.f32.mrf.mxu0
    %v8270 = vadd.f32 %v8181, %v8269
    %v8271 = vpop.f32.mrf.mxu0
    %v8272 = vadd.f32 %v8183, %v8271
    %8273 = vmatmul.bf16.gmra.mxu0 %v6791
    %v8274 = vpop.f32.mrf.mxu0
    %v8275 = vadd.f32 %v8186, %v8274
    %v8276 = vpop.f32.mrf.mxu0
    %v8277 = vadd.f32 %v8188, %v8276
    %8278 = vmatmul.bf16.gmra.mxu0 %v6795
    %v8279 = vpop.f32.mrf.mxu0
    %v8280 = vadd.f32 %v8191, %v8279
    %v8281 = vpop.f32.mrf.mxu0
    %v8282 = vadd.f32 %v8193, %v8281
    %8283 = vmatmul.bf16.gmra.mxu0 %v6799
    %v8284 = vpop.f32.mrf.mxu0
    %v8285 = vadd.f32 %v8196, %v8284
    %v8286 = vpop.f32.mrf.mxu0
    %v8287 = vadd.f32 %v8198, %v8286
    %8288 = vdwg.mxu0
    %8289 = vmatpush.bf16.msra.mxu0 %v7351
    %8290 = vmatpush.bf16.msra.mxu0 %v7347
    %8291 = vmatpush.bf16.msra.mxu0 %v7343
    %8292 = vmatpush.bf16.msra.mxu0 %v7339
    %8293 = vmatpush.bf16.msra.mxu0 %v7335
    %8294 = vmatpush.bf16.msra.mxu0 %v7331
    %8295 = vmatpush.bf16.msra.mxu0 %v7327
    %8296 = vmatpush.bf16.msra.mxu0 %v7323
    %8297 = vmatmul.bf16.gmra.mxu0 %v6736
    %v8298 = vpop.f32.mrf.mxu0
    %v8299 = vadd.f32 %v6931, %v8298
    %v8300 = vpop.f32.mrf.mxu0
    %v8301 = vadd.f32 %v6931, %v8300
    %8302 = vmatmul.bf16.gmra.mxu0 %v6740
    %v8303 = vpop.f32.mrf.mxu0
    %v8304 = vadd.f32 %v6931, %v8303
    %v8305 = vpop.f32.mrf.mxu0
    %v8306 = vadd.f32 %v6931, %v8305
    %8307 = vmatmul.bf16.gmra.mxu0 %v6744
    %v8308 = vpop.f32.mrf.mxu0
    %v8309 = vadd.f32 %v6931, %v8308
    %v8310 = vpop.f32.mrf.mxu0
    %v8311 = vadd.f32 %v6931, %v8310
    %8312 = vmatmul.bf16.gmra.mxu0 %v6748
    %v8313 = vpop.f32.mrf.mxu0
    %v8314 = vadd.f32 %v6931, %v8313
    %v8315 = vpop.f32.mrf.mxu0
    %v8316 = vadd.f32 %v6931, %v8315
    %8317 = vmatmul.bf16.gmra.mxu0 %v6752
    %v8318 = vpop.f32.mrf.mxu0
    %v8319 = vadd.f32 %v6931, %v8318
    %v8320 = vpop.f32.mrf.mxu0
    %v8321 = vadd.f32 %v6931, %v8320
    %8322 = vmatmul.bf16.gmra.mxu0 %v6756
    %v8323 = vpop.f32.mrf.mxu0
    %v8324 = vadd.f32 %v6931, %v8323
    %v8325 = vpop.f32.mrf.mxu0
    %v8326 = vadd.f32 %v6931, %v8325
    %8327 = vmatmul.bf16.gmra.mxu0 %v6760
    %v8328 = vpop.f32.mrf.mxu0
    %v8329 = vadd.f32 %v6931, %v8328
    %v8330 = vpop.f32.mrf.mxu0
    %v8331 = vadd.f32 %v6931, %v8330
    %8332 = vmatmul.bf16.gmra.mxu0 %v6764
    %v8333 = vpop.f32.mrf.mxu0
    %v8334 = vadd.f32 %v6931, %v8333
    %v8335 = vpop.f32.mrf.mxu0
    %v8336 = vadd.f32 %v6931, %v8335
    %8337 = vmatmul.bf16.gmra.mxu0 %v6768
    %v8338 = vpop.f32.mrf.mxu0
    %v8339 = vadd.f32 %v6931, %v8338
    %v8340 = vpop.f32.mrf.mxu0
    %v8341 = vadd.f32 %v6931, %v8340
    %8342 = vmatmul.bf16.gmra.mxu0 %v6772
    %v8343 = vpop.f32.mrf.mxu0
    %v8344 = vadd.f32 %v6931, %v8343
    %v8345 = vpop.f32.mrf.mxu0
    %v8346 = vadd.f32 %v6931, %v8345
    %8347 = vmatmul.bf16.gmra.mxu0 %v6776
    %v8348 = vpop.f32.mrf.mxu0
    %v8349 = vadd.f32 %v6931, %v8348
    %v8350 = vpop.f32.mrf.mxu0
    %v8351 = vadd.f32 %v6931, %v8350
    %8352 = vmatmul.bf16.gmra.mxu0 %v6780
    %v8353 = vpop.f32.mrf.mxu0
    %v8354 = vadd.f32 %v6931, %v8353
    %v8355 = vpop.f32.mrf.mxu0
    %v8356 = vadd.f32 %v6931, %v8355
    %8357 = vmatmul.bf16.gmra.mxu0 %v6784
    %v8358 = vpop.f32.mrf.mxu0
    %v8359 = vadd.f32 %v6931, %v8358
    %v8360 = vpop.f32.mrf.mxu0
    %v8361 = vadd.f32 %v6931, %v8360
    %8362 = vmatmul.bf16.gmra.mxu0 %v6788
    %v8363 = vpop.f32.mrf.mxu0
    %v8364 = vadd.f32 %v6931, %v8363
    %v8365 = vpop.f32.mrf.mxu0
    %v8366 = vadd.f32 %v6931, %v8365
    %8367 = vmatmul.bf16.gmra.mxu0 %v6792
    %v8368 = vpop.f32.mrf.mxu0
    %v8369 = vadd.f32 %v6931, %v8368
    %v8370 = vpop.f32.mrf.mxu0
    %v8371 = vadd.f32 %v6931, %v8370
    %8372 = vmatmul.bf16.gmra.mxu0 %v6796
    %v8373 = vpop.f32.mrf.mxu0
    %v8374 = vadd.f32 %v6931, %v8373
    %v8375 = vpop.f32.mrf.mxu0
    %v8376 = vadd.f32 %v6931, %v8375
    %8377 = vdwg.mxu0
    %8378 = vmatpush.bf16.msra.mxu0 %v7383
    %8379 = vmatpush.bf16.msra.mxu0 %v7379
    %8380 = vmatpush.bf16.msra.mxu0 %v7375
    %8381 = vmatpush.bf16.msra.mxu0 %v7371
    %8382 = vmatpush.bf16.msra.mxu0 %v7367
    %8383 = vmatpush.bf16.msra.mxu0 %v7363
    %8384 = vmatpush.bf16.msra.mxu0 %v7359
    %8385 = vmatpush.bf16.msra.mxu0 %v7355
    %8386 = vmatmul.bf16.gmra.mxu0 %v6737
    %v8387 = vpop.f32.mrf.mxu0
    %v8388 = vadd.f32 %v8299, %v8387
    %v8389 = vpop.f32.mrf.mxu0
    %v8390 = vadd.f32 %v8301, %v8389
    %8391 = vmatmul.bf16.gmra.mxu0 %v6741
    %v8392 = vpop.f32.mrf.mxu0
    %v8393 = vadd.f32 %v8304, %v8392
    %v8394 = vpop.f32.mrf.mxu0
    %v8395 = vadd.f32 %v8306, %v8394
    %8396 = vmatmul.bf16.gmra.mxu0 %v6745
    %v8397 = vpop.f32.mrf.mxu0
    %v8398 = vadd.f32 %v8309, %v8397
    %v8399 = vpop.f32.mrf.mxu0
    %v8400 = vadd.f32 %v8311, %v8399
    %8401 = vmatmul.bf16.gmra.mxu0 %v6749
    %v8402 = vpop.f32.mrf.mxu0
    %v8403 = vadd.f32 %v8314, %v8402
    %v8404 = vpop.f32.mrf.mxu0
    %v8405 = vadd.f32 %v8316, %v8404
    %8406 = vmatmul.bf16.gmra.mxu0 %v6753
    %v8407 = vpop.f32.mrf.mxu0
    %v8408 = vadd.f32 %v8319, %v8407
    %v8409 = vpop.f32.mrf.mxu0
    %v8410 = vadd.f32 %v8321, %v8409
    %8411 = vmatmul.bf16.gmra.mxu0 %v6757
    %v8412 = vpop.f32.mrf.mxu0
    %v8413 = vadd.f32 %v8324, %v8412
    %v8414 = vpop.f32.mrf.mxu0
    %v8415 = vadd.f32 %v8326, %v8414
    %8416 = vmatmul.bf16.gmra.mxu0 %v6761
    %v8417 = vpop.f32.mrf.mxu0
    %v8418 = vadd.f32 %v8329, %v8417
    %v8419 = vpop.f32.mrf.mxu0
    %v8420 = vadd.f32 %v8331, %v8419
    %8421 = vmatmul.bf16.gmra.mxu0 %v6765
    %v8422 = vpop.f32.mrf.mxu0
    %v8423 = vadd.f32 %v8334, %v8422
    %v8424 = vpop.f32.mrf.mxu0
    %v8425 = vadd.f32 %v8336, %v8424
    %8426 = vmatmul.bf16.gmra.mxu0 %v6769
    %v8427 = vpop.f32.mrf.mxu0
    %v8428 = vadd.f32 %v8339, %v8427
    %v8429 = vpop.f32.mrf.mxu0
    %v8430 = vadd.f32 %v8341, %v8429
    %8431 = vmatmul.bf16.gmra.mxu0 %v6773
    %v8432 = vpop.f32.mrf.mxu0
    %v8433 = vadd.f32 %v8344, %v8432
    %v8434 = vpop.f32.mrf.mxu0
    %v8435 = vadd.f32 %v8346, %v8434
    %8436 = vmatmul.bf16.gmra.mxu0 %v6777
    %v8437 = vpop.f32.mrf.mxu0
    %v8438 = vadd.f32 %v8349, %v8437
    %v8439 = vpop.f32.mrf.mxu0
    %v8440 = vadd.f32 %v8351, %v8439
    %8441 = vmatmul.bf16.gmra.mxu0 %v6781
    %v8442 = vpop.f32.mrf.mxu0
    %v8443 = vadd.f32 %v8354, %v8442
    %v8444 = vpop.f32.mrf.mxu0
    %v8445 = vadd.f32 %v8356, %v8444
    %8446 = vmatmul.bf16.gmra.mxu0 %v6785
    %v8447 = vpop.f32.mrf.mxu0
    %v8448 = vadd.f32 %v8359, %v8447
    %v8449 = vpop.f32.mrf.mxu0
    %v8450 = vadd.f32 %v8361, %v8449
    %8451 = vmatmul.bf16.gmra.mxu0 %v6789
    %v8452 = vpop.f32.mrf.mxu0
    %v8453 = vadd.f32 %v8364, %v8452
    %v8454 = vpop.f32.mrf.mxu0
    %v8455 = vadd.f32 %v8366, %v8454
    %8456 = vmatmul.bf16.gmra.mxu0 %v6793
    %v8457 = vpop.f32.mrf.mxu0
    %v8458 = vadd.f32 %v8369, %v8457
    %v8459 = vpop.f32.mrf.mxu0
    %v8460 = vadd.f32 %v8371, %v8459
    %8461 = vmatmul.bf16.gmra.mxu0 %v6797
    %v8462 = vpop.f32.mrf.mxu0
    %v8463 = vadd.f32 %v8374, %v8462
    %v8464 = vpop.f32.mrf.mxu0
    %v8465 = vadd.f32 %v8376, %v8464
    %8466 = vdwg.mxu0
    %8467 = vmatpush.bf16.msra.mxu0 %v7415
    %8468 = vmatpush.bf16.msra.mxu0 %v7411
    %8469 = vmatpush.bf16.msra.mxu0 %v7407
    %8470 = vmatpush.bf16.msra.mxu0 %v7403
    %8471 = vmatpush.bf16.msra.mxu0 %v7399
    %8472 = vmatpush.bf16.msra.mxu0 %v7395
    %8473 = vmatpush.bf16.msra.mxu0 %v7391
    %8474 = vmatpush.bf16.msra.mxu0 %v7387
    %8475 = vmatmul.bf16.gmra.mxu0 %v6738
    %v8476 = vpop.f32.mrf.mxu0
    %v8477 = vadd.f32 %v8388, %v8476
    %v8478 = vpop.f32.mrf.mxu0
    %v8479 = vadd.f32 %v8390, %v8478
    %8480 = vmatmul.bf16.gmra.mxu0 %v6742
    %v8481 = vpop.f32.mrf.mxu0
    %v8482 = vadd.f32 %v8393, %v8481
    %v8483 = vpop.f32.mrf.mxu0
    %v8484 = vadd.f32 %v8395, %v8483
    %8485 = vmatmul.bf16.gmra.mxu0 %v6746
    %v8486 = vpop.f32.mrf.mxu0
    %v8487 = vadd.f32 %v8398, %v8486
    %v8488 = vpop.f32.mrf.mxu0
    %v8489 = vadd.f32 %v8400, %v8488
    %8490 = vmatmul.bf16.gmra.mxu0 %v6750
    %v8491 = vpop.f32.mrf.mxu0
    %v8492 = vadd.f32 %v8403, %v8491
    %v8493 = vpop.f32.mrf.mxu0
    %v8494 = vadd.f32 %v8405, %v8493
    %8495 = vmatmul.bf16.gmra.mxu0 %v6754
    %v8496 = vpop.f32.mrf.mxu0
    %v8497 = vadd.f32 %v8408, %v8496
    %v8498 = vpop.f32.mrf.mxu0
    %v8499 = vadd.f32 %v8410, %v8498
    %8500 = vmatmul.bf16.gmra.mxu0 %v6758
    %v8501 = vpop.f32.mrf.mxu0
    %v8502 = vadd.f32 %v8413, %v8501
    %v8503 = vpop.f32.mrf.mxu0
    %v8504 = vadd.f32 %v8415, %v8503
    %8505 = vmatmul.bf16.gmra.mxu0 %v6762
    %v8506 = vpop.f32.mrf.mxu0
    %v8507 = vadd.f32 %v8418, %v8506
    %v8508 = vpop.f32.mrf.mxu0
    %v8509 = vadd.f32 %v8420, %v8508
    %8510 = vmatmul.bf16.gmra.mxu0 %v6766
    %v8511 = vpop.f32.mrf.mxu0
    %v8512 = vadd.f32 %v8423, %v8511
    %v8513 = vpop.f32.mrf.mxu0
    %v8514 = vadd.f32 %v8425, %v8513
    %8515 = vmatmul.bf16.gmra.mxu0 %v6770
    %v8516 = vpop.f32.mrf.mxu0
    %v8517 = vadd.f32 %v8428, %v8516
    %v8518 = vpop.f32.mrf.mxu0
    %v8519 = vadd.f32 %v8430, %v8518
    %8520 = vmatmul.bf16.gmra.mxu0 %v6774
    %v8521 = vpop.f32.mrf.mxu0
    %v8522 = vadd.f32 %v8433, %v8521
    %v8523 = vpop.f32.mrf.mxu0
    %v8524 = vadd.f32 %v8435, %v8523
    %8525 = vmatmul.bf16.gmra.mxu0 %v6778
    %v8526 = vpop.f32.mrf.mxu0
    %v8527 = vadd.f32 %v8438, %v8526
    %v8528 = vpop.f32.mrf.mxu0
    %v8529 = vadd.f32 %v8440, %v8528
    %8530 = vmatmul.bf16.gmra.mxu0 %v6782
    %v8531 = vpop.f32.mrf.mxu0
    %v8532 = vadd.f32 %v8443, %v8531
    %v8533 = vpop.f32.mrf.mxu0
    %v8534 = vadd.f32 %v8445, %v8533
    %8535 = vmatmul.bf16.gmra.mxu0 %v6786
    %v8536 = vpop.f32.mrf.mxu0
    %v8537 = vadd.f32 %v8448, %v8536
    %v8538 = vpop.f32.mrf.mxu0
    %v8539 = vadd.f32 %v8450, %v8538
    %8540 = vmatmul.bf16.gmra.mxu0 %v6790
    %v8541 = vpop.f32.mrf.mxu0
    %v8542 = vadd.f32 %v8453, %v8541
    %v8543 = vpop.f32.mrf.mxu0
    %v8544 = vadd.f32 %v8455, %v8543
    %8545 = vmatmul.bf16.gmra.mxu0 %v6794
    %v8546 = vpop.f32.mrf.mxu0
    %v8547 = vadd.f32 %v8458, %v8546
    %v8548 = vpop.f32.mrf.mxu0
    %v8549 = vadd.f32 %v8460, %v8548
    %8550 = vmatmul.bf16.gmra.mxu0 %v6798
    %v8551 = vpop.f32.mrf.mxu0
    %v8552 = vadd.f32 %v8463, %v8551
    %v8553 = vpop.f32.mrf.mxu0
    %v8554 = vadd.f32 %v8465, %v8553
    %8555 = vdwg.mxu0
    %8556 = vmatpush.bf16.msra.mxu0 %v7447
    %8557 = vmatpush.bf16.msra.mxu0 %v7443
    %8558 = vmatpush.bf16.msra.mxu0 %v7439
    %8559 = vmatpush.bf16.msra.mxu0 %v7435
    %8560 = vmatpush.bf16.msra.mxu0 %v7431
    %8561 = vmatpush.bf16.msra.mxu0 %v7427
    %8562 = vmatpush.bf16.msra.mxu0 %v7423
    %8563 = vmatpush.bf16.msra.mxu0 %v7419
    %8564 = vmatmul.bf16.gmra.mxu0 %v6739
    %v8565 = vpop.f32.mrf.mxu0
    %v8566 = vadd.f32 %v8477, %v8565
    %v8567 = vpop.f32.mrf.mxu0
    %v8568 = vadd.f32 %v8479, %v8567
    %8569 = vmatmul.bf16.gmra.mxu0 %v6743
    %v8570 = vpop.f32.mrf.mxu0
    %v8571 = vadd.f32 %v8482, %v8570
    %v8572 = vpop.f32.mrf.mxu0
    %v8573 = vadd.f32 %v8484, %v8572
    %8574 = vmatmul.bf16.gmra.mxu0 %v6747
    %v8575 = vpop.f32.mrf.mxu0
    %v8576 = vadd.f32 %v8487, %v8575
    %v8577 = vpop.f32.mrf.mxu0
    %v8578 = vadd.f32 %v8489, %v8577
    %8579 = vmatmul.bf16.gmra.mxu0 %v6751
    %v8580 = vpop.f32.mrf.mxu0
    %v8581 = vadd.f32 %v8492, %v8580
    %v8582 = vpop.f32.mrf.mxu0
    %v8583 = vadd.f32 %v8494, %v8582
    %8584 = vmatmul.bf16.gmra.mxu0 %v6755
    %v8585 = vpop.f32.mrf.mxu0
    %v8586 = vadd.f32 %v8497, %v8585
    %v8587 = vpop.f32.mrf.mxu0
    %v8588 = vadd.f32 %v8499, %v8587
    %8589 = vmatmul.bf16.gmra.mxu0 %v6759
    %v8590 = vpop.f32.mrf.mxu0
    %v8591 = vadd.f32 %v8502, %v8590
    %v8592 = vpop.f32.mrf.mxu0
    %v8593 = vadd.f32 %v8504, %v8592
    %8594 = vmatmul.bf16.gmra.mxu0 %v6763
    %v8595 = vpop.f32.mrf.mxu0
    %v8596 = vadd.f32 %v8507, %v8595
    %v8597 = vpop.f32.mrf.mxu0
    %v8598 = vadd.f32 %v8509, %v8597
    %8599 = vmatmul.bf16.gmra.mxu0 %v6767
    %v8600 = vpop.f32.mrf.mxu0
    %v8601 = vadd.f32 %v8512, %v8600
    %v8602 = vpop.f32.mrf.mxu0
    %v8603 = vadd.f32 %v8514, %v8602
    %8604 = vmatmul.bf16.gmra.mxu0 %v6771
    %v8605 = vpop.f32.mrf.mxu0
    %v8606 = vadd.f32 %v8517, %v8605
    %v8607 = vpop.f32.mrf.mxu0
    %v8608 = vadd.f32 %v8519, %v8607
    %8609 = vmatmul.bf16.gmra.mxu0 %v6775
    %v8610 = vpop.f32.mrf.mxu0
    %v8611 = vadd.f32 %v8522, %v8610
    %v8612 = vpop.f32.mrf.mxu0
    %v8613 = vadd.f32 %v8524, %v8612
    %8614 = vmatmul.bf16.gmra.mxu0 %v6779
    %v8615 = vpop.f32.mrf.mxu0
    %v8616 = vadd.f32 %v8527, %v8615
    %v8617 = vpop.f32.mrf.mxu0
    %v8618 = vadd.f32 %v8529, %v8617
    %8619 = vmatmul.bf16.gmra.mxu0 %v6783
    %v8620 = vpop.f32.mrf.mxu0
    %v8621 = vadd.f32 %v8532, %v8620
    %v8622 = vpop.f32.mrf.mxu0
    %v8623 = vadd.f32 %v8534, %v8622
    %8624 = vmatmul.bf16.gmra.mxu0 %v6787
    %v8625 = vpop.f32.mrf.mxu0
    %v8626 = vadd.f32 %v8537, %v8625
    %v8627 = vpop.f32.mrf.mxu0
    %v8628 = vadd.f32 %v8539, %v8627
    %8629 = vmatmul.bf16.gmra.mxu0 %v6791
    %v8630 = vpop.f32.mrf.mxu0
    %v8631 = vadd.f32 %v8542, %v8630
    %v8632 = vpop.f32.mrf.mxu0
    %v8633 = vadd.f32 %v8544, %v8632
    %8634 = vmatmul.bf16.gmra.mxu0 %v6795
    %v8635 = vpop.f32.mrf.mxu0
    %v8636 = vadd.f32 %v8547, %v8635
    %v8637 = vpop.f32.mrf.mxu0
    %v8638 = vadd.f32 %v8549, %v8637
    %8639 = vmatmul.bf16.gmra.mxu0 %v6799
    %v8640 = vpop.f32.mrf.mxu0
    %v8641 = vadd.f32 %v8552, %v8640
    %v8642 = vpop.f32.mrf.mxu0
    %v8643 = vadd.f32 %v8554, %v8642
    %8644 = vdwg.mxu0
    %8645 = vmatpush.bf16.msra.mxu0 %v7352
    %8646 = vmatpush.bf16.msra.mxu0 %v7348
    %8647 = vmatpush.bf16.msra.mxu0 %v7344
    %8648 = vmatpush.bf16.msra.mxu0 %v7340
    %8649 = vmatpush.bf16.msra.mxu0 %v7336
    %8650 = vmatpush.bf16.msra.mxu0 %v7332
    %8651 = vmatpush.bf16.msra.mxu0 %v7328
    %8652 = vmatpush.bf16.msra.mxu0 %v7324
    %8653 = vmatmul.bf16.gmra.mxu0 %v6736
    %v8654 = vpop.f32.mrf.mxu0
    %v8655 = vadd.f32 %v6932, %v8654
    %v8656 = vpop.f32.mrf.mxu0
    %v8657 = vadd.f32 %v6932, %v8656
    %8658 = vmatmul.bf16.gmra.mxu0 %v6740
    %v8659 = vpop.f32.mrf.mxu0
    %v8660 = vadd.f32 %v6932, %v8659
    %v8661 = vpop.f32.mrf.mxu0
    %v8662 = vadd.f32 %v6932, %v8661
    %8663 = vmatmul.bf16.gmra.mxu0 %v6744
    %v8664 = vpop.f32.mrf.mxu0
    %v8665 = vadd.f32 %v6932, %v8664
    %v8666 = vpop.f32.mrf.mxu0
    %v8667 = vadd.f32 %v6932, %v8666
    %8668 = vmatmul.bf16.gmra.mxu0 %v6748
    %v8669 = vpop.f32.mrf.mxu0
    %v8670 = vadd.f32 %v6932, %v8669
    %v8671 = vpop.f32.mrf.mxu0
    %v8672 = vadd.f32 %v6932, %v8671
    %8673 = vmatmul.bf16.gmra.mxu0 %v6752
    %v8674 = vpop.f32.mrf.mxu0
    %v8675 = vadd.f32 %v6932, %v8674
    %v8676 = vpop.f32.mrf.mxu0
    %v8677 = vadd.f32 %v6932, %v8676
    %8678 = vmatmul.bf16.gmra.mxu0 %v6756
    %v8679 = vpop.f32.mrf.mxu0
    %v8680 = vadd.f32 %v6932, %v8679
    %v8681 = vpop.f32.mrf.mxu0
    %v8682 = vadd.f32 %v6932, %v8681
    %8683 = vmatmul.bf16.gmra.mxu0 %v6760
    %v8684 = vpop.f32.mrf.mxu0
    %v8685 = vadd.f32 %v6932, %v8684
    %v8686 = vpop.f32.mrf.mxu0
    %v8687 = vadd.f32 %v6932, %v8686
    %8688 = vmatmul.bf16.gmra.mxu0 %v6764
    %v8689 = vpop.f32.mrf.mxu0
    %v8690 = vadd.f32 %v6932, %v8689
    %v8691 = vpop.f32.mrf.mxu0
    %v8692 = vadd.f32 %v6932, %v8691
    %8693 = vmatmul.bf16.gmra.mxu0 %v6768
    %v8694 = vpop.f32.mrf.mxu0
    %v8695 = vadd.f32 %v6932, %v8694
    %v8696 = vpop.f32.mrf.mxu0
    %v8697 = vadd.f32 %v6932, %v8696
    %8698 = vmatmul.bf16.gmra.mxu0 %v6772
    %v8699 = vpop.f32.mrf.mxu0
    %v8700 = vadd.f32 %v6932, %v8699
    %v8701 = vpop.f32.mrf.mxu0
    %v8702 = vadd.f32 %v6932, %v8701
    %8703 = vmatmul.bf16.gmra.mxu0 %v6776
    %v8704 = vpop.f32.mrf.mxu0
    %v8705 = vadd.f32 %v6932, %v8704
    %v8706 = vpop.f32.mrf.mxu0
    %v8707 = vadd.f32 %v6932, %v8706
    %8708 = vmatmul.bf16.gmra.mxu0 %v6780
    %v8709 = vpop.f32.mrf.mxu0
    %v8710 = vadd.f32 %v6932, %v8709
    %v8711 = vpop.f32.mrf.mxu0
    %v8712 = vadd.f32 %v6932, %v8711
    %8713 = vmatmul.bf16.gmra.mxu0 %v6784
    %v8714 = vpop.f32.mrf.mxu0
    %v8715 = vadd.f32 %v6932, %v8714
    %v8716 = vpop.f32.mrf.mxu0
    %v8717 = vadd.f32 %v6932, %v8716
    %8718 = vmatmul.bf16.gmra.mxu0 %v6788
    %v8719 = vpop.f32.mrf.mxu0
    %v8720 = vadd.f32 %v6932, %v8719
    %v8721 = vpop.f32.mrf.mxu0
    %v8722 = vadd.f32 %v6932, %v8721
    %8723 = vmatmul.bf16.gmra.mxu0 %v6792
    %v8724 = vpop.f32.mrf.mxu0
    %v8725 = vadd.f32 %v6932, %v8724
    %v8726 = vpop.f32.mrf.mxu0
    %v8727 = vadd.f32 %v6932, %v8726
    %8728 = vmatmul.bf16.gmra.mxu0 %v6796
    %v8729 = vpop.f32.mrf.mxu0
    %v8730 = vadd.f32 %v6932, %v8729
    %v8731 = vpop.f32.mrf.mxu0
    %v8732 = vadd.f32 %v6932, %v8731
    %8733 = vdwg.mxu0
    %8734 = vmatpush.bf16.msra.mxu0 %v7384
    %8735 = vmatpush.bf16.msra.mxu0 %v7380
    %8736 = vmatpush.bf16.msra.mxu0 %v7376
    %8737 = vmatpush.bf16.msra.mxu0 %v7372
    %8738 = vmatpush.bf16.msra.mxu0 %v7368
    %8739 = vmatpush.bf16.msra.mxu0 %v7364
    %8740 = vmatpush.bf16.msra.mxu0 %v7360
    %8741 = vmatpush.bf16.msra.mxu0 %v7356
    %8742 = vmatmul.bf16.gmra.mxu0 %v6737
    %v8743 = vpop.f32.mrf.mxu0
    %v8744 = vadd.f32 %v8655, %v8743
    %v8745 = vpop.f32.mrf.mxu0
    %v8746 = vadd.f32 %v8657, %v8745
    %8747 = vmatmul.bf16.gmra.mxu0 %v6741
    %v8748 = vpop.f32.mrf.mxu0
    %v8749 = vadd.f32 %v8660, %v8748
    %v8750 = vpop.f32.mrf.mxu0
    %v8751 = vadd.f32 %v8662, %v8750
    %8752 = vmatmul.bf16.gmra.mxu0 %v6745
    %v8753 = vpop.f32.mrf.mxu0
    %v8754 = vadd.f32 %v8665, %v8753
    %v8755 = vpop.f32.mrf.mxu0
    %v8756 = vadd.f32 %v8667, %v8755
    %8757 = vmatmul.bf16.gmra.mxu0 %v6749
    %v8758 = vpop.f32.mrf.mxu0
    %v8759 = vadd.f32 %v8670, %v8758
    %v8760 = vpop.f32.mrf.mxu0
    %v8761 = vadd.f32 %v8672, %v8760
    %8762 = vmatmul.bf16.gmra.mxu0 %v6753
    %v8763 = vpop.f32.mrf.mxu0
    %v8764 = vadd.f32 %v8675, %v8763
    %v8765 = vpop.f32.mrf.mxu0
    %v8766 = vadd.f32 %v8677, %v8765
    %8767 = vmatmul.bf16.gmra.mxu0 %v6757
    %v8768 = vpop.f32.mrf.mxu0
    %v8769 = vadd.f32 %v8680, %v8768
    %v8770 = vpop.f32.mrf.mxu0
    %v8771 = vadd.f32 %v8682, %v8770
    %8772 = vmatmul.bf16.gmra.mxu0 %v6761
    %v8773 = vpop.f32.mrf.mxu0
    %v8774 = vadd.f32 %v8685, %v8773
    %v8775 = vpop.f32.mrf.mxu0
    %v8776 = vadd.f32 %v8687, %v8775
    %8777 = vmatmul.bf16.gmra.mxu0 %v6765
    %v8778 = vpop.f32.mrf.mxu0
    %v8779 = vadd.f32 %v8690, %v8778
    %v8780 = vpop.f32.mrf.mxu0
    %v8781 = vadd.f32 %v8692, %v8780
    %8782 = vmatmul.bf16.gmra.mxu0 %v6769
    %v8783 = vpop.f32.mrf.mxu0
    %v8784 = vadd.f32 %v8695, %v8783
    %v8785 = vpop.f32.mrf.mxu0
    %v8786 = vadd.f32 %v8697, %v8785
    %8787 = vmatmul.bf16.gmra.mxu0 %v6773
    %v8788 = vpop.f32.mrf.mxu0
    %v8789 = vadd.f32 %v8700, %v8788
    %v8790 = vpop.f32.mrf.mxu0
    %v8791 = vadd.f32 %v8702, %v8790
    %8792 = vmatmul.bf16.gmra.mxu0 %v6777
    %v8793 = vpop.f32.mrf.mxu0
    %v8794 = vadd.f32 %v8705, %v8793
    %v8795 = vpop.f32.mrf.mxu0
    %v8796 = vadd.f32 %v8707, %v8795
    %8797 = vmatmul.bf16.gmra.mxu0 %v6781
    %v8798 = vpop.f32.mrf.mxu0
    %v8799 = vadd.f32 %v8710, %v8798
    %v8800 = vpop.f32.mrf.mxu0
    %v8801 = vadd.f32 %v8712, %v8800
    %8802 = vmatmul.bf16.gmra.mxu0 %v6785
    %v8803 = vpop.f32.mrf.mxu0
    %v8804 = vadd.f32 %v8715, %v8803
    %v8805 = vpop.f32.mrf.mxu0
    %v8806 = vadd.f32 %v8717, %v8805
    %8807 = vmatmul.bf16.gmra.mxu0 %v6789
    %v8808 = vpop.f32.mrf.mxu0
    %v8809 = vadd.f32 %v8720, %v8808
    %v8810 = vpop.f32.mrf.mxu0
    %v8811 = vadd.f32 %v8722, %v8810
    %8812 = vmatmul.bf16.gmra.mxu0 %v6793
    %v8813 = vpop.f32.mrf.mxu0
    %v8814 = vadd.f32 %v8725, %v8813
    %v8815 = vpop.f32.mrf.mxu0
    %v8816 = vadd.f32 %v8727, %v8815
    %8817 = vmatmul.bf16.gmra.mxu0 %v6797
    %v8818 = vpop.f32.mrf.mxu0
    %v8819 = vadd.f32 %v8730, %v8818
    %v8820 = vpop.f32.mrf.mxu0
    %v8821 = vadd.f32 %v8732, %v8820
    %8822 = vdwg.mxu0
    %8823 = vmatpush.bf16.msra.mxu0 %v7416
    %8824 = vmatpush.bf16.msra.mxu0 %v7412
    %8825 = vmatpush.bf16.msra.mxu0 %v7408
    %8826 = vmatpush.bf16.msra.mxu0 %v7404
    %8827 = vmatpush.bf16.msra.mxu0 %v7400
    %8828 = vmatpush.bf16.msra.mxu0 %v7396
    %8829 = vmatpush.bf16.msra.mxu0 %v7392
    %8830 = vmatpush.bf16.msra.mxu0 %v7388
    %8831 = vmatmul.bf16.gmra.mxu0 %v6738
    %v8832 = vpop.f32.mrf.mxu0
    %v8833 = vadd.f32 %v8744, %v8832
    %v8834 = vpop.f32.mrf.mxu0
    %v8835 = vadd.f32 %v8746, %v8834
    %8836 = vmatmul.bf16.gmra.mxu0 %v6742
    %v8837 = vpop.f32.mrf.mxu0
    %v8838 = vadd.f32 %v8749, %v8837
    %v8839 = vpop.f32.mrf.mxu0
    %v8840 = vadd.f32 %v8751, %v8839
    %8841 = vmatmul.bf16.gmra.mxu0 %v6746
    %v8842 = vpop.f32.mrf.mxu0
    %v8843 = vadd.f32 %v8754, %v8842
    %v8844 = vpop.f32.mrf.mxu0
    %v8845 = vadd.f32 %v8756, %v8844
    %8846 = vmatmul.bf16.gmra.mxu0 %v6750
    %v8847 = vpop.f32.mrf.mxu0
    %v8848 = vadd.f32 %v8759, %v8847
    %v8849 = vpop.f32.mrf.mxu0
    %v8850 = vadd.f32 %v8761, %v8849
    %8851 = vmatmul.bf16.gmra.mxu0 %v6754
    %v8852 = vpop.f32.mrf.mxu0
    %v8853 = vadd.f32 %v8764, %v8852
    %v8854 = vpop.f32.mrf.mxu0
    %v8855 = vadd.f32 %v8766, %v8854
    %8856 = vmatmul.bf16.gmra.mxu0 %v6758
    %v8857 = vpop.f32.mrf.mxu0
    %v8858 = vadd.f32 %v8769, %v8857
    %v8859 = vpop.f32.mrf.mxu0
    %v8860 = vadd.f32 %v8771, %v8859
    %8861 = vmatmul.bf16.gmra.mxu0 %v6762
    %v8862 = vpop.f32.mrf.mxu0
    %v8863 = vadd.f32 %v8774, %v8862
    %v8864 = vpop.f32.mrf.mxu0
    %v8865 = vadd.f32 %v8776, %v8864
    %8866 = vmatmul.bf16.gmra.mxu0 %v6766
    %v8867 = vpop.f32.mrf.mxu0
    %v8868 = vadd.f32 %v8779, %v8867
    %v8869 = vpop.f32.mrf.mxu0
    %v8870 = vadd.f32 %v8781, %v8869
    %8871 = vmatmul.bf16.gmra.mxu0 %v6770
    %v8872 = vpop.f32.mrf.mxu0
    %v8873 = vadd.f32 %v8784, %v8872
    %v8874 = vpop.f32.mrf.mxu0
    %v8875 = vadd.f32 %v8786, %v8874
    %8876 = vmatmul.bf16.gmra.mxu0 %v6774
    %v8877 = vpop.f32.mrf.mxu0
    %v8878 = vadd.f32 %v8789, %v8877
    %v8879 = vpop.f32.mrf.mxu0
    %v8880 = vadd.f32 %v8791, %v8879
    %8881 = vmatmul.bf16.gmra.mxu0 %v6778
    %v8882 = vpop.f32.mrf.mxu0
    %v8883 = vadd.f32 %v8794, %v8882
    %v8884 = vpop.f32.mrf.mxu0
    %v8885 = vadd.f32 %v8796, %v8884
    %8886 = vmatmul.bf16.gmra.mxu0 %v6782
    %v8887 = vpop.f32.mrf.mxu0
    %v8888 = vadd.f32 %v8799, %v8887
    %v8889 = vpop.f32.mrf.mxu0
    %v8890 = vadd.f32 %v8801, %v8889
    %8891 = vmatmul.bf16.gmra.mxu0 %v6786
    %v8892 = vpop.f32.mrf.mxu0
    %v8893 = vadd.f32 %v8804, %v8892
    %v8894 = vpop.f32.mrf.mxu0
    %v8895 = vadd.f32 %v8806, %v8894
    %8896 = vmatmul.bf16.gmra.mxu0 %v6790
    %v8897 = vpop.f32.mrf.mxu0
    %v8898 = vadd.f32 %v8809, %v8897
    %v8899 = vpop.f32.mrf.mxu0
    %v8900 = vadd.f32 %v8811, %v8899
    %8901 = vmatmul.bf16.gmra.mxu0 %v6794
    %v8902 = vpop.f32.mrf.mxu0
    %v8903 = vadd.f32 %v8814, %v8902
    %v8904 = vpop.f32.mrf.mxu0
    %v8905 = vadd.f32 %v8816, %v8904
    %8906 = vmatmul.bf16.gmra.mxu0 %v6798
    %v8907 = vpop.f32.mrf.mxu0
    %v8908 = vadd.f32 %v8819, %v8907
    %v8909 = vpop.f32.mrf.mxu0
    %v8910 = vadd.f32 %v8821, %v8909
    %8911 = vdwg.mxu0
    %8912 = vmatpush.bf16.msra.mxu0 %v7448
    %8913 = vmatpush.bf16.msra.mxu0 %v7444
    %8914 = vmatpush.bf16.msra.mxu0 %v7440
    %8915 = vmatpush.bf16.msra.mxu0 %v7436
    %8916 = vmatpush.bf16.msra.mxu0 %v7432
    %8917 = vmatpush.bf16.msra.mxu0 %v7428
    %8918 = vmatpush.bf16.msra.mxu0 %v7424
    %8919 = vmatpush.bf16.msra.mxu0 %v7420
    %8920 = vmatmul.bf16.gmra.mxu0 %v6739
    %v8921 = vpop.f32.mrf.mxu0
    %v8922 = vadd.f32 %v8833, %v8921
    %v8923 = vpop.f32.mrf.mxu0
    %v8924 = vadd.f32 %v8835, %v8923
    %8925 = vmatmul.bf16.gmra.mxu0 %v6743
    %v8926 = vpop.f32.mrf.mxu0
    %v8927 = vadd.f32 %v8838, %v8926
    %v8928 = vpop.f32.mrf.mxu0
    %v8929 = vadd.f32 %v8840, %v8928
    %8930 = vmatmul.bf16.gmra.mxu0 %v6747
    %v8931 = vpop.f32.mrf.mxu0
    %v8932 = vadd.f32 %v8843, %v8931
    %v8933 = vpop.f32.mrf.mxu0
    %v8934 = vadd.f32 %v8845, %v8933
    %8935 = vmatmul.bf16.gmra.mxu0 %v6751
    %v8936 = vpop.f32.mrf.mxu0
    %v8937 = vadd.f32 %v8848, %v8936
    %v8938 = vpop.f32.mrf.mxu0
    %v8939 = vadd.f32 %v8850, %v8938
    %8940 = vmatmul.bf16.gmra.mxu0 %v6755
    %v8941 = vpop.f32.mrf.mxu0
    %v8942 = vadd.f32 %v8853, %v8941
    %v8943 = vpop.f32.mrf.mxu0
    %v8944 = vadd.f32 %v8855, %v8943
    %8945 = vmatmul.bf16.gmra.mxu0 %v6759
    %v8946 = vpop.f32.mrf.mxu0
    %v8947 = vadd.f32 %v8858, %v8946
    %v8948 = vpop.f32.mrf.mxu0
    %v8949 = vadd.f32 %v8860, %v8948
    %8950 = vmatmul.bf16.gmra.mxu0 %v6763
    %v8951 = vpop.f32.mrf.mxu0
    %v8952 = vadd.f32 %v8863, %v8951
    %v8953 = vpop.f32.mrf.mxu0
    %v8954 = vadd.f32 %v8865, %v8953
    %8955 = vmatmul.bf16.gmra.mxu0 %v6767
    %v8956 = vpop.f32.mrf.mxu0
    %v8957 = vadd.f32 %v8868, %v8956
    %v8958 = vpop.f32.mrf.mxu0
    %v8959 = vadd.f32 %v8870, %v8958
    %8960 = vmatmul.bf16.gmra.mxu0 %v6771
    %v8961 = vpop.f32.mrf.mxu0
    %v8962 = vadd.f32 %v8873, %v8961
    %v8963 = vpop.f32.mrf.mxu0
    %v8964 = vadd.f32 %v8875, %v8963
    %8965 = vmatmul.bf16.gmra.mxu0 %v6775
    %v8966 = vpop.f32.mrf.mxu0
    %v8967 = vadd.f32 %v8878, %v8966
    %v8968 = vpop.f32.mrf.mxu0
    %v8969 = vadd.f32 %v8880, %v8968
    %8970 = vmatmul.bf16.gmra.mxu0 %v6779
    %v8971 = vpop.f32.mrf.mxu0
    %v8972 = vadd.f32 %v8883, %v8971
    %v8973 = vpop.f32.mrf.mxu0
    %v8974 = vadd.f32 %v8885, %v8973
    %8975 = vmatmul.bf16.gmra.mxu0 %v6783
    %v8976 = vpop.f32.mrf.mxu0
    %v8977 = vadd.f32 %v8888, %v8976
    %v8978 = vpop.f32.mrf.mxu0
    %v8979 = vadd.f32 %v8890, %v8978
    %8980 = vmatmul.bf16.gmra.mxu0 %v6787
    %v8981 = vpop.f32.mrf.mxu0
    %v8982 = vadd.f32 %v8893, %v8981
    %v8983 = vpop.f32.mrf.mxu0
    %v8984 = vadd.f32 %v8895, %v8983
    %8985 = vmatmul.bf16.gmra.mxu0 %v6791
    %v8986 = vpop.f32.mrf.mxu0
    %v8987 = vadd.f32 %v8898, %v8986
    %v8988 = vpop.f32.mrf.mxu0
    %v8989 = vadd.f32 %v8900, %v8988
    %8990 = vmatmul.bf16.gmra.mxu0 %v6795
    %v8991 = vpop.f32.mrf.mxu0
    %v8992 = vadd.f32 %v8903, %v8991
    %v8993 = vpop.f32.mrf.mxu0
    %v8994 = vadd.f32 %v8905, %v8993
    %8995 = vmatmul.bf16.gmra.mxu0 %v6799
    %v8996 = vpop.f32.mrf.mxu0
    %v8997 = vadd.f32 %v8908, %v8996
    %v8998 = vpop.f32.mrf.mxu0
    %v8999 = vadd.f32 %v8910, %v8998
    %9000 = vdwg.mxu0
    %9001 = vst [vmem:[#allocation8] sm:$0xff] %v7854
    %9002 = vst [vmem:[#allocation8 + $0x8] sm:$0xff] %v8210
    %9003 = vst [vmem:[#allocation8 + $0x10] sm:$0xff] %v8566
    %9004 = vst [vmem:[#allocation8 + $0x18] sm:$0xff] %v8922
    %9005 = vst [vmem:[#allocation8 + $0x20] sm:$0xff] %v7856
    %9006 = vst [vmem:[#allocation8 + $0x28] sm:$0xff] %v8212
    %9007 = vst [vmem:[#allocation8 + $0x30] sm:$0xff] %v8568
    %9008 = vst [vmem:[#allocation8 + $0x38] sm:$0xff] %v8924
    %9009 = vst [vmem:[#allocation8 + $0x40] sm:$0xff] %v7859
    %9010 = vst [vmem:[#allocation8 + $0x48] sm:$0xff] %v8215
    %9011 = vst [vmem:[#allocation8 + $0x50] sm:$0xff] %v8571
    %9012 = vst [vmem:[#allocation8 + $0x58] sm:$0xff] %v8927
    %9013 = vst [vmem:[#allocation8 + $0x60] sm:$0xff] %v7861
    %9014 = vst [vmem:[#allocation8 + $0x68] sm:$0xff] %v8217
    %9015 = vst [vmem:[#allocation8 + $0x70] sm:$0xff] %v8573
    %9016 = vst [vmem:[#allocation8 + $0x78] sm:$0xff] %v8929
    %9017 = vst [vmem:[#allocation8 + $0x80] sm:$0xff] %v7864
    %9018 = vst [vmem:[#allocation8 + $0x88] sm:$0xff] %v8220
    %9019 = vst [vmem:[#allocation8 + $0x90] sm:$0xff] %v8576
    %9020 = vst [vmem:[#allocation8 + $0x98] sm:$0xff] %v8932
    %9021 = vst [vmem:[#allocation8 + $0xa0] sm:$0xff] %v7866
    %9022 = vst [vmem:[#allocation8 + $0xa8] sm:$0xff] %v8222
    %9023 = vst [vmem:[#allocation8 + $0xb0] sm:$0xff] %v8578
    %9024 = vst [vmem:[#allocation8 + $0xb8] sm:$0xff] %v8934
    %9025 = vst [vmem:[#allocation8 + $0xc0] sm:$0xff] %v7869
    %9026 = vst [vmem:[#allocation8 + $0xc8] sm:$0xff] %v8225
    %9027 = vst [vmem:[#allocation8 + $0xd0] sm:$0xff] %v8581
    %9028 = vst [vmem:[#allocation8 + $0xd8] sm:$0xff] %v8937
    %9029 = vst [vmem:[#allocation8 + $0xe0] sm:$0xff] %v7871
    %9030 = vst [vmem:[#allocation8 + $0xe8] sm:$0xff] %v8227
    %9031 = vst [vmem:[#allocation8 + $0xf0] sm:$0xff] %v8583
    %9032 = vst [vmem:[#allocation8 + $0xf8] sm:$0xff] %v8939
    %9033 = vst [vmem:[#allocation8 + $0x100] sm:$0xff] %v7874
    %9034 = vst [vmem:[#allocation8 + $0x108] sm:$0xff] %v8230
    %9035 = vst [vmem:[#allocation8 + $0x110] sm:$0xff] %v8586
    %9036 = vst [vmem:[#allocation8 + $0x118] sm:$0xff] %v8942
    %9037 = vst [vmem:[#allocation8 + $0x120] sm:$0xff] %v7876
    %9038 = vst [vmem:[#allocation8 + $0x128] sm:$0xff] %v8232
    %9039 = vst [vmem:[#allocation8 + $0x130] sm:$0xff] %v8588
    %9040 = vst [vmem:[#allocation8 + $0x138] sm:$0xff] %v8944
    %9041 = vst [vmem:[#allocation8 + $0x140] sm:$0xff] %v7879
    %9042 = vst [vmem:[#allocation8 + $0x148] sm:$0xff] %v8235
    %9043 = vst [vmem:[#allocation8 + $0x150] sm:$0xff] %v8591
    %9044 = vst [vmem:[#allocation8 + $0x158] sm:$0xff] %v8947
    %9045 = vst [vmem:[#allocation8 + $0x160] sm:$0xff] %v7881
    %9046 = vst [vmem:[#allocation8 + $0x168] sm:$0xff] %v8237
    %9047 = vst [vmem:[#allocation8 + $0x170] sm:$0xff] %v8593
    %9048 = vst [vmem:[#allocation8 + $0x178] sm:$0xff] %v8949
    %9049 = vst [vmem:[#allocation8 + $0x180] sm:$0xff] %v7884
    %9050 = vst [vmem:[#allocation8 + $0x188] sm:$0xff] %v8240
    %9051 = vst [vmem:[#allocation8 + $0x190] sm:$0xff] %v8596
    %9052 = vst [vmem:[#allocation8 + $0x198] sm:$0xff] %v8952
    %9053 = vst [vmem:[#allocation8 + $0x1a0] sm:$0xff] %v7886
    %9054 = vst [vmem:[#allocation8 + $0x1a8] sm:$0xff] %v8242
    %9055 = vst [vmem:[#allocation8 + $0x1b0] sm:$0xff] %v8598
    %9056 = vst [vmem:[#allocation8 + $0x1b8] sm:$0xff] %v8954
    %9057 = vst [vmem:[#allocation8 + $0x1c0] sm:$0xff] %v7889
    %9058 = vst [vmem:[#allocation8 + $0x1c8] sm:$0xff] %v8245
    %9059 = vst [vmem:[#allocation8 + $0x1d0] sm:$0xff] %v8601
    %9060 = vst [vmem:[#allocation8 + $0x1d8] sm:$0xff] %v8957
    %9061 = vst [vmem:[#allocation8 + $0x1e0] sm:$0xff] %v7891
    %9062 = vst [vmem:[#allocation8 + $0x1e8] sm:$0xff] %v8247
    %9063 = vst [vmem:[#allocation8 + $0x1f0] sm:$0xff] %v8603
    %9064 = vst [vmem:[#allocation8 + $0x1f8] sm:$0xff] %v8959
    %9065 = vst [vmem:[#allocation8 + $0x200] sm:$0xff] %v7894
    %9066 = vst [vmem:[#allocation8 + $0x208] sm:$0xff] %v8250
    %9067 = vst [vmem:[#allocation8 + $0x210] sm:$0xff] %v8606
    %9068 = vst [vmem:[#allocation8 + $0x218] sm:$0xff] %v8962
    %9069 = vst [vmem:[#allocation8 + $0x220] sm:$0xff] %v7896
    %9070 = vst [vmem:[#allocation8 + $0x228] sm:$0xff] %v8252
    %9071 = vst [vmem:[#allocation8 + $0x230] sm:$0xff] %v8608
    %9072 = vst [vmem:[#allocation8 + $0x238] sm:$0xff] %v8964
    %9073 = vst [vmem:[#allocation8 + $0x240] sm:$0xff] %v7899
    %9074 = vst [vmem:[#allocation8 + $0x248] sm:$0xff] %v8255
    %9075 = vst [vmem:[#allocation8 + $0x250] sm:$0xff] %v8611
    %9076 = vst [vmem:[#allocation8 + $0x258] sm:$0xff] %v8967
    %9077 = vst [vmem:[#allocation8 + $0x260] sm:$0xff] %v7901
    %9078 = vst [vmem:[#allocation8 + $0x268] sm:$0xff] %v8257
    %9079 = vst [vmem:[#allocation8 + $0x270] sm:$0xff] %v8613
    %9080 = vst [vmem:[#allocation8 + $0x278] sm:$0xff] %v8969
    %9081 = vst [vmem:[#allocation8 + $0x280] sm:$0xff] %v7904
    %9082 = vst [vmem:[#allocation8 + $0x288] sm:$0xff] %v8260
    %9083 = vst [vmem:[#allocation8 + $0x290] sm:$0xff] %v8616
    %9084 = vst [vmem:[#allocation8 + $0x298] sm:$0xff] %v8972
    %9085 = vst [vmem:[#allocation8 + $0x2a0] sm:$0xff] %v7906
    %9086 = vst [vmem:[#allocation8 + $0x2a8] sm:$0xff] %v8262
    %9087 = vst [vmem:[#allocation8 + $0x2b0] sm:$0xff] %v8618
    %9088 = vst [vmem:[#allocation8 + $0x2b8] sm:$0xff] %v8974
    %9089 = vst [vmem:[#allocation8 + $0x2c0] sm:$0xff] %v7909
    %9090 = vst [vmem:[#allocation8 + $0x2c8] sm:$0xff] %v8265
    %9091 = vst [vmem:[#allocation8 + $0x2d0] sm:$0xff] %v8621
    %9092 = vst [vmem:[#allocation8 + $0x2d8] sm:$0xff] %v8977
    %9093 = vst [vmem:[#allocation8 + $0x2e0] sm:$0xff] %v7911
    %9094 = vst [vmem:[#allocation8 + $0x2e8] sm:$0xff] %v8267
    %9095 = vst [vmem:[#allocation8 + $0x2f0] sm:$0xff] %v8623
    %9096 = vst [vmem:[#allocation8 + $0x2f8] sm:$0xff] %v8979
    %9097 = vst [vmem:[#allocation8 + $0x300] sm:$0xff] %v7914
    %9098 = vst [vmem:[#allocation8 + $0x308] sm:$0xff] %v8270
    %9099 = vst [vmem:[#allocation8 + $0x310] sm:$0xff] %v8626
    %9100 = vst [vmem:[#allocation8 + $0x318] sm:$0xff] %v8982
    %9101 = vst [vmem:[#allocation8 + $0x320] sm:$0xff] %v7916
    %9102 = vst [vmem:[#allocation8 + $0x328] sm:$0xff] %v8272
    %9103 = vst [vmem:[#allocation8 + $0x330] sm:$0xff] %v8628
    %9104 = vst [vmem:[#allocation8 + $0x338] sm:$0xff] %v8984
    %9105 = vst [vmem:[#allocation8 + $0x340] sm:$0xff] %v7919
    %9106 = vst [vmem:[#allocation8 + $0x348] sm:$0xff] %v8275
    %9107 = vst [vmem:[#allocation8 + $0x350] sm:$0xff] %v8631
    %9108 = vst [vmem:[#allocation8 + $0x358] sm:$0xff] %v8987
    %9109 = vst [vmem:[#allocation8 + $0x360] sm:$0xff] %v7921
    %9110 = vst [vmem:[#allocation8 + $0x368] sm:$0xff] %v8277
    %9111 = vst [vmem:[#allocation8 + $0x370] sm:$0xff] %v8633
    %9112 = vst [vmem:[#allocation8 + $0x378] sm:$0xff] %v8989
    %9113 = vst [vmem:[#allocation8 + $0x380] sm:$0xff] %v7924
    %9114 = vst [vmem:[#allocation8 + $0x388] sm:$0xff] %v8280
    %9115 = vst [vmem:[#allocation8 + $0x390] sm:$0xff] %v8636
    %9116 = vst [vmem:[#allocation8 + $0x398] sm:$0xff] %v8992
    %9117 = vst [vmem:[#allocation8 + $0x3a0] sm:$0xff] %v7926
    %9118 = vst [vmem:[#allocation8 + $0x3a8] sm:$0xff] %v8282
    %9119 = vst [vmem:[#allocation8 + $0x3b0] sm:$0xff] %v8638
    %9120 = vst [vmem:[#allocation8 + $0x3b8] sm:$0xff] %v8994
    %9121 = vst [vmem:[#allocation8 + $0x3c0] sm:$0xff] %v7929
    %9122 = vst [vmem:[#allocation8 + $0x3c8] sm:$0xff] %v8285
    %9123 = vst [vmem:[#allocation8 + $0x3d0] sm:$0xff] %v8641
    %9124 = vst [vmem:[#allocation8 + $0x3d8] sm:$0xff] %v8997
    %9125 = vst [vmem:[#allocation8 + $0x3e0] sm:$0xff] %v7931
    %9126 = vst [vmem:[#allocation8 + $0x3e8] sm:$0xff] %v8287
    %9127 = vst [vmem:[#allocation8 + $0x3f0] sm:$0xff] %v8643
    %9128 = vst [vmem:[#allocation8 + $0x3f8] sm:$0xff] %v8999
    %v9129 = vadd.f32 %v7854, %v7856
    %v9130 = vadd.f32 %v9129, %v7859
    %v9131 = vadd.f32 %v9130, %v7861
    %v9132 = vadd.f32 %v9131, %v7864
    %v9133 = vadd.f32 %v9132, %v7866
    %v9134 = vadd.f32 %v9133, %v7869
    %v9135 = vadd.f32 %v9134, %v7871
    %v9136 = vadd.f32 %v9135, %v7874
    %v9137 = vadd.f32 %v9136, %v7876
    %v9138 = vadd.f32 %v9137, %v7879
    %v9139 = vadd.f32 %v9138, %v7881
    %v9140 = vadd.f32 %v9139, %v7884
    %v9141 = vadd.f32 %v9140, %v7886
    %v9142 = vadd.f32 %v9141, %v7889
    %v9143 = vadd.f32 %v9142, %v7891
    %v9144 = vadd.f32 %v9143, %v7894
    %v9145 = vadd.f32 %v9144, %v7896
    %v9146 = vadd.f32 %v9145, %v7899
    %v9147 = vadd.f32 %v9146, %v7901
    %v9148 = vadd.f32 %v9147, %v7904
    %v9149 = vadd.f32 %v9148, %v7906
    %v9150 = vadd.f32 %v9149, %v7909
    %v9151 = vadd.f32 %v9150, %v7911
    %v9152 = vadd.f32 %v9151, %v7914
    %v9153 = vadd.f32 %v9152, %v7916
    %v9154 = vadd.f32 %v9153, %v7919
    %v9155 = vadd.f32 %v9154, %v7921
    %v9156 = vadd.f32 %v9155, %v7924
    %v9157 = vadd.f32 %v9156, %v7926
    %v9158 = vadd.f32 %v9157, %v7929
    %v9159 = vadd.f32 %v9158, %v7931
    %v9160 = vrot.slane %v9159, 4
    %v9161 = vadd.f32 %v9159, %v9160
    %v9162 = vrot.slane %v9161, 2
    %v9163 = vadd.f32 %v9161, %v9162
    %v9164 = vrot.slane %v9163, 1
    %v9165 = vadd.f32 %v9163, %v9164
    %v9166 = vadd.f32 %v8210, %v8212
    %v9167 = vadd.f32 %v9166, %v8215
    %v9168 = vadd.f32 %v9167, %v8217
    %v9169 = vadd.f32 %v9168, %v8220
    %v9170 = vadd.f32 %v9169, %v8222
    %v9171 = vadd.f32 %v9170, %v8225
    %v9172 = vadd.f32 %v9171, %v8227
    %v9173 = vadd.f32 %v9172, %v8230
    %v9174 = vadd.f32 %v9173, %v8232
    %v9175 = vadd.f32 %v9174, %v8235
    %v9176 = vadd.f32 %v9175, %v8237
    %v9177 = vadd.f32 %v9176, %v8240
    %v9178 = vadd.f32 %v9177, %v8242
    %v9179 = vadd.f32 %v9178, %v8245
    %v9180 = vadd.f32 %v9179, %v8247
    %v9181 = vadd.f32 %v9180, %v8250
    %v9182 = vadd.f32 %v9181, %v8252
    %v9183 = vadd.f32 %v9182, %v8255
    %v9184 = vadd.f32 %v9183, %v8257
    %v9185 = vadd.f32 %v9184, %v8260
    %v9186 = vadd.f32 %v9185, %v8262
    %v9187 = vadd.f32 %v9186, %v8265
    %v9188 = vadd.f32 %v9187, %v8267
    %v9189 = vadd.f32 %v9188, %v8270
    %v9190 = vadd.f32 %v9189, %v8272
    %v9191 = vadd.f32 %v9190, %v8275
    %v9192 = vadd.f32 %v9191, %v8277
    %v9193 = vadd.f32 %v9192, %v8280
    %v9194 = vadd.f32 %v9193, %v8282
    %v9195 = vadd.f32 %v9194, %v8285
    %v9196 = vadd.f32 %v9195, %v8287
    %v9197 = vrot.slane %v9196, 4
    %v9198 = vadd.f32 %v9196, %v9197
    %v9199 = vrot.slane %v9198, 2
    %v9200 = vadd.f32 %v9198, %v9199
    %v9201 = vrot.slane %v9200, 1
    %v9202 = vadd.f32 %v9200, %v9201
    %v9203 = vadd.f32 %v8566, %v8568
    %v9204 = vadd.f32 %v9203, %v8571
    %v9205 = vadd.f32 %v9204, %v8573
    %v9206 = vadd.f32 %v9205, %v8576
    %v9207 = vadd.f32 %v9206, %v8578
    %v9208 = vadd.f32 %v9207, %v8581
    %v9209 = vadd.f32 %v9208, %v8583
    %v9210 = vadd.f32 %v9209, %v8586
    %v9211 = vadd.f32 %v9210, %v8588
    %v9212 = vadd.f32 %v9211, %v8591
    %v9213 = vadd.f32 %v9212, %v8593
    %v9214 = vadd.f32 %v9213, %v8596
    %v9215 = vadd.f32 %v9214, %v8598
    %v9216 = vadd.f32 %v9215, %v8601
    %v9217 = vadd.f32 %v9216, %v8603
    %v9218 = vadd.f32 %v9217, %v8606
    %v9219 = vadd.f32 %v9218, %v8608
    %v9220 = vadd.f32 %v9219, %v8611
    %v9221 = vadd.f32 %v9220, %v8613
    %v9222 = vadd.f32 %v9221, %v8616
    %v9223 = vadd.f32 %v9222, %v8618
    %v9224 = vadd.f32 %v9223, %v8621
    %v9225 = vadd.f32 %v9224, %v8623
    %v9226 = vadd.f32 %v9225, %v8626
    %v9227 = vadd.f32 %v9226, %v8628
    %v9228 = vadd.f32 %v9227, %v8631
    %v9229 = vadd.f32 %v9228, %v8633
    %v9230 = vadd.f32 %v9229, %v8636
    %v9231 = vadd.f32 %v9230, %v8638
    %v9232 = vadd.f32 %v9231, %v8641
    %v9233 = vadd.f32 %v9232, %v8643
    %v9234 = vrot.slane %v9233, 4
    %v9235 = vadd.f32 %v9233, %v9234
    %v9236 = vrot.slane %v9235, 2
    %v9237 = vadd.f32 %v9235, %v9236
    %v9238 = vrot.slane %v9237, 1
    %v9239 = vadd.f32 %v9237, %v9238
    %v9240 = vadd.f32 %v8922, %v8924
    %v9241 = vadd.f32 %v9240, %v8927
    %v9242 = vadd.f32 %v9241, %v8929
    %v9243 = vadd.f32 %v9242, %v8932
    %v9244 = vadd.f32 %v9243, %v8934
    %v9245 = vadd.f32 %v9244, %v8937
    %v9246 = vadd.f32 %v9245, %v8939
    %v9247 = vadd.f32 %v9246, %v8942
    %v9248 = vadd.f32 %v9247, %v8944
    %v9249 = vadd.f32 %v9248, %v8947
    %v9250 = vadd.f32 %v9249, %v8949
    %v9251 = vadd.f32 %v9250, %v8952
    %v9252 = vadd.f32 %v9251, %v8954
    %v9253 = vadd.f32 %v9252, %v8957
    %v9254 = vadd.f32 %v9253, %v8959
    %v9255 = vadd.f32 %v9254, %v8962
    %v9256 = vadd.f32 %v9255, %v8964
    %v9257 = vadd.f32 %v9256, %v8967
    %v9258 = vadd.f32 %v9257, %v8969
    %v9259 = vadd.f32 %v9258, %v8972
    %v9260 = vadd.f32 %v9259, %v8974
    %v9261 = vadd.f32 %v9260, %v8977
    %v9262 = vadd.f32 %v9261, %v8979
    %v9263 = vadd.f32 %v9262, %v8982
    %v9264 = vadd.f32 %v9263, %v8984
    %v9265 = vadd.f32 %v9264, %v8987
    %v9266 = vadd.f32 %v9265, %v8989
    %v9267 = vadd.f32 %v9266, %v8992
    %v9268 = vadd.f32 %v9267, %v8994
    %v9269 = vadd.f32 %v9268, %v8997
    %v9270 = vadd.f32 %v9269, %v8999
    %v9271 = vrot.slane %v9270, 4
    %v9272 = vadd.f32 %v9270, %v9271
    %v9273 = vrot.slane %v9272, 2
    %v9274 = vadd.f32 %v9272, %v9273
    %v9275 = vrot.slane %v9274, 1
    %v9276 = vadd.f32 %v9274, %v9275
    %v9277 = vmul.f32 %v9165, 0.00390625
    %v9278 = vmul.f32 %v9202, 0.00390625
    %v9279 = vmul.f32 %v9239, 0.00390625
    %v9280 = vmul.f32 %v9276, 0.00390625
    %v9281 = vmul.f32 %v7854, %v7854
    %v9282 = vmul.f32 %v8210, %v8210
    %v9283 = vmul.f32 %v8566, %v8566
    %v9284 = vmul.f32 %v8922, %v8922
    %v9285 = vmul.f32 %v7856, %v7856
    %v9286 = vmul.f32 %v8212, %v8212
    %v9287 = vmul.f32 %v8568, %v8568
    %v9288 = vmul.f32 %v8924, %v8924
    %v9289 = vmul.f32 %v7859, %v7859
    %v9290 = vmul.f32 %v8215, %v8215
    %v9291 = vmul.f32 %v8571, %v8571
    %v9292 = vmul.f32 %v8927, %v8927
    %v9293 = vmul.f32 %v7861, %v7861
    %v9294 = vmul.f32 %v8217, %v8217
    %v9295 = vmul.f32 %v8573, %v8573
    %v9296 = vmul.f32 %v8929, %v8929
    %v9297 = vmul.f32 %v7864, %v7864
    %v9298 = vmul.f32 %v8220, %v8220
    %v9299 = vmul.f32 %v8576, %v8576
    %v9300 = vmul.f32 %v8932, %v8932
    %v9301 = vmul.f32 %v7866, %v7866
    %v9302 = vmul.f32 %v8222, %v8222
    %v9303 = vmul.f32 %v8578, %v8578
    %v9304 = vmul.f32 %v8934, %v8934
    %v9305 = vmul.f32 %v7869, %v7869
    %v9306 = vmul.f32 %v8225, %v8225
    %v9307 = vmul.f32 %v8581, %v8581
    %v9308 = vmul.f32 %v8937, %v8937
    %v9309 = vmul.f32 %v7871, %v7871
    %v9310 = vmul.f32 %v8227, %v8227
    %v9311 = vmul.f32 %v8583, %v8583
    %v9312 = vmul.f32 %v8939, %v8939
    %v9313 = vmul.f32 %v7874, %v7874
    %v9314 = vmul.f32 %v8230, %v8230
    %v9315 = vmul.f32 %v8586, %v8586
    %v9316 = vmul.f32 %v8942, %v8942
    %v9317 = vmul.f32 %v7876, %v7876
    %v9318 = vmul.f32 %v8232, %v8232
    %v9319 = vmul.f32 %v8588, %v8588
    %v9320 = vmul.f32 %v8944, %v8944
    %v9321 = vmul.f32 %v7879, %v7879
    %v9322 = vmul.f32 %v8235, %v8235
    %v9323 = vmul.f32 %v8591, %v8591
    %v9324 = vmul.f32 %v8947, %v8947
    %v9325 = vmul.f32 %v7881, %v7881
    %v9326 = vmul.f32 %v8237, %v8237
    %v9327 = vmul.f32 %v8593, %v8593
    %v9328 = vmul.f32 %v8949, %v8949
    %v9329 = vmul.f32 %v7884, %v7884
    %v9330 = vmul.f32 %v8240, %v8240
    %v9331 = vmul.f32 %v8596, %v8596
    %v9332 = vmul.f32 %v8952, %v8952
    %v9333 = vmul.f32 %v7886, %v7886
    %v9334 = vmul.f32 %v8242, %v8242
    %v9335 = vmul.f32 %v8598, %v8598
    %v9336 = vmul.f32 %v8954, %v8954
    %v9337 = vmul.f32 %v7889, %v7889
    %v9338 = vmul.f32 %v8245, %v8245
    %v9339 = vmul.f32 %v8601, %v8601
    %v9340 = vmul.f32 %v8957, %v8957
    %v9341 = vmul.f32 %v7891, %v7891
    %v9342 = vmul.f32 %v8247, %v8247
    %v9343 = vmul.f32 %v8603, %v8603
    %v9344 = vmul.f32 %v8959, %v8959
    %v9345 = vmul.f32 %v7894, %v7894
    %v9346 = vmul.f32 %v8250, %v8250
    %v9347 = vmul.f32 %v8606, %v8606
    %v9348 = vmul.f32 %v8962, %v8962
    %v9349 = vmul.f32 %v7896, %v7896
    %v9350 = vmul.f32 %v8252, %v8252
    %v9351 = vmul.f32 %v8608, %v8608
    %v9352 = vmul.f32 %v8964, %v8964
    %v9353 = vmul.f32 %v7899, %v7899
    %v9354 = vmul.f32 %v8255, %v8255
    %v9355 = vmul.f32 %v8611, %v8611
    %v9356 = vmul.f32 %v8967, %v8967
    %v9357 = vmul.f32 %v7901, %v7901
    %v9358 = vmul.f32 %v8257, %v8257
    %v9359 = vmul.f32 %v8613, %v8613
    %v9360 = vmul.f32 %v8969, %v8969
    %v9361 = vmul.f32 %v7904, %v7904
    %v9362 = vmul.f32 %v8260, %v8260
    %v9363 = vmul.f32 %v8616, %v8616
    %v9364 = vmul.f32 %v8972, %v8972
    %v9365 = vmul.f32 %v7906, %v7906
    %v9366 = vmul.f32 %v8262, %v8262
    %v9367 = vmul.f32 %v8618, %v8618
    %v9368 = vmul.f32 %v8974, %v8974
    %v9369 = vmul.f32 %v7909, %v7909
    %v9370 = vmul.f32 %v8265, %v8265
    %v9371 = vmul.f32 %v8621, %v8621
    %v9372 = vmul.f32 %v8977, %v8977
    %v9373 = vmul.f32 %v7911, %v7911
    %v9374 = vmul.f32 %v8267, %v8267
    %v9375 = vmul.f32 %v8623, %v8623
    %v9376 = vmul.f32 %v8979, %v8979
    %v9377 = vmul.f32 %v7914, %v7914
    %v9378 = vmul.f32 %v8270, %v8270
    %v9379 = vmul.f32 %v8626, %v8626
    %v9380 = vmul.f32 %v8982, %v8982
    %v9381 = vmul.f32 %v7916, %v7916
    %v9382 = vmul.f32 %v8272, %v8272
    %v9383 = vmul.f32 %v8628, %v8628
    %v9384 = vmul.f32 %v8984, %v8984
    %v9385 = vmul.f32 %v7919, %v7919
    %v9386 = vmul.f32 %v8275, %v8275
    %v9387 = vmul.f32 %v8631, %v8631
    %v9388 = vmul.f32 %v8987, %v8987
    %v9389 = vmul.f32 %v7921, %v7921
    %v9390 = vmul.f32 %v8277, %v8277
    %v9391 = vmul.f32 %v8633, %v8633
    %v9392 = vmul.f32 %v8989, %v8989
    %v9393 = vmul.f32 %v7924, %v7924
    %v9394 = vmul.f32 %v8280, %v8280
    %v9395 = vmul.f32 %v8636, %v8636
    %v9396 = vmul.f32 %v8992, %v8992
    %v9397 = vmul.f32 %v7926, %v7926
    %v9398 = vmul.f32 %v8282, %v8282
    %v9399 = vmul.f32 %v8638, %v8638
    %v9400 = vmul.f32 %v8994, %v8994
    %v9401 = vmul.f32 %v7929, %v7929
    %v9402 = vmul.f32 %v8285, %v8285
    %v9403 = vmul.f32 %v8641, %v8641
    %v9404 = vmul.f32 %v8997, %v8997
    %v9405 = vmul.f32 %v7931, %v7931
    %v9406 = vmul.f32 %v8287, %v8287
    %v9407 = vmul.f32 %v8643, %v8643
    %v9408 = vmul.f32 %v8999, %v8999
    %v9409 = vadd.f32 %v9281, %v9285
    %v9410 = vadd.f32 %v9409, %v9289
    %v9411 = vadd.f32 %v9410, %v9293
    %v9412 = vadd.f32 %v9411, %v9297
    %v9413 = vadd.f32 %v9412, %v9301
    %v9414 = vadd.f32 %v9413, %v9305
    %v9415 = vadd.f32 %v9414, %v9309
    %v9416 = vadd.f32 %v9415, %v9313
    %v9417 = vadd.f32 %v9416, %v9317
    %v9418 = vadd.f32 %v9417, %v9321
    %v9419 = vadd.f32 %v9418, %v9325
    %v9420 = vadd.f32 %v9419, %v9329
    %v9421 = vadd.f32 %v9420, %v9333
    %v9422 = vadd.f32 %v9421, %v9337
    %v9423 = vadd.f32 %v9422, %v9341
    %v9424 = vadd.f32 %v9423, %v9345
    %v9425 = vadd.f32 %v9424, %v9349
    %v9426 = vadd.f32 %v9425, %v9353
    %v9427 = vadd.f32 %v9426, %v9357
    %v9428 = vadd.f32 %v9427, %v9361
    %v9429 = vadd.f32 %v9428, %v9365
    %v9430 = vadd.f32 %v9429, %v9369
    %v9431 = vadd.f32 %v9430, %v9373
    %v9432 = vadd.f32 %v9431, %v9377
    %v9433 = vadd.f32 %v9432, %v9381
    %v9434 = vadd.f32 %v9433, %v9385
    %v9435 = vadd.f32 %v9434, %v9389
    %v9436 = vadd.f32 %v9435, %v9393
    %v9437 = vadd.f32 %v9436, %v9397
    %v9438 = vadd.f32 %v9437, %v9401
    %v9439 = vadd.f32 %v9438, %v9405
    %v9440 = vrot.slane %v9439, 4
    %v9441 = vadd.f32 %v9439, %v9440
    %v9442 = vrot.slane %v9441, 2
    %v9443 = vadd.f32 %v9441, %v9442
    %v9444 = vrot.slane %v9443, 1
    %v9445 = vadd.f32 %v9443, %v9444
    %v9446 = vadd.f32 %v9282, %v9286
    %v9447 = vadd.f32 %v9446, %v9290
    %v9448 = vadd.f32 %v9447, %v9294
    %v9449 = vadd.f32 %v9448, %v9298
    %v9450 = vadd.f32 %v9449, %v9302
    %v9451 = vadd.f32 %v9450, %v9306
    %v9452 = vadd.f32 %v9451, %v9310
    %v9453 = vadd.f32 %v9452, %v9314
    %v9454 = vadd.f32 %v9453, %v9318
    %v9455 = vadd.f32 %v9454, %v9322
    %v9456 = vadd.f32 %v9455, %v9326
    %v9457 = vadd.f32 %v9456, %v9330
    %v9458 = vadd.f32 %v9457, %v9334
    %v9459 = vadd.f32 %v9458, %v9338
    %v9460 = vadd.f32 %v9459, %v9342
    %v9461 = vadd.f32 %v9460, %v9346
    %v9462 = vadd.f32 %v9461, %v9350
    %v9463 = vadd.f32 %v9462, %v9354
    %v9464 = vadd.f32 %v9463, %v9358
    %v9465 = vadd.f32 %v9464, %v9362
    %v9466 = vadd.f32 %v9465, %v9366
    %v9467 = vadd.f32 %v9466, %v9370
    %v9468 = vadd.f32 %v9467, %v9374
    %v9469 = vadd.f32 %v9468, %v9378
    %v9470 = vadd.f32 %v9469, %v9382
    %v9471 = vadd.f32 %v9470, %v9386
    %v9472 = vadd.f32 %v9471, %v9390
    %v9473 = vadd.f32 %v9472, %v9394
    %v9474 = vadd.f32 %v9473, %v9398
    %v9475 = vadd.f32 %v9474, %v9402
    %v9476 = vadd.f32 %v9475, %v9406
    %v9477 = vrot.slane %v9476, 4
    %v9478 = vadd.f32 %v9476, %v9477
    %v9479 = vrot.slane %v9478, 2
    %v9480 = vadd.f32 %v9478, %v9479
    %v9481 = vrot.slane %v9480, 1
    %v9482 = vadd.f32 %v9480, %v9481
    %v9483 = vadd.f32 %v9283, %v9287
    %v9484 = vadd.f32 %v9483, %v9291
    %v9485 = vadd.f32 %v9484, %v9295
    %v9486 = vadd.f32 %v9485, %v9299
    %v9487 = vadd.f32 %v9486, %v9303
    %v9488 = vadd.f32 %v9487, %v9307
    %v9489 = vadd.f32 %v9488, %v9311
    %v9490 = vadd.f32 %v9489, %v9315
    %v9491 = vadd.f32 %v9490, %v9319
    %v9492 = vadd.f32 %v9491, %v9323
    %v9493 = vadd.f32 %v9492, %v9327
    %v9494 = vadd.f32 %v9493, %v9331
    %v9495 = vadd.f32 %v9494, %v9335
    %v9496 = vadd.f32 %v9495, %v9339
    %v9497 = vadd.f32 %v9496, %v9343
    %v9498 = vadd.f32 %v9497, %v9347
    %v9499 = vadd.f32 %v9498, %v9351
    %v9500 = vadd.f32 %v9499, %v9355
    %v9501 = vadd.f32 %v9500, %v9359
    %v9502 = vadd.f32 %v9501, %v9363
    %v9503 = vadd.f32 %v9502, %v9367
    %v9504 = vadd.f32 %v9503, %v9371
    %v9505 = vadd.f32 %v9504, %v9375
    %v9506 = vadd.f32 %v9505, %v9379
    %v9507 = vadd.f32 %v9506, %v9383
    %v9508 = vadd.f32 %v9507, %v9387
    %v9509 = vadd.f32 %v9508, %v9391
    %v9510 = vadd.f32 %v9509, %v9395
    %v9511 = vadd.f32 %v9510, %v9399
    %v9512 = vadd.f32 %v9511, %v9403
    %v9513 = vadd.f32 %v9512, %v9407
    %v9514 = vrot.slane %v9513, 4
    %v9515 = vadd.f32 %v9513, %v9514
    %v9516 = vrot.slane %v9515, 2
    %v9517 = vadd.f32 %v9515, %v9516
    %v9518 = vrot.slane %v9517, 1
    %v9519 = vadd.f32 %v9517, %v9518
    %v9520 = vadd.f32 %v9284, %v9288
    %v9521 = vadd.f32 %v9520, %v9292
    %v9522 = vadd.f32 %v9521, %v9296
    %v9523 = vadd.f32 %v9522, %v9300
    %v9524 = vadd.f32 %v9523, %v9304
    %v9525 = vadd.f32 %v9524, %v9308
    %v9526 = vadd.f32 %v9525, %v9312
    %v9527 = vadd.f32 %v9526, %v9316
    %v9528 = vadd.f32 %v9527, %v9320
    %v9529 = vadd.f32 %v9528, %v9324
    %v9530 = vadd.f32 %v9529, %v9328
    %v9531 = vadd.f32 %v9530, %v9332
    %v9532 = vadd.f32 %v9531, %v9336
    %v9533 = vadd.f32 %v9532, %v9340
    %v9534 = vadd.f32 %v9533, %v9344
    %v9535 = vadd.f32 %v9534, %v9348
    %v9536 = vadd.f32 %v9535, %v9352
    %v9537 = vadd.f32 %v9536, %v9356
    %v9538 = vadd.f32 %v9537, %v9360
    %v9539 = vadd.f32 %v9538, %v9364
    %v9540 = vadd.f32 %v9539, %v9368
    %v9541 = vadd.f32 %v9540, %v9372
    %v9542 = vadd.f32 %v9541, %v9376
    %v9543 = vadd.f32 %v9542, %v9380
    %v9544 = vadd.f32 %v9543, %v9384
    %v9545 = vadd.f32 %v9544, %v9388
    %v9546 = vadd.f32 %v9545, %v9392
    %v9547 = vadd.f32 %v9546, %v9396
    %v9548 = vadd.f32 %v9547, %v9400
    %v9549 = vadd.f32 %v9548, %v9404
    %v9550 = vadd.f32 %v9549, %v9408
    %v9551 = vrot.slane %v9550, 4
    %v9552 = vadd.f32 %v9550, %v9551
    %v9553 = vrot.slane %v9552, 2
    %v9554 = vadd.f32 %v9552, %v9553
    %v9555 = vrot.slane %v9554, 1
    %v9556 = vadd.f32 %v9554, %v9555
    %v9557 = vmul.f32 %v9445, 0.00390625
    %v9558 = vmul.f32 %v9482, 0.00390625
    %v9559 = vmul.f32 %v9519, 0.00390625
    %v9560 = vmul.f32 %v9556, 0.00390625
    %v9561 = vmul.f32 %v9277, %v9277
    %v9562 = vmul.f32 %v9278, %v9278
    %v9563 = vmul.f32 %v9279, %v9279
    %v9564 = vmul.f32 %v9280, %v9280
    %v9565 = vsub.f32 %v9557, %v9561
    %v9566 = vsub.f32 %v9558, %v9562
    %v9567 = vsub.f32 %v9559, %v9563
    %v9568 = vsub.f32 %v9560, %v9564
    %v9569 = vmax.f32 %v9565, 0.0
    %v9570 = vmax.f32 %v9566, 0.0
    %v9571 = vmax.f32 %v9567, 0.0
    %v9572 = vmax.f32 %v9568, 0.0
    %v9573 = vmul.f32 %v9569, 1.0039216
    %v9574 = vmul.f32 %v9570, 1.0039216
    %v9575 = vmul.f32 %v9571, 1.0039216
    %v9576 = vmul.f32 %v9572, 1.0039216
    %9577 = vst [vmem:[#allocation9] sm:$0xff] 0.0
    %9578 = vst [vmem:[#allocation9 + $0x8] sm:$0xff] 0.0
    %9579 = vst [vmem:[#allocation9 + $0x10] sm:$0xff] 0.0
    %9580 = vst [vmem:[#allocation9 + $0x18] sm:$0xff] 0.0
    %v9585 = vrot.slane %v9278, 7
    %v9586 = vrot.slane %v9279, 6
    %v9587 = vrot.slane %v9280, 5
    %v9588 = vsel %vm3110, %v9277, %v9585
    %v9589 = vsel %vm3112, %v9586, %v9587
    %v9590 = vsel %vm3114, %v9588, %v9589
    %v9592 = vlaneseq
    %vm9593 = vcmp.ge.s32.totalorder %v9592, 0
    %vm9594 = vcmp.lt.s32.totalorder %v9592, 512
    %vm9595 = vmand %vm9593, %vm9594
    %9596 = vst.msk [vmem:[#allocation9] ss:$8 sm:$0xf] %vm9595, %v9590
    %9597 = vst.msk [vmem:[#allocation9] ss:$8 sm:$0x0] %vm9595, %v9590
    %v9602 = vrot.slane %v9574, 7
    %v9603 = vrot.slane %v9575, 6
    %v9604 = vrot.slane %v9576, 5
    %v9605 = vsel %vm3110, %v9573, %v9602
    %v9606 = vsel %vm3112, %v9603, %v9604
    %v9607 = vsel %vm3114, %v9605, %v9606
    %s9609 = scalar_lea.vmem [#allocation9], 1
    %9610 = vst.msk [vmem:[%s9609] ss:$8 sm:$0xf] %vm9595, %v9607
    %9611 = vst.msk [vmem:[%s9609] ss:$8 sm:$0x0] %vm9595, %v9607
    // Predicated region
    $region41: #{vicreg_forward.1} parent=1 // pred_check
      _
    $region42: #{vicreg_forward.1} parent=1 // pred_check_branch
      %9613 = sbr.rel (0) target = $region44
    $region43: #{vicreg_forward.1} parent=1 // pred_region
      %9615 = vsyncadd [#allocation7], 0
      %s9616 = sshll.u32 [#allocation8], 4
      %s9617 = int_to_ptr.vmem [resolvable:$true] %s9616
      %s9618 = sshll.u32 %s5, 4
      %s9619 = int_to_ptr.hbm [resolvable:$true] %s9618
      %9624 = dma.vmem_to_hbm [thread:$0]  %s9617, 16384, %s9619, [#allocation7], 512, 512, 32
    $region44: #{vicreg_forward.1} parent=1 // pred_fallthru
      _
    // Predicated region
    $region45: #{vicreg_forward.1} parent=1 // pred_check
      _
    $region46: #{vicreg_forward.1} parent=1 // pred_check_branch
      %9626 = sbr.rel (0) target = $region48
    $region47: #{vicreg_forward.1} parent=1 // pred_region
      %9628 = vsyncadd [#allocation10], 0
      %s9630 = sshll.u32 [#allocation9], 4
      %s9631 = int_to_ptr.vmem [resolvable:$true] %s9630
      %s9632 = sshll.u32 %s6, 4
      %s9633 = int_to_ptr.hbm [resolvable:$true] %s9632
      %9635 = dma.vmem_to_hbm [thread:$0]  %s9631, 512, %s9633, [#allocation10]
    $region48: #{vicreg_forward.1} parent=1 // pred_fallthru
      _
    // Predicated region
    $region49: #{vicreg_forward.1} parent=1 // pred_check
      _
    $region50: #{vicreg_forward.1} parent=1 // pred_check_branch
      %9637 = sbr.rel (0) target = $region52
    $region51: #{vicreg_forward.1} parent=1 // pred_region
      %9639 = dma.done [#allocation7], 16384
    $region52: #{vicreg_forward.1} parent=1 // pred_fallthru
      _
    // Predicated region
    $region53: #{vicreg_forward.1} parent=1 // pred_check
      _
    $region54: #{vicreg_forward.1} parent=1 // pred_check_branch
      %9641 = sbr.rel (0) target = $region56
    $region55: #{vicreg_forward.1} parent=1 // pred_region
      %9643 = dma.done [#allocation10], 512
    $region56: #{vicreg_forward.1} parent=1 // pred_fallthru
      _
    %9644 = vsyncpa [#allocation6], 1
    %9645 = vsyncpa [#allocation7], 1
    %9646 = vsyncpa [#allocation10], 1
  %9647 = vsyncmov [#allocation4]
  %s9648 = vpop.sfrf %9647
  %p9649 = scmp.eq.s32.totalorder %s9648, 0
  %p9650 = pneg %p9649
  %9652 = shalt.err (%p9650)
  %s9653 = scalar_lea.sflag [#allocation4], 1
  %9654 = vsyncmov %s9653
  %s9655 = vpop.sfrf %9654
  %p9656 = scmp.eq.s32.totalorder %s9655, 0
  %p9657 = pneg %p9656
  %9659 = shalt.err (%p9657)

</llo_original>
